<compile_context>
chip_gen: v6e
topology: v6e:2x2x1
jax: 0.10.0
libtpu: 0.0.40
codegen_flags: <defaults>
</compile_context>

<pallas_src>
import functools

import jax
import jax.numpy as jnp
from jax.experimental import pallas as pl
from jax.experimental.pallas import tpu as pltpu

LIN_SIZE = 1024
POOL = 10          # pool_size = (10, 10)
NUM_CLASSES = 117
VMEM_LIMIT = 32 * 1024 * 1024   # safe on v5e/v6e (128 MiB) and v7x (64 MiB)


def _round_up(x, m):
    return (x + m - 1) // m * m


# ----------------------------- Pallas kernels ------------------------------

def _linear_kernel(x_ref, w_ref, b_ref, o_ref, *, act):
    y = jnp.dot(x_ref[...], w_ref[...], preferred_element_type=jnp.float32)
    y = y + b_ref[...]
    if act == "relu":
        y = jnp.maximum(y, 0.0)
    o_ref[...] = y.astype(o_ref.dtype)


def _linear_mul_kernel(x_ref, w_ref, b_ref, m_ref, o_ref, *, act):
    # Same as _linear_kernel but fuses an elementwise gate (y * m) into the
    # epilogue (rides the VPU slot, free under the MXU).
    y = jnp.dot(x_ref[...], w_ref[...], preferred_element_type=jnp.float32)
    y = y + b_ref[...]
    if act == "relu":
        y = jnp.maximum(y, 0.0)
    o_ref[...] = (y * m_ref[...]).astype(o_ref.dtype)


def linear(x, w, b, act="none", mul=None):
    """y = act(x @ w + b) [* mul].  x:(M,K), w:(K,N), b:(N,), mul:(M,N)|None.

    bf16 MXU operands, f32 accumulate.  K and N are zero-padded to multiples
    of 128 (lane-dense loads/stores), M padded to the tile size; the real
    (M, N) slice is returned.
    """
    M, K = x.shape
    Kw, N = w.shape
    assert K == Kw
    Kp = _round_up(K, 128)
    Np = _round_up(N, 128)
    x = x.astype(jnp.bfloat16)
    w = w.astype(jnp.bfloat16)
    b = b.astype(jnp.float32)
    if Kp != K:
        x = jnp.pad(x, ((0, 0), (0, Kp - K)))
        w = jnp.pad(w, ((0, Kp - K), (0, 0)))
    if Np != N:
        w = jnp.pad(w, ((0, 0), (0, Np - N)))
        b = jnp.pad(b, (0, Np - N))
    tm = 1024 if M >= 1024 else max(8, _round_up(M, 8))
    Mp = _round_up(M, tm)
    if Mp != M:
        x = jnp.pad(x, ((0, Mp - M), (0, 0)))
    b2 = b.reshape(1, Np)

    in_specs = [pl.BlockSpec((tm, Kp), lambda i: (i, 0)),
                pl.BlockSpec((Kp, Np), lambda i: (0, 0)),
                pl.BlockSpec((1, Np), lambda i: (0, 0))]
    args = [x, w, b2]
    if mul is None:
        kernel = functools.partial(_linear_kernel, act=act)
    else:
        m = jnp.pad(mul.astype(jnp.float32), ((0, Mp - M), (0, Np - N)))
        in_specs.append(pl.BlockSpec((tm, Np), lambda i: (i, 0)))
        args.append(m)
        kernel = functools.partial(_linear_mul_kernel, act=act)

    out = pl.pallas_call(
        kernel,
        grid=(Mp // tm,),
        in_specs=in_specs,
        out_specs=pl.BlockSpec((tm, Np), lambda i: (i, 0)),
        out_shape=jax.ShapeDtypeStruct((Mp, Np), jnp.float32),
        compiler_params=pltpu.CompilerParams(
            dimension_semantics=("parallel",),
            vmem_limit_bytes=VMEM_LIMIT),
    )(*args)
    return out[:M, :N]


def _roi_block_kernel(x_ref, pool_ref, w1_ref, b1_ref, w2_ref, b2_ref,
                      w3_ref, b3_ref, o_ref):
    # x: (Mp, 1024) = all ROIs of this branch stacked row-wise (bf16).
    # Three 1x1-conv(+folded BN) layers, ReLU, residual add, then segmented
    # average pool (one row per ROI) done as a tiny pool-matrix matmul.
    x = x_ref[...]
    h = jnp.dot(x, w1_ref[...], preferred_element_type=jnp.float32) + b1_ref[...]
    h = jnp.dot(h.astype(jnp.bfloat16), w2_ref[...],
                preferred_element_type=jnp.float32) + b2_ref[...]
    h = jnp.dot(h.astype(jnp.bfloat16), w3_ref[...],
                preferred_element_type=jnp.float32) + b3_ref[...]
    res = jnp.maximum(h, 0.0) + x.astype(jnp.float32)
    o_ref[...] = jnp.dot(pool_ref[...], res, preferred_element_type=jnp.float32)


def roi_bottleneck_pool(x_nchw, ws, bs):
    """x:(N,1024,H,W) -> (N,1024): relu(bn3(c3(bn2(c2(bn1(c1(x)))))))+x,
    averaged over the HxW spatial extent of each ROI.  All ROIs of the branch
    run in a single fused kernel (high MXU row occupancy, weights loaded once).
    """
    n, c, h, w = x_nchw.shape
    hw = h * w
    M = n * hw
    Mp = _round_up(M, 8)
    Np = _round_up(n, 8)
    x = x_nchw.transpose(0, 2, 3, 1).reshape(M, c).astype(jnp.bfloat16)
    if Mp != M:
        x = jnp.pad(x, ((0, Mp - M), (0, 0)))
    # Segment-mean matrix: row i holds 1/hw over that ROI's rows; padded
    # rows/cols are zero so padding is numerically neutral.
    rows = jnp.arange(Np, dtype=jnp.int32)[:, None]
    cols = jnp.arange(Mp, dtype=jnp.int32)[None, :]
    pool = jnp.where((cols >= rows * hw) & (cols < (rows + 1) * hw),
                     jnp.float32(1.0 / hw), jnp.float32(0.0))
    out = pl.pallas_call(
        _roi_block_kernel,
        out_shape=jax.ShapeDtypeStruct((Np, c), jnp.float32),
        compiler_params=pltpu.CompilerParams(vmem_limit_bytes=VMEM_LIMIT),
    )(x, pool,
      ws[0].astype(jnp.bfloat16), bs[0].reshape(1, -1).astype(jnp.float32),
      ws[1].astype(jnp.bfloat16), bs[1].reshape(1, -1).astype(jnp.float32),
      ws[2].astype(jnp.bfloat16), bs[2].reshape(1, -1).astype(jnp.float32))
    return out[:n]


# ------------------------------ JAX glue ops --------------------------------

def _im2col(x_nchw, k):
    n, c, h, w = x_nchw.shape
    oh, ow = h - k + 1, w - k + 1
    cols = []
    for di in range(k):
        for dj in range(k):
            cols.append(x_nchw[:, :, di:di + oh, dj:dj + ow])
    patches = jnp.stack(cols, axis=2)           # (n, c, k*k, oh, ow)
    patches = patches.transpose(0, 3, 4, 1, 2)  # (n, oh, ow, c, k*k)
    return patches.reshape(n * oh * ow, c * k * k), oh, ow


def _maxpool2x2_nhwc(x):
    n, h, w, c = x.shape
    h2, w2 = h // 2, w // 2
    x = x[:, :h2 * 2, :w2 * 2, :].reshape(n, h2, 2, w2, 2, c)
    return x.max(axis=(2, 4))


def conv_map(x_nchw, w1, b1, w2, b2):
    """conv5x5 -> maxpool2 -> conv5x5 -> maxpool2 -> avgpool(13x13) -> (N,32).
    The convolutions run as im2col + Pallas matmul."""
    n = x_nchw.shape[0]
    patches, oh, ow = _im2col(x_nchw, 5)
    y = linear(patches, w1, b1).reshape(n, oh, ow, w1.shape[1])
    y = _maxpool2x2_nhwc(y).transpose(0, 3, 1, 2)
    patches2, oh2, ow2 = _im2col(y, 5)
    z = linear(patches2, w2, b2).reshape(n, oh2, ow2, w2.shape[1])
    z = _maxpool2x2_nhwc(z)               # (n, 13, 13, 32)
    return z.mean(axis=(1, 2))            # AvgPool2d((13,13)) + Flatten


def pairing(out2_people, out2_objects, out2_context, spatial_locs,
            pairs_info, object_one_hot):
    """Reproduces ROI.pairing ordering (person-major pairs), vectorized:
    row = [people(1024) | object(1024) | context(1024) | spatial(4)]."""
    pair_blocks, obj_blocks = [], []
    sp = so = sc = 0
    dim = out2_people.shape[1]
    for b, (np_b, no_b) in enumerate(pairs_info):
        npairs = np_b * no_b
        peo = out2_people[sp:sp + np_b]
        obj = out2_objects[so:so + no_b]
        peo_rep = jnp.repeat(peo, no_b, axis=0)
        obj_til = jnp.tile(obj, (np_b, 1))
        ctx_rep = jnp.broadcast_to(out2_context[b][None, :], (npairs, dim))
        sp_blk = spatial_locs[sc:sc + npairs]
        pair_blocks.append(
            jnp.concatenate([peo_rep, obj_til, ctx_rep, sp_blk], axis=1))
        obj_blocks.append(jnp.tile(object_one_hot[so:so + no_b], (np_b, 1)))
        sp += np_b
        so += no_b
        sc += npairs
    return (jnp.concatenate(pair_blocks, axis=0), out2_people, out2_objects,
            jnp.concatenate(obj_blocks, axis=0))


# ----------------------------- parameters ----------------------------------

def init_params(key):
    ks = iter(jax.random.split(key, 128))

    def nrm(shape, scale=0.05):
        return jax.random.normal(next(ks), shape, jnp.float32) * scale

    def lin_p(cin, cout):
        return nrm((cin, cout)), nrm((cout,), 0.01)

    def bottleneck():
        ws, bs = [], []
        for cin, cout in [(1024, 512), (512, 512), (512, 1024)]:
            w = nrm((cin, cout), 0.02)
            gamma = 1.0 + nrm((cout,), 0.01)
            beta = nrm((cout,), 0.01)
            mean = nrm((cout,), 0.01)
            var = 1.0 + jnp.abs(nrm((cout,), 0.01))
            s = gamma * jax.lax.rsqrt(var + 1e-5)
            ws.append(w * s[None, :])      # fold eval-mode BN into conv
            bs.append(beta - mean * s)
        return ws, bs

    p = {}
    p['conv_people'] = bottleneck()
    p['conv_objects'] = bottleneck()
    p['conv_context'] = bottleneck()
    p['lin_peo'] = lin_p(1024, 512)
    p['lin_obj'] = lin_p(1024, 512)
    p['lin_con'] = lin_p(1028, 512)
    p['sp_conv1'] = lin_p(3 * 25, 64)      # Conv2d(3, 64, 5) as im2col matmul
    p['sp_conv2'] = lin_p(64 * 25, 32)     # Conv2d(64, 32, 5)
    p['pose_conv1'] = lin_p(1 * 25, 64)    # Conv2d(1, 64, 5)
    p['pose_conv2'] = lin_p(64 * 25, 32)
    p['spmap_up'] = lin_p(32, 512)
    p['posemap_up'] = lin_p(32, 512)
    p['lin_spmap_tail'] = lin_p(512, NUM_CLASSES)
    p['peo_to_obj_w'] = lin_p(1024, 1024)
    p['obj_to_peo_w'] = lin_p(1024, 1024)
    p['w2v_fc1'] = lin_p(80, 512)
    p['w2v_fc2'] = lin_p(512, 512)
    p['final_obj_to_512'] = lin_p(1024, 512)
    p['lin_dim_down1'] = lin_p(1536, 1024)
    p['lin_dim_down2'] = lin_p(1024, 512)
    p['lin_single_tail'] = lin_p(512, 1)
    p['lin_visual_tail'] = lin_p(512, NUM_CLASSES)
    p['lin_graph_head1'] = lin_p(2048, 1024)
    p['lin_graph_head2'] = lin_p(1024, 512)
    p['lin_graph_tail'] = lin_p(512, NUM_CLASSES)
    # lin_single_head / lin_visual_head / dis layers unused in forward() are
    # intentionally not instantiated.
    return p


# ------------------------------- forward ------------------------------------

def vsgnet_forward(p, out1, rois_people, rois_objects, spatial_locs,
                   union_box, object_one_hot, pose_box, pairs_info):
    # --- visual branches: 1x1-conv bottleneck + residual + avg-pool ---------
    out2_people = roi_bottleneck_pool(rois_people, *p['conv_people'])
    out2_objects = roi_bottleneck_pool(rois_objects, *p['conv_objects'])
    out2_context = roi_bottleneck_pool(out1, *p['conv_context'])

    # --- spatial map branch --------------------------------------------------
    sp_feat = conv_map(union_box, p['sp_conv1'][0], p['sp_conv1'][1],
                       p['sp_conv2'][0], p['sp_conv2'][1])
    out2_union = linear(sp_feat, *p['spmap_up'], act="relu")

    # --- pose branch ---------------------------------------------------------
    pose_feat = conv_map(pose_box[:, None, :, :],
                         p['pose_conv1'][0], p['pose_conv1'][1],
                         p['pose_conv2'][0], p['pose_conv2'][1])
    out2_pose = linear(pose_feat, *p['posemap_up'], act="relu")

    # --- pairing -------------------------------------------------------------
    pairs, people, objects_only, pair_obj_one_out = pairing(
        out2_people, out2_objects, out2_context, spatial_locs, pairs_info,
        object_one_hot)

    # lin_stream_p = lin_peo(pairs_people) * out2_pose   (gate fused in kernel)
    lin_stream_p = linear(pairs[:, 0:1024], *p['lin_peo'], act="relu",
                          mul=out2_pose)
    lin_stream_o = linear(pairs[:, 1024:2048], *p['lin_obj'], act="relu")
    # lin_stream_c = lin_con(pairs_context) * out2_union (gate fused in kernel)
    lin_stream_c = linear(pairs[:, 2048:], *p['lin_con'], act="relu",
                          mul=out2_union)

    # --- stream fusion -------------------------------------------------------
    w2v_obj = linear(linear(pair_obj_one_out, *p['w2v_fc1']),
                     *p['w2v_fc2'], act="relu")
    lin_fix_o = jnp.concatenate([lin_stream_o, w2v_obj], axis=1)
    lin_final_o = linear(lin_fix_o, *p['final_obj_to_512'], act="relu")
    lin_join = jnp.concatenate([lin_stream_p, lin_final_o, lin_stream_c],
                               axis=1)
    lin_join = linear(linear(lin_join, *p['lin_dim_down1']),
                      *p['lin_dim_down2'], act="relu")
    lin_single = linear(lin_join, *p['lin_single_tail'])
    interaction_prob = jax.nn.sigmoid(lin_single)

    # --- graph refinement ----------------------------------------------------
    # Hoist the 1024x1024 linears out of the per-batch loop (one Pallas call
    # each); the tiny adjacency products stay in plain jnp.
    obj_w_all = linear(objects_only, *p['peo_to_obj_w'], act="relu")
    peo_w_all = linear(people, *p['obj_to_peo_w'], act="relu")
    pairs_f = []
    start_p = start_o = start_c = 0
    for (np_b, no_b) in pairs_info:
        peo = people[start_p:start_p + np_b]
        obj = objects_only[start_o:start_o + no_b]
        adj = interaction_prob[start_c:start_c + np_b * no_b].reshape(np_b,
                                                                      no_b)
        peo_r = peo + adj @ obj_w_all[start_o:start_o + no_b]
        obj_r = obj + adj.T @ peo_w_all[start_p:start_p + np_b]
        pairs_f.append(jnp.concatenate(
            [jnp.repeat(peo_r, no_b, axis=0), jnp.tile(obj_r, (np_b, 1))],
            axis=1))
        start_p += np_b
        start_o += no_b
        start_c += np_b * no_b
    pairs_graph = jnp.concatenate(pairs_f, axis=0)

    # --- heads ---------------------------------------------------------------
    lin_visual = linear(lin_join, *p['lin_visual_tail'])
    lin_graph_h1 = linear(pairs_graph, *p['lin_graph_head1'])
    # lin_graph_t = lin_graph_head(pairs_graph) * out2_union (gate fused)
    lin_graph_t = linear(lin_graph_h1, *p['lin_graph_head2'], act="relu",
                         mul=out2_union)
    lin_graph = linear(lin_graph_t, *p['lin_graph_tail'])
    lin_att = linear(out2_union, *p['lin_spmap_tail'])
    return [lin_visual, lin_single, lin_graph, lin_att]


# --------------------------------- main --------------------------------------

if __name__ == "__main__":
    key = jax.random.PRNGKey(0)
    kp, kd = jax.random.split(key)
    params = init_params(kp)

    dks = iter(jax.random.split(kd, 16))
    pairs_info = ((2, 2), (2, 2))                # (num_people, num_objects)
    B = len(pairs_info)
    P = sum(l[0] for l in pairs_info)            # total people
    O = sum(l[1] for l in pairs_info)            # total objects
    NP = sum(l[0] * l[1] for l in pairs_info)    # total pairs

    # Synthetic stand-ins for Conv_pretrain output and ROI.get_pool_loc outputs.
    out1 = jax.random.normal(next(dks), (B, 1024, 16, 16), jnp.float32)
    rois_people = jax.random.normal(next(dks), (P, 1024, POOL, POOL),
                                    jnp.float32)
    rois_objects = jax.random.normal(next(dks), (O, 1024, POOL, POOL),
                                     jnp.float32)
    spatial_locs = jax.random.uniform(next(dks), (NP, 4), jnp.float32)
    union_box = jax.random.uniform(next(dks), (NP, 3, 64, 64), jnp.float32)
    object_one_hot = jax.nn.one_hot(
        jax.random.randint(next(dks), (O,), 0, 80), 80, dtype=jnp.float32)
    pose_box = jax.random.uniform(next(dks), (NP, 64, 64), jnp.float32)

    outs = vsgnet_forward(params, out1, rois_people, rois_objects,
                          spatial_locs, union_box, object_one_hot,
                          pose_box, pairs_info)
    outs = jax.block_until_ready(outs)
    lin_visual, lin_single, lin_graph, lin_att = outs
    assert lin_visual.shape == (NP, NUM_CLASSES)
    assert lin_single.shape == (NP, 1)
    assert lin_graph.shape == (NP, NUM_CLASSES)
    assert lin_att.shape == (NP, NUM_CLASSES)
    assert all(bool(jnp.all(jnp.isfinite(o))) for o in outs)
    print("KERNEL_OK")
</pallas_src>

<mosaic_0001>
module attributes {stable_mosaic.version = 11 : i64} {
  func.func @_roi_block_kernel(%arg0: memref<400x1024xbf16, #tpu.memory_space<vmem>>, %arg1: memref<8x400xf32, #tpu.memory_space<vmem>>, %arg2: memref<1024x512xbf16, #tpu.memory_space<vmem>>, %arg3: memref<1x512xf32, #tpu.memory_space<vmem>>, %arg4: memref<512x512xbf16, #tpu.memory_space<vmem>>, %arg5: memref<1x512xf32, #tpu.memory_space<vmem>>, %arg6: memref<512x1024xbf16, #tpu.memory_space<vmem>>, %arg7: memref<1x1024xf32, #tpu.memory_space<vmem>>, %arg8: memref<8x1024xf32, #tpu.memory_space<vmem>>) attributes {dimension_semantics = [], scalar_prefetch = 0 : i64, scratch_operands = 0 : i64, tpu.core_type = #tpu.core_type<tc>} {
    %c0 = arith.constant 0 : index
    %c0_0 = arith.constant 0 : index
    %0 = vector.load %arg0[%c0, %c0_0] : memref<400x1024xbf16, #tpu.memory_space<vmem>>, vector<400x1024xbf16>
    %c0_1 = arith.constant 0 : index
    %c0_2 = arith.constant 0 : index
    %1 = vector.load %arg2[%c0_1, %c0_2] : memref<1024x512xbf16, #tpu.memory_space<vmem>>, vector<1024x512xbf16>
    %cst = arith.constant dense<0.000000e+00> : vector<400x512xf32>
    %2 = tpu.matmul %0, %1, %cst {dimension_numbers = #tpu.dot_dimension_numbers<[1], [0], [0], [1], [0, 0, 1, 1], [], []>} : vector<400x1024xbf16>, vector<1024x512xbf16>, vector<400x512xf32> -> vector<400x512xf32>
    %c0_3 = arith.constant 0 : index
    %c0_4 = arith.constant 0 : index
    %3 = vector.load %arg3[%c0_3, %c0_4] : memref<1x512xf32, #tpu.memory_space<vmem>>, vector<1x512xf32>
    %4 = vector.broadcast %3 : vector<1x512xf32> to vector<400x512xf32>
    %5 = arith.addf %2, %4 : vector<400x512xf32>
    %6 = arith.truncf %5 : vector<400x512xf32> to vector<400x512xbf16>
    %c0_5 = arith.constant 0 : index
    %c0_6 = arith.constant 0 : index
    %7 = vector.load %arg4[%c0_5, %c0_6] : memref<512x512xbf16, #tpu.memory_space<vmem>>, vector<512x512xbf16>
    %cst_7 = arith.constant dense<0.000000e+00> : vector<400x512xf32>
    %8 = tpu.matmul %6, %7, %cst_7 {dimension_numbers = #tpu.dot_dimension_numbers<[1], [0], [0], [1], [0, 0, 1, 1], [], []>} : vector<400x512xbf16>, vector<512x512xbf16>, vector<400x512xf32> -> vector<400x512xf32>
    %c0_8 = arith.constant 0 : index
    %c0_9 = arith.constant 0 : index
    %9 = vector.load %arg5[%c0_8, %c0_9] : memref<1x512xf32, #tpu.memory_space<vmem>>, vector<1x512xf32>
    %10 = vector.broadcast %9 : vector<1x512xf32> to vector<400x512xf32>
    %11 = arith.addf %8, %10 : vector<400x512xf32>
    %12 = arith.truncf %11 : vector<400x512xf32> to vector<400x512xbf16>
    %c0_10 = arith.constant 0 : index
    %c0_11 = arith.constant 0 : index
    %13 = vector.load %arg6[%c0_10, %c0_11] : memref<512x1024xbf16, #tpu.memory_space<vmem>>, vector<512x1024xbf16>
    %cst_12 = arith.constant dense<0.000000e+00> : vector<400x1024xf32>
    %14 = tpu.matmul %12, %13, %cst_12 {dimension_numbers = #tpu.dot_dimension_numbers<[1], [0], [0], [1], [0, 0, 1, 1], [], []>} : vector<400x512xbf16>, vector<512x1024xbf16>, vector<400x1024xf32> -> vector<400x1024xf32>
    %c0_13 = arith.constant 0 : index
    %c0_14 = arith.constant 0 : index
    %15 = vector.load %arg7[%c0_13, %c0_14] : memref<1x1024xf32, #tpu.memory_space<vmem>>, vector<1x1024xf32>
    %16 = vector.broadcast %15 : vector<1x1024xf32> to vector<400x1024xf32>
    %17 = arith.addf %14, %16 : vector<400x1024xf32>
    %cst_15 = arith.constant 0.000000e+00 : f32
    %18 = vector.broadcast %cst_15 : f32 to vector<400x1024xf32>
    %19 = arith.maximumf %17, %18 : vector<400x1024xf32>
    %20 = arith.extf %0 : vector<400x1024xbf16> to vector<400x1024xf32>
    %21 = arith.addf %19, %20 : vector<400x1024xf32>
    %c0_16 = arith.constant 0 : index
    %c0_17 = arith.constant 0 : index
    %22 = vector.load %arg1[%c0_16, %c0_17] : memref<8x400xf32, #tpu.memory_space<vmem>>, vector<8x400xf32>
    %cst_18 = arith.constant dense<0.000000e+00> : vector<8x1024xf32>
    %23 = tpu.matmul %22, %21, %cst_18 {dimension_numbers = #tpu.dot_dimension_numbers<[1], [0], [0], [1], [0, 0, 1, 1], [], []>} : vector<8x400xf32>, vector<400x1024xf32>, vector<8x1024xf32> -> vector<8x1024xf32>
    %c0_19 = arith.constant 0 : index
    %c0_20 = arith.constant 0 : index
    %24 = vector.load %arg8[%c0_19, %c0_20] : memref<8x1024xf32, #tpu.memory_space<vmem>>, vector<8x1024xf32>
    tpu.vector_store %arg8[%c0_19, %c0_20], %23 {strides = array<i32>} : memref<8x1024xf32, #tpu.memory_space<vmem>>, vector<8x1024xf32>,
    return
  }
}

</mosaic_0001>

<llo_original>
// kernel: tpu_custom_call.1
$region0: #{tpu_custom_call.1}
  #allocation0 [shape = 'u32[]', space=smem, size = 0x4, offset = 0x4, fixed_abs, tag = 'smem constant byte address 0x4 - core index']
  #allocation1 [shape = 'u32[144,128]{1,0:T(1,128)}', space=vmem, size = 0x12000, scoped, tag = 'internal scratch']
  %s0 = inlined_call_operand.hbm [shape: bf16[400,1024], index: 0, kind: input, shape index: {}]
  %s1 = inlined_call_operand.hbm [shape: f32[8,400], index: 1, kind: input, shape index: {}]
  %s2 = inlined_call_operand.hbm [shape: bf16[1024,512], index: 2, kind: input, shape index: {}]
  %s3 = inlined_call_operand.vmem [shape: f32[1,512], index: 3, kind: input, shape index: {}]
  %s4 = inlined_call_operand.hbm [shape: bf16[512,512], index: 4, kind: input, shape index: {}]
  %s5 = inlined_call_operand.hbm [shape: f32[1,512], index: 5, kind: input, shape index: {}]
  %s6 = inlined_call_operand.hbm [shape: bf16[512,1024], index: 6, kind: input, shape index: {}]
  %s7 = inlined_call_operand.vmem [shape: f32[1,1024], index: 7, kind: input, shape index: {}]
  %s8 = inlined_call_operand.hbm [shape: f32[8,1024], index: 8, kind: output, shape index: {}]
  %s9 = sld [smem:[#allocation0]]
  $region66: #{tpu_custom_call.1} parent=0
    _
  %s11 = ssub.s32 1, %s9
  %s12 = scalar_select 0, %s11, %s9
  $region1: #{tpu_custom_call.1} parent=0
    #allocation2 [shape = 'u8[819200]{0}', space=vmem, size = 0xc8000, scoped, tag = 'input window, operand 0, single buffered']
    #allocation3 [shape = 's32[1]{0}', space=sflag, size = 0x4, scoped, tag = 'scoped memory for tpu_custom_call.1']
    #allocation4 [shape = 's32[1]{0}', space=sflag, size = 0x4, scoped, tag = 'scoped memory for tpu_custom_call.1']
    #allocation5 [shape = 'u8[16384]{0}', space=vmem, size = 0x4000, scoped, tag = 'input window, operand 1, single buffered']
    #allocation6 [shape = 's32[1]{0}', space=sflag, size = 0x4, scoped, tag = 'scoped memory for tpu_custom_call.1']
    #allocation7 [shape = 'u8[1048576]{0}', space=vmem, size = 0x100000, scoped, tag = 'input window, operand 2, single buffered']
    #allocation8 [shape = 'u8[524288]{0}', space=vmem, size = 0x80000, scoped, tag = 'input window, operand 4, single buffered']
    #allocation9 [shape = 's32[1]{0}', space=sflag, size = 0x4, scoped, tag = 'scoped memory for tpu_custom_call.1']
    #allocation10 [shape = 'u8[2048]{0}', space=vmem, size = 0x800, scoped, tag = 'input window, operand 5, single buffered']
    #allocation11 [shape = 'u8[1048576]{0}', space=vmem, size = 0x100000, scoped, tag = 'input window, operand 6, single buffered']
    #allocation12 [shape = 's32[1]{0}', space=sflag, size = 0x4, scoped, tag = 'scoped memory for tpu_custom_call.1']
    #allocation13 [shape = 'u8[32768]{0}', space=vmem, size = 0x8000, scoped, tag = 'output window, operand 0, single buffered']
    %13 = vsyncpa [#allocation3], 0
    %14 = vsyncpa [#allocation6], 0
    %15 = vsyncpa [#allocation9], 0
    %16 = vsyncpa [#allocation12], 0
    %17 = vsyncpa [#allocation4], 0
    // Predicated region
    $region2: #{tpu_custom_call.1} parent=1 // pred_check
      _
    $region3: #{tpu_custom_call.1} parent=1 // pred_check_branch
      %19 = sbr.rel (0) target = $region5
    $region4: #{tpu_custom_call.1} parent=1 // pred_region
      %s21 = ssub.s32 25600, 25600
      %22 = vsyncadd [#allocation3], %s21
      %s23 = sshll.u32 [#allocation2], 4
      %s24 = int_to_ptr.vmem [resolvable:$true] %s23
      %29 = dma.hbm_to_vmem [thread:$0]  %s0, 25600, %s24, [#allocation3], 512, 512, 32
    $region5: #{tpu_custom_call.1} parent=1 // pred_fallthru
      _
    // Predicated region
    $region6: #{tpu_custom_call.1} parent=1 // pred_check
      _
    $region7: #{tpu_custom_call.1} parent=1 // pred_check_branch
      %31 = sbr.rel (0) target = $region9
    $region8: #{tpu_custom_call.1} parent=1 // pred_region
      %s33 = ssub.s32 512, 512
      %34 = vsyncadd [#allocation6], %s33
      %s36 = sshll.u32 [#allocation5], 4
      %s37 = int_to_ptr.vmem [resolvable:$true] %s36
      %39 = dma.hbm_to_vmem [thread:$0]  %s1, 512, %s37, [#allocation6]
    $region9: #{tpu_custom_call.1} parent=1 // pred_fallthru
      _
    // Predicated region
    $region10: #{tpu_custom_call.1} parent=1 // pred_check
      _
    $region11: #{tpu_custom_call.1} parent=1 // pred_check_branch
      %41 = sbr.rel (0) target = $region13
    $region12: #{tpu_custom_call.1} parent=1 // pred_region
      %s43 = ssub.s32 32768, 32768
      %44 = vsyncadd [#allocation6], %s43
      %s45 = sshll.u32 [#allocation7], 4
      %s46 = int_to_ptr.vmem [resolvable:$true] %s45
      %51 = dma.hbm_to_vmem [thread:$0]  %s2, 32768, %s46, [#allocation6], 256, 256, 16
    $region13: #{tpu_custom_call.1} parent=1 // pred_fallthru
      _
    // Predicated region
    $region14: #{tpu_custom_call.1} parent=1 // pred_check
      _
    $region15: #{tpu_custom_call.1} parent=1 // pred_check_branch
      %53 = sbr.rel (0) target = $region17
    $region16: #{tpu_custom_call.1} parent=1 // pred_region
      _
    $region17: #{tpu_custom_call.1} parent=1 // pred_fallthru
      _
    // Predicated region
    $region18: #{tpu_custom_call.1} parent=1 // pred_check
      _
    $region19: #{tpu_custom_call.1} parent=1 // pred_check_branch
      %55 = sbr.rel (0) target = $region21
    $region20: #{tpu_custom_call.1} parent=1 // pred_region
      %s57 = ssub.s32 16384, 16384
      %58 = vsyncadd [#allocation9], %s57
      %s59 = sshll.u32 [#allocation8], 4
      %s60 = int_to_ptr.vmem [resolvable:$true] %s59
      %65 = dma.hbm_to_vmem [thread:$0]  %s4, 16384, %s60, [#allocation9], 256, 256, 16
    $region21: #{tpu_custom_call.1} parent=1 // pred_fallthru
      _
    // Predicated region
    $region22: #{tpu_custom_call.1} parent=1 // pred_check
      _
    $region23: #{tpu_custom_call.1} parent=1 // pred_check_branch
      %67 = sbr.rel (0) target = $region25
    $region24: #{tpu_custom_call.1} parent=1 // pred_region
      %s69 = ssub.s32 64, 64
      %70 = vsyncadd [#allocation9], %s69
      %s72 = sshll.u32 [#allocation10], 4
      %s73 = int_to_ptr.vmem [resolvable:$true] %s72
      %75 = dma.hbm_to_vmem [thread:$0]  %s5, 64, %s73, [#allocation9]
    $region25: #{tpu_custom_call.1} parent=1 // pred_fallthru
      _
    // Predicated region
    $region26: #{tpu_custom_call.1} parent=1 // pred_check
      _
    $region27: #{tpu_custom_call.1} parent=1 // pred_check_branch
      %77 = sbr.rel (0) target = $region29
    $region28: #{tpu_custom_call.1} parent=1 // pred_region
      %s79 = ssub.s32 32768, 32768
      %80 = vsyncadd [#allocation12], %s79
      %s81 = sshll.u32 [#allocation11], 4
      %s82 = int_to_ptr.vmem [resolvable:$true] %s81
      %87 = dma.hbm_to_vmem [thread:$0]  %s6, 32768, %s82, [#allocation12], 512, 512, 32
    $region29: #{tpu_custom_call.1} parent=1 // pred_fallthru
      _
    // Predicated region
    $region30: #{tpu_custom_call.1} parent=1 // pred_check
      _
    $region31: #{tpu_custom_call.1} parent=1 // pred_check_branch
      %89 = sbr.rel (0) target = $region33
    $region32: #{tpu_custom_call.1} parent=1 // pred_region
      _
    $region33: #{tpu_custom_call.1} parent=1 // pred_fallthru
      _
    // Predicated region
    $region34: #{tpu_custom_call.1} parent=1 // pred_check
      _
    $region35: #{tpu_custom_call.1} parent=1 // pred_check_branch
      %91 = sbr.rel (0) target = $region37
    $region36: #{tpu_custom_call.1} parent=1 // pred_region
      %92 = dma.done [#allocation3], 25600
    $region37: #{tpu_custom_call.1} parent=1 // pred_fallthru
      _
    // Predicated region
    $region38: #{tpu_custom_call.1} parent=1 // pred_check
      _
    $region39: #{tpu_custom_call.1} parent=1 // pred_check_branch
      %94 = sbr.rel (0) target = $region41
    $region40: #{tpu_custom_call.1} parent=1 // pred_region
      %95 = dma.done [#allocation6], 512
    $region41: #{tpu_custom_call.1} parent=1 // pred_fallthru
      _
    // Predicated region
    $region42: #{tpu_custom_call.1} parent=1 // pred_check
      _
    $region43: #{tpu_custom_call.1} parent=1 // pred_check_branch
      %97 = sbr.rel (0) target = $region45
    $region44: #{tpu_custom_call.1} parent=1 // pred_region
      %98 = dma.done [#allocation6], 32768
    $region45: #{tpu_custom_call.1} parent=1 // pred_fallthru
      _
    // Predicated region
    $region46: #{tpu_custom_call.1} parent=1 // pred_check
      _
    $region47: #{tpu_custom_call.1} parent=1 // pred_check_branch
      %100 = sbr.rel (0) target = $region49
    $region48: #{tpu_custom_call.1} parent=1 // pred_region
      %101 = dma.done [#allocation9], 16384
    $region49: #{tpu_custom_call.1} parent=1 // pred_fallthru
      _
    // Predicated region
    $region50: #{tpu_custom_call.1} parent=1 // pred_check
      _
    $region51: #{tpu_custom_call.1} parent=1 // pred_check_branch
      %103 = sbr.rel (0) target = $region53
    $region52: #{tpu_custom_call.1} parent=1 // pred_region
      %104 = dma.done [#allocation9], 64
    $region53: #{tpu_custom_call.1} parent=1 // pred_fallthru
      _
    // Predicated region
    $region54: #{tpu_custom_call.1} parent=1 // pred_check
      _
    $region55: #{tpu_custom_call.1} parent=1 // pred_check_branch
      %106 = sbr.rel (0) target = $region57
    $region56: #{tpu_custom_call.1} parent=1 // pred_region
      %107 = dma.done [#allocation12], 32768
    $region57: #{tpu_custom_call.1} parent=1 // pred_fallthru
      _
    %v108 = vld [vmem:[#allocation2] sm:$0xff]
    %v109 = vld [vmem:[#allocation2 + $0x8] sm:$0xff]
    %v110 = vld [vmem:[#allocation2 + $0x10] sm:$0xff]
    %v111 = vld [vmem:[#allocation2 + $0x18] sm:$0xff]
    %v112 = vld [vmem:[#allocation2 + $0x20] sm:$0xff]
    %v113 = vld [vmem:[#allocation2 + $0x28] sm:$0xff]
    %v114 = vld [vmem:[#allocation2 + $0x30] sm:$0xff]
    %v115 = vld [vmem:[#allocation2 + $0x38] sm:$0xff]
    %v116 = vld [vmem:[#allocation2 + $0x40] sm:$0xff]
    %v117 = vld [vmem:[#allocation2 + $0x48] sm:$0xff]
    %v118 = vld [vmem:[#allocation2 + $0x50] sm:$0xff]
    %v119 = vld [vmem:[#allocation2 + $0x58] sm:$0xff]
    %v120 = vld [vmem:[#allocation2 + $0x60] sm:$0xff]
    %v121 = vld [vmem:[#allocation2 + $0x68] sm:$0xff]
    %v122 = vld [vmem:[#allocation2 + $0x70] sm:$0xff]
    %v123 = vld [vmem:[#allocation2 + $0x78] sm:$0xff]
    %v124 = vld [vmem:[#allocation2 + $0x80] sm:$0xff]
    %v125 = vld [vmem:[#allocation2 + $0x88] sm:$0xff]
    %v126 = vld [vmem:[#allocation2 + $0x90] sm:$0xff]
    %v127 = vld [vmem:[#allocation2 + $0x98] sm:$0xff]
    %v128 = vld [vmem:[#allocation2 + $0xa0] sm:$0xff]
    %v129 = vld [vmem:[#allocation2 + $0xa8] sm:$0xff]
    %v130 = vld [vmem:[#allocation2 + $0xb0] sm:$0xff]
    %v131 = vld [vmem:[#allocation2 + $0xb8] sm:$0xff]
    %v132 = vld [vmem:[#allocation2 + $0xc0] sm:$0xff]
    %v133 = vld [vmem:[#allocation2 + $0xc8] sm:$0xff]
    %v134 = vld [vmem:[#allocation2 + $0xd0] sm:$0xff]
    %v135 = vld [vmem:[#allocation2 + $0xd8] sm:$0xff]
    %v136 = vld [vmem:[#allocation2 + $0xe0] sm:$0xff]
    %v137 = vld [vmem:[#allocation2 + $0xe8] sm:$0xff]
    %v138 = vld [vmem:[#allocation2 + $0xf0] sm:$0xff]
    %v139 = vld [vmem:[#allocation2 + $0xf8] sm:$0xff]
    %v140 = vld [vmem:[#allocation2 + $0x100] sm:$0xff]
    %v141 = vld [vmem:[#allocation2 + $0x108] sm:$0xff]
    %v142 = vld [vmem:[#allocation2 + $0x110] sm:$0xff]
    %v143 = vld [vmem:[#allocation2 + $0x118] sm:$0xff]
    %v144 = vld [vmem:[#allocation2 + $0x120] sm:$0xff]
    %v145 = vld [vmem:[#allocation2 + $0x128] sm:$0xff]
    %v146 = vld [vmem:[#allocation2 + $0x130] sm:$0xff]
    %v147 = vld [vmem:[#allocation2 + $0x138] sm:$0xff]
    %v148 = vld [vmem:[#allocation2 + $0x140] sm:$0xff]
    %v149 = vld [vmem:[#allocation2 + $0x148] sm:$0xff]
    %v150 = vld [vmem:[#allocation2 + $0x150] sm:$0xff]
    %v151 = vld [vmem:[#allocation2 + $0x158] sm:$0xff]
    %v152 = vld [vmem:[#allocation2 + $0x160] sm:$0xff]
    %v153 = vld [vmem:[#allocation2 + $0x168] sm:$0xff]
    %v154 = vld [vmem:[#allocation2 + $0x170] sm:$0xff]
    %v155 = vld [vmem:[#allocation2 + $0x178] sm:$0xff]
    %v156 = vld [vmem:[#allocation2 + $0x180] sm:$0xff]
    %v157 = vld [vmem:[#allocation2 + $0x188] sm:$0xff]
    %v158 = vld [vmem:[#allocation2 + $0x190] sm:$0xff]
    %v159 = vld [vmem:[#allocation2 + $0x198] sm:$0xff]
    %v160 = vld [vmem:[#allocation2 + $0x1a0] sm:$0xff]
    %v161 = vld [vmem:[#allocation2 + $0x1a8] sm:$0xff]
    %v162 = vld [vmem:[#allocation2 + $0x1b0] sm:$0xff]
    %v163 = vld [vmem:[#allocation2 + $0x1b8] sm:$0xff]
    %v164 = vld [vmem:[#allocation2 + $0x1c0] sm:$0xff]
    %v165 = vld [vmem:[#allocation2 + $0x1c8] sm:$0xff]
    %v166 = vld [vmem:[#allocation2 + $0x1d0] sm:$0xff]
    %v167 = vld [vmem:[#allocation2 + $0x1d8] sm:$0xff]
    %v168 = vld [vmem:[#allocation2 + $0x1e0] sm:$0xff]
    %v169 = vld [vmem:[#allocation2 + $0x1e8] sm:$0xff]
    %v170 = vld [vmem:[#allocation2 + $0x1f0] sm:$0xff]
    %v171 = vld [vmem:[#allocation2 + $0x1f8] sm:$0xff]
    %v172 = vld [vmem:[#allocation2 + $0x200] sm:$0xff]
    %v173 = vld [vmem:[#allocation2 + $0x208] sm:$0xff]
    %v174 = vld [vmem:[#allocation2 + $0x210] sm:$0xff]
    %v175 = vld [vmem:[#allocation2 + $0x218] sm:$0xff]
    %v176 = vld [vmem:[#allocation2 + $0x220] sm:$0xff]
    %v177 = vld [vmem:[#allocation2 + $0x228] sm:$0xff]
    %v178 = vld [vmem:[#allocation2 + $0x230] sm:$0xff]
    %v179 = vld [vmem:[#allocation2 + $0x238] sm:$0xff]
    %v180 = vld [vmem:[#allocation2 + $0x240] sm:$0xff]
    %v181 = vld [vmem:[#allocation2 + $0x248] sm:$0xff]
    %v182 = vld [vmem:[#allocation2 + $0x250] sm:$0xff]
    %v183 = vld [vmem:[#allocation2 + $0x258] sm:$0xff]
    %v184 = vld [vmem:[#allocation2 + $0x260] sm:$0xff]
    %v185 = vld [vmem:[#allocation2 + $0x268] sm:$0xff]
    %v186 = vld [vmem:[#allocation2 + $0x270] sm:$0xff]
    %v187 = vld [vmem:[#allocation2 + $0x278] sm:$0xff]
    %v188 = vld [vmem:[#allocation2 + $0x280] sm:$0xff]
    %v189 = vld [vmem:[#allocation2 + $0x288] sm:$0xff]
    %v190 = vld [vmem:[#allocation2 + $0x290] sm:$0xff]
    %v191 = vld [vmem:[#allocation2 + $0x298] sm:$0xff]
    %v192 = vld [vmem:[#allocation2 + $0x2a0] sm:$0xff]
    %v193 = vld [vmem:[#allocation2 + $0x2a8] sm:$0xff]
    %v194 = vld [vmem:[#allocation2 + $0x2b0] sm:$0xff]
    %v195 = vld [vmem:[#allocation2 + $0x2b8] sm:$0xff]
    %v196 = vld [vmem:[#allocation2 + $0x2c0] sm:$0xff]
    %v197 = vld [vmem:[#allocation2 + $0x2c8] sm:$0xff]
    %v198 = vld [vmem:[#allocation2 + $0x2d0] sm:$0xff]
    %v199 = vld [vmem:[#allocation2 + $0x2d8] sm:$0xff]
    %v200 = vld [vmem:[#allocation2 + $0x2e0] sm:$0xff]
    %v201 = vld [vmem:[#allocation2 + $0x2e8] sm:$0xff]
    %v202 = vld [vmem:[#allocation2 + $0x2f0] sm:$0xff]
    %v203 = vld [vmem:[#allocation2 + $0x2f8] sm:$0xff]
    %v204 = vld [vmem:[#allocation2 + $0x300] sm:$0xff]
    %v205 = vld [vmem:[#allocation2 + $0x308] sm:$0xff]
    %v206 = vld [vmem:[#allocation2 + $0x310] sm:$0xff]
    %v207 = vld [vmem:[#allocation2 + $0x318] sm:$0xff]
    %v208 = vld [vmem:[#allocation2 + $0x320] sm:$0xff]
    %v209 = vld [vmem:[#allocation2 + $0x328] sm:$0xff]
    %v210 = vld [vmem:[#allocation2 + $0x330] sm:$0xff]
    %v211 = vld [vmem:[#allocation2 + $0x338] sm:$0xff]
    %v212 = vld [vmem:[#allocation2 + $0x340] sm:$0xff]
    %v213 = vld [vmem:[#allocation2 + $0x348] sm:$0xff]
    %v214 = vld [vmem:[#allocation2 + $0x350] sm:$0xff]
    %v215 = vld [vmem:[#allocation2 + $0x358] sm:$0xff]
    %v216 = vld [vmem:[#allocation2 + $0x360] sm:$0xff]
    %v217 = vld [vmem:[#allocation2 + $0x368] sm:$0xff]
    %v218 = vld [vmem:[#allocation2 + $0x370] sm:$0xff]
    %v219 = vld [vmem:[#allocation2 + $0x378] sm:$0xff]
    %v220 = vld [vmem:[#allocation2 + $0x380] sm:$0xff]
    %v221 = vld [vmem:[#allocation2 + $0x388] sm:$0xff]
    %v222 = vld [vmem:[#allocation2 + $0x390] sm:$0xff]
    %v223 = vld [vmem:[#allocation2 + $0x398] sm:$0xff]
    %v224 = vld [vmem:[#allocation2 + $0x3a0] sm:$0xff]
    %v225 = vld [vmem:[#allocation2 + $0x3a8] sm:$0xff]
    %v226 = vld [vmem:[#allocation2 + $0x3b0] sm:$0xff]
    %v227 = vld [vmem:[#allocation2 + $0x3b8] sm:$0xff]
    %v228 = vld [vmem:[#allocation2 + $0x3c0] sm:$0xff]
    %v229 = vld [vmem:[#allocation2 + $0x3c8] sm:$0xff]
    %v230 = vld [vmem:[#allocation2 + $0x3d0] sm:$0xff]
    %v231 = vld [vmem:[#allocation2 + $0x3d8] sm:$0xff]
    %v232 = vld [vmem:[#allocation2 + $0x3e0] sm:$0xff]
    %v233 = vld [vmem:[#allocation2 + $0x3e8] sm:$0xff]
    %v234 = vld [vmem:[#allocation2 + $0x3f0] sm:$0xff]
    %v235 = vld [vmem:[#allocation2 + $0x3f8] sm:$0xff]
    %v236 = vld [vmem:[#allocation2 + $0x400] sm:$0xff]
    %v237 = vld [vmem:[#allocation2 + $0x408] sm:$0xff]
    %v238 = vld [vmem:[#allocation2 + $0x410] sm:$0xff]
    %v239 = vld [vmem:[#allocation2 + $0x418] sm:$0xff]
    %v240 = vld [vmem:[#allocation2 + $0x420] sm:$0xff]
    %v241 = vld [vmem:[#allocation2 + $0x428] sm:$0xff]
    %v242 = vld [vmem:[#allocation2 + $0x430] sm:$0xff]
    %v243 = vld [vmem:[#allocation2 + $0x438] sm:$0xff]
    %v244 = vld [vmem:[#allocation2 + $0x440] sm:$0xff]
    %v245 = vld [vmem:[#allocation2 + $0x448] sm:$0xff]
    %v246 = vld [vmem:[#allocation2 + $0x450] sm:$0xff]
    %v247 = vld [vmem:[#allocation2 + $0x458] sm:$0xff]
    %v248 = vld [vmem:[#allocation2 + $0x460] sm:$0xff]
    %v249 = vld [vmem:[#allocation2 + $0x468] sm:$0xff]
    %v250 = vld [vmem:[#allocation2 + $0x470] sm:$0xff]
    %v251 = vld [vmem:[#allocation2 + $0x478] sm:$0xff]
    %v252 = vld [vmem:[#allocation2 + $0x480] sm:$0xff]
    %v253 = vld [vmem:[#allocation2 + $0x488] sm:$0xff]
    %v254 = vld [vmem:[#allocation2 + $0x490] sm:$0xff]
    %v255 = vld [vmem:[#allocation2 + $0x498] sm:$0xff]
    %v256 = vld [vmem:[#allocation2 + $0x4a0] sm:$0xff]
    %v257 = vld [vmem:[#allocation2 + $0x4a8] sm:$0xff]
    %v258 = vld [vmem:[#allocation2 + $0x4b0] sm:$0xff]
    %v259 = vld [vmem:[#allocation2 + $0x4b8] sm:$0xff]
    %v260 = vld [vmem:[#allocation2 + $0x4c0] sm:$0xff]
    %v261 = vld [vmem:[#allocation2 + $0x4c8] sm:$0xff]
    %v262 = vld [vmem:[#allocation2 + $0x4d0] sm:$0xff]
    %v263 = vld [vmem:[#allocation2 + $0x4d8] sm:$0xff]
    %v264 = vld [vmem:[#allocation2 + $0x4e0] sm:$0xff]
    %v265 = vld [vmem:[#allocation2 + $0x4e8] sm:$0xff]
    %v266 = vld [vmem:[#allocation2 + $0x4f0] sm:$0xff]
    %v267 = vld [vmem:[#allocation2 + $0x4f8] sm:$0xff]
    %v268 = vld [vmem:[#allocation2 + $0x500] sm:$0xff]
    %v269 = vld [vmem:[#allocation2 + $0x508] sm:$0xff]
    %v270 = vld [vmem:[#allocation2 + $0x510] sm:$0xff]
    %v271 = vld [vmem:[#allocation2 + $0x518] sm:$0xff]
    %v272 = vld [vmem:[#allocation2 + $0x520] sm:$0xff]
    %v273 = vld [vmem:[#allocation2 + $0x528] sm:$0xff]
    %v274 = vld [vmem:[#allocation2 + $0x530] sm:$0xff]
    %v275 = vld [vmem:[#allocation2 + $0x538] sm:$0xff]
    %v276 = vld [vmem:[#allocation2 + $0x540] sm:$0xff]
    %v277 = vld [vmem:[#allocation2 + $0x548] sm:$0xff]
    %v278 = vld [vmem:[#allocation2 + $0x550] sm:$0xff]
    %v279 = vld [vmem:[#allocation2 + $0x558] sm:$0xff]
    %v280 = vld [vmem:[#allocation2 + $0x560] sm:$0xff]
    %v281 = vld [vmem:[#allocation2 + $0x568] sm:$0xff]
    %v282 = vld [vmem:[#allocation2 + $0x570] sm:$0xff]
    %v283 = vld [vmem:[#allocation2 + $0x578] sm:$0xff]
    %v284 = vld [vmem:[#allocation2 + $0x580] sm:$0xff]
    %v285 = vld [vmem:[#allocation2 + $0x588] sm:$0xff]
    %v286 = vld [vmem:[#allocation2 + $0x590] sm:$0xff]
    %v287 = vld [vmem:[#allocation2 + $0x598] sm:$0xff]
    %v288 = vld [vmem:[#allocation2 + $0x5a0] sm:$0xff]
    %v289 = vld [vmem:[#allocation2 + $0x5a8] sm:$0xff]
    %v290 = vld [vmem:[#allocation2 + $0x5b0] sm:$0xff]
    %v291 = vld [vmem:[#allocation2 + $0x5b8] sm:$0xff]
    %v292 = vld [vmem:[#allocation2 + $0x5c0] sm:$0xff]
    %v293 = vld [vmem:[#allocation2 + $0x5c8] sm:$0xff]
    %v294 = vld [vmem:[#allocation2 + $0x5d0] sm:$0xff]
    %v295 = vld [vmem:[#allocation2 + $0x5d8] sm:$0xff]
    %v296 = vld [vmem:[#allocation2 + $0x5e0] sm:$0xff]
    %v297 = vld [vmem:[#allocation2 + $0x5e8] sm:$0xff]
    %v298 = vld [vmem:[#allocation2 + $0x5f0] sm:$0xff]
    %v299 = vld [vmem:[#allocation2 + $0x5f8] sm:$0xff]
    %v300 = vld [vmem:[#allocation2 + $0x600] sm:$0xff]
    %v301 = vld [vmem:[#allocation2 + $0x608] sm:$0xff]
    %v302 = vld [vmem:[#allocation2 + $0x610] sm:$0xff]
    %v303 = vld [vmem:[#allocation2 + $0x618] sm:$0xff]
    %v304 = vld [vmem:[#allocation2 + $0x620] sm:$0xff]
    %v305 = vld [vmem:[#allocation2 + $0x628] sm:$0xff]
    %v306 = vld [vmem:[#allocation2 + $0x630] sm:$0xff]
    %v307 = vld [vmem:[#allocation2 + $0x638] sm:$0xff]
    %v308 = vld [vmem:[#allocation7] sm:$0xff]
    %v309 = vld [vmem:[#allocation7 + $0x8] sm:$0xff]
    %v310 = vld [vmem:[#allocation7 + $0x10] sm:$0xff]
    %v311 = vld [vmem:[#allocation7 + $0x18] sm:$0xff]
    %v312 = vld [vmem:[#allocation7 + $0x20] sm:$0xff]
    %v313 = vld [vmem:[#allocation7 + $0x28] sm:$0xff]
    %v314 = vld [vmem:[#allocation7 + $0x30] sm:$0xff]
    %v315 = vld [vmem:[#allocation7 + $0x38] sm:$0xff]
    %v316 = vld [vmem:[#allocation7 + $0x40] sm:$0xff]
    %v317 = vld [vmem:[#allocation7 + $0x48] sm:$0xff]
    %v318 = vld [vmem:[#allocation7 + $0x50] sm:$0xff]
    %v319 = vld [vmem:[#allocation7 + $0x58] sm:$0xff]
    %v320 = vld [vmem:[#allocation7 + $0x60] sm:$0xff]
    %v321 = vld [vmem:[#allocation7 + $0x68] sm:$0xff]
    %v322 = vld [vmem:[#allocation7 + $0x70] sm:$0xff]
    %v323 = vld [vmem:[#allocation7 + $0x78] sm:$0xff]
    %v324 = vld [vmem:[#allocation7 + $0x80] sm:$0xff]
    %v325 = vld [vmem:[#allocation7 + $0x88] sm:$0xff]
    %v326 = vld [vmem:[#allocation7 + $0x90] sm:$0xff]
    %v327 = vld [vmem:[#allocation7 + $0x98] sm:$0xff]
    %v328 = vld [vmem:[#allocation7 + $0xa0] sm:$0xff]
    %v329 = vld [vmem:[#allocation7 + $0xa8] sm:$0xff]
    %v330 = vld [vmem:[#allocation7 + $0xb0] sm:$0xff]
    %v331 = vld [vmem:[#allocation7 + $0xb8] sm:$0xff]
    %v332 = vld [vmem:[#allocation7 + $0xc0] sm:$0xff]
    %v333 = vld [vmem:[#allocation7 + $0xc8] sm:$0xff]
    %v334 = vld [vmem:[#allocation7 + $0xd0] sm:$0xff]
    %v335 = vld [vmem:[#allocation7 + $0xd8] sm:$0xff]
    %v336 = vld [vmem:[#allocation7 + $0xe0] sm:$0xff]
    %v337 = vld [vmem:[#allocation7 + $0xe8] sm:$0xff]
    %v338 = vld [vmem:[#allocation7 + $0xf0] sm:$0xff]
    %v339 = vld [vmem:[#allocation7 + $0xf8] sm:$0xff]
    %v340 = vld [vmem:[#allocation7 + $0x100] sm:$0xff]
    %v341 = vld [vmem:[#allocation7 + $0x108] sm:$0xff]
    %v342 = vld [vmem:[#allocation7 + $0x110] sm:$0xff]
    %v343 = vld [vmem:[#allocation7 + $0x118] sm:$0xff]
    %v344 = vld [vmem:[#allocation7 + $0x120] sm:$0xff]
    %v345 = vld [vmem:[#allocation7 + $0x128] sm:$0xff]
    %v346 = vld [vmem:[#allocation7 + $0x130] sm:$0xff]
    %v347 = vld [vmem:[#allocation7 + $0x138] sm:$0xff]
    %v348 = vld [vmem:[#allocation7 + $0x140] sm:$0xff]
    %v349 = vld [vmem:[#allocation7 + $0x148] sm:$0xff]
    %v350 = vld [vmem:[#allocation7 + $0x150] sm:$0xff]
    %v351 = vld [vmem:[#allocation7 + $0x158] sm:$0xff]
    %v352 = vld [vmem:[#allocation7 + $0x160] sm:$0xff]
    %v353 = vld [vmem:[#allocation7 + $0x168] sm:$0xff]
    %v354 = vld [vmem:[#allocation7 + $0x170] sm:$0xff]
    %v355 = vld [vmem:[#allocation7 + $0x178] sm:$0xff]
    %v356 = vld [vmem:[#allocation7 + $0x180] sm:$0xff]
    %v357 = vld [vmem:[#allocation7 + $0x188] sm:$0xff]
    %v358 = vld [vmem:[#allocation7 + $0x190] sm:$0xff]
    %v359 = vld [vmem:[#allocation7 + $0x198] sm:$0xff]
    %v360 = vld [vmem:[#allocation7 + $0x1a0] sm:$0xff]
    %v361 = vld [vmem:[#allocation7 + $0x1a8] sm:$0xff]
    %v362 = vld [vmem:[#allocation7 + $0x1b0] sm:$0xff]
    %v363 = vld [vmem:[#allocation7 + $0x1b8] sm:$0xff]
    %v364 = vld [vmem:[#allocation7 + $0x1c0] sm:$0xff]
    %v365 = vld [vmem:[#allocation7 + $0x1c8] sm:$0xff]
    %v366 = vld [vmem:[#allocation7 + $0x1d0] sm:$0xff]
    %v367 = vld [vmem:[#allocation7 + $0x1d8] sm:$0xff]
    %v368 = vld [vmem:[#allocation7 + $0x1e0] sm:$0xff]
    %v369 = vld [vmem:[#allocation7 + $0x1e8] sm:$0xff]
    %v370 = vld [vmem:[#allocation7 + $0x1f0] sm:$0xff]
    %v371 = vld [vmem:[#allocation7 + $0x1f8] sm:$0xff]
    %v372 = vld [vmem:[#allocation7 + $0x200] sm:$0xff]
    %v373 = vld [vmem:[#allocation7 + $0x208] sm:$0xff]
    %v374 = vld [vmem:[#allocation7 + $0x210] sm:$0xff]
    %v375 = vld [vmem:[#allocation7 + $0x218] sm:$0xff]
    %v376 = vld [vmem:[#allocation7 + $0x220] sm:$0xff]
    %v377 = vld [vmem:[#allocation7 + $0x228] sm:$0xff]
    %v378 = vld [vmem:[#allocation7 + $0x230] sm:$0xff]
    %v379 = vld [vmem:[#allocation7 + $0x238] sm:$0xff]
    %v380 = vld [vmem:[#allocation7 + $0x240] sm:$0xff]
    %v381 = vld [vmem:[#allocation7 + $0x248] sm:$0xff]
    %v382 = vld [vmem:[#allocation7 + $0x250] sm:$0xff]
    %v383 = vld [vmem:[#allocation7 + $0x258] sm:$0xff]
    %v384 = vld [vmem:[#allocation7 + $0x260] sm:$0xff]
    %v385 = vld [vmem:[#allocation7 + $0x268] sm:$0xff]
    %v386 = vld [vmem:[#allocation7 + $0x270] sm:$0xff]
    %v387 = vld [vmem:[#allocation7 + $0x278] sm:$0xff]
    %v388 = vld [vmem:[#allocation7 + $0x280] sm:$0xff]
    %v389 = vld [vmem:[#allocation7 + $0x288] sm:$0xff]
    %v390 = vld [vmem:[#allocation7 + $0x290] sm:$0xff]
    %v391 = vld [vmem:[#allocation7 + $0x298] sm:$0xff]
    %v392 = vld [vmem:[#allocation7 + $0x2a0] sm:$0xff]
    %v393 = vld [vmem:[#allocation7 + $0x2a8] sm:$0xff]
    %v394 = vld [vmem:[#allocation7 + $0x2b0] sm:$0xff]
    %v395 = vld [vmem:[#allocation7 + $0x2b8] sm:$0xff]
    %v396 = vld [vmem:[#allocation7 + $0x2c0] sm:$0xff]
    %v397 = vld [vmem:[#allocation7 + $0x2c8] sm:$0xff]
    %v398 = vld [vmem:[#allocation7 + $0x2d0] sm:$0xff]
    %v399 = vld [vmem:[#allocation7 + $0x2d8] sm:$0xff]
    %v400 = vld [vmem:[#allocation7 + $0x2e0] sm:$0xff]
    %v401 = vld [vmem:[#allocation7 + $0x2e8] sm:$0xff]
    %v402 = vld [vmem:[#allocation7 + $0x2f0] sm:$0xff]
    %v403 = vld [vmem:[#allocation7 + $0x2f8] sm:$0xff]
    %v404 = vld [vmem:[#allocation7 + $0x300] sm:$0xff]
    %v405 = vld [vmem:[#allocation7 + $0x308] sm:$0xff]
    %v406 = vld [vmem:[#allocation7 + $0x310] sm:$0xff]
    %v407 = vld [vmem:[#allocation7 + $0x318] sm:$0xff]
    %v408 = vld [vmem:[#allocation7 + $0x320] sm:$0xff]
    %v409 = vld [vmem:[#allocation7 + $0x328] sm:$0xff]
    %v410 = vld [vmem:[#allocation7 + $0x330] sm:$0xff]
    %v411 = vld [vmem:[#allocation7 + $0x338] sm:$0xff]
    %v412 = vld [vmem:[#allocation7 + $0x340] sm:$0xff]
    %v413 = vld [vmem:[#allocation7 + $0x348] sm:$0xff]
    %v414 = vld [vmem:[#allocation7 + $0x350] sm:$0xff]
    %v415 = vld [vmem:[#allocation7 + $0x358] sm:$0xff]
    %v416 = vld [vmem:[#allocation7 + $0x360] sm:$0xff]
    %v417 = vld [vmem:[#allocation7 + $0x368] sm:$0xff]
    %v418 = vld [vmem:[#allocation7 + $0x370] sm:$0xff]
    %v419 = vld [vmem:[#allocation7 + $0x378] sm:$0xff]
    %v420 = vld [vmem:[#allocation7 + $0x380] sm:$0xff]
    %v421 = vld [vmem:[#allocation7 + $0x388] sm:$0xff]
    %v422 = vld [vmem:[#allocation7 + $0x390] sm:$0xff]
    %v423 = vld [vmem:[#allocation7 + $0x398] sm:$0xff]
    %v424 = vld [vmem:[#allocation7 + $0x3a0] sm:$0xff]
    %v425 = vld [vmem:[#allocation7 + $0x3a8] sm:$0xff]
    %v426 = vld [vmem:[#allocation7 + $0x3b0] sm:$0xff]
    %v427 = vld [vmem:[#allocation7 + $0x3b8] sm:$0xff]
    %v428 = vld [vmem:[#allocation7 + $0x3c0] sm:$0xff]
    %v429 = vld [vmem:[#allocation7 + $0x3c8] sm:$0xff]
    %v430 = vld [vmem:[#allocation7 + $0x3d0] sm:$0xff]
    %v431 = vld [vmem:[#allocation7 + $0x3d8] sm:$0xff]
    %v432 = vld [vmem:[#allocation7 + $0x3e0] sm:$0xff]
    %v433 = vld [vmem:[#allocation7 + $0x3e8] sm:$0xff]
    %v434 = vld [vmem:[#allocation7 + $0x3f0] sm:$0xff]
    %v435 = vld [vmem:[#allocation7 + $0x3f8] sm:$0xff]
    %v436 = vld [vmem:[#allocation7 + $0x400] sm:$0xff]
    %v437 = vld [vmem:[#allocation7 + $0x408] sm:$0xff]
    %v438 = vld [vmem:[#allocation7 + $0x410] sm:$0xff]
    %v439 = vld [vmem:[#allocation7 + $0x418] sm:$0xff]
    %v440 = vld [vmem:[#allocation7 + $0x420] sm:$0xff]
    %v441 = vld [vmem:[#allocation7 + $0x428] sm:$0xff]
    %v442 = vld [vmem:[#allocation7 + $0x430] sm:$0xff]
    %v443 = vld [vmem:[#allocation7 + $0x438] sm:$0xff]
    %v444 = vld [vmem:[#allocation7 + $0x440] sm:$0xff]
    %v445 = vld [vmem:[#allocation7 + $0x448] sm:$0xff]
    %v446 = vld [vmem:[#allocation7 + $0x450] sm:$0xff]
    %v447 = vld [vmem:[#allocation7 + $0x458] sm:$0xff]
    %v448 = vld [vmem:[#allocation7 + $0x460] sm:$0xff]
    %v449 = vld [vmem:[#allocation7 + $0x468] sm:$0xff]
    %v450 = vld [vmem:[#allocation7 + $0x470] sm:$0xff]
    %v451 = vld [vmem:[#allocation7 + $0x478] sm:$0xff]
    %v452 = vld [vmem:[#allocation7 + $0x480] sm:$0xff]
    %v453 = vld [vmem:[#allocation7 + $0x488] sm:$0xff]
    %v454 = vld [vmem:[#allocation7 + $0x490] sm:$0xff]
    %v455 = vld [vmem:[#allocation7 + $0x498] sm:$0xff]
    %v456 = vld [vmem:[#allocation7 + $0x4a0] sm:$0xff]
    %v457 = vld [vmem:[#allocation7 + $0x4a8] sm:$0xff]
    %v458 = vld [vmem:[#allocation7 + $0x4b0] sm:$0xff]
    %v459 = vld [vmem:[#allocation7 + $0x4b8] sm:$0xff]
    %v460 = vld [vmem:[#allocation7 + $0x4c0] sm:$0xff]
    %v461 = vld [vmem:[#allocation7 + $0x4c8] sm:$0xff]
    %v462 = vld [vmem:[#allocation7 + $0x4d0] sm:$0xff]
    %v463 = vld [vmem:[#allocation7 + $0x4d8] sm:$0xff]
    %v464 = vld [vmem:[#allocation7 + $0x4e0] sm:$0xff]
    %v465 = vld [vmem:[#allocation7 + $0x4e8] sm:$0xff]
    %v466 = vld [vmem:[#allocation7 + $0x4f0] sm:$0xff]
    %v467 = vld [vmem:[#allocation7 + $0x4f8] sm:$0xff]
    %v468 = vld [vmem:[#allocation7 + $0x500] sm:$0xff]
    %v469 = vld [vmem:[#allocation7 + $0x508] sm:$0xff]
    %v470 = vld [vmem:[#allocation7 + $0x510] sm:$0xff]
    %v471 = vld [vmem:[#allocation7 + $0x518] sm:$0xff]
    %v472 = vld [vmem:[#allocation7 + $0x520] sm:$0xff]
    %v473 = vld [vmem:[#allocation7 + $0x528] sm:$0xff]
    %v474 = vld [vmem:[#allocation7 + $0x530] sm:$0xff]
    %v475 = vld [vmem:[#allocation7 + $0x538] sm:$0xff]
    %v476 = vld [vmem:[#allocation7 + $0x540] sm:$0xff]
    %v477 = vld [vmem:[#allocation7 + $0x548] sm:$0xff]
    %v478 = vld [vmem:[#allocation7 + $0x550] sm:$0xff]
    %v479 = vld [vmem:[#allocation7 + $0x558] sm:$0xff]
    %v480 = vld [vmem:[#allocation7 + $0x560] sm:$0xff]
    %v481 = vld [vmem:[#allocation7 + $0x568] sm:$0xff]
    %v482 = vld [vmem:[#allocation7 + $0x570] sm:$0xff]
    %v483 = vld [vmem:[#allocation7 + $0x578] sm:$0xff]
    %v484 = vld [vmem:[#allocation7 + $0x580] sm:$0xff]
    %v485 = vld [vmem:[#allocation7 + $0x588] sm:$0xff]
    %v486 = vld [vmem:[#allocation7 + $0x590] sm:$0xff]
    %v487 = vld [vmem:[#allocation7 + $0x598] sm:$0xff]
    %v488 = vld [vmem:[#allocation7 + $0x5a0] sm:$0xff]
    %v489 = vld [vmem:[#allocation7 + $0x5a8] sm:$0xff]
    %v490 = vld [vmem:[#allocation7 + $0x5b0] sm:$0xff]
    %v491 = vld [vmem:[#allocation7 + $0x5b8] sm:$0xff]
    %v492 = vld [vmem:[#allocation7 + $0x5c0] sm:$0xff]
    %v493 = vld [vmem:[#allocation7 + $0x5c8] sm:$0xff]
    %v494 = vld [vmem:[#allocation7 + $0x5d0] sm:$0xff]
    %v495 = vld [vmem:[#allocation7 + $0x5d8] sm:$0xff]
    %v496 = vld [vmem:[#allocation7 + $0x5e0] sm:$0xff]
    %v497 = vld [vmem:[#allocation7 + $0x5e8] sm:$0xff]
    %v498 = vld [vmem:[#allocation7 + $0x5f0] sm:$0xff]
    %v499 = vld [vmem:[#allocation7 + $0x5f8] sm:$0xff]
    %v500 = vld [vmem:[#allocation7 + $0x600] sm:$0xff]
    %v501 = vld [vmem:[#allocation7 + $0x608] sm:$0xff]
    %v502 = vld [vmem:[#allocation7 + $0x610] sm:$0xff]
    %v503 = vld [vmem:[#allocation7 + $0x618] sm:$0xff]
    %v504 = vld [vmem:[#allocation7 + $0x620] sm:$0xff]
    %v505 = vld [vmem:[#allocation7 + $0x628] sm:$0xff]
    %v506 = vld [vmem:[#allocation7 + $0x630] sm:$0xff]
    %v507 = vld [vmem:[#allocation7 + $0x638] sm:$0xff]
    %v508 = vld [vmem:[#allocation7 + $0x640] sm:$0xff]
    %v509 = vld [vmem:[#allocation7 + $0x648] sm:$0xff]
    %v510 = vld [vmem:[#allocation7 + $0x650] sm:$0xff]
    %v511 = vld [vmem:[#allocation7 + $0x658] sm:$0xff]
    %v512 = vld [vmem:[#allocation7 + $0x660] sm:$0xff]
    %v513 = vld [vmem:[#allocation7 + $0x668] sm:$0xff]
    %v514 = vld [vmem:[#allocation7 + $0x670] sm:$0xff]
    %v515 = vld [vmem:[#allocation7 + $0x678] sm:$0xff]
    %v516 = vld [vmem:[#allocation7 + $0x680] sm:$0xff]
    %v517 = vld [vmem:[#allocation7 + $0x688] sm:$0xff]
    %v518 = vld [vmem:[#allocation7 + $0x690] sm:$0xff]
    %v519 = vld [vmem:[#allocation7 + $0x698] sm:$0xff]
    %v520 = vld [vmem:[#allocation7 + $0x6a0] sm:$0xff]
    %v521 = vld [vmem:[#allocation7 + $0x6a8] sm:$0xff]
    %v522 = vld [vmem:[#allocation7 + $0x6b0] sm:$0xff]
    %v523 = vld [vmem:[#allocation7 + $0x6b8] sm:$0xff]
    %v524 = vld [vmem:[#allocation7 + $0x6c0] sm:$0xff]
    %v525 = vld [vmem:[#allocation7 + $0x6c8] sm:$0xff]
    %v526 = vld [vmem:[#allocation7 + $0x6d0] sm:$0xff]
    %v527 = vld [vmem:[#allocation7 + $0x6d8] sm:$0xff]
    %v528 = vld [vmem:[#allocation7 + $0x6e0] sm:$0xff]
    %v529 = vld [vmem:[#allocation7 + $0x6e8] sm:$0xff]
    %v530 = vld [vmem:[#allocation7 + $0x6f0] sm:$0xff]
    %v531 = vld [vmem:[#allocation7 + $0x6f8] sm:$0xff]
    %v532 = vld [vmem:[#allocation7 + $0x700] sm:$0xff]
    %v533 = vld [vmem:[#allocation7 + $0x708] sm:$0xff]
    %v534 = vld [vmem:[#allocation7 + $0x710] sm:$0xff]
    %v535 = vld [vmem:[#allocation7 + $0x718] sm:$0xff]
    %v536 = vld [vmem:[#allocation7 + $0x720] sm:$0xff]
    %v537 = vld [vmem:[#allocation7 + $0x728] sm:$0xff]
    %v538 = vld [vmem:[#allocation7 + $0x730] sm:$0xff]
    %v539 = vld [vmem:[#allocation7 + $0x738] sm:$0xff]
    %v540 = vld [vmem:[#allocation7 + $0x740] sm:$0xff]
    %v541 = vld [vmem:[#allocation7 + $0x748] sm:$0xff]
    %v542 = vld [vmem:[#allocation7 + $0x750] sm:$0xff]
    %v543 = vld [vmem:[#allocation7 + $0x758] sm:$0xff]
    %v544 = vld [vmem:[#allocation7 + $0x760] sm:$0xff]
    %v545 = vld [vmem:[#allocation7 + $0x768] sm:$0xff]
    %v546 = vld [vmem:[#allocation7 + $0x770] sm:$0xff]
    %v547 = vld [vmem:[#allocation7 + $0x778] sm:$0xff]
    %v548 = vld [vmem:[#allocation7 + $0x780] sm:$0xff]
    %v549 = vld [vmem:[#allocation7 + $0x788] sm:$0xff]
    %v550 = vld [vmem:[#allocation7 + $0x790] sm:$0xff]
    %v551 = vld [vmem:[#allocation7 + $0x798] sm:$0xff]
    %v552 = vld [vmem:[#allocation7 + $0x7a0] sm:$0xff]
    %v553 = vld [vmem:[#allocation7 + $0x7a8] sm:$0xff]
    %v554 = vld [vmem:[#allocation7 + $0x7b0] sm:$0xff]
    %v555 = vld [vmem:[#allocation7 + $0x7b8] sm:$0xff]
    %v556 = vld [vmem:[#allocation7 + $0x7c0] sm:$0xff]
    %v557 = vld [vmem:[#allocation7 + $0x7c8] sm:$0xff]
    %v558 = vld [vmem:[#allocation7 + $0x7d0] sm:$0xff]
    %v559 = vld [vmem:[#allocation7 + $0x7d8] sm:$0xff]
    %v560 = vld [vmem:[#allocation7 + $0x7e0] sm:$0xff]
    %v561 = vld [vmem:[#allocation7 + $0x7e8] sm:$0xff]
    %v562 = vld [vmem:[#allocation7 + $0x7f0] sm:$0xff]
    %v563 = vld [vmem:[#allocation7 + $0x7f8] sm:$0xff]
    %v564 = vld [vmem:[%s3] sm:$0xf]
    %v566 = vlaneseq
    %v567 = vshrl.u32 %v566, 7
    %v568 = vsub.s32 0, %v567
    %v569 = vrot.slane %v564, %v568
    %v570 = vlaneseq
    %v571 = vshrl.u32 %v570, 7
    %v572 = vsub.s32 1, %v571
    %v573 = vrot.slane %v564, %v572
    %v574 = vlaneseq
    %v575 = vshrl.u32 %v574, 7
    %v576 = vsub.s32 2, %v575
    %v577 = vrot.slane %v564, %v576
    %v578 = vlaneseq
    %v579 = vshrl.u32 %v578, 7
    %v580 = vsub.s32 3, %v579
    %v581 = vrot.slane %v564, %v580
    %v786 = vunpack.c.l.b16 %v108
    %v787 = vunpack.c.h.b16 %v108
    %v788 = vunpack.c.l.b16 %v109
    %v789 = vunpack.c.h.b16 %v109
    %v790 = vunpack.c.l.b16 %v110
    %v791 = vunpack.c.h.b16 %v110
    %v792 = vunpack.c.l.b16 %v111
    %v793 = vunpack.c.h.b16 %v111
    %v794 = vunpack.c.l.b16 %v112
    %v795 = vunpack.c.h.b16 %v112
    %v796 = vunpack.c.l.b16 %v113
    %v797 = vunpack.c.h.b16 %v113
    %v798 = vunpack.c.l.b16 %v114
    %v799 = vunpack.c.h.b16 %v114
    %v800 = vunpack.c.l.b16 %v115
    %v801 = vunpack.c.h.b16 %v115
    %v802 = vunpack.c.l.b16 %v116
    %v803 = vunpack.c.h.b16 %v116
    %v804 = vunpack.c.l.b16 %v117
    %v805 = vunpack.c.h.b16 %v117
    %v806 = vunpack.c.l.b16 %v118
    %v807 = vunpack.c.h.b16 %v118
    %v808 = vunpack.c.l.b16 %v119
    %v809 = vunpack.c.h.b16 %v119
    %v810 = vunpack.c.l.b16 %v120
    %v811 = vunpack.c.h.b16 %v120
    %v812 = vunpack.c.l.b16 %v121
    %v813 = vunpack.c.h.b16 %v121
    %v814 = vunpack.c.l.b16 %v122
    %v815 = vunpack.c.h.b16 %v122
    %v816 = vunpack.c.l.b16 %v123
    %v817 = vunpack.c.h.b16 %v123
    %v818 = vunpack.c.l.b16 %v124
    %v819 = vunpack.c.h.b16 %v124
    %v820 = vunpack.c.l.b16 %v125
    %v821 = vunpack.c.h.b16 %v125
    %v822 = vunpack.c.l.b16 %v126
    %v823 = vunpack.c.h.b16 %v126
    %v824 = vunpack.c.l.b16 %v127
    %v825 = vunpack.c.h.b16 %v127
    %v826 = vunpack.c.l.b16 %v128
    %v827 = vunpack.c.h.b16 %v128
    %v828 = vunpack.c.l.b16 %v129
    %v829 = vunpack.c.h.b16 %v129
    %v830 = vunpack.c.l.b16 %v130
    %v831 = vunpack.c.h.b16 %v130
    %v832 = vunpack.c.l.b16 %v131
    %v833 = vunpack.c.h.b16 %v131
    %v834 = vunpack.c.l.b16 %v132
    %v835 = vunpack.c.h.b16 %v132
    %v836 = vunpack.c.l.b16 %v133
    %v837 = vunpack.c.h.b16 %v133
    %v838 = vunpack.c.l.b16 %v134
    %v839 = vunpack.c.h.b16 %v134
    %v840 = vunpack.c.l.b16 %v135
    %v841 = vunpack.c.h.b16 %v135
    %v842 = vunpack.c.l.b16 %v136
    %v843 = vunpack.c.h.b16 %v136
    %v844 = vunpack.c.l.b16 %v137
    %v845 = vunpack.c.h.b16 %v137
    %v846 = vunpack.c.l.b16 %v138
    %v847 = vunpack.c.h.b16 %v138
    %v848 = vunpack.c.l.b16 %v139
    %v849 = vunpack.c.h.b16 %v139
    %v850 = vunpack.c.l.b16 %v140
    %v851 = vunpack.c.h.b16 %v140
    %v852 = vunpack.c.l.b16 %v141
    %v853 = vunpack.c.h.b16 %v141
    %v854 = vunpack.c.l.b16 %v142
    %v855 = vunpack.c.h.b16 %v142
    %v856 = vunpack.c.l.b16 %v143
    %v857 = vunpack.c.h.b16 %v143
    %v858 = vunpack.c.l.b16 %v144
    %v859 = vunpack.c.h.b16 %v144
    %v860 = vunpack.c.l.b16 %v145
    %v861 = vunpack.c.h.b16 %v145
    %v862 = vunpack.c.l.b16 %v146
    %v863 = vunpack.c.h.b16 %v146
    %v864 = vunpack.c.l.b16 %v147
    %v865 = vunpack.c.h.b16 %v147
    %v866 = vunpack.c.l.b16 %v148
    %v867 = vunpack.c.h.b16 %v148
    %v868 = vunpack.c.l.b16 %v149
    %v869 = vunpack.c.h.b16 %v149
    %v870 = vunpack.c.l.b16 %v150
    %v871 = vunpack.c.h.b16 %v150
    %v872 = vunpack.c.l.b16 %v151
    %v873 = vunpack.c.h.b16 %v151
    %v874 = vunpack.c.l.b16 %v152
    %v875 = vunpack.c.h.b16 %v152
    %v876 = vunpack.c.l.b16 %v153
    %v877 = vunpack.c.h.b16 %v153
    %v878 = vunpack.c.l.b16 %v154
    %v879 = vunpack.c.h.b16 %v154
    %v880 = vunpack.c.l.b16 %v155
    %v881 = vunpack.c.h.b16 %v155
    %v882 = vunpack.c.l.b16 %v156
    %v883 = vunpack.c.h.b16 %v156
    %v884 = vunpack.c.l.b16 %v157
    %v885 = vunpack.c.h.b16 %v157
    %v886 = vunpack.c.l.b16 %v158
    %v887 = vunpack.c.h.b16 %v158
    %v888 = vunpack.c.l.b16 %v159
    %v889 = vunpack.c.h.b16 %v159
    %v890 = vunpack.c.l.b16 %v160
    %v891 = vunpack.c.h.b16 %v160
    %v892 = vunpack.c.l.b16 %v161
    %v893 = vunpack.c.h.b16 %v161
    %v894 = vunpack.c.l.b16 %v162
    %v895 = vunpack.c.h.b16 %v162
    %v896 = vunpack.c.l.b16 %v163
    %v897 = vunpack.c.h.b16 %v163
    %v898 = vunpack.c.l.b16 %v164
    %v899 = vunpack.c.h.b16 %v164
    %v900 = vunpack.c.l.b16 %v165
    %v901 = vunpack.c.h.b16 %v165
    %v902 = vunpack.c.l.b16 %v166
    %v903 = vunpack.c.h.b16 %v166
    %v904 = vunpack.c.l.b16 %v167
    %v905 = vunpack.c.h.b16 %v167
    %v906 = vunpack.c.l.b16 %v168
    %v907 = vunpack.c.h.b16 %v168
    %v908 = vunpack.c.l.b16 %v169
    %v909 = vunpack.c.h.b16 %v169
    %v910 = vunpack.c.l.b16 %v170
    %v911 = vunpack.c.h.b16 %v170
    %v912 = vunpack.c.l.b16 %v171
    %v913 = vunpack.c.h.b16 %v171
    %v914 = vunpack.c.l.b16 %v172
    %v915 = vunpack.c.h.b16 %v172
    %v916 = vunpack.c.l.b16 %v173
    %v917 = vunpack.c.h.b16 %v173
    %v918 = vunpack.c.l.b16 %v174
    %v919 = vunpack.c.h.b16 %v174
    %v920 = vunpack.c.l.b16 %v175
    %v921 = vunpack.c.h.b16 %v175
    %v922 = vunpack.c.l.b16 %v176
    %v923 = vunpack.c.h.b16 %v176
    %v924 = vunpack.c.l.b16 %v177
    %v925 = vunpack.c.h.b16 %v177
    %v926 = vunpack.c.l.b16 %v178
    %v927 = vunpack.c.h.b16 %v178
    %v928 = vunpack.c.l.b16 %v179
    %v929 = vunpack.c.h.b16 %v179
    %v930 = vunpack.c.l.b16 %v180
    %v931 = vunpack.c.h.b16 %v180
    %v932 = vunpack.c.l.b16 %v181
    %v933 = vunpack.c.h.b16 %v181
    %v934 = vunpack.c.l.b16 %v182
    %v935 = vunpack.c.h.b16 %v182
    %v936 = vunpack.c.l.b16 %v183
    %v937 = vunpack.c.h.b16 %v183
    %v938 = vunpack.c.l.b16 %v184
    %v939 = vunpack.c.h.b16 %v184
    %v940 = vunpack.c.l.b16 %v185
    %v941 = vunpack.c.h.b16 %v185
    %v942 = vunpack.c.l.b16 %v186
    %v943 = vunpack.c.h.b16 %v186
    %v944 = vunpack.c.l.b16 %v187
    %v945 = vunpack.c.h.b16 %v187
    %v946 = vunpack.c.l.b16 %v188
    %v947 = vunpack.c.h.b16 %v188
    %v948 = vunpack.c.l.b16 %v189
    %v949 = vunpack.c.h.b16 %v189
    %v950 = vunpack.c.l.b16 %v190
    %v951 = vunpack.c.h.b16 %v190
    %v952 = vunpack.c.l.b16 %v191
    %v953 = vunpack.c.h.b16 %v191
    %v954 = vunpack.c.l.b16 %v192
    %v955 = vunpack.c.h.b16 %v192
    %v956 = vunpack.c.l.b16 %v193
    %v957 = vunpack.c.h.b16 %v193
    %v958 = vunpack.c.l.b16 %v194
    %v959 = vunpack.c.h.b16 %v194
    %v960 = vunpack.c.l.b16 %v195
    %v961 = vunpack.c.h.b16 %v195
    %v962 = vunpack.c.l.b16 %v196
    %v963 = vunpack.c.h.b16 %v196
    %v964 = vunpack.c.l.b16 %v197
    %v965 = vunpack.c.h.b16 %v197
    %v966 = vunpack.c.l.b16 %v198
    %v967 = vunpack.c.h.b16 %v198
    %v968 = vunpack.c.l.b16 %v199
    %v969 = vunpack.c.h.b16 %v199
    %v970 = vunpack.c.l.b16 %v200
    %v971 = vunpack.c.h.b16 %v200
    %v972 = vunpack.c.l.b16 %v201
    %v973 = vunpack.c.h.b16 %v201
    %v974 = vunpack.c.l.b16 %v202
    %v975 = vunpack.c.h.b16 %v202
    %v976 = vunpack.c.l.b16 %v203
    %v977 = vunpack.c.h.b16 %v203
    %v978 = vunpack.c.l.b16 %v204
    %v979 = vunpack.c.h.b16 %v204
    %v980 = vunpack.c.l.b16 %v205
    %v981 = vunpack.c.h.b16 %v205
    %v982 = vunpack.c.l.b16 %v206
    %v983 = vunpack.c.h.b16 %v206
    %v984 = vunpack.c.l.b16 %v207
    %v985 = vunpack.c.h.b16 %v207
    %v986 = vunpack.c.l.b16 %v208
    %v987 = vunpack.c.h.b16 %v208
    %v988 = vunpack.c.l.b16 %v209
    %v989 = vunpack.c.h.b16 %v209
    %v990 = vunpack.c.l.b16 %v210
    %v991 = vunpack.c.h.b16 %v210
    %v992 = vunpack.c.l.b16 %v211
    %v993 = vunpack.c.h.b16 %v211
    %v994 = vunpack.c.l.b16 %v212
    %v995 = vunpack.c.h.b16 %v212
    %v996 = vunpack.c.l.b16 %v213
    %v997 = vunpack.c.h.b16 %v213
    %v998 = vunpack.c.l.b16 %v214
    %v999 = vunpack.c.h.b16 %v214
    %v1000 = vunpack.c.l.b16 %v215
    %v1001 = vunpack.c.h.b16 %v215
    %v1002 = vunpack.c.l.b16 %v216
    %v1003 = vunpack.c.h.b16 %v216
    %v1004 = vunpack.c.l.b16 %v217
    %v1005 = vunpack.c.h.b16 %v217
    %v1006 = vunpack.c.l.b16 %v218
    %v1007 = vunpack.c.h.b16 %v218
    %v1008 = vunpack.c.l.b16 %v219
    %v1009 = vunpack.c.h.b16 %v219
    %v1010 = vunpack.c.l.b16 %v220
    %v1011 = vunpack.c.h.b16 %v220
    %v1012 = vunpack.c.l.b16 %v221
    %v1013 = vunpack.c.h.b16 %v221
    %v1014 = vunpack.c.l.b16 %v222
    %v1015 = vunpack.c.h.b16 %v222
    %v1016 = vunpack.c.l.b16 %v223
    %v1017 = vunpack.c.h.b16 %v223
    %v1018 = vunpack.c.l.b16 %v224
    %v1019 = vunpack.c.h.b16 %v224
    %v1020 = vunpack.c.l.b16 %v225
    %v1021 = vunpack.c.h.b16 %v225
    %v1022 = vunpack.c.l.b16 %v226
    %v1023 = vunpack.c.h.b16 %v226
    %v1024 = vunpack.c.l.b16 %v227
    %v1025 = vunpack.c.h.b16 %v227
    %v1026 = vunpack.c.l.b16 %v228
    %v1027 = vunpack.c.h.b16 %v228
    %v1028 = vunpack.c.l.b16 %v229
    %v1029 = vunpack.c.h.b16 %v229
    %v1030 = vunpack.c.l.b16 %v230
    %v1031 = vunpack.c.h.b16 %v230
    %v1032 = vunpack.c.l.b16 %v231
    %v1033 = vunpack.c.h.b16 %v231
    %v1034 = vunpack.c.l.b16 %v232
    %v1035 = vunpack.c.h.b16 %v232
    %v1036 = vunpack.c.l.b16 %v233
    %v1037 = vunpack.c.h.b16 %v233
    %v1038 = vunpack.c.l.b16 %v234
    %v1039 = vunpack.c.h.b16 %v234
    %v1040 = vunpack.c.l.b16 %v235
    %v1041 = vunpack.c.h.b16 %v235
    %v1042 = vunpack.c.l.b16 %v236
    %v1043 = vunpack.c.h.b16 %v236
    %v1044 = vunpack.c.l.b16 %v237
    %v1045 = vunpack.c.h.b16 %v237
    %v1046 = vunpack.c.l.b16 %v238
    %v1047 = vunpack.c.h.b16 %v238
    %v1048 = vunpack.c.l.b16 %v239
    %v1049 = vunpack.c.h.b16 %v239
    %v1050 = vunpack.c.l.b16 %v240
    %v1051 = vunpack.c.h.b16 %v240
    %v1052 = vunpack.c.l.b16 %v241
    %v1053 = vunpack.c.h.b16 %v241
    %v1054 = vunpack.c.l.b16 %v242
    %v1055 = vunpack.c.h.b16 %v242
    %v1056 = vunpack.c.l.b16 %v243
    %v1057 = vunpack.c.h.b16 %v243
    %v1058 = vunpack.c.l.b16 %v244
    %v1059 = vunpack.c.h.b16 %v244
    %v1060 = vunpack.c.l.b16 %v245
    %v1061 = vunpack.c.h.b16 %v245
    %v1062 = vunpack.c.l.b16 %v246
    %v1063 = vunpack.c.h.b16 %v246
    %v1064 = vunpack.c.l.b16 %v247
    %v1065 = vunpack.c.h.b16 %v247
    %v1066 = vunpack.c.l.b16 %v248
    %v1067 = vunpack.c.h.b16 %v248
    %v1068 = vunpack.c.l.b16 %v249
    %v1069 = vunpack.c.h.b16 %v249
    %v1070 = vunpack.c.l.b16 %v250
    %v1071 = vunpack.c.h.b16 %v250
    %v1072 = vunpack.c.l.b16 %v251
    %v1073 = vunpack.c.h.b16 %v251
    %v1074 = vunpack.c.l.b16 %v252
    %v1075 = vunpack.c.h.b16 %v252
    %v1076 = vunpack.c.l.b16 %v253
    %v1077 = vunpack.c.h.b16 %v253
    %v1078 = vunpack.c.l.b16 %v254
    %v1079 = vunpack.c.h.b16 %v254
    %v1080 = vunpack.c.l.b16 %v255
    %v1081 = vunpack.c.h.b16 %v255
    %v1082 = vunpack.c.l.b16 %v256
    %v1083 = vunpack.c.h.b16 %v256
    %v1084 = vunpack.c.l.b16 %v257
    %v1085 = vunpack.c.h.b16 %v257
    %v1086 = vunpack.c.l.b16 %v258
    %v1087 = vunpack.c.h.b16 %v258
    %v1088 = vunpack.c.l.b16 %v259
    %v1089 = vunpack.c.h.b16 %v259
    %v1090 = vunpack.c.l.b16 %v260
    %v1091 = vunpack.c.h.b16 %v260
    %v1092 = vunpack.c.l.b16 %v261
    %v1093 = vunpack.c.h.b16 %v261
    %v1094 = vunpack.c.l.b16 %v262
    %v1095 = vunpack.c.h.b16 %v262
    %v1096 = vunpack.c.l.b16 %v263
    %v1097 = vunpack.c.h.b16 %v263
    %v1098 = vunpack.c.l.b16 %v264
    %v1099 = vunpack.c.h.b16 %v264
    %v1100 = vunpack.c.l.b16 %v265
    %v1101 = vunpack.c.h.b16 %v265
    %v1102 = vunpack.c.l.b16 %v266
    %v1103 = vunpack.c.h.b16 %v266
    %v1104 = vunpack.c.l.b16 %v267
    %v1105 = vunpack.c.h.b16 %v267
    %v1106 = vunpack.c.l.b16 %v268
    %v1107 = vunpack.c.h.b16 %v268
    %v1108 = vunpack.c.l.b16 %v269
    %v1109 = vunpack.c.h.b16 %v269
    %v1110 = vunpack.c.l.b16 %v270
    %v1111 = vunpack.c.h.b16 %v270
    %v1112 = vunpack.c.l.b16 %v271
    %v1113 = vunpack.c.h.b16 %v271
    %v1114 = vunpack.c.l.b16 %v272
    %v1115 = vunpack.c.h.b16 %v272
    %v1116 = vunpack.c.l.b16 %v273
    %v1117 = vunpack.c.h.b16 %v273
    %v1118 = vunpack.c.l.b16 %v274
    %v1119 = vunpack.c.h.b16 %v274
    %v1120 = vunpack.c.l.b16 %v275
    %v1121 = vunpack.c.h.b16 %v275
    %v1122 = vunpack.c.l.b16 %v276
    %v1123 = vunpack.c.h.b16 %v276
    %v1124 = vunpack.c.l.b16 %v277
    %v1125 = vunpack.c.h.b16 %v277
    %v1126 = vunpack.c.l.b16 %v278
    %v1127 = vunpack.c.h.b16 %v278
    %v1128 = vunpack.c.l.b16 %v279
    %v1129 = vunpack.c.h.b16 %v279
    %v1130 = vunpack.c.l.b16 %v280
    %v1131 = vunpack.c.h.b16 %v280
    %v1132 = vunpack.c.l.b16 %v281
    %v1133 = vunpack.c.h.b16 %v281
    %v1134 = vunpack.c.l.b16 %v282
    %v1135 = vunpack.c.h.b16 %v282
    %v1136 = vunpack.c.l.b16 %v283
    %v1137 = vunpack.c.h.b16 %v283
    %v1138 = vunpack.c.l.b16 %v284
    %v1139 = vunpack.c.h.b16 %v284
    %v1140 = vunpack.c.l.b16 %v285
    %v1141 = vunpack.c.h.b16 %v285
    %v1142 = vunpack.c.l.b16 %v286
    %v1143 = vunpack.c.h.b16 %v286
    %v1144 = vunpack.c.l.b16 %v287
    %v1145 = vunpack.c.h.b16 %v287
    %v1146 = vunpack.c.l.b16 %v288
    %v1147 = vunpack.c.h.b16 %v288
    %v1148 = vunpack.c.l.b16 %v289
    %v1149 = vunpack.c.h.b16 %v289
    %v1150 = vunpack.c.l.b16 %v290
    %v1151 = vunpack.c.h.b16 %v290
    %v1152 = vunpack.c.l.b16 %v291
    %v1153 = vunpack.c.h.b16 %v291
    %v1154 = vunpack.c.l.b16 %v292
    %v1155 = vunpack.c.h.b16 %v292
    %v1156 = vunpack.c.l.b16 %v293
    %v1157 = vunpack.c.h.b16 %v293
    %v1158 = vunpack.c.l.b16 %v294
    %v1159 = vunpack.c.h.b16 %v294
    %v1160 = vunpack.c.l.b16 %v295
    %v1161 = vunpack.c.h.b16 %v295
    %v1162 = vunpack.c.l.b16 %v296
    %v1163 = vunpack.c.h.b16 %v296
    %v1164 = vunpack.c.l.b16 %v297
    %v1165 = vunpack.c.h.b16 %v297
    %v1166 = vunpack.c.l.b16 %v298
    %v1167 = vunpack.c.h.b16 %v298
    %v1168 = vunpack.c.l.b16 %v299
    %v1169 = vunpack.c.h.b16 %v299
    %v1170 = vunpack.c.l.b16 %v300
    %v1171 = vunpack.c.h.b16 %v300
    %v1172 = vunpack.c.l.b16 %v301
    %v1173 = vunpack.c.h.b16 %v301
    %v1174 = vunpack.c.l.b16 %v302
    %v1175 = vunpack.c.h.b16 %v302
    %v1176 = vunpack.c.l.b16 %v303
    %v1177 = vunpack.c.h.b16 %v303
    %v1178 = vunpack.c.l.b16 %v304
    %v1179 = vunpack.c.h.b16 %v304
    %v1180 = vunpack.c.l.b16 %v305
    %v1181 = vunpack.c.h.b16 %v305
    %v1182 = vunpack.c.l.b16 %v306
    %v1183 = vunpack.c.h.b16 %v306
    %v1184 = vunpack.c.l.b16 %v307
    %v1185 = vunpack.c.h.b16 %v307
    %v1186 = vpack.c.b16 %v794, %v786
    %v1187 = vpack.c.b16 %v795, %v787
    %v1188 = vpack.c.b16 %v796, %v788
    %v1189 = vpack.c.b16 %v797, %v789
    %v1190 = vpack.c.b16 %v798, %v790
    %v1191 = vpack.c.b16 %v799, %v791
    %v1192 = vpack.c.b16 %v800, %v792
    %v1193 = vpack.c.b16 %v801, %v793
    %v1194 = vpack.c.b16 %v810, %v802
    %v1195 = vpack.c.b16 %v811, %v803
    %v1196 = vpack.c.b16 %v812, %v804
    %v1197 = vpack.c.b16 %v813, %v805
    %v1198 = vpack.c.b16 %v814, %v806
    %v1199 = vpack.c.b16 %v815, %v807
    %v1200 = vpack.c.b16 %v816, %v808
    %v1201 = vpack.c.b16 %v817, %v809
    %v1202 = vpack.c.b16 %v826, %v818
    %v1203 = vpack.c.b16 %v827, %v819
    %v1204 = vpack.c.b16 %v828, %v820
    %v1205 = vpack.c.b16 %v829, %v821
    %v1206 = vpack.c.b16 %v830, %v822
    %v1207 = vpack.c.b16 %v831, %v823
    %v1208 = vpack.c.b16 %v832, %v824
    %v1209 = vpack.c.b16 %v833, %v825
    %v1210 = vpack.c.b16 %v842, %v834
    %v1211 = vpack.c.b16 %v843, %v835
    %v1212 = vpack.c.b16 %v844, %v836
    %v1213 = vpack.c.b16 %v845, %v837
    %v1214 = vpack.c.b16 %v846, %v838
    %v1215 = vpack.c.b16 %v847, %v839
    %v1216 = vpack.c.b16 %v848, %v840
    %v1217 = vpack.c.b16 %v849, %v841
    %v1218 = vpack.c.b16 %v858, %v850
    %v1219 = vpack.c.b16 %v859, %v851
    %v1220 = vpack.c.b16 %v860, %v852
    %v1221 = vpack.c.b16 %v861, %v853
    %v1222 = vpack.c.b16 %v862, %v854
    %v1223 = vpack.c.b16 %v863, %v855
    %v1224 = vpack.c.b16 %v864, %v856
    %v1225 = vpack.c.b16 %v865, %v857
    %v1226 = vpack.c.b16 %v874, %v866
    %v1227 = vpack.c.b16 %v875, %v867
    %v1228 = vpack.c.b16 %v876, %v868
    %v1229 = vpack.c.b16 %v877, %v869
    %v1230 = vpack.c.b16 %v878, %v870
    %v1231 = vpack.c.b16 %v879, %v871
    %v1232 = vpack.c.b16 %v880, %v872
    %v1233 = vpack.c.b16 %v881, %v873
    %v1234 = vpack.c.b16 %v890, %v882
    %v1235 = vpack.c.b16 %v891, %v883
    %v1236 = vpack.c.b16 %v892, %v884
    %v1237 = vpack.c.b16 %v893, %v885
    %v1238 = vpack.c.b16 %v894, %v886
    %v1239 = vpack.c.b16 %v895, %v887
    %v1240 = vpack.c.b16 %v896, %v888
    %v1241 = vpack.c.b16 %v897, %v889
    %v1242 = vpack.c.b16 %v906, %v898
    %v1243 = vpack.c.b16 %v907, %v899
    %v1244 = vpack.c.b16 %v908, %v900
    %v1245 = vpack.c.b16 %v909, %v901
    %v1246 = vpack.c.b16 %v910, %v902
    %v1247 = vpack.c.b16 %v911, %v903
    %v1248 = vpack.c.b16 %v912, %v904
    %v1249 = vpack.c.b16 %v913, %v905
    %v1250 = vpack.c.b16 %v922, %v914
    %v1251 = vpack.c.b16 %v923, %v915
    %v1252 = vpack.c.b16 %v924, %v916
    %v1253 = vpack.c.b16 %v925, %v917
    %v1254 = vpack.c.b16 %v926, %v918
    %v1255 = vpack.c.b16 %v927, %v919
    %v1256 = vpack.c.b16 %v928, %v920
    %v1257 = vpack.c.b16 %v929, %v921
    %v1258 = vpack.c.b16 %v938, %v930
    %v1259 = vpack.c.b16 %v939, %v931
    %v1260 = vpack.c.b16 %v940, %v932
    %v1261 = vpack.c.b16 %v941, %v933
    %v1262 = vpack.c.b16 %v942, %v934
    %v1263 = vpack.c.b16 %v943, %v935
    %v1264 = vpack.c.b16 %v944, %v936
    %v1265 = vpack.c.b16 %v945, %v937
    %v1266 = vpack.c.b16 %v954, %v946
    %v1267 = vpack.c.b16 %v955, %v947
    %v1268 = vpack.c.b16 %v956, %v948
    %v1269 = vpack.c.b16 %v957, %v949
    %v1270 = vpack.c.b16 %v958, %v950
    %v1271 = vpack.c.b16 %v959, %v951
    %v1272 = vpack.c.b16 %v960, %v952
    %v1273 = vpack.c.b16 %v961, %v953
    %v1274 = vpack.c.b16 %v970, %v962
    %v1275 = vpack.c.b16 %v971, %v963
    %v1276 = vpack.c.b16 %v972, %v964
    %v1277 = vpack.c.b16 %v973, %v965
    %v1278 = vpack.c.b16 %v974, %v966
    %v1279 = vpack.c.b16 %v975, %v967
    %v1280 = vpack.c.b16 %v976, %v968
    %v1281 = vpack.c.b16 %v977, %v969
    %v1282 = vpack.c.b16 %v986, %v978
    %v1283 = vpack.c.b16 %v987, %v979
    %v1284 = vpack.c.b16 %v988, %v980
    %v1285 = vpack.c.b16 %v989, %v981
    %v1286 = vpack.c.b16 %v990, %v982
    %v1287 = vpack.c.b16 %v991, %v983
    %v1288 = vpack.c.b16 %v992, %v984
    %v1289 = vpack.c.b16 %v993, %v985
    %v1290 = vpack.c.b16 %v1002, %v994
    %v1291 = vpack.c.b16 %v1003, %v995
    %v1292 = vpack.c.b16 %v1004, %v996
    %v1293 = vpack.c.b16 %v1005, %v997
    %v1294 = vpack.c.b16 %v1006, %v998
    %v1295 = vpack.c.b16 %v1007, %v999
    %v1296 = vpack.c.b16 %v1008, %v1000
    %v1297 = vpack.c.b16 %v1009, %v1001
    %v1298 = vpack.c.b16 %v1018, %v1010
    %v1299 = vpack.c.b16 %v1019, %v1011
    %v1300 = vpack.c.b16 %v1020, %v1012
    %v1301 = vpack.c.b16 %v1021, %v1013
    %v1302 = vpack.c.b16 %v1022, %v1014
    %v1303 = vpack.c.b16 %v1023, %v1015
    %v1304 = vpack.c.b16 %v1024, %v1016
    %v1305 = vpack.c.b16 %v1025, %v1017
    %v1306 = vpack.c.b16 %v1034, %v1026
    %v1307 = vpack.c.b16 %v1035, %v1027
    %v1308 = vpack.c.b16 %v1036, %v1028
    %v1309 = vpack.c.b16 %v1037, %v1029
    %v1310 = vpack.c.b16 %v1038, %v1030
    %v1311 = vpack.c.b16 %v1039, %v1031
    %v1312 = vpack.c.b16 %v1040, %v1032
    %v1313 = vpack.c.b16 %v1041, %v1033
    %v1314 = vpack.c.b16 %v1050, %v1042
    %v1315 = vpack.c.b16 %v1051, %v1043
    %v1316 = vpack.c.b16 %v1052, %v1044
    %v1317 = vpack.c.b16 %v1053, %v1045
    %v1318 = vpack.c.b16 %v1054, %v1046
    %v1319 = vpack.c.b16 %v1055, %v1047
    %v1320 = vpack.c.b16 %v1056, %v1048
    %v1321 = vpack.c.b16 %v1057, %v1049
    %v1322 = vpack.c.b16 %v1066, %v1058
    %v1323 = vpack.c.b16 %v1067, %v1059
    %v1324 = vpack.c.b16 %v1068, %v1060
    %v1325 = vpack.c.b16 %v1069, %v1061
    %v1326 = vpack.c.b16 %v1070, %v1062
    %v1327 = vpack.c.b16 %v1071, %v1063
    %v1328 = vpack.c.b16 %v1072, %v1064
    %v1329 = vpack.c.b16 %v1073, %v1065
    %v1330 = vpack.c.b16 %v1082, %v1074
    %v1331 = vpack.c.b16 %v1083, %v1075
    %v1332 = vpack.c.b16 %v1084, %v1076
    %v1333 = vpack.c.b16 %v1085, %v1077
    %v1334 = vpack.c.b16 %v1086, %v1078
    %v1335 = vpack.c.b16 %v1087, %v1079
    %v1336 = vpack.c.b16 %v1088, %v1080
    %v1337 = vpack.c.b16 %v1089, %v1081
    %v1338 = vpack.c.b16 %v1098, %v1090
    %v1339 = vpack.c.b16 %v1099, %v1091
    %v1340 = vpack.c.b16 %v1100, %v1092
    %v1341 = vpack.c.b16 %v1101, %v1093
    %v1342 = vpack.c.b16 %v1102, %v1094
    %v1343 = vpack.c.b16 %v1103, %v1095
    %v1344 = vpack.c.b16 %v1104, %v1096
    %v1345 = vpack.c.b16 %v1105, %v1097
    %v1346 = vpack.c.b16 %v1114, %v1106
    %v1347 = vpack.c.b16 %v1115, %v1107
    %v1348 = vpack.c.b16 %v1116, %v1108
    %v1349 = vpack.c.b16 %v1117, %v1109
    %v1350 = vpack.c.b16 %v1118, %v1110
    %v1351 = vpack.c.b16 %v1119, %v1111
    %v1352 = vpack.c.b16 %v1120, %v1112
    %v1353 = vpack.c.b16 %v1121, %v1113
    %v1354 = vpack.c.b16 %v1130, %v1122
    %v1355 = vpack.c.b16 %v1131, %v1123
    %v1356 = vpack.c.b16 %v1132, %v1124
    %v1357 = vpack.c.b16 %v1133, %v1125
    %v1358 = vpack.c.b16 %v1134, %v1126
    %v1359 = vpack.c.b16 %v1135, %v1127
    %v1360 = vpack.c.b16 %v1136, %v1128
    %v1361 = vpack.c.b16 %v1137, %v1129
    %v1362 = vpack.c.b16 %v1146, %v1138
    %v1363 = vpack.c.b16 %v1147, %v1139
    %v1364 = vpack.c.b16 %v1148, %v1140
    %v1365 = vpack.c.b16 %v1149, %v1141
    %v1366 = vpack.c.b16 %v1150, %v1142
    %v1367 = vpack.c.b16 %v1151, %v1143
    %v1368 = vpack.c.b16 %v1152, %v1144
    %v1369 = vpack.c.b16 %v1153, %v1145
    %v1370 = vpack.c.b16 %v1162, %v1154
    %v1371 = vpack.c.b16 %v1163, %v1155
    %v1372 = vpack.c.b16 %v1164, %v1156
    %v1373 = vpack.c.b16 %v1165, %v1157
    %v1374 = vpack.c.b16 %v1166, %v1158
    %v1375 = vpack.c.b16 %v1167, %v1159
    %v1376 = vpack.c.b16 %v1168, %v1160
    %v1377 = vpack.c.b16 %v1169, %v1161
    %v1378 = vpack.c.b16 %v1178, %v1170
    %v1379 = vpack.c.b16 %v1179, %v1171
    %v1380 = vpack.c.b16 %v1180, %v1172
    %v1381 = vpack.c.b16 %v1181, %v1173
    %v1382 = vpack.c.b16 %v1182, %v1174
    %v1383 = vpack.c.b16 %v1183, %v1175
    %v1384 = vpack.c.b16 %v1184, %v1176
    %v1385 = vpack.c.b16 %v1185, %v1177
    %v1842 = vunpack.c.l.b16 %v308
    %v1843 = vunpack.c.h.b16 %v308
    %v1844 = vunpack.c.l.b16 %v309
    %v1845 = vunpack.c.h.b16 %v309
    %v1846 = vunpack.c.l.b16 %v310
    %v1847 = vunpack.c.h.b16 %v310
    %v1848 = vunpack.c.l.b16 %v311
    %v1849 = vunpack.c.h.b16 %v311
    %v1850 = vunpack.c.l.b16 %v312
    %v1851 = vunpack.c.h.b16 %v312
    %v1852 = vunpack.c.l.b16 %v313
    %v1853 = vunpack.c.h.b16 %v313
    %v1854 = vunpack.c.l.b16 %v314
    %v1855 = vunpack.c.h.b16 %v314
    %v1856 = vunpack.c.l.b16 %v315
    %v1857 = vunpack.c.h.b16 %v315
    %v1858 = vunpack.c.l.b16 %v316
    %v1859 = vunpack.c.h.b16 %v316
    %v1860 = vunpack.c.l.b16 %v317
    %v1861 = vunpack.c.h.b16 %v317
    %v1862 = vunpack.c.l.b16 %v318
    %v1863 = vunpack.c.h.b16 %v318
    %v1864 = vunpack.c.l.b16 %v319
    %v1865 = vunpack.c.h.b16 %v319
    %v1866 = vunpack.c.l.b16 %v320
    %v1867 = vunpack.c.h.b16 %v320
    %v1868 = vunpack.c.l.b16 %v321
    %v1869 = vunpack.c.h.b16 %v321
    %v1870 = vunpack.c.l.b16 %v322
    %v1871 = vunpack.c.h.b16 %v322
    %v1872 = vunpack.c.l.b16 %v323
    %v1873 = vunpack.c.h.b16 %v323
    %v1874 = vunpack.c.l.b16 %v324
    %v1875 = vunpack.c.h.b16 %v324
    %v1876 = vunpack.c.l.b16 %v325
    %v1877 = vunpack.c.h.b16 %v325
    %v1878 = vunpack.c.l.b16 %v326
    %v1879 = vunpack.c.h.b16 %v326
    %v1880 = vunpack.c.l.b16 %v327
    %v1881 = vunpack.c.h.b16 %v327
    %v1882 = vunpack.c.l.b16 %v328
    %v1883 = vunpack.c.h.b16 %v328
    %v1884 = vunpack.c.l.b16 %v329
    %v1885 = vunpack.c.h.b16 %v329
    %v1886 = vunpack.c.l.b16 %v330
    %v1887 = vunpack.c.h.b16 %v330
    %v1888 = vunpack.c.l.b16 %v331
    %v1889 = vunpack.c.h.b16 %v331
    %v1890 = vunpack.c.l.b16 %v332
    %v1891 = vunpack.c.h.b16 %v332
    %v1892 = vunpack.c.l.b16 %v333
    %v1893 = vunpack.c.h.b16 %v333
    %v1894 = vunpack.c.l.b16 %v334
    %v1895 = vunpack.c.h.b16 %v334
    %v1896 = vunpack.c.l.b16 %v335
    %v1897 = vunpack.c.h.b16 %v335
    %v1898 = vunpack.c.l.b16 %v336
    %v1899 = vunpack.c.h.b16 %v336
    %v1900 = vunpack.c.l.b16 %v337
    %v1901 = vunpack.c.h.b16 %v337
    %v1902 = vunpack.c.l.b16 %v338
    %v1903 = vunpack.c.h.b16 %v338
    %v1904 = vunpack.c.l.b16 %v339
    %v1905 = vunpack.c.h.b16 %v339
    %v1906 = vunpack.c.l.b16 %v340
    %v1907 = vunpack.c.h.b16 %v340
    %v1908 = vunpack.c.l.b16 %v341
    %v1909 = vunpack.c.h.b16 %v341
    %v1910 = vunpack.c.l.b16 %v342
    %v1911 = vunpack.c.h.b16 %v342
    %v1912 = vunpack.c.l.b16 %v343
    %v1913 = vunpack.c.h.b16 %v343
    %v1914 = vunpack.c.l.b16 %v344
    %v1915 = vunpack.c.h.b16 %v344
    %v1916 = vunpack.c.l.b16 %v345
    %v1917 = vunpack.c.h.b16 %v345
    %v1918 = vunpack.c.l.b16 %v346
    %v1919 = vunpack.c.h.b16 %v346
    %v1920 = vunpack.c.l.b16 %v347
    %v1921 = vunpack.c.h.b16 %v347
    %v1922 = vunpack.c.l.b16 %v348
    %v1923 = vunpack.c.h.b16 %v348
    %v1924 = vunpack.c.l.b16 %v349
    %v1925 = vunpack.c.h.b16 %v349
    %v1926 = vunpack.c.l.b16 %v350
    %v1927 = vunpack.c.h.b16 %v350
    %v1928 = vunpack.c.l.b16 %v351
    %v1929 = vunpack.c.h.b16 %v351
    %v1930 = vunpack.c.l.b16 %v352
    %v1931 = vunpack.c.h.b16 %v352
    %v1932 = vunpack.c.l.b16 %v353
    %v1933 = vunpack.c.h.b16 %v353
    %v1934 = vunpack.c.l.b16 %v354
    %v1935 = vunpack.c.h.b16 %v354
    %v1936 = vunpack.c.l.b16 %v355
    %v1937 = vunpack.c.h.b16 %v355
    %v1938 = vunpack.c.l.b16 %v356
    %v1939 = vunpack.c.h.b16 %v356
    %v1940 = vunpack.c.l.b16 %v357
    %v1941 = vunpack.c.h.b16 %v357
    %v1942 = vunpack.c.l.b16 %v358
    %v1943 = vunpack.c.h.b16 %v358
    %v1944 = vunpack.c.l.b16 %v359
    %v1945 = vunpack.c.h.b16 %v359
    %v1946 = vunpack.c.l.b16 %v360
    %v1947 = vunpack.c.h.b16 %v360
    %v1948 = vunpack.c.l.b16 %v361
    %v1949 = vunpack.c.h.b16 %v361
    %v1950 = vunpack.c.l.b16 %v362
    %v1951 = vunpack.c.h.b16 %v362
    %v1952 = vunpack.c.l.b16 %v363
    %v1953 = vunpack.c.h.b16 %v363
    %v1954 = vunpack.c.l.b16 %v364
    %v1955 = vunpack.c.h.b16 %v364
    %v1956 = vunpack.c.l.b16 %v365
    %v1957 = vunpack.c.h.b16 %v365
    %v1958 = vunpack.c.l.b16 %v366
    %v1959 = vunpack.c.h.b16 %v366
    %v1960 = vunpack.c.l.b16 %v367
    %v1961 = vunpack.c.h.b16 %v367
    %v1962 = vunpack.c.l.b16 %v368
    %v1963 = vunpack.c.h.b16 %v368
    %v1964 = vunpack.c.l.b16 %v369
    %v1965 = vunpack.c.h.b16 %v369
    %v1966 = vunpack.c.l.b16 %v370
    %v1967 = vunpack.c.h.b16 %v370
    %v1968 = vunpack.c.l.b16 %v371
    %v1969 = vunpack.c.h.b16 %v371
    %v1970 = vunpack.c.l.b16 %v372
    %v1971 = vunpack.c.h.b16 %v372
    %v1972 = vunpack.c.l.b16 %v373
    %v1973 = vunpack.c.h.b16 %v373
    %v1974 = vunpack.c.l.b16 %v374
    %v1975 = vunpack.c.h.b16 %v374
    %v1976 = vunpack.c.l.b16 %v375
    %v1977 = vunpack.c.h.b16 %v375
    %v1978 = vunpack.c.l.b16 %v376
    %v1979 = vunpack.c.h.b16 %v376
    %v1980 = vunpack.c.l.b16 %v377
    %v1981 = vunpack.c.h.b16 %v377
    %v1982 = vunpack.c.l.b16 %v378
    %v1983 = vunpack.c.h.b16 %v378
    %v1984 = vunpack.c.l.b16 %v379
    %v1985 = vunpack.c.h.b16 %v379
    %v1986 = vunpack.c.l.b16 %v380
    %v1987 = vunpack.c.h.b16 %v380
    %v1988 = vunpack.c.l.b16 %v381
    %v1989 = vunpack.c.h.b16 %v381
    %v1990 = vunpack.c.l.b16 %v382
    %v1991 = vunpack.c.h.b16 %v382
    %v1992 = vunpack.c.l.b16 %v383
    %v1993 = vunpack.c.h.b16 %v383
    %v1994 = vunpack.c.l.b16 %v384
    %v1995 = vunpack.c.h.b16 %v384
    %v1996 = vunpack.c.l.b16 %v385
    %v1997 = vunpack.c.h.b16 %v385
    %v1998 = vunpack.c.l.b16 %v386
    %v1999 = vunpack.c.h.b16 %v386
    %v2000 = vunpack.c.l.b16 %v387
    %v2001 = vunpack.c.h.b16 %v387
    %v2002 = vunpack.c.l.b16 %v388
    %v2003 = vunpack.c.h.b16 %v388
    %v2004 = vunpack.c.l.b16 %v389
    %v2005 = vunpack.c.h.b16 %v389
    %v2006 = vunpack.c.l.b16 %v390
    %v2007 = vunpack.c.h.b16 %v390
    %v2008 = vunpack.c.l.b16 %v391
    %v2009 = vunpack.c.h.b16 %v391
    %v2010 = vunpack.c.l.b16 %v392
    %v2011 = vunpack.c.h.b16 %v392
    %v2012 = vunpack.c.l.b16 %v393
    %v2013 = vunpack.c.h.b16 %v393
    %v2014 = vunpack.c.l.b16 %v394
    %v2015 = vunpack.c.h.b16 %v394
    %v2016 = vunpack.c.l.b16 %v395
    %v2017 = vunpack.c.h.b16 %v395
    %v2018 = vunpack.c.l.b16 %v396
    %v2019 = vunpack.c.h.b16 %v396
    %v2020 = vunpack.c.l.b16 %v397
    %v2021 = vunpack.c.h.b16 %v397
    %v2022 = vunpack.c.l.b16 %v398
    %v2023 = vunpack.c.h.b16 %v398
    %v2024 = vunpack.c.l.b16 %v399
    %v2025 = vunpack.c.h.b16 %v399
    %v2026 = vunpack.c.l.b16 %v400
    %v2027 = vunpack.c.h.b16 %v400
    %v2028 = vunpack.c.l.b16 %v401
    %v2029 = vunpack.c.h.b16 %v401
    %v2030 = vunpack.c.l.b16 %v402
    %v2031 = vunpack.c.h.b16 %v402
    %v2032 = vunpack.c.l.b16 %v403
    %v2033 = vunpack.c.h.b16 %v403
    %v2034 = vunpack.c.l.b16 %v404
    %v2035 = vunpack.c.h.b16 %v404
    %v2036 = vunpack.c.l.b16 %v405
    %v2037 = vunpack.c.h.b16 %v405
    %v2038 = vunpack.c.l.b16 %v406
    %v2039 = vunpack.c.h.b16 %v406
    %v2040 = vunpack.c.l.b16 %v407
    %v2041 = vunpack.c.h.b16 %v407
    %v2042 = vunpack.c.l.b16 %v408
    %v2043 = vunpack.c.h.b16 %v408
    %v2044 = vunpack.c.l.b16 %v409
    %v2045 = vunpack.c.h.b16 %v409
    %v2046 = vunpack.c.l.b16 %v410
    %v2047 = vunpack.c.h.b16 %v410
    %v2048 = vunpack.c.l.b16 %v411
    %v2049 = vunpack.c.h.b16 %v411
    %v2050 = vunpack.c.l.b16 %v412
    %v2051 = vunpack.c.h.b16 %v412
    %v2052 = vunpack.c.l.b16 %v413
    %v2053 = vunpack.c.h.b16 %v413
    %v2054 = vunpack.c.l.b16 %v414
    %v2055 = vunpack.c.h.b16 %v414
    %v2056 = vunpack.c.l.b16 %v415
    %v2057 = vunpack.c.h.b16 %v415
    %v2058 = vunpack.c.l.b16 %v416
    %v2059 = vunpack.c.h.b16 %v416
    %v2060 = vunpack.c.l.b16 %v417
    %v2061 = vunpack.c.h.b16 %v417
    %v2062 = vunpack.c.l.b16 %v418
    %v2063 = vunpack.c.h.b16 %v418
    %v2064 = vunpack.c.l.b16 %v419
    %v2065 = vunpack.c.h.b16 %v419
    %v2066 = vunpack.c.l.b16 %v420
    %v2067 = vunpack.c.h.b16 %v420
    %v2068 = vunpack.c.l.b16 %v421
    %v2069 = vunpack.c.h.b16 %v421
    %v2070 = vunpack.c.l.b16 %v422
    %v2071 = vunpack.c.h.b16 %v422
    %v2072 = vunpack.c.l.b16 %v423
    %v2073 = vunpack.c.h.b16 %v423
    %v2074 = vunpack.c.l.b16 %v424
    %v2075 = vunpack.c.h.b16 %v424
    %v2076 = vunpack.c.l.b16 %v425
    %v2077 = vunpack.c.h.b16 %v425
    %v2078 = vunpack.c.l.b16 %v426
    %v2079 = vunpack.c.h.b16 %v426
    %v2080 = vunpack.c.l.b16 %v427
    %v2081 = vunpack.c.h.b16 %v427
    %v2082 = vunpack.c.l.b16 %v428
    %v2083 = vunpack.c.h.b16 %v428
    %v2084 = vunpack.c.l.b16 %v429
    %v2085 = vunpack.c.h.b16 %v429
    %v2086 = vunpack.c.l.b16 %v430
    %v2087 = vunpack.c.h.b16 %v430
    %v2088 = vunpack.c.l.b16 %v431
    %v2089 = vunpack.c.h.b16 %v431
    %v2090 = vunpack.c.l.b16 %v432
    %v2091 = vunpack.c.h.b16 %v432
    %v2092 = vunpack.c.l.b16 %v433
    %v2093 = vunpack.c.h.b16 %v433
    %v2094 = vunpack.c.l.b16 %v434
    %v2095 = vunpack.c.h.b16 %v434
    %v2096 = vunpack.c.l.b16 %v435
    %v2097 = vunpack.c.h.b16 %v435
    %v2098 = vunpack.c.l.b16 %v436
    %v2099 = vunpack.c.h.b16 %v436
    %v2100 = vunpack.c.l.b16 %v437
    %v2101 = vunpack.c.h.b16 %v437
    %v2102 = vunpack.c.l.b16 %v438
    %v2103 = vunpack.c.h.b16 %v438
    %v2104 = vunpack.c.l.b16 %v439
    %v2105 = vunpack.c.h.b16 %v439
    %v2106 = vunpack.c.l.b16 %v440
    %v2107 = vunpack.c.h.b16 %v440
    %v2108 = vunpack.c.l.b16 %v441
    %v2109 = vunpack.c.h.b16 %v441
    %v2110 = vunpack.c.l.b16 %v442
    %v2111 = vunpack.c.h.b16 %v442
    %v2112 = vunpack.c.l.b16 %v443
    %v2113 = vunpack.c.h.b16 %v443
    %v2114 = vunpack.c.l.b16 %v444
    %v2115 = vunpack.c.h.b16 %v444
    %v2116 = vunpack.c.l.b16 %v445
    %v2117 = vunpack.c.h.b16 %v445
    %v2118 = vunpack.c.l.b16 %v446
    %v2119 = vunpack.c.h.b16 %v446
    %v2120 = vunpack.c.l.b16 %v447
    %v2121 = vunpack.c.h.b16 %v447
    %v2122 = vunpack.c.l.b16 %v448
    %v2123 = vunpack.c.h.b16 %v448
    %v2124 = vunpack.c.l.b16 %v449
    %v2125 = vunpack.c.h.b16 %v449
    %v2126 = vunpack.c.l.b16 %v450
    %v2127 = vunpack.c.h.b16 %v450
    %v2128 = vunpack.c.l.b16 %v451
    %v2129 = vunpack.c.h.b16 %v451
    %v2130 = vunpack.c.l.b16 %v452
    %v2131 = vunpack.c.h.b16 %v452
    %v2132 = vunpack.c.l.b16 %v453
    %v2133 = vunpack.c.h.b16 %v453
    %v2134 = vunpack.c.l.b16 %v454
    %v2135 = vunpack.c.h.b16 %v454
    %v2136 = vunpack.c.l.b16 %v455
    %v2137 = vunpack.c.h.b16 %v455
    %v2138 = vunpack.c.l.b16 %v456
    %v2139 = vunpack.c.h.b16 %v456
    %v2140 = vunpack.c.l.b16 %v457
    %v2141 = vunpack.c.h.b16 %v457
    %v2142 = vunpack.c.l.b16 %v458
    %v2143 = vunpack.c.h.b16 %v458
    %v2144 = vunpack.c.l.b16 %v459
    %v2145 = vunpack.c.h.b16 %v459
    %v2146 = vunpack.c.l.b16 %v460
    %v2147 = vunpack.c.h.b16 %v460
    %v2148 = vunpack.c.l.b16 %v461
    %v2149 = vunpack.c.h.b16 %v461
    %v2150 = vunpack.c.l.b16 %v462
    %v2151 = vunpack.c.h.b16 %v462
    %v2152 = vunpack.c.l.b16 %v463
    %v2153 = vunpack.c.h.b16 %v463
    %v2154 = vunpack.c.l.b16 %v464
    %v2155 = vunpack.c.h.b16 %v464
    %v2156 = vunpack.c.l.b16 %v465
    %v2157 = vunpack.c.h.b16 %v465
    %v2158 = vunpack.c.l.b16 %v466
    %v2159 = vunpack.c.h.b16 %v466
    %v2160 = vunpack.c.l.b16 %v467
    %v2161 = vunpack.c.h.b16 %v467
    %v2162 = vunpack.c.l.b16 %v468
    %v2163 = vunpack.c.h.b16 %v468
    %v2164 = vunpack.c.l.b16 %v469
    %v2165 = vunpack.c.h.b16 %v469
    %v2166 = vunpack.c.l.b16 %v470
    %v2167 = vunpack.c.h.b16 %v470
    %v2168 = vunpack.c.l.b16 %v471
    %v2169 = vunpack.c.h.b16 %v471
    %v2170 = vunpack.c.l.b16 %v472
    %v2171 = vunpack.c.h.b16 %v472
    %v2172 = vunpack.c.l.b16 %v473
    %v2173 = vunpack.c.h.b16 %v473
    %v2174 = vunpack.c.l.b16 %v474
    %v2175 = vunpack.c.h.b16 %v474
    %v2176 = vunpack.c.l.b16 %v475
    %v2177 = vunpack.c.h.b16 %v475
    %v2178 = vunpack.c.l.b16 %v476
    %v2179 = vunpack.c.h.b16 %v476
    %v2180 = vunpack.c.l.b16 %v477
    %v2181 = vunpack.c.h.b16 %v477
    %v2182 = vunpack.c.l.b16 %v478
    %v2183 = vunpack.c.h.b16 %v478
    %v2184 = vunpack.c.l.b16 %v479
    %v2185 = vunpack.c.h.b16 %v479
    %v2186 = vunpack.c.l.b16 %v480
    %v2187 = vunpack.c.h.b16 %v480
    %v2188 = vunpack.c.l.b16 %v481
    %v2189 = vunpack.c.h.b16 %v481
    %v2190 = vunpack.c.l.b16 %v482
    %v2191 = vunpack.c.h.b16 %v482
    %v2192 = vunpack.c.l.b16 %v483
    %v2193 = vunpack.c.h.b16 %v483
    %v2194 = vunpack.c.l.b16 %v484
    %v2195 = vunpack.c.h.b16 %v484
    %v2196 = vunpack.c.l.b16 %v485
    %v2197 = vunpack.c.h.b16 %v485
    %v2198 = vunpack.c.l.b16 %v486
    %v2199 = vunpack.c.h.b16 %v486
    %v2200 = vunpack.c.l.b16 %v487
    %v2201 = vunpack.c.h.b16 %v487
    %v2202 = vunpack.c.l.b16 %v488
    %v2203 = vunpack.c.h.b16 %v488
    %v2204 = vunpack.c.l.b16 %v489
    %v2205 = vunpack.c.h.b16 %v489
    %v2206 = vunpack.c.l.b16 %v490
    %v2207 = vunpack.c.h.b16 %v490
    %v2208 = vunpack.c.l.b16 %v491
    %v2209 = vunpack.c.h.b16 %v491
    %v2210 = vunpack.c.l.b16 %v492
    %v2211 = vunpack.c.h.b16 %v492
    %v2212 = vunpack.c.l.b16 %v493
    %v2213 = vunpack.c.h.b16 %v493
    %v2214 = vunpack.c.l.b16 %v494
    %v2215 = vunpack.c.h.b16 %v494
    %v2216 = vunpack.c.l.b16 %v495
    %v2217 = vunpack.c.h.b16 %v495
    %v2218 = vunpack.c.l.b16 %v496
    %v2219 = vunpack.c.h.b16 %v496
    %v2220 = vunpack.c.l.b16 %v497
    %v2221 = vunpack.c.h.b16 %v497
    %v2222 = vunpack.c.l.b16 %v498
    %v2223 = vunpack.c.h.b16 %v498
    %v2224 = vunpack.c.l.b16 %v499
    %v2225 = vunpack.c.h.b16 %v499
    %v2226 = vunpack.c.l.b16 %v500
    %v2227 = vunpack.c.h.b16 %v500
    %v2228 = vunpack.c.l.b16 %v501
    %v2229 = vunpack.c.h.b16 %v501
    %v2230 = vunpack.c.l.b16 %v502
    %v2231 = vunpack.c.h.b16 %v502
    %v2232 = vunpack.c.l.b16 %v503
    %v2233 = vunpack.c.h.b16 %v503
    %v2234 = vunpack.c.l.b16 %v504
    %v2235 = vunpack.c.h.b16 %v504
    %v2236 = vunpack.c.l.b16 %v505
    %v2237 = vunpack.c.h.b16 %v505
    %v2238 = vunpack.c.l.b16 %v506
    %v2239 = vunpack.c.h.b16 %v506
    %v2240 = vunpack.c.l.b16 %v507
    %v2241 = vunpack.c.h.b16 %v507
    %v2242 = vunpack.c.l.b16 %v508
    %v2243 = vunpack.c.h.b16 %v508
    %v2244 = vunpack.c.l.b16 %v509
    %v2245 = vunpack.c.h.b16 %v509
    %v2246 = vunpack.c.l.b16 %v510
    %v2247 = vunpack.c.h.b16 %v510
    %v2248 = vunpack.c.l.b16 %v511
    %v2249 = vunpack.c.h.b16 %v511
    %v2250 = vunpack.c.l.b16 %v512
    %v2251 = vunpack.c.h.b16 %v512
    %v2252 = vunpack.c.l.b16 %v513
    %v2253 = vunpack.c.h.b16 %v513
    %v2254 = vunpack.c.l.b16 %v514
    %v2255 = vunpack.c.h.b16 %v514
    %v2256 = vunpack.c.l.b16 %v515
    %v2257 = vunpack.c.h.b16 %v515
    %v2258 = vunpack.c.l.b16 %v516
    %v2259 = vunpack.c.h.b16 %v516
    %v2260 = vunpack.c.l.b16 %v517
    %v2261 = vunpack.c.h.b16 %v517
    %v2262 = vunpack.c.l.b16 %v518
    %v2263 = vunpack.c.h.b16 %v518
    %v2264 = vunpack.c.l.b16 %v519
    %v2265 = vunpack.c.h.b16 %v519
    %v2266 = vunpack.c.l.b16 %v520
    %v2267 = vunpack.c.h.b16 %v520
    %v2268 = vunpack.c.l.b16 %v521
    %v2269 = vunpack.c.h.b16 %v521
    %v2270 = vunpack.c.l.b16 %v522
    %v2271 = vunpack.c.h.b16 %v522
    %v2272 = vunpack.c.l.b16 %v523
    %v2273 = vunpack.c.h.b16 %v523
    %v2274 = vunpack.c.l.b16 %v524
    %v2275 = vunpack.c.h.b16 %v524
    %v2276 = vunpack.c.l.b16 %v525
    %v2277 = vunpack.c.h.b16 %v525
    %v2278 = vunpack.c.l.b16 %v526
    %v2279 = vunpack.c.h.b16 %v526
    %v2280 = vunpack.c.l.b16 %v527
    %v2281 = vunpack.c.h.b16 %v527
    %v2282 = vunpack.c.l.b16 %v528
    %v2283 = vunpack.c.h.b16 %v528
    %v2284 = vunpack.c.l.b16 %v529
    %v2285 = vunpack.c.h.b16 %v529
    %v2286 = vunpack.c.l.b16 %v530
    %v2287 = vunpack.c.h.b16 %v530
    %v2288 = vunpack.c.l.b16 %v531
    %v2289 = vunpack.c.h.b16 %v531
    %v2290 = vunpack.c.l.b16 %v532
    %v2291 = vunpack.c.h.b16 %v532
    %v2292 = vunpack.c.l.b16 %v533
    %v2293 = vunpack.c.h.b16 %v533
    %v2294 = vunpack.c.l.b16 %v534
    %v2295 = vunpack.c.h.b16 %v534
    %v2296 = vunpack.c.l.b16 %v535
    %v2297 = vunpack.c.h.b16 %v535
    %v2298 = vunpack.c.l.b16 %v536
    %v2299 = vunpack.c.h.b16 %v536
    %v2300 = vunpack.c.l.b16 %v537
    %v2301 = vunpack.c.h.b16 %v537
    %v2302 = vunpack.c.l.b16 %v538
    %v2303 = vunpack.c.h.b16 %v538
    %v2304 = vunpack.c.l.b16 %v539
    %v2305 = vunpack.c.h.b16 %v539
    %v2306 = vunpack.c.l.b16 %v540
    %v2307 = vunpack.c.h.b16 %v540
    %v2308 = vunpack.c.l.b16 %v541
    %v2309 = vunpack.c.h.b16 %v541
    %v2310 = vunpack.c.l.b16 %v542
    %v2311 = vunpack.c.h.b16 %v542
    %v2312 = vunpack.c.l.b16 %v543
    %v2313 = vunpack.c.h.b16 %v543
    %v2314 = vunpack.c.l.b16 %v544
    %v2315 = vunpack.c.h.b16 %v544
    %v2316 = vunpack.c.l.b16 %v545
    %v2317 = vunpack.c.h.b16 %v545
    %v2318 = vunpack.c.l.b16 %v546
    %v2319 = vunpack.c.h.b16 %v546
    %v2320 = vunpack.c.l.b16 %v547
    %v2321 = vunpack.c.h.b16 %v547
    %v2322 = vunpack.c.l.b16 %v548
    %v2323 = vunpack.c.h.b16 %v548
    %v2324 = vunpack.c.l.b16 %v549
    %v2325 = vunpack.c.h.b16 %v549
    %v2326 = vunpack.c.l.b16 %v550
    %v2327 = vunpack.c.h.b16 %v550
    %v2328 = vunpack.c.l.b16 %v551
    %v2329 = vunpack.c.h.b16 %v551
    %v2330 = vunpack.c.l.b16 %v552
    %v2331 = vunpack.c.h.b16 %v552
    %v2332 = vunpack.c.l.b16 %v553
    %v2333 = vunpack.c.h.b16 %v553
    %v2334 = vunpack.c.l.b16 %v554
    %v2335 = vunpack.c.h.b16 %v554
    %v2336 = vunpack.c.l.b16 %v555
    %v2337 = vunpack.c.h.b16 %v555
    %v2338 = vunpack.c.l.b16 %v556
    %v2339 = vunpack.c.h.b16 %v556
    %v2340 = vunpack.c.l.b16 %v557
    %v2341 = vunpack.c.h.b16 %v557
    %v2342 = vunpack.c.l.b16 %v558
    %v2343 = vunpack.c.h.b16 %v558
    %v2344 = vunpack.c.l.b16 %v559
    %v2345 = vunpack.c.h.b16 %v559
    %v2346 = vunpack.c.l.b16 %v560
    %v2347 = vunpack.c.h.b16 %v560
    %v2348 = vunpack.c.l.b16 %v561
    %v2349 = vunpack.c.h.b16 %v561
    %v2350 = vunpack.c.l.b16 %v562
    %v2351 = vunpack.c.h.b16 %v562
    %v2352 = vunpack.c.l.b16 %v563
    %v2353 = vunpack.c.h.b16 %v563
    %v2354 = vpack.c.b16 %v1846, %v1842
    %v2355 = vpack.c.b16 %v1847, %v1843
    %v2356 = vpack.c.b16 %v1848, %v1844
    %v2357 = vpack.c.b16 %v1849, %v1845
    %v2358 = vpack.c.b16 %v1854, %v1850
    %v2359 = vpack.c.b16 %v1855, %v1851
    %v2360 = vpack.c.b16 %v1856, %v1852
    %v2361 = vpack.c.b16 %v1857, %v1853
    %v2362 = vpack.c.b16 %v1862, %v1858
    %v2363 = vpack.c.b16 %v1863, %v1859
    %v2364 = vpack.c.b16 %v1864, %v1860
    %v2365 = vpack.c.b16 %v1865, %v1861
    %v2366 = vpack.c.b16 %v1870, %v1866
    %v2367 = vpack.c.b16 %v1871, %v1867
    %v2368 = vpack.c.b16 %v1872, %v1868
    %v2369 = vpack.c.b16 %v1873, %v1869
    %v2370 = vpack.c.b16 %v1878, %v1874
    %v2371 = vpack.c.b16 %v1879, %v1875
    %v2372 = vpack.c.b16 %v1880, %v1876
    %v2373 = vpack.c.b16 %v1881, %v1877
    %v2374 = vpack.c.b16 %v1886, %v1882
    %v2375 = vpack.c.b16 %v1887, %v1883
    %v2376 = vpack.c.b16 %v1888, %v1884
    %v2377 = vpack.c.b16 %v1889, %v1885
    %v2378 = vpack.c.b16 %v1894, %v1890
    %v2379 = vpack.c.b16 %v1895, %v1891
    %v2380 = vpack.c.b16 %v1896, %v1892
    %v2381 = vpack.c.b16 %v1897, %v1893
    %v2382 = vpack.c.b16 %v1902, %v1898
    %v2383 = vpack.c.b16 %v1903, %v1899
    %v2384 = vpack.c.b16 %v1904, %v1900
    %v2385 = vpack.c.b16 %v1905, %v1901
    %v2386 = vpack.c.b16 %v1910, %v1906
    %v2387 = vpack.c.b16 %v1911, %v1907
    %v2388 = vpack.c.b16 %v1912, %v1908
    %v2389 = vpack.c.b16 %v1913, %v1909
    %v2390 = vpack.c.b16 %v1918, %v1914
    %v2391 = vpack.c.b16 %v1919, %v1915
    %v2392 = vpack.c.b16 %v1920, %v1916
    %v2393 = vpack.c.b16 %v1921, %v1917
    %v2394 = vpack.c.b16 %v1926, %v1922
    %v2395 = vpack.c.b16 %v1927, %v1923
    %v2396 = vpack.c.b16 %v1928, %v1924
    %v2397 = vpack.c.b16 %v1929, %v1925
    %v2398 = vpack.c.b16 %v1934, %v1930
    %v2399 = vpack.c.b16 %v1935, %v1931
    %v2400 = vpack.c.b16 %v1936, %v1932
    %v2401 = vpack.c.b16 %v1937, %v1933
    %v2402 = vpack.c.b16 %v1942, %v1938
    %v2403 = vpack.c.b16 %v1943, %v1939
    %v2404 = vpack.c.b16 %v1944, %v1940
    %v2405 = vpack.c.b16 %v1945, %v1941
    %v2406 = vpack.c.b16 %v1950, %v1946
    %v2407 = vpack.c.b16 %v1951, %v1947
    %v2408 = vpack.c.b16 %v1952, %v1948
    %v2409 = vpack.c.b16 %v1953, %v1949
    %v2410 = vpack.c.b16 %v1958, %v1954
    %v2411 = vpack.c.b16 %v1959, %v1955
    %v2412 = vpack.c.b16 %v1960, %v1956
    %v2413 = vpack.c.b16 %v1961, %v1957
    %v2414 = vpack.c.b16 %v1966, %v1962
    %v2415 = vpack.c.b16 %v1967, %v1963
    %v2416 = vpack.c.b16 %v1968, %v1964
    %v2417 = vpack.c.b16 %v1969, %v1965
    %v2418 = vpack.c.b16 %v1974, %v1970
    %v2419 = vpack.c.b16 %v1975, %v1971
    %v2420 = vpack.c.b16 %v1976, %v1972
    %v2421 = vpack.c.b16 %v1977, %v1973
    %v2422 = vpack.c.b16 %v1982, %v1978
    %v2423 = vpack.c.b16 %v1983, %v1979
    %v2424 = vpack.c.b16 %v1984, %v1980
    %v2425 = vpack.c.b16 %v1985, %v1981
    %v2426 = vpack.c.b16 %v1990, %v1986
    %v2427 = vpack.c.b16 %v1991, %v1987
    %v2428 = vpack.c.b16 %v1992, %v1988
    %v2429 = vpack.c.b16 %v1993, %v1989
    %v2430 = vpack.c.b16 %v1998, %v1994
    %v2431 = vpack.c.b16 %v1999, %v1995
    %v2432 = vpack.c.b16 %v2000, %v1996
    %v2433 = vpack.c.b16 %v2001, %v1997
    %v2434 = vpack.c.b16 %v2006, %v2002
    %v2435 = vpack.c.b16 %v2007, %v2003
    %v2436 = vpack.c.b16 %v2008, %v2004
    %v2437 = vpack.c.b16 %v2009, %v2005
    %v2438 = vpack.c.b16 %v2014, %v2010
    %v2439 = vpack.c.b16 %v2015, %v2011
    %v2440 = vpack.c.b16 %v2016, %v2012
    %v2441 = vpack.c.b16 %v2017, %v2013
    %v2442 = vpack.c.b16 %v2022, %v2018
    %v2443 = vpack.c.b16 %v2023, %v2019
    %v2444 = vpack.c.b16 %v2024, %v2020
    %v2445 = vpack.c.b16 %v2025, %v2021
    %v2446 = vpack.c.b16 %v2030, %v2026
    %v2447 = vpack.c.b16 %v2031, %v2027
    %v2448 = vpack.c.b16 %v2032, %v2028
    %v2449 = vpack.c.b16 %v2033, %v2029
    %v2450 = vpack.c.b16 %v2038, %v2034
    %v2451 = vpack.c.b16 %v2039, %v2035
    %v2452 = vpack.c.b16 %v2040, %v2036
    %v2453 = vpack.c.b16 %v2041, %v2037
    %v2454 = vpack.c.b16 %v2046, %v2042
    %v2455 = vpack.c.b16 %v2047, %v2043
    %v2456 = vpack.c.b16 %v2048, %v2044
    %v2457 = vpack.c.b16 %v2049, %v2045
    %v2458 = vpack.c.b16 %v2054, %v2050
    %v2459 = vpack.c.b16 %v2055, %v2051
    %v2460 = vpack.c.b16 %v2056, %v2052
    %v2461 = vpack.c.b16 %v2057, %v2053
    %v2462 = vpack.c.b16 %v2062, %v2058
    %v2463 = vpack.c.b16 %v2063, %v2059
    %v2464 = vpack.c.b16 %v2064, %v2060
    %v2465 = vpack.c.b16 %v2065, %v2061
    %v2466 = vpack.c.b16 %v2070, %v2066
    %v2467 = vpack.c.b16 %v2071, %v2067
    %v2468 = vpack.c.b16 %v2072, %v2068
    %v2469 = vpack.c.b16 %v2073, %v2069
    %v2470 = vpack.c.b16 %v2078, %v2074
    %v2471 = vpack.c.b16 %v2079, %v2075
    %v2472 = vpack.c.b16 %v2080, %v2076
    %v2473 = vpack.c.b16 %v2081, %v2077
    %v2474 = vpack.c.b16 %v2086, %v2082
    %v2475 = vpack.c.b16 %v2087, %v2083
    %v2476 = vpack.c.b16 %v2088, %v2084
    %v2477 = vpack.c.b16 %v2089, %v2085
    %v2478 = vpack.c.b16 %v2094, %v2090
    %v2479 = vpack.c.b16 %v2095, %v2091
    %v2480 = vpack.c.b16 %v2096, %v2092
    %v2481 = vpack.c.b16 %v2097, %v2093
    %v2482 = vpack.c.b16 %v2102, %v2098
    %v2483 = vpack.c.b16 %v2103, %v2099
    %v2484 = vpack.c.b16 %v2104, %v2100
    %v2485 = vpack.c.b16 %v2105, %v2101
    %v2486 = vpack.c.b16 %v2110, %v2106
    %v2487 = vpack.c.b16 %v2111, %v2107
    %v2488 = vpack.c.b16 %v2112, %v2108
    %v2489 = vpack.c.b16 %v2113, %v2109
    %v2490 = vpack.c.b16 %v2118, %v2114
    %v2491 = vpack.c.b16 %v2119, %v2115
    %v2492 = vpack.c.b16 %v2120, %v2116
    %v2493 = vpack.c.b16 %v2121, %v2117
    %v2494 = vpack.c.b16 %v2126, %v2122
    %v2495 = vpack.c.b16 %v2127, %v2123
    %v2496 = vpack.c.b16 %v2128, %v2124
    %v2497 = vpack.c.b16 %v2129, %v2125
    %v2498 = vpack.c.b16 %v2134, %v2130
    %v2499 = vpack.c.b16 %v2135, %v2131
    %v2500 = vpack.c.b16 %v2136, %v2132
    %v2501 = vpack.c.b16 %v2137, %v2133
    %v2502 = vpack.c.b16 %v2142, %v2138
    %v2503 = vpack.c.b16 %v2143, %v2139
    %v2504 = vpack.c.b16 %v2144, %v2140
    %v2505 = vpack.c.b16 %v2145, %v2141
    %v2506 = vpack.c.b16 %v2150, %v2146
    %v2507 = vpack.c.b16 %v2151, %v2147
    %v2508 = vpack.c.b16 %v2152, %v2148
    %v2509 = vpack.c.b16 %v2153, %v2149
    %v2510 = vpack.c.b16 %v2158, %v2154
    %v2511 = vpack.c.b16 %v2159, %v2155
    %v2512 = vpack.c.b16 %v2160, %v2156
    %v2513 = vpack.c.b16 %v2161, %v2157
    %v2514 = vpack.c.b16 %v2166, %v2162
    %v2515 = vpack.c.b16 %v2167, %v2163
    %v2516 = vpack.c.b16 %v2168, %v2164
    %v2517 = vpack.c.b16 %v2169, %v2165
    %v2518 = vpack.c.b16 %v2174, %v2170
    %v2519 = vpack.c.b16 %v2175, %v2171
    %v2520 = vpack.c.b16 %v2176, %v2172
    %v2521 = vpack.c.b16 %v2177, %v2173
    %v2522 = vpack.c.b16 %v2182, %v2178
    %v2523 = vpack.c.b16 %v2183, %v2179
    %v2524 = vpack.c.b16 %v2184, %v2180
    %v2525 = vpack.c.b16 %v2185, %v2181
    %v2526 = vpack.c.b16 %v2190, %v2186
    %v2527 = vpack.c.b16 %v2191, %v2187
    %v2528 = vpack.c.b16 %v2192, %v2188
    %v2529 = vpack.c.b16 %v2193, %v2189
    %v2530 = vpack.c.b16 %v2198, %v2194
    %v2531 = vpack.c.b16 %v2199, %v2195
    %v2532 = vpack.c.b16 %v2200, %v2196
    %v2533 = vpack.c.b16 %v2201, %v2197
    %v2534 = vpack.c.b16 %v2206, %v2202
    %v2535 = vpack.c.b16 %v2207, %v2203
    %v2536 = vpack.c.b16 %v2208, %v2204
    %v2537 = vpack.c.b16 %v2209, %v2205
    %v2538 = vpack.c.b16 %v2214, %v2210
    %v2539 = vpack.c.b16 %v2215, %v2211
    %v2540 = vpack.c.b16 %v2216, %v2212
    %v2541 = vpack.c.b16 %v2217, %v2213
    %v2542 = vpack.c.b16 %v2222, %v2218
    %v2543 = vpack.c.b16 %v2223, %v2219
    %v2544 = vpack.c.b16 %v2224, %v2220
    %v2545 = vpack.c.b16 %v2225, %v2221
    %v2546 = vpack.c.b16 %v2230, %v2226
    %v2547 = vpack.c.b16 %v2231, %v2227
    %v2548 = vpack.c.b16 %v2232, %v2228
    %v2549 = vpack.c.b16 %v2233, %v2229
    %v2550 = vpack.c.b16 %v2238, %v2234
    %v2551 = vpack.c.b16 %v2239, %v2235
    %v2552 = vpack.c.b16 %v2240, %v2236
    %v2553 = vpack.c.b16 %v2241, %v2237
    %v2554 = vpack.c.b16 %v2246, %v2242
    %v2555 = vpack.c.b16 %v2247, %v2243
    %v2556 = vpack.c.b16 %v2248, %v2244
    %v2557 = vpack.c.b16 %v2249, %v2245
    %v2558 = vpack.c.b16 %v2254, %v2250
    %v2559 = vpack.c.b16 %v2255, %v2251
    %v2560 = vpack.c.b16 %v2256, %v2252
    %v2561 = vpack.c.b16 %v2257, %v2253
    %v2562 = vpack.c.b16 %v2262, %v2258
    %v2563 = vpack.c.b16 %v2263, %v2259
    %v2564 = vpack.c.b16 %v2264, %v2260
    %v2565 = vpack.c.b16 %v2265, %v2261
    %v2566 = vpack.c.b16 %v2270, %v2266
    %v2567 = vpack.c.b16 %v2271, %v2267
    %v2568 = vpack.c.b16 %v2272, %v2268
    %v2569 = vpack.c.b16 %v2273, %v2269
    %v2570 = vpack.c.b16 %v2278, %v2274
    %v2571 = vpack.c.b16 %v2279, %v2275
    %v2572 = vpack.c.b16 %v2280, %v2276
    %v2573 = vpack.c.b16 %v2281, %v2277
    %v2574 = vpack.c.b16 %v2286, %v2282
    %v2575 = vpack.c.b16 %v2287, %v2283
    %v2576 = vpack.c.b16 %v2288, %v2284
    %v2577 = vpack.c.b16 %v2289, %v2285
    %v2578 = vpack.c.b16 %v2294, %v2290
    %v2579 = vpack.c.b16 %v2295, %v2291
    %v2580 = vpack.c.b16 %v2296, %v2292
    %v2581 = vpack.c.b16 %v2297, %v2293
    %v2582 = vpack.c.b16 %v2302, %v2298
    %v2583 = vpack.c.b16 %v2303, %v2299
    %v2584 = vpack.c.b16 %v2304, %v2300
    %v2585 = vpack.c.b16 %v2305, %v2301
    %v2586 = vpack.c.b16 %v2310, %v2306
    %v2587 = vpack.c.b16 %v2311, %v2307
    %v2588 = vpack.c.b16 %v2312, %v2308
    %v2589 = vpack.c.b16 %v2313, %v2309
    %v2590 = vpack.c.b16 %v2318, %v2314
    %v2591 = vpack.c.b16 %v2319, %v2315
    %v2592 = vpack.c.b16 %v2320, %v2316
    %v2593 = vpack.c.b16 %v2321, %v2317
    %v2594 = vpack.c.b16 %v2326, %v2322
    %v2595 = vpack.c.b16 %v2327, %v2323
    %v2596 = vpack.c.b16 %v2328, %v2324
    %v2597 = vpack.c.b16 %v2329, %v2325
    %v2598 = vpack.c.b16 %v2334, %v2330
    %v2599 = vpack.c.b16 %v2335, %v2331
    %v2600 = vpack.c.b16 %v2336, %v2332
    %v2601 = vpack.c.b16 %v2337, %v2333
    %v2602 = vpack.c.b16 %v2342, %v2338
    %v2603 = vpack.c.b16 %v2343, %v2339
    %v2604 = vpack.c.b16 %v2344, %v2340
    %v2605 = vpack.c.b16 %v2345, %v2341
    %v2606 = vpack.c.b16 %v2350, %v2346
    %v2607 = vpack.c.b16 %v2351, %v2347
    %v2608 = vpack.c.b16 %v2352, %v2348
    %v2609 = vpack.c.b16 %v2353, %v2349
    %2866 = vmatprep.subr.bf16.mxu0 %v2383
    %2867 = vmatpush1.bf16.msra.mxu0 %v2382
    %2868 = vmatprep.subr.bf16.mxu0 %v2379
    %2869 = vmatpush1.bf16.msra.mxu0 %v2378
    %2870 = vmatprep.subr.bf16.mxu0 %v2375
    %2871 = vmatpush1.bf16.msra.mxu0 %v2374
    %2872 = vmatprep.subr.bf16.mxu0 %v2371
    %2873 = vmatpush1.bf16.msra.mxu0 %v2370
    %2874 = vmatprep.subr.bf16.mxu0 %v2367
    %2875 = vmatpush1.bf16.msra.mxu0 %v2366
    %2876 = vmatprep.subr.bf16.mxu0 %v2363
    %2877 = vmatpush1.bf16.msra.mxu0 %v2362
    %2878 = vmatprep.subr.bf16.mxu0 %v2359
    %2879 = vmatpush1.bf16.msra.mxu0 %v2358
    %2880 = vmatprep.subr.bf16.mxu0 %v2355
    %2881 = vmatpush1.bf16.msra.mxu0 %v2354
    %2882 = vmatprep.subr.bf16.mxu0 %v2415
    %2883 = vmatpush2.bf16.msra.mxu0 %v2414
    %2884 = vmatprep.subr.bf16.mxu0 %v2411
    %2885 = vmatpush2.bf16.msra.mxu0 %v2410
    %2886 = vmatprep.subr.bf16.mxu0 %v2407
    %2887 = vmatpush2.bf16.msra.mxu0 %v2406
    %2888 = vmatprep.subr.bf16.mxu0 %v2403
    %2889 = vmatpush2.bf16.msra.mxu0 %v2402
    %2890 = vmatprep.subr.bf16.mxu0 %v2399
    %2891 = vmatpush2.bf16.msra.mxu0 %v2398
    %2892 = vmatprep.subr.bf16.mxu0 %v2395
    %2893 = vmatpush2.bf16.msra.mxu0 %v2394
    %2894 = vmatprep.subr.bf16.mxu0 %v2391
    %2895 = vmatpush2.bf16.msra.mxu0 %v2390
    %2896 = vmatprep.subr.bf16.mxu0 %v2387
    %2897 = vmatpush2.bf16.msra.mxu0 %v2386
    %2898 = vmatprep.mubr.bf16.mxu0 %v1187
    %2899 = vmatmul.mubr.bf16.gmra.mxu0 %v1186
    %v2900 = vpop.f32.mrf.mxu0
    %v2901 = vadd.f32 %v569, %v2900
    %v2902 = vpop.f32.mrf.mxu0
    %v2903 = vadd.f32 %v573, %v2902
    %v2904 = vpop.f32.mrf.mxu0
    %v2905 = vadd.f32 %v569, %v2904
    %v2906 = vpop.f32.mrf.mxu0
    %v2907 = vadd.f32 %v573, %v2906
    %2908 = vmatprep.mubr.bf16.mxu0 %v1195
    %2909 = vmatmul.mubr.bf16.gmra.mxu0 %v1194
    %v2910 = vpop.f32.mrf.mxu0
    %v2911 = vadd.f32 %v569, %v2910
    %v2912 = vpop.f32.mrf.mxu0
    %v2913 = vadd.f32 %v573, %v2912
    %v2914 = vpop.f32.mrf.mxu0
    %v2915 = vadd.f32 %v569, %v2914
    %v2916 = vpop.f32.mrf.mxu0
    %v2917 = vadd.f32 %v573, %v2916
    %2918 = vmatprep.mubr.bf16.mxu0 %v1203
    %2919 = vmatmul.mubr.bf16.gmra.mxu0 %v1202
    %v2920 = vpop.f32.mrf.mxu0
    %v2921 = vadd.f32 %v569, %v2920
    %v2922 = vpop.f32.mrf.mxu0
    %v2923 = vadd.f32 %v573, %v2922
    %v2924 = vpop.f32.mrf.mxu0
    %v2925 = vadd.f32 %v569, %v2924
    %v2926 = vpop.f32.mrf.mxu0
    %v2927 = vadd.f32 %v573, %v2926
    %2928 = vmatprep.mubr.bf16.mxu0 %v1211
    %2929 = vmatmul.mubr.bf16.gmra.mxu0 %v1210
    %v2930 = vpop.f32.mrf.mxu0
    %v2931 = vadd.f32 %v569, %v2930
    %v2932 = vpop.f32.mrf.mxu0
    %v2933 = vadd.f32 %v573, %v2932
    %v2934 = vpop.f32.mrf.mxu0
    %v2935 = vadd.f32 %v569, %v2934
    %v2936 = vpop.f32.mrf.mxu0
    %v2937 = vadd.f32 %v573, %v2936
    %2938 = vmatprep.mubr.bf16.mxu0 %v1219
    %2939 = vmatmul.mubr.bf16.gmra.mxu0 %v1218
    %v2940 = vpop.f32.mrf.mxu0
    %v2941 = vadd.f32 %v569, %v2940
    %v2942 = vpop.f32.mrf.mxu0
    %v2943 = vadd.f32 %v573, %v2942
    %v2944 = vpop.f32.mrf.mxu0
    %v2945 = vadd.f32 %v569, %v2944
    %v2946 = vpop.f32.mrf.mxu0
    %v2947 = vadd.f32 %v573, %v2946
    %2948 = vmatprep.mubr.bf16.mxu0 %v1227
    %2949 = vmatmul.mubr.bf16.gmra.mxu0 %v1226
    %v2950 = vpop.f32.mrf.mxu0
    %v2951 = vadd.f32 %v569, %v2950
    %v2952 = vpop.f32.mrf.mxu0
    %v2953 = vadd.f32 %v573, %v2952
    %v2954 = vpop.f32.mrf.mxu0
    %v2955 = vadd.f32 %v569, %v2954
    %v2956 = vpop.f32.mrf.mxu0
    %v2957 = vadd.f32 %v573, %v2956
    %2958 = vmatprep.mubr.bf16.mxu0 %v1235
    %2959 = vmatmul.mubr.bf16.gmra.mxu0 %v1234
    %v2960 = vpop.f32.mrf.mxu0
    %v2961 = vadd.f32 %v569, %v2960
    %v2962 = vpop.f32.mrf.mxu0
    %v2963 = vadd.f32 %v573, %v2962
    %v2964 = vpop.f32.mrf.mxu0
    %v2965 = vadd.f32 %v569, %v2964
    %v2966 = vpop.f32.mrf.mxu0
    %v2967 = vadd.f32 %v573, %v2966
    %2968 = vmatprep.mubr.bf16.mxu0 %v1243
    %2969 = vmatmul.mubr.bf16.gmra.mxu0 %v1242
    %v2970 = vpop.f32.mrf.mxu0
    %v2971 = vadd.f32 %v569, %v2970
    %v2972 = vpop.f32.mrf.mxu0
    %v2973 = vadd.f32 %v573, %v2972
    %v2974 = vpop.f32.mrf.mxu0
    %v2975 = vadd.f32 %v569, %v2974
    %v2976 = vpop.f32.mrf.mxu0
    %v2977 = vadd.f32 %v573, %v2976
    %2978 = vmatprep.mubr.bf16.mxu0 %v1251
    %2979 = vmatmul.mubr.bf16.gmra.mxu0 %v1250
    %v2980 = vpop.f32.mrf.mxu0
    %v2981 = vadd.f32 %v569, %v2980
    %v2982 = vpop.f32.mrf.mxu0
    %v2983 = vadd.f32 %v573, %v2982
    %v2984 = vpop.f32.mrf.mxu0
    %v2985 = vadd.f32 %v569, %v2984
    %v2986 = vpop.f32.mrf.mxu0
    %v2987 = vadd.f32 %v573, %v2986
    %2988 = vmatprep.mubr.bf16.mxu0 %v1259
    %2989 = vmatmul.mubr.bf16.gmra.mxu0 %v1258
    %v2990 = vpop.f32.mrf.mxu0
    %v2991 = vadd.f32 %v569, %v2990
    %v2992 = vpop.f32.mrf.mxu0
    %v2993 = vadd.f32 %v573, %v2992
    %v2994 = vpop.f32.mrf.mxu0
    %v2995 = vadd.f32 %v569, %v2994
    %v2996 = vpop.f32.mrf.mxu0
    %v2997 = vadd.f32 %v573, %v2996
    %2998 = vmatprep.mubr.bf16.mxu0 %v1267
    %2999 = vmatmul.mubr.bf16.gmra.mxu0 %v1266
    %v3000 = vpop.f32.mrf.mxu0
    %v3001 = vadd.f32 %v569, %v3000
    %v3002 = vpop.f32.mrf.mxu0
    %v3003 = vadd.f32 %v573, %v3002
    %v3004 = vpop.f32.mrf.mxu0
    %v3005 = vadd.f32 %v569, %v3004
    %v3006 = vpop.f32.mrf.mxu0
    %v3007 = vadd.f32 %v573, %v3006
    %3008 = vmatprep.mubr.bf16.mxu0 %v1275
    %3009 = vmatmul.mubr.bf16.gmra.mxu0 %v1274
    %v3010 = vpop.f32.mrf.mxu0
    %v3011 = vadd.f32 %v569, %v3010
    %v3012 = vpop.f32.mrf.mxu0
    %v3013 = vadd.f32 %v573, %v3012
    %v3014 = vpop.f32.mrf.mxu0
    %v3015 = vadd.f32 %v569, %v3014
    %v3016 = vpop.f32.mrf.mxu0
    %v3017 = vadd.f32 %v573, %v3016
    %3018 = vmatprep.mubr.bf16.mxu0 %v1283
    %3019 = vmatmul.mubr.bf16.gmra.mxu0 %v1282
    %v3020 = vpop.f32.mrf.mxu0
    %v3021 = vadd.f32 %v569, %v3020
    %v3022 = vpop.f32.mrf.mxu0
    %v3023 = vadd.f32 %v573, %v3022
    %v3024 = vpop.f32.mrf.mxu0
    %v3025 = vadd.f32 %v569, %v3024
    %v3026 = vpop.f32.mrf.mxu0
    %v3027 = vadd.f32 %v573, %v3026
    %3028 = vmatprep.mubr.bf16.mxu0 %v1291
    %3029 = vmatmul.mubr.bf16.gmra.mxu0 %v1290
    %v3030 = vpop.f32.mrf.mxu0
    %v3031 = vadd.f32 %v569, %v3030
    %v3032 = vpop.f32.mrf.mxu0
    %v3033 = vadd.f32 %v573, %v3032
    %v3034 = vpop.f32.mrf.mxu0
    %v3035 = vadd.f32 %v569, %v3034
    %v3036 = vpop.f32.mrf.mxu0
    %v3037 = vadd.f32 %v573, %v3036
    %3038 = vmatprep.mubr.bf16.mxu0 %v1299
    %3039 = vmatmul.mubr.bf16.gmra.mxu0 %v1298
    %v3040 = vpop.f32.mrf.mxu0
    %v3041 = vadd.f32 %v569, %v3040
    %v3042 = vpop.f32.mrf.mxu0
    %v3043 = vadd.f32 %v573, %v3042
    %v3044 = vpop.f32.mrf.mxu0
    %v3045 = vadd.f32 %v569, %v3044
    %v3046 = vpop.f32.mrf.mxu0
    %v3047 = vadd.f32 %v573, %v3046
    %3048 = vmatprep.mubr.bf16.mxu0 %v1307
    %3049 = vmatmul.mubr.bf16.gmra.mxu0 %v1306
    %v3050 = vpop.f32.mrf.mxu0
    %v3051 = vadd.f32 %v569, %v3050
    %v3052 = vpop.f32.mrf.mxu0
    %v3053 = vadd.f32 %v573, %v3052
    %v3054 = vpop.f32.mrf.mxu0
    %v3055 = vadd.f32 %v569, %v3054
    %v3056 = vpop.f32.mrf.mxu0
    %v3057 = vadd.f32 %v573, %v3056
    %3058 = vmatprep.mubr.bf16.mxu0 %v1315
    %3059 = vmatmul.mubr.bf16.gmra.mxu0 %v1314
    %v3060 = vpop.f32.mrf.mxu0
    %v3061 = vadd.f32 %v569, %v3060
    %v3062 = vpop.f32.mrf.mxu0
    %v3063 = vadd.f32 %v573, %v3062
    %v3064 = vpop.f32.mrf.mxu0
    %v3065 = vadd.f32 %v569, %v3064
    %v3066 = vpop.f32.mrf.mxu0
    %v3067 = vadd.f32 %v573, %v3066
    %3068 = vmatprep.mubr.bf16.mxu0 %v1323
    %3069 = vmatmul.mubr.bf16.gmra.mxu0 %v1322
    %v3070 = vpop.f32.mrf.mxu0
    %v3071 = vadd.f32 %v569, %v3070
    %v3072 = vpop.f32.mrf.mxu0
    %v3073 = vadd.f32 %v573, %v3072
    %v3074 = vpop.f32.mrf.mxu0
    %v3075 = vadd.f32 %v569, %v3074
    %v3076 = vpop.f32.mrf.mxu0
    %v3077 = vadd.f32 %v573, %v3076
    %3078 = vmatprep.mubr.bf16.mxu0 %v1331
    %3079 = vmatmul.mubr.bf16.gmra.mxu0 %v1330
    %v3080 = vpop.f32.mrf.mxu0
    %v3081 = vadd.f32 %v569, %v3080
    %v3082 = vpop.f32.mrf.mxu0
    %v3083 = vadd.f32 %v573, %v3082
    %v3084 = vpop.f32.mrf.mxu0
    %v3085 = vadd.f32 %v569, %v3084
    %v3086 = vpop.f32.mrf.mxu0
    %v3087 = vadd.f32 %v573, %v3086
    %3088 = vmatprep.mubr.bf16.mxu0 %v1339
    %3089 = vmatmul.mubr.bf16.gmra.mxu0 %v1338
    %v3090 = vpop.f32.mrf.mxu0
    %v3091 = vadd.f32 %v569, %v3090
    %v3092 = vpop.f32.mrf.mxu0
    %v3093 = vadd.f32 %v573, %v3092
    %v3094 = vpop.f32.mrf.mxu0
    %v3095 = vadd.f32 %v569, %v3094
    %v3096 = vpop.f32.mrf.mxu0
    %v3097 = vadd.f32 %v573, %v3096
    %3098 = vmatprep.mubr.bf16.mxu0 %v1347
    %3099 = vmatmul.mubr.bf16.gmra.mxu0 %v1346
    %v3100 = vpop.f32.mrf.mxu0
    %v3101 = vadd.f32 %v569, %v3100
    %v3102 = vpop.f32.mrf.mxu0
    %v3103 = vadd.f32 %v573, %v3102
    %v3104 = vpop.f32.mrf.mxu0
    %v3105 = vadd.f32 %v569, %v3104
    %v3106 = vpop.f32.mrf.mxu0
    %v3107 = vadd.f32 %v573, %v3106
    %3108 = vmatprep.mubr.bf16.mxu0 %v1355
    %3109 = vmatmul.mubr.bf16.gmra.mxu0 %v1354
    %v3110 = vpop.f32.mrf.mxu0
    %v3111 = vadd.f32 %v569, %v3110
    %v3112 = vpop.f32.mrf.mxu0
    %v3113 = vadd.f32 %v573, %v3112
    %v3114 = vpop.f32.mrf.mxu0
    %v3115 = vadd.f32 %v569, %v3114
    %v3116 = vpop.f32.mrf.mxu0
    %v3117 = vadd.f32 %v573, %v3116
    %3118 = vmatprep.mubr.bf16.mxu0 %v1363
    %3119 = vmatmul.mubr.bf16.gmra.mxu0 %v1362
    %v3120 = vpop.f32.mrf.mxu0
    %v3121 = vadd.f32 %v569, %v3120
    %v3122 = vpop.f32.mrf.mxu0
    %v3123 = vadd.f32 %v573, %v3122
    %v3124 = vpop.f32.mrf.mxu0
    %v3125 = vadd.f32 %v569, %v3124
    %v3126 = vpop.f32.mrf.mxu0
    %v3127 = vadd.f32 %v573, %v3126
    %3128 = vmatprep.mubr.bf16.mxu0 %v1371
    %3129 = vmatmul.mubr.bf16.gmra.mxu0 %v1370
    %v3130 = vpop.f32.mrf.mxu0
    %v3131 = vadd.f32 %v569, %v3130
    %v3132 = vpop.f32.mrf.mxu0
    %v3133 = vadd.f32 %v573, %v3132
    %v3134 = vpop.f32.mrf.mxu0
    %v3135 = vadd.f32 %v569, %v3134
    %v3136 = vpop.f32.mrf.mxu0
    %v3137 = vadd.f32 %v573, %v3136
    %3138 = vmatprep.mubr.bf16.mxu0 %v1379
    %3139 = vmatmul.mubr.bf16.gmra.mxu0 %v1378
    %v3140 = vpop.f32.mrf.mxu0
    %v3141 = vadd.f32 %v569, %v3140
    %v3142 = vpop.f32.mrf.mxu0
    %v3143 = vadd.f32 %v573, %v3142
    %v3144 = vpop.f32.mrf.mxu0
    %v3145 = vadd.f32 %v569, %v3144
    %v3146 = vpop.f32.mrf.mxu0
    %v3147 = vadd.f32 %v573, %v3146
    %3148 = vdwg.mxu0
    %3149 = vmatprep.subr.bf16.mxu0 %v2447
    %3150 = vmatpush1.bf16.msra.mxu0 %v2446
    %3151 = vmatprep.subr.bf16.mxu0 %v2443
    %3152 = vmatpush1.bf16.msra.mxu0 %v2442
    %3153 = vmatprep.subr.bf16.mxu0 %v2439
    %3154 = vmatpush1.bf16.msra.mxu0 %v2438
    %3155 = vmatprep.subr.bf16.mxu0 %v2435
    %3156 = vmatpush1.bf16.msra.mxu0 %v2434
    %3157 = vmatprep.subr.bf16.mxu0 %v2431
    %3158 = vmatpush1.bf16.msra.mxu0 %v2430
    %3159 = vmatprep.subr.bf16.mxu0 %v2427
    %3160 = vmatpush1.bf16.msra.mxu0 %v2426
    %3161 = vmatprep.subr.bf16.mxu0 %v2423
    %3162 = vmatpush1.bf16.msra.mxu0 %v2422
    %3163 = vmatprep.subr.bf16.mxu0 %v2419
    %3164 = vmatpush1.bf16.msra.mxu0 %v2418
    %3165 = vmatprep.subr.bf16.mxu0 %v2479
    %3166 = vmatpush2.bf16.msra.mxu0 %v2478
    %3167 = vmatprep.subr.bf16.mxu0 %v2475
    %3168 = vmatpush2.bf16.msra.mxu0 %v2474
    %3169 = vmatprep.subr.bf16.mxu0 %v2471
    %3170 = vmatpush2.bf16.msra.mxu0 %v2470
    %3171 = vmatprep.subr.bf16.mxu0 %v2467
    %3172 = vmatpush2.bf16.msra.mxu0 %v2466
    %3173 = vmatprep.subr.bf16.mxu0 %v2463
    %3174 = vmatpush2.bf16.msra.mxu0 %v2462
    %3175 = vmatprep.subr.bf16.mxu0 %v2459
    %3176 = vmatpush2.bf16.msra.mxu0 %v2458
    %3177 = vmatprep.subr.bf16.mxu0 %v2455
    %3178 = vmatpush2.bf16.msra.mxu0 %v2454
    %3179 = vmatprep.subr.bf16.mxu0 %v2451
    %3180 = vmatpush2.bf16.msra.mxu0 %v2450
    %3181 = vmatprep.mubr.bf16.mxu0 %v1189
    %3182 = vmatmul.mubr.bf16.gmra.mxu0 %v1188
    %v3183 = vpop.f32.mrf.mxu0
    %v3184 = vadd.f32 %v2901, %v3183
    %v3185 = vpop.f32.mrf.mxu0
    %v3186 = vadd.f32 %v2903, %v3185
    %v3187 = vpop.f32.mrf.mxu0
    %v3188 = vadd.f32 %v2905, %v3187
    %v3189 = vpop.f32.mrf.mxu0
    %v3190 = vadd.f32 %v2907, %v3189
    %3191 = vmatprep.mubr.bf16.mxu0 %v1197
    %3192 = vmatmul.mubr.bf16.gmra.mxu0 %v1196
    %v3193 = vpop.f32.mrf.mxu0
    %v3194 = vadd.f32 %v2911, %v3193
    %v3195 = vpop.f32.mrf.mxu0
    %v3196 = vadd.f32 %v2913, %v3195
    %v3197 = vpop.f32.mrf.mxu0
    %v3198 = vadd.f32 %v2915, %v3197
    %v3199 = vpop.f32.mrf.mxu0
    %v3200 = vadd.f32 %v2917, %v3199
    %3201 = vmatprep.mubr.bf16.mxu0 %v1205
    %3202 = vmatmul.mubr.bf16.gmra.mxu0 %v1204
    %v3203 = vpop.f32.mrf.mxu0
    %v3204 = vadd.f32 %v2921, %v3203
    %v3205 = vpop.f32.mrf.mxu0
    %v3206 = vadd.f32 %v2923, %v3205
    %v3207 = vpop.f32.mrf.mxu0
    %v3208 = vadd.f32 %v2925, %v3207
    %v3209 = vpop.f32.mrf.mxu0
    %v3210 = vadd.f32 %v2927, %v3209
    %3211 = vmatprep.mubr.bf16.mxu0 %v1213
    %3212 = vmatmul.mubr.bf16.gmra.mxu0 %v1212
    %v3213 = vpop.f32.mrf.mxu0
    %v3214 = vadd.f32 %v2931, %v3213
    %v3215 = vpop.f32.mrf.mxu0
    %v3216 = vadd.f32 %v2933, %v3215
    %v3217 = vpop.f32.mrf.mxu0
    %v3218 = vadd.f32 %v2935, %v3217
    %v3219 = vpop.f32.mrf.mxu0
    %v3220 = vadd.f32 %v2937, %v3219
    %3221 = vmatprep.mubr.bf16.mxu0 %v1221
    %3222 = vmatmul.mubr.bf16.gmra.mxu0 %v1220
    %v3223 = vpop.f32.mrf.mxu0
    %v3224 = vadd.f32 %v2941, %v3223
    %v3225 = vpop.f32.mrf.mxu0
    %v3226 = vadd.f32 %v2943, %v3225
    %v3227 = vpop.f32.mrf.mxu0
    %v3228 = vadd.f32 %v2945, %v3227
    %v3229 = vpop.f32.mrf.mxu0
    %v3230 = vadd.f32 %v2947, %v3229
    %3231 = vmatprep.mubr.bf16.mxu0 %v1229
    %3232 = vmatmul.mubr.bf16.gmra.mxu0 %v1228
    %v3233 = vpop.f32.mrf.mxu0
    %v3234 = vadd.f32 %v2951, %v3233
    %v3235 = vpop.f32.mrf.mxu0
    %v3236 = vadd.f32 %v2953, %v3235
    %v3237 = vpop.f32.mrf.mxu0
    %v3238 = vadd.f32 %v2955, %v3237
    %v3239 = vpop.f32.mrf.mxu0
    %v3240 = vadd.f32 %v2957, %v3239
    %3241 = vmatprep.mubr.bf16.mxu0 %v1237
    %3242 = vmatmul.mubr.bf16.gmra.mxu0 %v1236
    %v3243 = vpop.f32.mrf.mxu0
    %v3244 = vadd.f32 %v2961, %v3243
    %v3245 = vpop.f32.mrf.mxu0
    %v3246 = vadd.f32 %v2963, %v3245
    %v3247 = vpop.f32.mrf.mxu0
    %v3248 = vadd.f32 %v2965, %v3247
    %v3249 = vpop.f32.mrf.mxu0
    %v3250 = vadd.f32 %v2967, %v3249
    %3251 = vmatprep.mubr.bf16.mxu0 %v1245
    %3252 = vmatmul.mubr.bf16.gmra.mxu0 %v1244
    %v3253 = vpop.f32.mrf.mxu0
    %v3254 = vadd.f32 %v2971, %v3253
    %v3255 = vpop.f32.mrf.mxu0
    %v3256 = vadd.f32 %v2973, %v3255
    %v3257 = vpop.f32.mrf.mxu0
    %v3258 = vadd.f32 %v2975, %v3257
    %v3259 = vpop.f32.mrf.mxu0
    %v3260 = vadd.f32 %v2977, %v3259
    %3261 = vmatprep.mubr.bf16.mxu0 %v1253
    %3262 = vmatmul.mubr.bf16.gmra.mxu0 %v1252
    %v3263 = vpop.f32.mrf.mxu0
    %v3264 = vadd.f32 %v2981, %v3263
    %v3265 = vpop.f32.mrf.mxu0
    %v3266 = vadd.f32 %v2983, %v3265
    %v3267 = vpop.f32.mrf.mxu0
    %v3268 = vadd.f32 %v2985, %v3267
    %v3269 = vpop.f32.mrf.mxu0
    %v3270 = vadd.f32 %v2987, %v3269
    %3271 = vmatprep.mubr.bf16.mxu0 %v1261
    %3272 = vmatmul.mubr.bf16.gmra.mxu0 %v1260
    %v3273 = vpop.f32.mrf.mxu0
    %v3274 = vadd.f32 %v2991, %v3273
    %v3275 = vpop.f32.mrf.mxu0
    %v3276 = vadd.f32 %v2993, %v3275
    %v3277 = vpop.f32.mrf.mxu0
    %v3278 = vadd.f32 %v2995, %v3277
    %v3279 = vpop.f32.mrf.mxu0
    %v3280 = vadd.f32 %v2997, %v3279
    %3281 = vmatprep.mubr.bf16.mxu0 %v1269
    %3282 = vmatmul.mubr.bf16.gmra.mxu0 %v1268
    %v3283 = vpop.f32.mrf.mxu0
    %v3284 = vadd.f32 %v3001, %v3283
    %v3285 = vpop.f32.mrf.mxu0
    %v3286 = vadd.f32 %v3003, %v3285
    %v3287 = vpop.f32.mrf.mxu0
    %v3288 = vadd.f32 %v3005, %v3287
    %v3289 = vpop.f32.mrf.mxu0
    %v3290 = vadd.f32 %v3007, %v3289
    %3291 = vmatprep.mubr.bf16.mxu0 %v1277
    %3292 = vmatmul.mubr.bf16.gmra.mxu0 %v1276
    %v3293 = vpop.f32.mrf.mxu0
    %v3294 = vadd.f32 %v3011, %v3293
    %v3295 = vpop.f32.mrf.mxu0
    %v3296 = vadd.f32 %v3013, %v3295
    %v3297 = vpop.f32.mrf.mxu0
    %v3298 = vadd.f32 %v3015, %v3297
    %v3299 = vpop.f32.mrf.mxu0
    %v3300 = vadd.f32 %v3017, %v3299
    %3301 = vmatprep.mubr.bf16.mxu0 %v1285
    %3302 = vmatmul.mubr.bf16.gmra.mxu0 %v1284
    %v3303 = vpop.f32.mrf.mxu0
    %v3304 = vadd.f32 %v3021, %v3303
    %v3305 = vpop.f32.mrf.mxu0
    %v3306 = vadd.f32 %v3023, %v3305
    %v3307 = vpop.f32.mrf.mxu0
    %v3308 = vadd.f32 %v3025, %v3307
    %v3309 = vpop.f32.mrf.mxu0
    %v3310 = vadd.f32 %v3027, %v3309
    %3311 = vmatprep.mubr.bf16.mxu0 %v1293
    %3312 = vmatmul.mubr.bf16.gmra.mxu0 %v1292
    %v3313 = vpop.f32.mrf.mxu0
    %v3314 = vadd.f32 %v3031, %v3313
    %v3315 = vpop.f32.mrf.mxu0
    %v3316 = vadd.f32 %v3033, %v3315
    %v3317 = vpop.f32.mrf.mxu0
    %v3318 = vadd.f32 %v3035, %v3317
    %v3319 = vpop.f32.mrf.mxu0
    %v3320 = vadd.f32 %v3037, %v3319
    %3321 = vmatprep.mubr.bf16.mxu0 %v1301
    %3322 = vmatmul.mubr.bf16.gmra.mxu0 %v1300
    %v3323 = vpop.f32.mrf.mxu0
    %v3324 = vadd.f32 %v3041, %v3323
    %v3325 = vpop.f32.mrf.mxu0
    %v3326 = vadd.f32 %v3043, %v3325
    %v3327 = vpop.f32.mrf.mxu0
    %v3328 = vadd.f32 %v3045, %v3327
    %v3329 = vpop.f32.mrf.mxu0
    %v3330 = vadd.f32 %v3047, %v3329
    %3331 = vmatprep.mubr.bf16.mxu0 %v1309
    %3332 = vmatmul.mubr.bf16.gmra.mxu0 %v1308
    %v3333 = vpop.f32.mrf.mxu0
    %v3334 = vadd.f32 %v3051, %v3333
    %v3335 = vpop.f32.mrf.mxu0
    %v3336 = vadd.f32 %v3053, %v3335
    %v3337 = vpop.f32.mrf.mxu0
    %v3338 = vadd.f32 %v3055, %v3337
    %v3339 = vpop.f32.mrf.mxu0
    %v3340 = vadd.f32 %v3057, %v3339
    %3341 = vmatprep.mubr.bf16.mxu0 %v1317
    %3342 = vmatmul.mubr.bf16.gmra.mxu0 %v1316
    %v3343 = vpop.f32.mrf.mxu0
    %v3344 = vadd.f32 %v3061, %v3343
    %v3345 = vpop.f32.mrf.mxu0
    %v3346 = vadd.f32 %v3063, %v3345
    %v3347 = vpop.f32.mrf.mxu0
    %v3348 = vadd.f32 %v3065, %v3347
    %v3349 = vpop.f32.mrf.mxu0
    %v3350 = vadd.f32 %v3067, %v3349
    %3351 = vmatprep.mubr.bf16.mxu0 %v1325
    %3352 = vmatmul.mubr.bf16.gmra.mxu0 %v1324
    %v3353 = vpop.f32.mrf.mxu0
    %v3354 = vadd.f32 %v3071, %v3353
    %v3355 = vpop.f32.mrf.mxu0
    %v3356 = vadd.f32 %v3073, %v3355
    %v3357 = vpop.f32.mrf.mxu0
    %v3358 = vadd.f32 %v3075, %v3357
    %v3359 = vpop.f32.mrf.mxu0
    %v3360 = vadd.f32 %v3077, %v3359
    %3361 = vmatprep.mubr.bf16.mxu0 %v1333
    %3362 = vmatmul.mubr.bf16.gmra.mxu0 %v1332
    %v3363 = vpop.f32.mrf.mxu0
    %v3364 = vadd.f32 %v3081, %v3363
    %v3365 = vpop.f32.mrf.mxu0
    %v3366 = vadd.f32 %v3083, %v3365
    %v3367 = vpop.f32.mrf.mxu0
    %v3368 = vadd.f32 %v3085, %v3367
    %v3369 = vpop.f32.mrf.mxu0
    %v3370 = vadd.f32 %v3087, %v3369
    %3371 = vmatprep.mubr.bf16.mxu0 %v1341
    %3372 = vmatmul.mubr.bf16.gmra.mxu0 %v1340
    %v3373 = vpop.f32.mrf.mxu0
    %v3374 = vadd.f32 %v3091, %v3373
    %v3375 = vpop.f32.mrf.mxu0
    %v3376 = vadd.f32 %v3093, %v3375
    %v3377 = vpop.f32.mrf.mxu0
    %v3378 = vadd.f32 %v3095, %v3377
    %v3379 = vpop.f32.mrf.mxu0
    %v3380 = vadd.f32 %v3097, %v3379
    %3381 = vmatprep.mubr.bf16.mxu0 %v1349
    %3382 = vmatmul.mubr.bf16.gmra.mxu0 %v1348
    %v3383 = vpop.f32.mrf.mxu0
    %v3384 = vadd.f32 %v3101, %v3383
    %v3385 = vpop.f32.mrf.mxu0
    %v3386 = vadd.f32 %v3103, %v3385
    %v3387 = vpop.f32.mrf.mxu0
    %v3388 = vadd.f32 %v3105, %v3387
    %v3389 = vpop.f32.mrf.mxu0
    %v3390 = vadd.f32 %v3107, %v3389
    %3391 = vmatprep.mubr.bf16.mxu0 %v1357
    %3392 = vmatmul.mubr.bf16.gmra.mxu0 %v1356
    %v3393 = vpop.f32.mrf.mxu0
    %v3394 = vadd.f32 %v3111, %v3393
    %v3395 = vpop.f32.mrf.mxu0
    %v3396 = vadd.f32 %v3113, %v3395
    %v3397 = vpop.f32.mrf.mxu0
    %v3398 = vadd.f32 %v3115, %v3397
    %v3399 = vpop.f32.mrf.mxu0
    %v3400 = vadd.f32 %v3117, %v3399
    %3401 = vmatprep.mubr.bf16.mxu0 %v1365
    %3402 = vmatmul.mubr.bf16.gmra.mxu0 %v1364
    %v3403 = vpop.f32.mrf.mxu0
    %v3404 = vadd.f32 %v3121, %v3403
    %v3405 = vpop.f32.mrf.mxu0
    %v3406 = vadd.f32 %v3123, %v3405
    %v3407 = vpop.f32.mrf.mxu0
    %v3408 = vadd.f32 %v3125, %v3407
    %v3409 = vpop.f32.mrf.mxu0
    %v3410 = vadd.f32 %v3127, %v3409
    %3411 = vmatprep.mubr.bf16.mxu0 %v1373
    %3412 = vmatmul.mubr.bf16.gmra.mxu0 %v1372
    %v3413 = vpop.f32.mrf.mxu0
    %v3414 = vadd.f32 %v3131, %v3413
    %v3415 = vpop.f32.mrf.mxu0
    %v3416 = vadd.f32 %v3133, %v3415
    %v3417 = vpop.f32.mrf.mxu0
    %v3418 = vadd.f32 %v3135, %v3417
    %v3419 = vpop.f32.mrf.mxu0
    %v3420 = vadd.f32 %v3137, %v3419
    %3421 = vmatprep.mubr.bf16.mxu0 %v1381
    %3422 = vmatmul.mubr.bf16.gmra.mxu0 %v1380
    %v3423 = vpop.f32.mrf.mxu0
    %v3424 = vadd.f32 %v3141, %v3423
    %v3425 = vpop.f32.mrf.mxu0
    %v3426 = vadd.f32 %v3143, %v3425
    %v3427 = vpop.f32.mrf.mxu0
    %v3428 = vadd.f32 %v3145, %v3427
    %v3429 = vpop.f32.mrf.mxu0
    %v3430 = vadd.f32 %v3147, %v3429
    %3431 = vdwg.mxu0
    %3432 = vmatprep.subr.bf16.mxu0 %v2511
    %3433 = vmatpush1.bf16.msra.mxu0 %v2510
    %3434 = vmatprep.subr.bf16.mxu0 %v2507
    %3435 = vmatpush1.bf16.msra.mxu0 %v2506
    %3436 = vmatprep.subr.bf16.mxu0 %v2503
    %3437 = vmatpush1.bf16.msra.mxu0 %v2502
    %3438 = vmatprep.subr.bf16.mxu0 %v2499
    %3439 = vmatpush1.bf16.msra.mxu0 %v2498
    %3440 = vmatprep.subr.bf16.mxu0 %v2495
    %3441 = vmatpush1.bf16.msra.mxu0 %v2494
    %3442 = vmatprep.subr.bf16.mxu0 %v2491
    %3443 = vmatpush1.bf16.msra.mxu0 %v2490
    %3444 = vmatprep.subr.bf16.mxu0 %v2487
    %3445 = vmatpush1.bf16.msra.mxu0 %v2486
    %3446 = vmatprep.subr.bf16.mxu0 %v2483
    %3447 = vmatpush1.bf16.msra.mxu0 %v2482
    %3448 = vmatprep.subr.bf16.mxu0 %v2543
    %3449 = vmatpush2.bf16.msra.mxu0 %v2542
    %3450 = vmatprep.subr.bf16.mxu0 %v2539
    %3451 = vmatpush2.bf16.msra.mxu0 %v2538
    %3452 = vmatprep.subr.bf16.mxu0 %v2535
    %3453 = vmatpush2.bf16.msra.mxu0 %v2534
    %3454 = vmatprep.subr.bf16.mxu0 %v2531
    %3455 = vmatpush2.bf16.msra.mxu0 %v2530
    %3456 = vmatprep.subr.bf16.mxu0 %v2527
    %3457 = vmatpush2.bf16.msra.mxu0 %v2526
    %3458 = vmatprep.subr.bf16.mxu0 %v2523
    %3459 = vmatpush2.bf16.msra.mxu0 %v2522
    %3460 = vmatprep.subr.bf16.mxu0 %v2519
    %3461 = vmatpush2.bf16.msra.mxu0 %v2518
    %3462 = vmatprep.subr.bf16.mxu0 %v2515
    %3463 = vmatpush2.bf16.msra.mxu0 %v2514
    %3464 = vmatprep.mubr.bf16.mxu0 %v1191
    %3465 = vmatmul.mubr.bf16.gmra.mxu0 %v1190
    %v3466 = vpop.f32.mrf.mxu0
    %v3467 = vadd.f32 %v3184, %v3466
    %v3468 = vpop.f32.mrf.mxu0
    %v3469 = vadd.f32 %v3186, %v3468
    %v3470 = vpop.f32.mrf.mxu0
    %v3471 = vadd.f32 %v3188, %v3470
    %v3472 = vpop.f32.mrf.mxu0
    %v3473 = vadd.f32 %v3190, %v3472
    %3474 = vmatprep.mubr.bf16.mxu0 %v1199
    %3475 = vmatmul.mubr.bf16.gmra.mxu0 %v1198
    %v3476 = vpop.f32.mrf.mxu0
    %v3477 = vadd.f32 %v3194, %v3476
    %v3478 = vpop.f32.mrf.mxu0
    %v3479 = vadd.f32 %v3196, %v3478
    %v3480 = vpop.f32.mrf.mxu0
    %v3481 = vadd.f32 %v3198, %v3480
    %v3482 = vpop.f32.mrf.mxu0
    %v3483 = vadd.f32 %v3200, %v3482
    %3484 = vmatprep.mubr.bf16.mxu0 %v1207
    %3485 = vmatmul.mubr.bf16.gmra.mxu0 %v1206
    %v3486 = vpop.f32.mrf.mxu0
    %v3487 = vadd.f32 %v3204, %v3486
    %v3488 = vpop.f32.mrf.mxu0
    %v3489 = vadd.f32 %v3206, %v3488
    %v3490 = vpop.f32.mrf.mxu0
    %v3491 = vadd.f32 %v3208, %v3490
    %v3492 = vpop.f32.mrf.mxu0
    %v3493 = vadd.f32 %v3210, %v3492
    %3494 = vmatprep.mubr.bf16.mxu0 %v1215
    %3495 = vmatmul.mubr.bf16.gmra.mxu0 %v1214
    %v3496 = vpop.f32.mrf.mxu0
    %v3497 = vadd.f32 %v3214, %v3496
    %v3498 = vpop.f32.mrf.mxu0
    %v3499 = vadd.f32 %v3216, %v3498
    %v3500 = vpop.f32.mrf.mxu0
    %v3501 = vadd.f32 %v3218, %v3500
    %v3502 = vpop.f32.mrf.mxu0
    %v3503 = vadd.f32 %v3220, %v3502
    %3504 = vmatprep.mubr.bf16.mxu0 %v1223
    %3505 = vmatmul.mubr.bf16.gmra.mxu0 %v1222
    %v3506 = vpop.f32.mrf.mxu0
    %v3507 = vadd.f32 %v3224, %v3506
    %v3508 = vpop.f32.mrf.mxu0
    %v3509 = vadd.f32 %v3226, %v3508
    %v3510 = vpop.f32.mrf.mxu0
    %v3511 = vadd.f32 %v3228, %v3510
    %v3512 = vpop.f32.mrf.mxu0
    %v3513 = vadd.f32 %v3230, %v3512
    %3514 = vmatprep.mubr.bf16.mxu0 %v1231
    %3515 = vmatmul.mubr.bf16.gmra.mxu0 %v1230
    %v3516 = vpop.f32.mrf.mxu0
    %v3517 = vadd.f32 %v3234, %v3516
    %v3518 = vpop.f32.mrf.mxu0
    %v3519 = vadd.f32 %v3236, %v3518
    %v3520 = vpop.f32.mrf.mxu0
    %v3521 = vadd.f32 %v3238, %v3520
    %v3522 = vpop.f32.mrf.mxu0
    %v3523 = vadd.f32 %v3240, %v3522
    %3524 = vmatprep.mubr.bf16.mxu0 %v1239
    %3525 = vmatmul.mubr.bf16.gmra.mxu0 %v1238
    %v3526 = vpop.f32.mrf.mxu0
    %v3527 = vadd.f32 %v3244, %v3526
    %v3528 = vpop.f32.mrf.mxu0
    %v3529 = vadd.f32 %v3246, %v3528
    %v3530 = vpop.f32.mrf.mxu0
    %v3531 = vadd.f32 %v3248, %v3530
    %v3532 = vpop.f32.mrf.mxu0
    %v3533 = vadd.f32 %v3250, %v3532
    %3534 = vmatprep.mubr.bf16.mxu0 %v1247
    %3535 = vmatmul.mubr.bf16.gmra.mxu0 %v1246
    %v3536 = vpop.f32.mrf.mxu0
    %v3537 = vadd.f32 %v3254, %v3536
    %v3538 = vpop.f32.mrf.mxu0
    %v3539 = vadd.f32 %v3256, %v3538
    %v3540 = vpop.f32.mrf.mxu0
    %v3541 = vadd.f32 %v3258, %v3540
    %v3542 = vpop.f32.mrf.mxu0
    %v3543 = vadd.f32 %v3260, %v3542
    %3544 = vmatprep.mubr.bf16.mxu0 %v1255
    %3545 = vmatmul.mubr.bf16.gmra.mxu0 %v1254
    %v3546 = vpop.f32.mrf.mxu0
    %v3547 = vadd.f32 %v3264, %v3546
    %v3548 = vpop.f32.mrf.mxu0
    %v3549 = vadd.f32 %v3266, %v3548
    %v3550 = vpop.f32.mrf.mxu0
    %v3551 = vadd.f32 %v3268, %v3550
    %v3552 = vpop.f32.mrf.mxu0
    %v3553 = vadd.f32 %v3270, %v3552
    %3554 = vmatprep.mubr.bf16.mxu0 %v1263
    %3555 = vmatmul.mubr.bf16.gmra.mxu0 %v1262
    %v3556 = vpop.f32.mrf.mxu0
    %v3557 = vadd.f32 %v3274, %v3556
    %v3558 = vpop.f32.mrf.mxu0
    %v3559 = vadd.f32 %v3276, %v3558
    %v3560 = vpop.f32.mrf.mxu0
    %v3561 = vadd.f32 %v3278, %v3560
    %v3562 = vpop.f32.mrf.mxu0
    %v3563 = vadd.f32 %v3280, %v3562
    %3564 = vmatprep.mubr.bf16.mxu0 %v1271
    %3565 = vmatmul.mubr.bf16.gmra.mxu0 %v1270
    %v3566 = vpop.f32.mrf.mxu0
    %v3567 = vadd.f32 %v3284, %v3566
    %v3568 = vpop.f32.mrf.mxu0
    %v3569 = vadd.f32 %v3286, %v3568
    %v3570 = vpop.f32.mrf.mxu0
    %v3571 = vadd.f32 %v3288, %v3570
    %v3572 = vpop.f32.mrf.mxu0
    %v3573 = vadd.f32 %v3290, %v3572
    %3574 = vmatprep.mubr.bf16.mxu0 %v1279
    %3575 = vmatmul.mubr.bf16.gmra.mxu0 %v1278
    %v3576 = vpop.f32.mrf.mxu0
    %v3577 = vadd.f32 %v3294, %v3576
    %v3578 = vpop.f32.mrf.mxu0
    %v3579 = vadd.f32 %v3296, %v3578
    %v3580 = vpop.f32.mrf.mxu0
    %v3581 = vadd.f32 %v3298, %v3580
    %v3582 = vpop.f32.mrf.mxu0
    %v3583 = vadd.f32 %v3300, %v3582
    %3584 = vmatprep.mubr.bf16.mxu0 %v1287
    %3585 = vmatmul.mubr.bf16.gmra.mxu0 %v1286
    %v3586 = vpop.f32.mrf.mxu0
    %v3587 = vadd.f32 %v3304, %v3586
    %v3588 = vpop.f32.mrf.mxu0
    %v3589 = vadd.f32 %v3306, %v3588
    %v3590 = vpop.f32.mrf.mxu0
    %v3591 = vadd.f32 %v3308, %v3590
    %v3592 = vpop.f32.mrf.mxu0
    %v3593 = vadd.f32 %v3310, %v3592
    %3594 = vmatprep.mubr.bf16.mxu0 %v1295
    %3595 = vmatmul.mubr.bf16.gmra.mxu0 %v1294
    %v3596 = vpop.f32.mrf.mxu0
    %v3597 = vadd.f32 %v3314, %v3596
    %v3598 = vpop.f32.mrf.mxu0
    %v3599 = vadd.f32 %v3316, %v3598
    %v3600 = vpop.f32.mrf.mxu0
    %v3601 = vadd.f32 %v3318, %v3600
    %v3602 = vpop.f32.mrf.mxu0
    %v3603 = vadd.f32 %v3320, %v3602
    %3604 = vmatprep.mubr.bf16.mxu0 %v1303
    %3605 = vmatmul.mubr.bf16.gmra.mxu0 %v1302
    %v3606 = vpop.f32.mrf.mxu0
    %v3607 = vadd.f32 %v3324, %v3606
    %v3608 = vpop.f32.mrf.mxu0
    %v3609 = vadd.f32 %v3326, %v3608
    %v3610 = vpop.f32.mrf.mxu0
    %v3611 = vadd.f32 %v3328, %v3610
    %v3612 = vpop.f32.mrf.mxu0
    %v3613 = vadd.f32 %v3330, %v3612
    %3614 = vmatprep.mubr.bf16.mxu0 %v1311
    %3615 = vmatmul.mubr.bf16.gmra.mxu0 %v1310
    %v3616 = vpop.f32.mrf.mxu0
    %v3617 = vadd.f32 %v3334, %v3616
    %v3618 = vpop.f32.mrf.mxu0
    %v3619 = vadd.f32 %v3336, %v3618
    %v3620 = vpop.f32.mrf.mxu0
    %v3621 = vadd.f32 %v3338, %v3620
    %v3622 = vpop.f32.mrf.mxu0
    %v3623 = vadd.f32 %v3340, %v3622
    %3624 = vmatprep.mubr.bf16.mxu0 %v1319
    %3625 = vmatmul.mubr.bf16.gmra.mxu0 %v1318
    %v3626 = vpop.f32.mrf.mxu0
    %v3627 = vadd.f32 %v3344, %v3626
    %v3628 = vpop.f32.mrf.mxu0
    %v3629 = vadd.f32 %v3346, %v3628
    %v3630 = vpop.f32.mrf.mxu0
    %v3631 = vadd.f32 %v3348, %v3630
    %v3632 = vpop.f32.mrf.mxu0
    %v3633 = vadd.f32 %v3350, %v3632
    %3634 = vmatprep.mubr.bf16.mxu0 %v1327
    %3635 = vmatmul.mubr.bf16.gmra.mxu0 %v1326
    %v3636 = vpop.f32.mrf.mxu0
    %v3637 = vadd.f32 %v3354, %v3636
    %v3638 = vpop.f32.mrf.mxu0
    %v3639 = vadd.f32 %v3356, %v3638
    %v3640 = vpop.f32.mrf.mxu0
    %v3641 = vadd.f32 %v3358, %v3640
    %v3642 = vpop.f32.mrf.mxu0
    %v3643 = vadd.f32 %v3360, %v3642
    %3644 = vmatprep.mubr.bf16.mxu0 %v1335
    %3645 = vmatmul.mubr.bf16.gmra.mxu0 %v1334
    %v3646 = vpop.f32.mrf.mxu0
    %v3647 = vadd.f32 %v3364, %v3646
    %v3648 = vpop.f32.mrf.mxu0
    %v3649 = vadd.f32 %v3366, %v3648
    %v3650 = vpop.f32.mrf.mxu0
    %v3651 = vadd.f32 %v3368, %v3650
    %v3652 = vpop.f32.mrf.mxu0
    %v3653 = vadd.f32 %v3370, %v3652
    %3654 = vmatprep.mubr.bf16.mxu0 %v1343
    %3655 = vmatmul.mubr.bf16.gmra.mxu0 %v1342
    %v3656 = vpop.f32.mrf.mxu0
    %v3657 = vadd.f32 %v3374, %v3656
    %v3658 = vpop.f32.mrf.mxu0
    %v3659 = vadd.f32 %v3376, %v3658
    %v3660 = vpop.f32.mrf.mxu0
    %v3661 = vadd.f32 %v3378, %v3660
    %v3662 = vpop.f32.mrf.mxu0
    %v3663 = vadd.f32 %v3380, %v3662
    %3664 = vmatprep.mubr.bf16.mxu0 %v1351
    %3665 = vmatmul.mubr.bf16.gmra.mxu0 %v1350
    %v3666 = vpop.f32.mrf.mxu0
    %v3667 = vadd.f32 %v3384, %v3666
    %v3668 = vpop.f32.mrf.mxu0
    %v3669 = vadd.f32 %v3386, %v3668
    %v3670 = vpop.f32.mrf.mxu0
    %v3671 = vadd.f32 %v3388, %v3670
    %v3672 = vpop.f32.mrf.mxu0
    %v3673 = vadd.f32 %v3390, %v3672
    %3674 = vmatprep.mubr.bf16.mxu0 %v1359
    %3675 = vmatmul.mubr.bf16.gmra.mxu0 %v1358
    %v3676 = vpop.f32.mrf.mxu0
    %v3677 = vadd.f32 %v3394, %v3676
    %v3678 = vpop.f32.mrf.mxu0
    %v3679 = vadd.f32 %v3396, %v3678
    %v3680 = vpop.f32.mrf.mxu0
    %v3681 = vadd.f32 %v3398, %v3680
    %v3682 = vpop.f32.mrf.mxu0
    %v3683 = vadd.f32 %v3400, %v3682
    %3684 = vmatprep.mubr.bf16.mxu0 %v1367
    %3685 = vmatmul.mubr.bf16.gmra.mxu0 %v1366
    %v3686 = vpop.f32.mrf.mxu0
    %v3687 = vadd.f32 %v3404, %v3686
    %v3688 = vpop.f32.mrf.mxu0
    %v3689 = vadd.f32 %v3406, %v3688
    %v3690 = vpop.f32.mrf.mxu0
    %v3691 = vadd.f32 %v3408, %v3690
    %v3692 = vpop.f32.mrf.mxu0
    %v3693 = vadd.f32 %v3410, %v3692
    %3694 = vmatprep.mubr.bf16.mxu0 %v1375
    %3695 = vmatmul.mubr.bf16.gmra.mxu0 %v1374
    %v3696 = vpop.f32.mrf.mxu0
    %v3697 = vadd.f32 %v3414, %v3696
    %v3698 = vpop.f32.mrf.mxu0
    %v3699 = vadd.f32 %v3416, %v3698
    %v3700 = vpop.f32.mrf.mxu0
    %v3701 = vadd.f32 %v3418, %v3700
    %v3702 = vpop.f32.mrf.mxu0
    %v3703 = vadd.f32 %v3420, %v3702
    %3704 = vmatprep.mubr.bf16.mxu0 %v1383
    %3705 = vmatmul.mubr.bf16.gmra.mxu0 %v1382
    %v3706 = vpop.f32.mrf.mxu0
    %v3707 = vadd.f32 %v3424, %v3706
    %v3708 = vpop.f32.mrf.mxu0
    %v3709 = vadd.f32 %v3426, %v3708
    %v3710 = vpop.f32.mrf.mxu0
    %v3711 = vadd.f32 %v3428, %v3710
    %v3712 = vpop.f32.mrf.mxu0
    %v3713 = vadd.f32 %v3430, %v3712
    %3714 = vdwg.mxu0
    %3715 = vmatprep.subr.bf16.mxu0 %v2575
    %3716 = vmatpush1.bf16.msra.mxu0 %v2574
    %3717 = vmatprep.subr.bf16.mxu0 %v2571
    %3718 = vmatpush1.bf16.msra.mxu0 %v2570
    %3719 = vmatprep.subr.bf16.mxu0 %v2567
    %3720 = vmatpush1.bf16.msra.mxu0 %v2566
    %3721 = vmatprep.subr.bf16.mxu0 %v2563
    %3722 = vmatpush1.bf16.msra.mxu0 %v2562
    %3723 = vmatprep.subr.bf16.mxu0 %v2559
    %3724 = vmatpush1.bf16.msra.mxu0 %v2558
    %3725 = vmatprep.subr.bf16.mxu0 %v2555
    %3726 = vmatpush1.bf16.msra.mxu0 %v2554
    %3727 = vmatprep.subr.bf16.mxu0 %v2551
    %3728 = vmatpush1.bf16.msra.mxu0 %v2550
    %3729 = vmatprep.subr.bf16.mxu0 %v2547
    %3730 = vmatpush1.bf16.msra.mxu0 %v2546
    %3731 = vmatprep.subr.bf16.mxu0 %v2607
    %3732 = vmatpush2.bf16.msra.mxu0 %v2606
    %3733 = vmatprep.subr.bf16.mxu0 %v2603
    %3734 = vmatpush2.bf16.msra.mxu0 %v2602
    %3735 = vmatprep.subr.bf16.mxu0 %v2599
    %3736 = vmatpush2.bf16.msra.mxu0 %v2598
    %3737 = vmatprep.subr.bf16.mxu0 %v2595
    %3738 = vmatpush2.bf16.msra.mxu0 %v2594
    %3739 = vmatprep.subr.bf16.mxu0 %v2591
    %3740 = vmatpush2.bf16.msra.mxu0 %v2590
    %3741 = vmatprep.subr.bf16.mxu0 %v2587
    %3742 = vmatpush2.bf16.msra.mxu0 %v2586
    %3743 = vmatprep.subr.bf16.mxu0 %v2583
    %3744 = vmatpush2.bf16.msra.mxu0 %v2582
    %3745 = vmatprep.subr.bf16.mxu0 %v2579
    %3746 = vmatpush2.bf16.msra.mxu0 %v2578
    %3747 = vmatprep.mubr.bf16.mxu0 %v1193
    %3748 = vmatmul.mubr.bf16.gmra.mxu0 %v1192
    %v3749 = vpop.f32.mrf.mxu0
    %v3750 = vadd.f32 %v3467, %v3749
    %v3751 = vpop.f32.mrf.mxu0
    %v3752 = vadd.f32 %v3469, %v3751
    %v3753 = vpop.f32.mrf.mxu0
    %v3754 = vadd.f32 %v3471, %v3753
    %v3755 = vpop.f32.mrf.mxu0
    %v3756 = vadd.f32 %v3473, %v3755
    %3757 = vmatprep.mubr.bf16.mxu0 %v1201
    %3758 = vmatmul.mubr.bf16.gmra.mxu0 %v1200
    %v3759 = vpop.f32.mrf.mxu0
    %v3760 = vadd.f32 %v3477, %v3759
    %v3761 = vpop.f32.mrf.mxu0
    %v3762 = vadd.f32 %v3479, %v3761
    %v3763 = vpop.f32.mrf.mxu0
    %v3764 = vadd.f32 %v3481, %v3763
    %v3765 = vpop.f32.mrf.mxu0
    %v3766 = vadd.f32 %v3483, %v3765
    %3767 = vmatprep.mubr.bf16.mxu0 %v1209
    %3768 = vmatmul.mubr.bf16.gmra.mxu0 %v1208
    %v3769 = vpop.f32.mrf.mxu0
    %v3770 = vadd.f32 %v3487, %v3769
    %v3771 = vpop.f32.mrf.mxu0
    %v3772 = vadd.f32 %v3489, %v3771
    %v3773 = vpop.f32.mrf.mxu0
    %v3774 = vadd.f32 %v3491, %v3773
    %v3775 = vpop.f32.mrf.mxu0
    %v3776 = vadd.f32 %v3493, %v3775
    %3777 = vmatprep.mubr.bf16.mxu0 %v1217
    %3778 = vmatmul.mubr.bf16.gmra.mxu0 %v1216
    %v3779 = vpop.f32.mrf.mxu0
    %v3780 = vadd.f32 %v3497, %v3779
    %v3781 = vpop.f32.mrf.mxu0
    %v3782 = vadd.f32 %v3499, %v3781
    %v3783 = vpop.f32.mrf.mxu0
    %v3784 = vadd.f32 %v3501, %v3783
    %v3785 = vpop.f32.mrf.mxu0
    %v3786 = vadd.f32 %v3503, %v3785
    %3787 = vmatprep.mubr.bf16.mxu0 %v1225
    %3788 = vmatmul.mubr.bf16.gmra.mxu0 %v1224
    %v3789 = vpop.f32.mrf.mxu0
    %v3790 = vadd.f32 %v3507, %v3789
    %v3791 = vpop.f32.mrf.mxu0
    %v3792 = vadd.f32 %v3509, %v3791
    %v3793 = vpop.f32.mrf.mxu0
    %v3794 = vadd.f32 %v3511, %v3793
    %v3795 = vpop.f32.mrf.mxu0
    %v3796 = vadd.f32 %v3513, %v3795
    %3797 = vmatprep.mubr.bf16.mxu0 %v1233
    %3798 = vmatmul.mubr.bf16.gmra.mxu0 %v1232
    %v3799 = vpop.f32.mrf.mxu0
    %v3800 = vadd.f32 %v3517, %v3799
    %v3801 = vpop.f32.mrf.mxu0
    %v3802 = vadd.f32 %v3519, %v3801
    %v3803 = vpop.f32.mrf.mxu0
    %v3804 = vadd.f32 %v3521, %v3803
    %v3805 = vpop.f32.mrf.mxu0
    %v3806 = vadd.f32 %v3523, %v3805
    %3807 = vmatprep.mubr.bf16.mxu0 %v1241
    %3808 = vmatmul.mubr.bf16.gmra.mxu0 %v1240
    %v3809 = vpop.f32.mrf.mxu0
    %v3810 = vadd.f32 %v3527, %v3809
    %v3811 = vpop.f32.mrf.mxu0
    %v3812 = vadd.f32 %v3529, %v3811
    %v3813 = vpop.f32.mrf.mxu0
    %v3814 = vadd.f32 %v3531, %v3813
    %v3815 = vpop.f32.mrf.mxu0
    %v3816 = vadd.f32 %v3533, %v3815
    %3817 = vmatprep.mubr.bf16.mxu0 %v1249
    %3818 = vmatmul.mubr.bf16.gmra.mxu0 %v1248
    %v3819 = vpop.f32.mrf.mxu0
    %v3820 = vadd.f32 %v3537, %v3819
    %v3821 = vpop.f32.mrf.mxu0
    %v3822 = vadd.f32 %v3539, %v3821
    %v3823 = vpop.f32.mrf.mxu0
    %v3824 = vadd.f32 %v3541, %v3823
    %v3825 = vpop.f32.mrf.mxu0
    %v3826 = vadd.f32 %v3543, %v3825
    %3827 = vmatprep.mubr.bf16.mxu0 %v1257
    %3828 = vmatmul.mubr.bf16.gmra.mxu0 %v1256
    %v3829 = vpop.f32.mrf.mxu0
    %v3830 = vadd.f32 %v3547, %v3829
    %v3831 = vpop.f32.mrf.mxu0
    %v3832 = vadd.f32 %v3549, %v3831
    %v3833 = vpop.f32.mrf.mxu0
    %v3834 = vadd.f32 %v3551, %v3833
    %v3835 = vpop.f32.mrf.mxu0
    %v3836 = vadd.f32 %v3553, %v3835
    %3837 = vmatprep.mubr.bf16.mxu0 %v1265
    %3838 = vmatmul.mubr.bf16.gmra.mxu0 %v1264
    %v3839 = vpop.f32.mrf.mxu0
    %v3840 = vadd.f32 %v3557, %v3839
    %v3841 = vpop.f32.mrf.mxu0
    %v3842 = vadd.f32 %v3559, %v3841
    %v3843 = vpop.f32.mrf.mxu0
    %v3844 = vadd.f32 %v3561, %v3843
    %v3845 = vpop.f32.mrf.mxu0
    %v3846 = vadd.f32 %v3563, %v3845
    %3847 = vmatprep.mubr.bf16.mxu0 %v1273
    %3848 = vmatmul.mubr.bf16.gmra.mxu0 %v1272
    %v3849 = vpop.f32.mrf.mxu0
    %v3850 = vadd.f32 %v3567, %v3849
    %v3851 = vpop.f32.mrf.mxu0
    %v3852 = vadd.f32 %v3569, %v3851
    %v3853 = vpop.f32.mrf.mxu0
    %v3854 = vadd.f32 %v3571, %v3853
    %v3855 = vpop.f32.mrf.mxu0
    %v3856 = vadd.f32 %v3573, %v3855
    %3857 = vmatprep.mubr.bf16.mxu0 %v1281
    %3858 = vmatmul.mubr.bf16.gmra.mxu0 %v1280
    %v3859 = vpop.f32.mrf.mxu0
    %v3860 = vadd.f32 %v3577, %v3859
    %v3861 = vpop.f32.mrf.mxu0
    %v3862 = vadd.f32 %v3579, %v3861
    %v3863 = vpop.f32.mrf.mxu0
    %v3864 = vadd.f32 %v3581, %v3863
    %v3865 = vpop.f32.mrf.mxu0
    %v3866 = vadd.f32 %v3583, %v3865
    %3867 = vmatprep.mubr.bf16.mxu0 %v1289
    %3868 = vmatmul.mubr.bf16.gmra.mxu0 %v1288
    %v3869 = vpop.f32.mrf.mxu0
    %v3870 = vadd.f32 %v3587, %v3869
    %v3871 = vpop.f32.mrf.mxu0
    %v3872 = vadd.f32 %v3589, %v3871
    %v3873 = vpop.f32.mrf.mxu0
    %v3874 = vadd.f32 %v3591, %v3873
    %v3875 = vpop.f32.mrf.mxu0
    %v3876 = vadd.f32 %v3593, %v3875
    %3877 = vmatprep.mubr.bf16.mxu0 %v1297
    %3878 = vmatmul.mubr.bf16.gmra.mxu0 %v1296
    %v3879 = vpop.f32.mrf.mxu0
    %v3880 = vadd.f32 %v3597, %v3879
    %v3881 = vpop.f32.mrf.mxu0
    %v3882 = vadd.f32 %v3599, %v3881
    %v3883 = vpop.f32.mrf.mxu0
    %v3884 = vadd.f32 %v3601, %v3883
    %v3885 = vpop.f32.mrf.mxu0
    %v3886 = vadd.f32 %v3603, %v3885
    %3887 = vmatprep.mubr.bf16.mxu0 %v1305
    %3888 = vmatmul.mubr.bf16.gmra.mxu0 %v1304
    %v3889 = vpop.f32.mrf.mxu0
    %v3890 = vadd.f32 %v3607, %v3889
    %v3891 = vpop.f32.mrf.mxu0
    %v3892 = vadd.f32 %v3609, %v3891
    %v3893 = vpop.f32.mrf.mxu0
    %v3894 = vadd.f32 %v3611, %v3893
    %v3895 = vpop.f32.mrf.mxu0
    %v3896 = vadd.f32 %v3613, %v3895
    %3897 = vmatprep.mubr.bf16.mxu0 %v1313
    %3898 = vmatmul.mubr.bf16.gmra.mxu0 %v1312
    %v3899 = vpop.f32.mrf.mxu0
    %v3900 = vadd.f32 %v3617, %v3899
    %v3901 = vpop.f32.mrf.mxu0
    %v3902 = vadd.f32 %v3619, %v3901
    %v3903 = vpop.f32.mrf.mxu0
    %v3904 = vadd.f32 %v3621, %v3903
    %v3905 = vpop.f32.mrf.mxu0
    %v3906 = vadd.f32 %v3623, %v3905
    %3907 = vmatprep.mubr.bf16.mxu0 %v1321
    %3908 = vmatmul.mubr.bf16.gmra.mxu0 %v1320
    %v3909 = vpop.f32.mrf.mxu0
    %v3910 = vadd.f32 %v3627, %v3909
    %v3911 = vpop.f32.mrf.mxu0
    %v3912 = vadd.f32 %v3629, %v3911
    %v3913 = vpop.f32.mrf.mxu0
    %v3914 = vadd.f32 %v3631, %v3913
    %v3915 = vpop.f32.mrf.mxu0
    %v3916 = vadd.f32 %v3633, %v3915
    %3917 = vmatprep.mubr.bf16.mxu0 %v1329
    %3918 = vmatmul.mubr.bf16.gmra.mxu0 %v1328
    %v3919 = vpop.f32.mrf.mxu0
    %v3920 = vadd.f32 %v3637, %v3919
    %v3921 = vpop.f32.mrf.mxu0
    %v3922 = vadd.f32 %v3639, %v3921
    %v3923 = vpop.f32.mrf.mxu0
    %v3924 = vadd.f32 %v3641, %v3923
    %v3925 = vpop.f32.mrf.mxu0
    %v3926 = vadd.f32 %v3643, %v3925
    %3927 = vmatprep.mubr.bf16.mxu0 %v1337
    %3928 = vmatmul.mubr.bf16.gmra.mxu0 %v1336
    %v3929 = vpop.f32.mrf.mxu0
    %v3930 = vadd.f32 %v3647, %v3929
    %v3931 = vpop.f32.mrf.mxu0
    %v3932 = vadd.f32 %v3649, %v3931
    %v3933 = vpop.f32.mrf.mxu0
    %v3934 = vadd.f32 %v3651, %v3933
    %v3935 = vpop.f32.mrf.mxu0
    %v3936 = vadd.f32 %v3653, %v3935
    %3937 = vmatprep.mubr.bf16.mxu0 %v1345
    %3938 = vmatmul.mubr.bf16.gmra.mxu0 %v1344
    %v3939 = vpop.f32.mrf.mxu0
    %v3940 = vadd.f32 %v3657, %v3939
    %v3941 = vpop.f32.mrf.mxu0
    %v3942 = vadd.f32 %v3659, %v3941
    %v3943 = vpop.f32.mrf.mxu0
    %v3944 = vadd.f32 %v3661, %v3943
    %v3945 = vpop.f32.mrf.mxu0
    %v3946 = vadd.f32 %v3663, %v3945
    %3947 = vmatprep.mubr.bf16.mxu0 %v1353
    %3948 = vmatmul.mubr.bf16.gmra.mxu0 %v1352
    %v3949 = vpop.f32.mrf.mxu0
    %v3950 = vadd.f32 %v3667, %v3949
    %v3951 = vpop.f32.mrf.mxu0
    %v3952 = vadd.f32 %v3669, %v3951
    %v3953 = vpop.f32.mrf.mxu0
    %v3954 = vadd.f32 %v3671, %v3953
    %v3955 = vpop.f32.mrf.mxu0
    %v3956 = vadd.f32 %v3673, %v3955
    %3957 = vmatprep.mubr.bf16.mxu0 %v1361
    %3958 = vmatmul.mubr.bf16.gmra.mxu0 %v1360
    %v3959 = vpop.f32.mrf.mxu0
    %v3960 = vadd.f32 %v3677, %v3959
    %v3961 = vpop.f32.mrf.mxu0
    %v3962 = vadd.f32 %v3679, %v3961
    %v3963 = vpop.f32.mrf.mxu0
    %v3964 = vadd.f32 %v3681, %v3963
    %v3965 = vpop.f32.mrf.mxu0
    %v3966 = vadd.f32 %v3683, %v3965
    %3967 = vmatprep.mubr.bf16.mxu0 %v1369
    %3968 = vmatmul.mubr.bf16.gmra.mxu0 %v1368
    %v3969 = vpop.f32.mrf.mxu0
    %v3970 = vadd.f32 %v3687, %v3969
    %v3971 = vpop.f32.mrf.mxu0
    %v3972 = vadd.f32 %v3689, %v3971
    %v3973 = vpop.f32.mrf.mxu0
    %v3974 = vadd.f32 %v3691, %v3973
    %v3975 = vpop.f32.mrf.mxu0
    %v3976 = vadd.f32 %v3693, %v3975
    %3977 = vmatprep.mubr.bf16.mxu0 %v1377
    %3978 = vmatmul.mubr.bf16.gmra.mxu0 %v1376
    %v3979 = vpop.f32.mrf.mxu0
    %v3980 = vadd.f32 %v3697, %v3979
    %v3981 = vpop.f32.mrf.mxu0
    %v3982 = vadd.f32 %v3699, %v3981
    %v3983 = vpop.f32.mrf.mxu0
    %v3984 = vadd.f32 %v3701, %v3983
    %v3985 = vpop.f32.mrf.mxu0
    %v3986 = vadd.f32 %v3703, %v3985
    %3987 = vmatprep.mubr.bf16.mxu0 %v1385
    %3988 = vmatmul.mubr.bf16.gmra.mxu0 %v1384
    %v3989 = vpop.f32.mrf.mxu0
    %v3990 = vadd.f32 %v3707, %v3989
    %v3991 = vpop.f32.mrf.mxu0
    %v3992 = vadd.f32 %v3709, %v3991
    %v3993 = vpop.f32.mrf.mxu0
    %v3994 = vadd.f32 %v3711, %v3993
    %v3995 = vpop.f32.mrf.mxu0
    %v3996 = vadd.f32 %v3713, %v3995
    %3997 = vdwg.mxu0
    %3998 = vmatprep.subr.bf16.mxu0 %v2385
    %3999 = vmatpush1.bf16.msra.mxu0 %v2384
    %4000 = vmatprep.subr.bf16.mxu0 %v2381
    %4001 = vmatpush1.bf16.msra.mxu0 %v2380
    %4002 = vmatprep.subr.bf16.mxu0 %v2377
    %4003 = vmatpush1.bf16.msra.mxu0 %v2376
    %4004 = vmatprep.subr.bf16.mxu0 %v2373
    %4005 = vmatpush1.bf16.msra.mxu0 %v2372
    %4006 = vmatprep.subr.bf16.mxu0 %v2369
    %4007 = vmatpush1.bf16.msra.mxu0 %v2368
    %4008 = vmatprep.subr.bf16.mxu0 %v2365
    %4009 = vmatpush1.bf16.msra.mxu0 %v2364
    %4010 = vmatprep.subr.bf16.mxu0 %v2361
    %4011 = vmatpush1.bf16.msra.mxu0 %v2360
    %4012 = vmatprep.subr.bf16.mxu0 %v2357
    %4013 = vmatpush1.bf16.msra.mxu0 %v2356
    %4014 = vmatprep.subr.bf16.mxu0 %v2417
    %4015 = vmatpush2.bf16.msra.mxu0 %v2416
    %4016 = vmatprep.subr.bf16.mxu0 %v2413
    %4017 = vmatpush2.bf16.msra.mxu0 %v2412
    %4018 = vmatprep.subr.bf16.mxu0 %v2409
    %4019 = vmatpush2.bf16.msra.mxu0 %v2408
    %4020 = vmatprep.subr.bf16.mxu0 %v2405
    %4021 = vmatpush2.bf16.msra.mxu0 %v2404
    %4022 = vmatprep.subr.bf16.mxu0 %v2401
    %4023 = vmatpush2.bf16.msra.mxu0 %v2400
    %4024 = vmatprep.subr.bf16.mxu0 %v2397
    %4025 = vmatpush2.bf16.msra.mxu0 %v2396
    %4026 = vmatprep.subr.bf16.mxu0 %v2393
    %4027 = vmatpush2.bf16.msra.mxu0 %v2392
    %4028 = vmatprep.subr.bf16.mxu0 %v2389
    %4029 = vmatpush2.bf16.msra.mxu0 %v2388
    %4030 = vmatprep.mubr.bf16.mxu0 %v1187
    %4031 = vmatmul.mubr.bf16.gmra.mxu0 %v1186
    %v4032 = vpop.f32.mrf.mxu0
    %v4033 = vadd.f32 %v577, %v4032
    %v4034 = vpop.f32.mrf.mxu0
    %v4035 = vadd.f32 %v581, %v4034
    %v4036 = vpop.f32.mrf.mxu0
    %v4037 = vadd.f32 %v577, %v4036
    %v4038 = vpop.f32.mrf.mxu0
    %v4039 = vadd.f32 %v581, %v4038
    %4040 = vmatprep.mubr.bf16.mxu0 %v1195
    %4041 = vmatmul.mubr.bf16.gmra.mxu0 %v1194
    %v4042 = vpop.f32.mrf.mxu0
    %v4043 = vadd.f32 %v577, %v4042
    %v4044 = vpop.f32.mrf.mxu0
    %v4045 = vadd.f32 %v581, %v4044
    %v4046 = vpop.f32.mrf.mxu0
    %v4047 = vadd.f32 %v577, %v4046
    %v4048 = vpop.f32.mrf.mxu0
    %v4049 = vadd.f32 %v581, %v4048
    %4050 = vmatprep.mubr.bf16.mxu0 %v1203
    %4051 = vmatmul.mubr.bf16.gmra.mxu0 %v1202
    %v4052 = vpop.f32.mrf.mxu0
    %v4053 = vadd.f32 %v577, %v4052
    %v4054 = vpop.f32.mrf.mxu0
    %v4055 = vadd.f32 %v581, %v4054
    %v4056 = vpop.f32.mrf.mxu0
    %v4057 = vadd.f32 %v577, %v4056
    %v4058 = vpop.f32.mrf.mxu0
    %v4059 = vadd.f32 %v581, %v4058
    %4060 = vmatprep.mubr.bf16.mxu0 %v1211
    %4061 = vmatmul.mubr.bf16.gmra.mxu0 %v1210
    %v4062 = vpop.f32.mrf.mxu0
    %v4063 = vadd.f32 %v577, %v4062
    %v4064 = vpop.f32.mrf.mxu0
    %v4065 = vadd.f32 %v581, %v4064
    %v4066 = vpop.f32.mrf.mxu0
    %v4067 = vadd.f32 %v577, %v4066
    %v4068 = vpop.f32.mrf.mxu0
    %v4069 = vadd.f32 %v581, %v4068
    %4070 = vmatprep.mubr.bf16.mxu0 %v1219
    %4071 = vmatmul.mubr.bf16.gmra.mxu0 %v1218
    %v4072 = vpop.f32.mrf.mxu0
    %v4073 = vadd.f32 %v577, %v4072
    %v4074 = vpop.f32.mrf.mxu0
    %v4075 = vadd.f32 %v581, %v4074
    %v4076 = vpop.f32.mrf.mxu0
    %v4077 = vadd.f32 %v577, %v4076
    %v4078 = vpop.f32.mrf.mxu0
    %v4079 = vadd.f32 %v581, %v4078
    %4080 = vmatprep.mubr.bf16.mxu0 %v1227
    %4081 = vmatmul.mubr.bf16.gmra.mxu0 %v1226
    %v4082 = vpop.f32.mrf.mxu0
    %v4083 = vadd.f32 %v577, %v4082
    %v4084 = vpop.f32.mrf.mxu0
    %v4085 = vadd.f32 %v581, %v4084
    %v4086 = vpop.f32.mrf.mxu0
    %v4087 = vadd.f32 %v577, %v4086
    %v4088 = vpop.f32.mrf.mxu0
    %v4089 = vadd.f32 %v581, %v4088
    %4090 = vmatprep.mubr.bf16.mxu0 %v1235
    %4091 = vmatmul.mubr.bf16.gmra.mxu0 %v1234
    %v4092 = vpop.f32.mrf.mxu0
    %v4093 = vadd.f32 %v577, %v4092
    %v4094 = vpop.f32.mrf.mxu0
    %v4095 = vadd.f32 %v581, %v4094
    %v4096 = vpop.f32.mrf.mxu0
    %v4097 = vadd.f32 %v577, %v4096
    %v4098 = vpop.f32.mrf.mxu0
    %v4099 = vadd.f32 %v581, %v4098
    %4100 = vmatprep.mubr.bf16.mxu0 %v1243
    %4101 = vmatmul.mubr.bf16.gmra.mxu0 %v1242
    %v4102 = vpop.f32.mrf.mxu0
    %v4103 = vadd.f32 %v577, %v4102
    %v4104 = vpop.f32.mrf.mxu0
    %v4105 = vadd.f32 %v581, %v4104
    %v4106 = vpop.f32.mrf.mxu0
    %v4107 = vadd.f32 %v577, %v4106
    %v4108 = vpop.f32.mrf.mxu0
    %v4109 = vadd.f32 %v581, %v4108
    %4110 = vmatprep.mubr.bf16.mxu0 %v1251
    %4111 = vmatmul.mubr.bf16.gmra.mxu0 %v1250
    %v4112 = vpop.f32.mrf.mxu0
    %v4113 = vadd.f32 %v577, %v4112
    %v4114 = vpop.f32.mrf.mxu0
    %v4115 = vadd.f32 %v581, %v4114
    %v4116 = vpop.f32.mrf.mxu0
    %v4117 = vadd.f32 %v577, %v4116
    %v4118 = vpop.f32.mrf.mxu0
    %v4119 = vadd.f32 %v581, %v4118
    %4120 = vmatprep.mubr.bf16.mxu0 %v1259
    %4121 = vmatmul.mubr.bf16.gmra.mxu0 %v1258
    %v4122 = vpop.f32.mrf.mxu0
    %v4123 = vadd.f32 %v577, %v4122
    %v4124 = vpop.f32.mrf.mxu0
    %v4125 = vadd.f32 %v581, %v4124
    %v4126 = vpop.f32.mrf.mxu0
    %v4127 = vadd.f32 %v577, %v4126
    %v4128 = vpop.f32.mrf.mxu0
    %v4129 = vadd.f32 %v581, %v4128
    %4130 = vmatprep.mubr.bf16.mxu0 %v1267
    %4131 = vmatmul.mubr.bf16.gmra.mxu0 %v1266
    %v4132 = vpop.f32.mrf.mxu0
    %v4133 = vadd.f32 %v577, %v4132
    %v4134 = vpop.f32.mrf.mxu0
    %v4135 = vadd.f32 %v581, %v4134
    %v4136 = vpop.f32.mrf.mxu0
    %v4137 = vadd.f32 %v577, %v4136
    %v4138 = vpop.f32.mrf.mxu0
    %v4139 = vadd.f32 %v581, %v4138
    %4140 = vmatprep.mubr.bf16.mxu0 %v1275
    %4141 = vmatmul.mubr.bf16.gmra.mxu0 %v1274
    %v4142 = vpop.f32.mrf.mxu0
    %v4143 = vadd.f32 %v577, %v4142
    %v4144 = vpop.f32.mrf.mxu0
    %v4145 = vadd.f32 %v581, %v4144
    %v4146 = vpop.f32.mrf.mxu0
    %v4147 = vadd.f32 %v577, %v4146
    %v4148 = vpop.f32.mrf.mxu0
    %v4149 = vadd.f32 %v581, %v4148
    %4150 = vmatprep.mubr.bf16.mxu0 %v1283
    %4151 = vmatmul.mubr.bf16.gmra.mxu0 %v1282
    %v4152 = vpop.f32.mrf.mxu0
    %v4153 = vadd.f32 %v577, %v4152
    %v4154 = vpop.f32.mrf.mxu0
    %v4155 = vadd.f32 %v581, %v4154
    %v4156 = vpop.f32.mrf.mxu0
    %v4157 = vadd.f32 %v577, %v4156
    %v4158 = vpop.f32.mrf.mxu0
    %v4159 = vadd.f32 %v581, %v4158
    %4160 = vmatprep.mubr.bf16.mxu0 %v1291
    %4161 = vmatmul.mubr.bf16.gmra.mxu0 %v1290
    %v4162 = vpop.f32.mrf.mxu0
    %v4163 = vadd.f32 %v577, %v4162
    %v4164 = vpop.f32.mrf.mxu0
    %v4165 = vadd.f32 %v581, %v4164
    %v4166 = vpop.f32.mrf.mxu0
    %v4167 = vadd.f32 %v577, %v4166
    %v4168 = vpop.f32.mrf.mxu0
    %v4169 = vadd.f32 %v581, %v4168
    %4170 = vmatprep.mubr.bf16.mxu0 %v1299
    %4171 = vmatmul.mubr.bf16.gmra.mxu0 %v1298
    %v4172 = vpop.f32.mrf.mxu0
    %v4173 = vadd.f32 %v577, %v4172
    %v4174 = vpop.f32.mrf.mxu0
    %v4175 = vadd.f32 %v581, %v4174
    %v4176 = vpop.f32.mrf.mxu0
    %v4177 = vadd.f32 %v577, %v4176
    %v4178 = vpop.f32.mrf.mxu0
    %v4179 = vadd.f32 %v581, %v4178
    %4180 = vmatprep.mubr.bf16.mxu0 %v1307
    %4181 = vmatmul.mubr.bf16.gmra.mxu0 %v1306
    %v4182 = vpop.f32.mrf.mxu0
    %v4183 = vadd.f32 %v577, %v4182
    %v4184 = vpop.f32.mrf.mxu0
    %v4185 = vadd.f32 %v581, %v4184
    %v4186 = vpop.f32.mrf.mxu0
    %v4187 = vadd.f32 %v577, %v4186
    %v4188 = vpop.f32.mrf.mxu0
    %v4189 = vadd.f32 %v581, %v4188
    %4190 = vmatprep.mubr.bf16.mxu0 %v1315
    %4191 = vmatmul.mubr.bf16.gmra.mxu0 %v1314
    %v4192 = vpop.f32.mrf.mxu0
    %v4193 = vadd.f32 %v577, %v4192
    %v4194 = vpop.f32.mrf.mxu0
    %v4195 = vadd.f32 %v581, %v4194
    %v4196 = vpop.f32.mrf.mxu0
    %v4197 = vadd.f32 %v577, %v4196
    %v4198 = vpop.f32.mrf.mxu0
    %v4199 = vadd.f32 %v581, %v4198
    %4200 = vmatprep.mubr.bf16.mxu0 %v1323
    %4201 = vmatmul.mubr.bf16.gmra.mxu0 %v1322
    %v4202 = vpop.f32.mrf.mxu0
    %v4203 = vadd.f32 %v577, %v4202
    %v4204 = vpop.f32.mrf.mxu0
    %v4205 = vadd.f32 %v581, %v4204
    %v4206 = vpop.f32.mrf.mxu0
    %v4207 = vadd.f32 %v577, %v4206
    %v4208 = vpop.f32.mrf.mxu0
    %v4209 = vadd.f32 %v581, %v4208
    %4210 = vmatprep.mubr.bf16.mxu0 %v1331
    %4211 = vmatmul.mubr.bf16.gmra.mxu0 %v1330
    %v4212 = vpop.f32.mrf.mxu0
    %v4213 = vadd.f32 %v577, %v4212
    %v4214 = vpop.f32.mrf.mxu0
    %v4215 = vadd.f32 %v581, %v4214
    %v4216 = vpop.f32.mrf.mxu0
    %v4217 = vadd.f32 %v577, %v4216
    %v4218 = vpop.f32.mrf.mxu0
    %v4219 = vadd.f32 %v581, %v4218
    %4220 = vmatprep.mubr.bf16.mxu0 %v1339
    %4221 = vmatmul.mubr.bf16.gmra.mxu0 %v1338
    %v4222 = vpop.f32.mrf.mxu0
    %v4223 = vadd.f32 %v577, %v4222
    %v4224 = vpop.f32.mrf.mxu0
    %v4225 = vadd.f32 %v581, %v4224
    %v4226 = vpop.f32.mrf.mxu0
    %v4227 = vadd.f32 %v577, %v4226
    %v4228 = vpop.f32.mrf.mxu0
    %v4229 = vadd.f32 %v581, %v4228
    %4230 = vmatprep.mubr.bf16.mxu0 %v1347
    %4231 = vmatmul.mubr.bf16.gmra.mxu0 %v1346
    %v4232 = vpop.f32.mrf.mxu0
    %v4233 = vadd.f32 %v577, %v4232
    %v4234 = vpop.f32.mrf.mxu0
    %v4235 = vadd.f32 %v581, %v4234
    %v4236 = vpop.f32.mrf.mxu0
    %v4237 = vadd.f32 %v577, %v4236
    %v4238 = vpop.f32.mrf.mxu0
    %v4239 = vadd.f32 %v581, %v4238
    %4240 = vmatprep.mubr.bf16.mxu0 %v1355
    %4241 = vmatmul.mubr.bf16.gmra.mxu0 %v1354
    %v4242 = vpop.f32.mrf.mxu0
    %v4243 = vadd.f32 %v577, %v4242
    %v4244 = vpop.f32.mrf.mxu0
    %v4245 = vadd.f32 %v581, %v4244
    %v4246 = vpop.f32.mrf.mxu0
    %v4247 = vadd.f32 %v577, %v4246
    %v4248 = vpop.f32.mrf.mxu0
    %v4249 = vadd.f32 %v581, %v4248
    %4250 = vmatprep.mubr.bf16.mxu0 %v1363
    %4251 = vmatmul.mubr.bf16.gmra.mxu0 %v1362
    %v4252 = vpop.f32.mrf.mxu0
    %v4253 = vadd.f32 %v577, %v4252
    %v4254 = vpop.f32.mrf.mxu0
    %v4255 = vadd.f32 %v581, %v4254
    %v4256 = vpop.f32.mrf.mxu0
    %v4257 = vadd.f32 %v577, %v4256
    %v4258 = vpop.f32.mrf.mxu0
    %v4259 = vadd.f32 %v581, %v4258
    %4260 = vmatprep.mubr.bf16.mxu0 %v1371
    %4261 = vmatmul.mubr.bf16.gmra.mxu0 %v1370
    %v4262 = vpop.f32.mrf.mxu0
    %v4263 = vadd.f32 %v577, %v4262
    %v4264 = vpop.f32.mrf.mxu0
    %v4265 = vadd.f32 %v581, %v4264
    %v4266 = vpop.f32.mrf.mxu0
    %v4267 = vadd.f32 %v577, %v4266
    %v4268 = vpop.f32.mrf.mxu0
    %v4269 = vadd.f32 %v581, %v4268
    %4270 = vmatprep.mubr.bf16.mxu0 %v1379
    %4271 = vmatmul.mubr.bf16.gmra.mxu0 %v1378
    %v4272 = vpop.f32.mrf.mxu0
    %v4273 = vadd.f32 %v577, %v4272
    %v4274 = vpop.f32.mrf.mxu0
    %v4275 = vadd.f32 %v581, %v4274
    %v4276 = vpop.f32.mrf.mxu0
    %v4277 = vadd.f32 %v577, %v4276
    %v4278 = vpop.f32.mrf.mxu0
    %v4279 = vadd.f32 %v581, %v4278
    %4280 = vdwg.mxu0
    %4281 = vmatprep.subr.bf16.mxu0 %v2449
    %4282 = vmatpush1.bf16.msra.mxu0 %v2448
    %4283 = vmatprep.subr.bf16.mxu0 %v2445
    %4284 = vmatpush1.bf16.msra.mxu0 %v2444
    %4285 = vmatprep.subr.bf16.mxu0 %v2441
    %4286 = vmatpush1.bf16.msra.mxu0 %v2440
    %4287 = vmatprep.subr.bf16.mxu0 %v2437
    %4288 = vmatpush1.bf16.msra.mxu0 %v2436
    %4289 = vmatprep.subr.bf16.mxu0 %v2433
    %4290 = vmatpush1.bf16.msra.mxu0 %v2432
    %4291 = vmatprep.subr.bf16.mxu0 %v2429
    %4292 = vmatpush1.bf16.msra.mxu0 %v2428
    %4293 = vmatprep.subr.bf16.mxu0 %v2425
    %4294 = vmatpush1.bf16.msra.mxu0 %v2424
    %4295 = vmatprep.subr.bf16.mxu0 %v2421
    %4296 = vmatpush1.bf16.msra.mxu0 %v2420
    %4297 = vmatprep.subr.bf16.mxu0 %v2481
    %4298 = vmatpush2.bf16.msra.mxu0 %v2480
    %4299 = vmatprep.subr.bf16.mxu0 %v2477
    %4300 = vmatpush2.bf16.msra.mxu0 %v2476
    %4301 = vmatprep.subr.bf16.mxu0 %v2473
    %4302 = vmatpush2.bf16.msra.mxu0 %v2472
    %4303 = vmatprep.subr.bf16.mxu0 %v2469
    %4304 = vmatpush2.bf16.msra.mxu0 %v2468
    %4305 = vmatprep.subr.bf16.mxu0 %v2465
    %4306 = vmatpush2.bf16.msra.mxu0 %v2464
    %4307 = vmatprep.subr.bf16.mxu0 %v2461
    %4308 = vmatpush2.bf16.msra.mxu0 %v2460
    %4309 = vmatprep.subr.bf16.mxu0 %v2457
    %4310 = vmatpush2.bf16.msra.mxu0 %v2456
    %4311 = vmatprep.subr.bf16.mxu0 %v2453
    %4312 = vmatpush2.bf16.msra.mxu0 %v2452
    %4313 = vmatprep.mubr.bf16.mxu0 %v1189
    %4314 = vmatmul.mubr.bf16.gmra.mxu0 %v1188
    %v4315 = vpop.f32.mrf.mxu0
    %v4316 = vadd.f32 %v4033, %v4315
    %v4317 = vpop.f32.mrf.mxu0
    %v4318 = vadd.f32 %v4035, %v4317
    %v4319 = vpop.f32.mrf.mxu0
    %v4320 = vadd.f32 %v4037, %v4319
    %v4321 = vpop.f32.mrf.mxu0
    %v4322 = vadd.f32 %v4039, %v4321
    %4323 = vmatprep.mubr.bf16.mxu0 %v1197
    %4324 = vmatmul.mubr.bf16.gmra.mxu0 %v1196
    %v4325 = vpop.f32.mrf.mxu0
    %v4326 = vadd.f32 %v4043, %v4325
    %v4327 = vpop.f32.mrf.mxu0
    %v4328 = vadd.f32 %v4045, %v4327
    %v4329 = vpop.f32.mrf.mxu0
    %v4330 = vadd.f32 %v4047, %v4329
    %v4331 = vpop.f32.mrf.mxu0
    %v4332 = vadd.f32 %v4049, %v4331
    %4333 = vmatprep.mubr.bf16.mxu0 %v1205
    %4334 = vmatmul.mubr.bf16.gmra.mxu0 %v1204
    %v4335 = vpop.f32.mrf.mxu0
    %v4336 = vadd.f32 %v4053, %v4335
    %v4337 = vpop.f32.mrf.mxu0
    %v4338 = vadd.f32 %v4055, %v4337
    %v4339 = vpop.f32.mrf.mxu0
    %v4340 = vadd.f32 %v4057, %v4339
    %v4341 = vpop.f32.mrf.mxu0
    %v4342 = vadd.f32 %v4059, %v4341
    %4343 = vmatprep.mubr.bf16.mxu0 %v1213
    %4344 = vmatmul.mubr.bf16.gmra.mxu0 %v1212
    %v4345 = vpop.f32.mrf.mxu0
    %v4346 = vadd.f32 %v4063, %v4345
    %v4347 = vpop.f32.mrf.mxu0
    %v4348 = vadd.f32 %v4065, %v4347
    %v4349 = vpop.f32.mrf.mxu0
    %v4350 = vadd.f32 %v4067, %v4349
    %v4351 = vpop.f32.mrf.mxu0
    %v4352 = vadd.f32 %v4069, %v4351
    %4353 = vmatprep.mubr.bf16.mxu0 %v1221
    %4354 = vmatmul.mubr.bf16.gmra.mxu0 %v1220
    %v4355 = vpop.f32.mrf.mxu0
    %v4356 = vadd.f32 %v4073, %v4355
    %v4357 = vpop.f32.mrf.mxu0
    %v4358 = vadd.f32 %v4075, %v4357
    %v4359 = vpop.f32.mrf.mxu0
    %v4360 = vadd.f32 %v4077, %v4359
    %v4361 = vpop.f32.mrf.mxu0
    %v4362 = vadd.f32 %v4079, %v4361
    %4363 = vmatprep.mubr.bf16.mxu0 %v1229
    %4364 = vmatmul.mubr.bf16.gmra.mxu0 %v1228
    %v4365 = vpop.f32.mrf.mxu0
    %v4366 = vadd.f32 %v4083, %v4365
    %v4367 = vpop.f32.mrf.mxu0
    %v4368 = vadd.f32 %v4085, %v4367
    %v4369 = vpop.f32.mrf.mxu0
    %v4370 = vadd.f32 %v4087, %v4369
    %v4371 = vpop.f32.mrf.mxu0
    %v4372 = vadd.f32 %v4089, %v4371
    %4373 = vmatprep.mubr.bf16.mxu0 %v1237
    %4374 = vmatmul.mubr.bf16.gmra.mxu0 %v1236
    %v4375 = vpop.f32.mrf.mxu0
    %v4376 = vadd.f32 %v4093, %v4375
    %v4377 = vpop.f32.mrf.mxu0
    %v4378 = vadd.f32 %v4095, %v4377
    %v4379 = vpop.f32.mrf.mxu0
    %v4380 = vadd.f32 %v4097, %v4379
    %v4381 = vpop.f32.mrf.mxu0
    %v4382 = vadd.f32 %v4099, %v4381
    %4383 = vmatprep.mubr.bf16.mxu0 %v1245
    %4384 = vmatmul.mubr.bf16.gmra.mxu0 %v1244
    %v4385 = vpop.f32.mrf.mxu0
    %v4386 = vadd.f32 %v4103, %v4385
    %v4387 = vpop.f32.mrf.mxu0
    %v4388 = vadd.f32 %v4105, %v4387
    %v4389 = vpop.f32.mrf.mxu0
    %v4390 = vadd.f32 %v4107, %v4389
    %v4391 = vpop.f32.mrf.mxu0
    %v4392 = vadd.f32 %v4109, %v4391
    %4393 = vmatprep.mubr.bf16.mxu0 %v1253
    %4394 = vmatmul.mubr.bf16.gmra.mxu0 %v1252
    %v4395 = vpop.f32.mrf.mxu0
    %v4396 = vadd.f32 %v4113, %v4395
    %v4397 = vpop.f32.mrf.mxu0
    %v4398 = vadd.f32 %v4115, %v4397
    %v4399 = vpop.f32.mrf.mxu0
    %v4400 = vadd.f32 %v4117, %v4399
    %v4401 = vpop.f32.mrf.mxu0
    %v4402 = vadd.f32 %v4119, %v4401
    %4403 = vmatprep.mubr.bf16.mxu0 %v1261
    %4404 = vmatmul.mubr.bf16.gmra.mxu0 %v1260
    %v4405 = vpop.f32.mrf.mxu0
    %v4406 = vadd.f32 %v4123, %v4405
    %v4407 = vpop.f32.mrf.mxu0
    %v4408 = vadd.f32 %v4125, %v4407
    %v4409 = vpop.f32.mrf.mxu0
    %v4410 = vadd.f32 %v4127, %v4409
    %v4411 = vpop.f32.mrf.mxu0
    %v4412 = vadd.f32 %v4129, %v4411
    %4413 = vmatprep.mubr.bf16.mxu0 %v1269
    %4414 = vmatmul.mubr.bf16.gmra.mxu0 %v1268
    %v4415 = vpop.f32.mrf.mxu0
    %v4416 = vadd.f32 %v4133, %v4415
    %v4417 = vpop.f32.mrf.mxu0
    %v4418 = vadd.f32 %v4135, %v4417
    %v4419 = vpop.f32.mrf.mxu0
    %v4420 = vadd.f32 %v4137, %v4419
    %v4421 = vpop.f32.mrf.mxu0
    %v4422 = vadd.f32 %v4139, %v4421
    %4423 = vmatprep.mubr.bf16.mxu0 %v1277
    %4424 = vmatmul.mubr.bf16.gmra.mxu0 %v1276
    %v4425 = vpop.f32.mrf.mxu0
    %v4426 = vadd.f32 %v4143, %v4425
    %v4427 = vpop.f32.mrf.mxu0
    %v4428 = vadd.f32 %v4145, %v4427
    %v4429 = vpop.f32.mrf.mxu0
    %v4430 = vadd.f32 %v4147, %v4429
    %v4431 = vpop.f32.mrf.mxu0
    %v4432 = vadd.f32 %v4149, %v4431
    %4433 = vmatprep.mubr.bf16.mxu0 %v1285
    %4434 = vmatmul.mubr.bf16.gmra.mxu0 %v1284
    %v4435 = vpop.f32.mrf.mxu0
    %v4436 = vadd.f32 %v4153, %v4435
    %v4437 = vpop.f32.mrf.mxu0
    %v4438 = vadd.f32 %v4155, %v4437
    %v4439 = vpop.f32.mrf.mxu0
    %v4440 = vadd.f32 %v4157, %v4439
    %v4441 = vpop.f32.mrf.mxu0
    %v4442 = vadd.f32 %v4159, %v4441
    %4443 = vmatprep.mubr.bf16.mxu0 %v1293
    %4444 = vmatmul.mubr.bf16.gmra.mxu0 %v1292
    %v4445 = vpop.f32.mrf.mxu0
    %v4446 = vadd.f32 %v4163, %v4445
    %v4447 = vpop.f32.mrf.mxu0
    %v4448 = vadd.f32 %v4165, %v4447
    %v4449 = vpop.f32.mrf.mxu0
    %v4450 = vadd.f32 %v4167, %v4449
    %v4451 = vpop.f32.mrf.mxu0
    %v4452 = vadd.f32 %v4169, %v4451
    %4453 = vmatprep.mubr.bf16.mxu0 %v1301
    %4454 = vmatmul.mubr.bf16.gmra.mxu0 %v1300
    %v4455 = vpop.f32.mrf.mxu0
    %v4456 = vadd.f32 %v4173, %v4455
    %v4457 = vpop.f32.mrf.mxu0
    %v4458 = vadd.f32 %v4175, %v4457
    %v4459 = vpop.f32.mrf.mxu0
    %v4460 = vadd.f32 %v4177, %v4459
    %v4461 = vpop.f32.mrf.mxu0
    %v4462 = vadd.f32 %v4179, %v4461
    %4463 = vmatprep.mubr.bf16.mxu0 %v1309
    %4464 = vmatmul.mubr.bf16.gmra.mxu0 %v1308
    %v4465 = vpop.f32.mrf.mxu0
    %v4466 = vadd.f32 %v4183, %v4465
    %v4467 = vpop.f32.mrf.mxu0
    %v4468 = vadd.f32 %v4185, %v4467
    %v4469 = vpop.f32.mrf.mxu0
    %v4470 = vadd.f32 %v4187, %v4469
    %v4471 = vpop.f32.mrf.mxu0
    %v4472 = vadd.f32 %v4189, %v4471
    %4473 = vmatprep.mubr.bf16.mxu0 %v1317
    %4474 = vmatmul.mubr.bf16.gmra.mxu0 %v1316
    %v4475 = vpop.f32.mrf.mxu0
    %v4476 = vadd.f32 %v4193, %v4475
    %v4477 = vpop.f32.mrf.mxu0
    %v4478 = vadd.f32 %v4195, %v4477
    %v4479 = vpop.f32.mrf.mxu0
    %v4480 = vadd.f32 %v4197, %v4479
    %v4481 = vpop.f32.mrf.mxu0
    %v4482 = vadd.f32 %v4199, %v4481
    %4483 = vmatprep.mubr.bf16.mxu0 %v1325
    %4484 = vmatmul.mubr.bf16.gmra.mxu0 %v1324
    %v4485 = vpop.f32.mrf.mxu0
    %v4486 = vadd.f32 %v4203, %v4485
    %v4487 = vpop.f32.mrf.mxu0
    %v4488 = vadd.f32 %v4205, %v4487
    %v4489 = vpop.f32.mrf.mxu0
    %v4490 = vadd.f32 %v4207, %v4489
    %v4491 = vpop.f32.mrf.mxu0
    %v4492 = vadd.f32 %v4209, %v4491
    %4493 = vmatprep.mubr.bf16.mxu0 %v1333
    %4494 = vmatmul.mubr.bf16.gmra.mxu0 %v1332
    %v4495 = vpop.f32.mrf.mxu0
    %v4496 = vadd.f32 %v4213, %v4495
    %v4497 = vpop.f32.mrf.mxu0
    %v4498 = vadd.f32 %v4215, %v4497
    %v4499 = vpop.f32.mrf.mxu0
    %v4500 = vadd.f32 %v4217, %v4499
    %v4501 = vpop.f32.mrf.mxu0
    %v4502 = vadd.f32 %v4219, %v4501
    %4503 = vmatprep.mubr.bf16.mxu0 %v1341
    %4504 = vmatmul.mubr.bf16.gmra.mxu0 %v1340
    %v4505 = vpop.f32.mrf.mxu0
    %v4506 = vadd.f32 %v4223, %v4505
    %v4507 = vpop.f32.mrf.mxu0
    %v4508 = vadd.f32 %v4225, %v4507
    %v4509 = vpop.f32.mrf.mxu0
    %v4510 = vadd.f32 %v4227, %v4509
    %v4511 = vpop.f32.mrf.mxu0
    %v4512 = vadd.f32 %v4229, %v4511
    %4513 = vmatprep.mubr.bf16.mxu0 %v1349
    %4514 = vmatmul.mubr.bf16.gmra.mxu0 %v1348
    %v4515 = vpop.f32.mrf.mxu0
    %v4516 = vadd.f32 %v4233, %v4515
    %v4517 = vpop.f32.mrf.mxu0
    %v4518 = vadd.f32 %v4235, %v4517
    %v4519 = vpop.f32.mrf.mxu0
    %v4520 = vadd.f32 %v4237, %v4519
    %v4521 = vpop.f32.mrf.mxu0
    %v4522 = vadd.f32 %v4239, %v4521
    %4523 = vmatprep.mubr.bf16.mxu0 %v1357
    %4524 = vmatmul.mubr.bf16.gmra.mxu0 %v1356
    %v4525 = vpop.f32.mrf.mxu0
    %v4526 = vadd.f32 %v4243, %v4525
    %v4527 = vpop.f32.mrf.mxu0
    %v4528 = vadd.f32 %v4245, %v4527
    %v4529 = vpop.f32.mrf.mxu0
    %v4530 = vadd.f32 %v4247, %v4529
    %v4531 = vpop.f32.mrf.mxu0
    %v4532 = vadd.f32 %v4249, %v4531
    %4533 = vmatprep.mubr.bf16.mxu0 %v1365
    %4534 = vmatmul.mubr.bf16.gmra.mxu0 %v1364
    %v4535 = vpop.f32.mrf.mxu0
    %v4536 = vadd.f32 %v4253, %v4535
    %v4537 = vpop.f32.mrf.mxu0
    %v4538 = vadd.f32 %v4255, %v4537
    %v4539 = vpop.f32.mrf.mxu0
    %v4540 = vadd.f32 %v4257, %v4539
    %v4541 = vpop.f32.mrf.mxu0
    %v4542 = vadd.f32 %v4259, %v4541
    %4543 = vmatprep.mubr.bf16.mxu0 %v1373
    %4544 = vmatmul.mubr.bf16.gmra.mxu0 %v1372
    %v4545 = vpop.f32.mrf.mxu0
    %v4546 = vadd.f32 %v4263, %v4545
    %v4547 = vpop.f32.mrf.mxu0
    %v4548 = vadd.f32 %v4265, %v4547
    %v4549 = vpop.f32.mrf.mxu0
    %v4550 = vadd.f32 %v4267, %v4549
    %v4551 = vpop.f32.mrf.mxu0
    %v4552 = vadd.f32 %v4269, %v4551
    %4553 = vmatprep.mubr.bf16.mxu0 %v1381
    %4554 = vmatmul.mubr.bf16.gmra.mxu0 %v1380
    %v4555 = vpop.f32.mrf.mxu0
    %v4556 = vadd.f32 %v4273, %v4555
    %v4557 = vpop.f32.mrf.mxu0
    %v4558 = vadd.f32 %v4275, %v4557
    %v4559 = vpop.f32.mrf.mxu0
    %v4560 = vadd.f32 %v4277, %v4559
    %v4561 = vpop.f32.mrf.mxu0
    %v4562 = vadd.f32 %v4279, %v4561
    %4563 = vdwg.mxu0
    %4564 = vmatprep.subr.bf16.mxu0 %v2513
    %4565 = vmatpush1.bf16.msra.mxu0 %v2512
    %4566 = vmatprep.subr.bf16.mxu0 %v2509
    %4567 = vmatpush1.bf16.msra.mxu0 %v2508
    %4568 = vmatprep.subr.bf16.mxu0 %v2505
    %4569 = vmatpush1.bf16.msra.mxu0 %v2504
    %4570 = vmatprep.subr.bf16.mxu0 %v2501
    %4571 = vmatpush1.bf16.msra.mxu0 %v2500
    %4572 = vmatprep.subr.bf16.mxu0 %v2497
    %4573 = vmatpush1.bf16.msra.mxu0 %v2496
    %4574 = vmatprep.subr.bf16.mxu0 %v2493
    %4575 = vmatpush1.bf16.msra.mxu0 %v2492
    %4576 = vmatprep.subr.bf16.mxu0 %v2489
    %4577 = vmatpush1.bf16.msra.mxu0 %v2488
    %4578 = vmatprep.subr.bf16.mxu0 %v2485
    %4579 = vmatpush1.bf16.msra.mxu0 %v2484
    %4580 = vmatprep.subr.bf16.mxu0 %v2545
    %4581 = vmatpush2.bf16.msra.mxu0 %v2544
    %4582 = vmatprep.subr.bf16.mxu0 %v2541
    %4583 = vmatpush2.bf16.msra.mxu0 %v2540
    %4584 = vmatprep.subr.bf16.mxu0 %v2537
    %4585 = vmatpush2.bf16.msra.mxu0 %v2536
    %4586 = vmatprep.subr.bf16.mxu0 %v2533
    %4587 = vmatpush2.bf16.msra.mxu0 %v2532
    %4588 = vmatprep.subr.bf16.mxu0 %v2529
    %4589 = vmatpush2.bf16.msra.mxu0 %v2528
    %4590 = vmatprep.subr.bf16.mxu0 %v2525
    %4591 = vmatpush2.bf16.msra.mxu0 %v2524
    %4592 = vmatprep.subr.bf16.mxu0 %v2521
    %4593 = vmatpush2.bf16.msra.mxu0 %v2520
    %4594 = vmatprep.subr.bf16.mxu0 %v2517
    %4595 = vmatpush2.bf16.msra.mxu0 %v2516
    %4596 = vmatprep.mubr.bf16.mxu0 %v1191
    %4597 = vmatmul.mubr.bf16.gmra.mxu0 %v1190
    %v4598 = vpop.f32.mrf.mxu0
    %v4599 = vadd.f32 %v4316, %v4598
    %v4600 = vpop.f32.mrf.mxu0
    %v4601 = vadd.f32 %v4318, %v4600
    %v4602 = vpop.f32.mrf.mxu0
    %v4603 = vadd.f32 %v4320, %v4602
    %v4604 = vpop.f32.mrf.mxu0
    %v4605 = vadd.f32 %v4322, %v4604
    %4606 = vmatprep.mubr.bf16.mxu0 %v1199
    %4607 = vmatmul.mubr.bf16.gmra.mxu0 %v1198
    %v4608 = vpop.f32.mrf.mxu0
    %v4609 = vadd.f32 %v4326, %v4608
    %v4610 = vpop.f32.mrf.mxu0
    %v4611 = vadd.f32 %v4328, %v4610
    %v4612 = vpop.f32.mrf.mxu0
    %v4613 = vadd.f32 %v4330, %v4612
    %v4614 = vpop.f32.mrf.mxu0
    %v4615 = vadd.f32 %v4332, %v4614
    %4616 = vmatprep.mubr.bf16.mxu0 %v1207
    %4617 = vmatmul.mubr.bf16.gmra.mxu0 %v1206
    %v4618 = vpop.f32.mrf.mxu0
    %v4619 = vadd.f32 %v4336, %v4618
    %v4620 = vpop.f32.mrf.mxu0
    %v4621 = vadd.f32 %v4338, %v4620
    %v4622 = vpop.f32.mrf.mxu0
    %v4623 = vadd.f32 %v4340, %v4622
    %v4624 = vpop.f32.mrf.mxu0
    %v4625 = vadd.f32 %v4342, %v4624
    %4626 = vmatprep.mubr.bf16.mxu0 %v1215
    %4627 = vmatmul.mubr.bf16.gmra.mxu0 %v1214
    %v4628 = vpop.f32.mrf.mxu0
    %v4629 = vadd.f32 %v4346, %v4628
    %v4630 = vpop.f32.mrf.mxu0
    %v4631 = vadd.f32 %v4348, %v4630
    %v4632 = vpop.f32.mrf.mxu0
    %v4633 = vadd.f32 %v4350, %v4632
    %v4634 = vpop.f32.mrf.mxu0
    %v4635 = vadd.f32 %v4352, %v4634
    %4636 = vmatprep.mubr.bf16.mxu0 %v1223
    %4637 = vmatmul.mubr.bf16.gmra.mxu0 %v1222
    %v4638 = vpop.f32.mrf.mxu0
    %v4639 = vadd.f32 %v4356, %v4638
    %v4640 = vpop.f32.mrf.mxu0
    %v4641 = vadd.f32 %v4358, %v4640
    %v4642 = vpop.f32.mrf.mxu0
    %v4643 = vadd.f32 %v4360, %v4642
    %v4644 = vpop.f32.mrf.mxu0
    %v4645 = vadd.f32 %v4362, %v4644
    %4646 = vmatprep.mubr.bf16.mxu0 %v1231
    %4647 = vmatmul.mubr.bf16.gmra.mxu0 %v1230
    %v4648 = vpop.f32.mrf.mxu0
    %v4649 = vadd.f32 %v4366, %v4648
    %v4650 = vpop.f32.mrf.mxu0
    %v4651 = vadd.f32 %v4368, %v4650
    %v4652 = vpop.f32.mrf.mxu0
    %v4653 = vadd.f32 %v4370, %v4652
    %v4654 = vpop.f32.mrf.mxu0
    %v4655 = vadd.f32 %v4372, %v4654
    %4656 = vmatprep.mubr.bf16.mxu0 %v1239
    %4657 = vmatmul.mubr.bf16.gmra.mxu0 %v1238
    %v4658 = vpop.f32.mrf.mxu0
    %v4659 = vadd.f32 %v4376, %v4658
    %v4660 = vpop.f32.mrf.mxu0
    %v4661 = vadd.f32 %v4378, %v4660
    %v4662 = vpop.f32.mrf.mxu0
    %v4663 = vadd.f32 %v4380, %v4662
    %v4664 = vpop.f32.mrf.mxu0
    %v4665 = vadd.f32 %v4382, %v4664
    %4666 = vmatprep.mubr.bf16.mxu0 %v1247
    %4667 = vmatmul.mubr.bf16.gmra.mxu0 %v1246
    %v4668 = vpop.f32.mrf.mxu0
    %v4669 = vadd.f32 %v4386, %v4668
    %v4670 = vpop.f32.mrf.mxu0
    %v4671 = vadd.f32 %v4388, %v4670
    %v4672 = vpop.f32.mrf.mxu0
    %v4673 = vadd.f32 %v4390, %v4672
    %v4674 = vpop.f32.mrf.mxu0
    %v4675 = vadd.f32 %v4392, %v4674
    %4676 = vmatprep.mubr.bf16.mxu0 %v1255
    %4677 = vmatmul.mubr.bf16.gmra.mxu0 %v1254
    %v4678 = vpop.f32.mrf.mxu0
    %v4679 = vadd.f32 %v4396, %v4678
    %v4680 = vpop.f32.mrf.mxu0
    %v4681 = vadd.f32 %v4398, %v4680
    %v4682 = vpop.f32.mrf.mxu0
    %v4683 = vadd.f32 %v4400, %v4682
    %v4684 = vpop.f32.mrf.mxu0
    %v4685 = vadd.f32 %v4402, %v4684
    %4686 = vmatprep.mubr.bf16.mxu0 %v1263
    %4687 = vmatmul.mubr.bf16.gmra.mxu0 %v1262
    %v4688 = vpop.f32.mrf.mxu0
    %v4689 = vadd.f32 %v4406, %v4688
    %v4690 = vpop.f32.mrf.mxu0
    %v4691 = vadd.f32 %v4408, %v4690
    %v4692 = vpop.f32.mrf.mxu0
    %v4693 = vadd.f32 %v4410, %v4692
    %v4694 = vpop.f32.mrf.mxu0
    %v4695 = vadd.f32 %v4412, %v4694
    %4696 = vmatprep.mubr.bf16.mxu0 %v1271
    %4697 = vmatmul.mubr.bf16.gmra.mxu0 %v1270
    %v4698 = vpop.f32.mrf.mxu0
    %v4699 = vadd.f32 %v4416, %v4698
    %v4700 = vpop.f32.mrf.mxu0
    %v4701 = vadd.f32 %v4418, %v4700
    %v4702 = vpop.f32.mrf.mxu0
    %v4703 = vadd.f32 %v4420, %v4702
    %v4704 = vpop.f32.mrf.mxu0
    %v4705 = vadd.f32 %v4422, %v4704
    %4706 = vmatprep.mubr.bf16.mxu0 %v1279
    %4707 = vmatmul.mubr.bf16.gmra.mxu0 %v1278
    %v4708 = vpop.f32.mrf.mxu0
    %v4709 = vadd.f32 %v4426, %v4708
    %v4710 = vpop.f32.mrf.mxu0
    %v4711 = vadd.f32 %v4428, %v4710
    %v4712 = vpop.f32.mrf.mxu0
    %v4713 = vadd.f32 %v4430, %v4712
    %v4714 = vpop.f32.mrf.mxu0
    %v4715 = vadd.f32 %v4432, %v4714
    %4716 = vmatprep.mubr.bf16.mxu0 %v1287
    %4717 = vmatmul.mubr.bf16.gmra.mxu0 %v1286
    %v4718 = vpop.f32.mrf.mxu0
    %v4719 = vadd.f32 %v4436, %v4718
    %v4720 = vpop.f32.mrf.mxu0
    %v4721 = vadd.f32 %v4438, %v4720
    %v4722 = vpop.f32.mrf.mxu0
    %v4723 = vadd.f32 %v4440, %v4722
    %v4724 = vpop.f32.mrf.mxu0
    %v4725 = vadd.f32 %v4442, %v4724
    %4726 = vmatprep.mubr.bf16.mxu0 %v1295
    %4727 = vmatmul.mubr.bf16.gmra.mxu0 %v1294
    %v4728 = vpop.f32.mrf.mxu0
    %v4729 = vadd.f32 %v4446, %v4728
    %v4730 = vpop.f32.mrf.mxu0
    %v4731 = vadd.f32 %v4448, %v4730
    %v4732 = vpop.f32.mrf.mxu0
    %v4733 = vadd.f32 %v4450, %v4732
    %v4734 = vpop.f32.mrf.mxu0
    %v4735 = vadd.f32 %v4452, %v4734
    %4736 = vmatprep.mubr.bf16.mxu0 %v1303
    %4737 = vmatmul.mubr.bf16.gmra.mxu0 %v1302
    %v4738 = vpop.f32.mrf.mxu0
    %v4739 = vadd.f32 %v4456, %v4738
    %v4740 = vpop.f32.mrf.mxu0
    %v4741 = vadd.f32 %v4458, %v4740
    %v4742 = vpop.f32.mrf.mxu0
    %v4743 = vadd.f32 %v4460, %v4742
    %v4744 = vpop.f32.mrf.mxu0
    %v4745 = vadd.f32 %v4462, %v4744
    %4746 = vmatprep.mubr.bf16.mxu0 %v1311
    %4747 = vmatmul.mubr.bf16.gmra.mxu0 %v1310
    %v4748 = vpop.f32.mrf.mxu0
    %v4749 = vadd.f32 %v4466, %v4748
    %v4750 = vpop.f32.mrf.mxu0
    %v4751 = vadd.f32 %v4468, %v4750
    %v4752 = vpop.f32.mrf.mxu0
    %v4753 = vadd.f32 %v4470, %v4752
    %v4754 = vpop.f32.mrf.mxu0
    %v4755 = vadd.f32 %v4472, %v4754
    %4756 = vmatprep.mubr.bf16.mxu0 %v1319
    %4757 = vmatmul.mubr.bf16.gmra.mxu0 %v1318
    %v4758 = vpop.f32.mrf.mxu0
    %v4759 = vadd.f32 %v4476, %v4758
    %v4760 = vpop.f32.mrf.mxu0
    %v4761 = vadd.f32 %v4478, %v4760
    %v4762 = vpop.f32.mrf.mxu0
    %v4763 = vadd.f32 %v4480, %v4762
    %v4764 = vpop.f32.mrf.mxu0
    %v4765 = vadd.f32 %v4482, %v4764
    %4766 = vmatprep.mubr.bf16.mxu0 %v1327
    %4767 = vmatmul.mubr.bf16.gmra.mxu0 %v1326
    %v4768 = vpop.f32.mrf.mxu0
    %v4769 = vadd.f32 %v4486, %v4768
    %v4770 = vpop.f32.mrf.mxu0
    %v4771 = vadd.f32 %v4488, %v4770
    %v4772 = vpop.f32.mrf.mxu0
    %v4773 = vadd.f32 %v4490, %v4772
    %v4774 = vpop.f32.mrf.mxu0
    %v4775 = vadd.f32 %v4492, %v4774
    %4776 = vmatprep.mubr.bf16.mxu0 %v1335
    %4777 = vmatmul.mubr.bf16.gmra.mxu0 %v1334
    %v4778 = vpop.f32.mrf.mxu0
    %v4779 = vadd.f32 %v4496, %v4778
    %v4780 = vpop.f32.mrf.mxu0
    %v4781 = vadd.f32 %v4498, %v4780
    %v4782 = vpop.f32.mrf.mxu0
    %v4783 = vadd.f32 %v4500, %v4782
    %v4784 = vpop.f32.mrf.mxu0
    %v4785 = vadd.f32 %v4502, %v4784
    %4786 = vmatprep.mubr.bf16.mxu0 %v1343
    %4787 = vmatmul.mubr.bf16.gmra.mxu0 %v1342
    %v4788 = vpop.f32.mrf.mxu0
    %v4789 = vadd.f32 %v4506, %v4788
    %v4790 = vpop.f32.mrf.mxu0
    %v4791 = vadd.f32 %v4508, %v4790
    %v4792 = vpop.f32.mrf.mxu0
    %v4793 = vadd.f32 %v4510, %v4792
    %v4794 = vpop.f32.mrf.mxu0
    %v4795 = vadd.f32 %v4512, %v4794
    %4796 = vmatprep.mubr.bf16.mxu0 %v1351
    %4797 = vmatmul.mubr.bf16.gmra.mxu0 %v1350
    %v4798 = vpop.f32.mrf.mxu0
    %v4799 = vadd.f32 %v4516, %v4798
    %v4800 = vpop.f32.mrf.mxu0
    %v4801 = vadd.f32 %v4518, %v4800
    %v4802 = vpop.f32.mrf.mxu0
    %v4803 = vadd.f32 %v4520, %v4802
    %v4804 = vpop.f32.mrf.mxu0
    %v4805 = vadd.f32 %v4522, %v4804
    %4806 = vmatprep.mubr.bf16.mxu0 %v1359
    %4807 = vmatmul.mubr.bf16.gmra.mxu0 %v1358
    %v4808 = vpop.f32.mrf.mxu0
    %v4809 = vadd.f32 %v4526, %v4808
    %v4810 = vpop.f32.mrf.mxu0
    %v4811 = vadd.f32 %v4528, %v4810
    %v4812 = vpop.f32.mrf.mxu0
    %v4813 = vadd.f32 %v4530, %v4812
    %v4814 = vpop.f32.mrf.mxu0
    %v4815 = vadd.f32 %v4532, %v4814
    %4816 = vmatprep.mubr.bf16.mxu0 %v1367
    %4817 = vmatmul.mubr.bf16.gmra.mxu0 %v1366
    %v4818 = vpop.f32.mrf.mxu0
    %v4819 = vadd.f32 %v4536, %v4818
    %v4820 = vpop.f32.mrf.mxu0
    %v4821 = vadd.f32 %v4538, %v4820
    %v4822 = vpop.f32.mrf.mxu0
    %v4823 = vadd.f32 %v4540, %v4822
    %v4824 = vpop.f32.mrf.mxu0
    %v4825 = vadd.f32 %v4542, %v4824
    %4826 = vmatprep.mubr.bf16.mxu0 %v1375
    %4827 = vmatmul.mubr.bf16.gmra.mxu0 %v1374
    %v4828 = vpop.f32.mrf.mxu0
    %v4829 = vadd.f32 %v4546, %v4828
    %v4830 = vpop.f32.mrf.mxu0
    %v4831 = vadd.f32 %v4548, %v4830
    %v4832 = vpop.f32.mrf.mxu0
    %v4833 = vadd.f32 %v4550, %v4832
    %v4834 = vpop.f32.mrf.mxu0
    %v4835 = vadd.f32 %v4552, %v4834
    %4836 = vmatprep.mubr.bf16.mxu0 %v1383
    %4837 = vmatmul.mubr.bf16.gmra.mxu0 %v1382
    %v4838 = vpop.f32.mrf.mxu0
    %v4839 = vadd.f32 %v4556, %v4838
    %v4840 = vpop.f32.mrf.mxu0
    %v4841 = vadd.f32 %v4558, %v4840
    %v4842 = vpop.f32.mrf.mxu0
    %v4843 = vadd.f32 %v4560, %v4842
    %v4844 = vpop.f32.mrf.mxu0
    %v4845 = vadd.f32 %v4562, %v4844
    %4846 = vdwg.mxu0
    %4847 = vmatprep.subr.bf16.mxu0 %v2577
    %4848 = vmatpush1.bf16.msra.mxu0 %v2576
    %4849 = vmatprep.subr.bf16.mxu0 %v2573
    %4850 = vmatpush1.bf16.msra.mxu0 %v2572
    %4851 = vmatprep.subr.bf16.mxu0 %v2569
    %4852 = vmatpush1.bf16.msra.mxu0 %v2568
    %4853 = vmatprep.subr.bf16.mxu0 %v2565
    %4854 = vmatpush1.bf16.msra.mxu0 %v2564
    %4855 = vmatprep.subr.bf16.mxu0 %v2561
    %4856 = vmatpush1.bf16.msra.mxu0 %v2560
    %4857 = vmatprep.subr.bf16.mxu0 %v2557
    %4858 = vmatpush1.bf16.msra.mxu0 %v2556
    %4859 = vmatprep.subr.bf16.mxu0 %v2553
    %4860 = vmatpush1.bf16.msra.mxu0 %v2552
    %4861 = vmatprep.subr.bf16.mxu0 %v2549
    %4862 = vmatpush1.bf16.msra.mxu0 %v2548
    %4863 = vmatprep.subr.bf16.mxu0 %v2609
    %4864 = vmatpush2.bf16.msra.mxu0 %v2608
    %4865 = vmatprep.subr.bf16.mxu0 %v2605
    %4866 = vmatpush2.bf16.msra.mxu0 %v2604
    %4867 = vmatprep.subr.bf16.mxu0 %v2601
    %4868 = vmatpush2.bf16.msra.mxu0 %v2600
    %4869 = vmatprep.subr.bf16.mxu0 %v2597
    %4870 = vmatpush2.bf16.msra.mxu0 %v2596
    %4871 = vmatprep.subr.bf16.mxu0 %v2593
    %4872 = vmatpush2.bf16.msra.mxu0 %v2592
    %4873 = vmatprep.subr.bf16.mxu0 %v2589
    %4874 = vmatpush2.bf16.msra.mxu0 %v2588
    %4875 = vmatprep.subr.bf16.mxu0 %v2585
    %4876 = vmatpush2.bf16.msra.mxu0 %v2584
    %4877 = vmatprep.subr.bf16.mxu0 %v2581
    %4878 = vmatpush2.bf16.msra.mxu0 %v2580
    %4879 = vmatprep.mubr.bf16.mxu0 %v1193
    %4880 = vmatmul.mubr.bf16.gmra.mxu0 %v1192
    %v4881 = vpop.f32.mrf.mxu0
    %v4882 = vadd.f32 %v4599, %v4881
    %v4883 = vpop.f32.mrf.mxu0
    %v4884 = vadd.f32 %v4601, %v4883
    %v4885 = vpop.f32.mrf.mxu0
    %v4886 = vadd.f32 %v4603, %v4885
    %v4887 = vpop.f32.mrf.mxu0
    %v4888 = vadd.f32 %v4605, %v4887
    %4889 = vmatprep.mubr.bf16.mxu0 %v1201
    %4890 = vmatmul.mubr.bf16.gmra.mxu0 %v1200
    %v4891 = vpop.f32.mrf.mxu0
    %v4892 = vadd.f32 %v4609, %v4891
    %v4893 = vpop.f32.mrf.mxu0
    %v4894 = vadd.f32 %v4611, %v4893
    %v4895 = vpop.f32.mrf.mxu0
    %v4896 = vadd.f32 %v4613, %v4895
    %v4897 = vpop.f32.mrf.mxu0
    %v4898 = vadd.f32 %v4615, %v4897
    %4899 = vmatprep.mubr.bf16.mxu0 %v1209
    %4900 = vmatmul.mubr.bf16.gmra.mxu0 %v1208
    %v4901 = vpop.f32.mrf.mxu0
    %v4902 = vadd.f32 %v4619, %v4901
    %v4903 = vpop.f32.mrf.mxu0
    %v4904 = vadd.f32 %v4621, %v4903
    %v4905 = vpop.f32.mrf.mxu0
    %v4906 = vadd.f32 %v4623, %v4905
    %v4907 = vpop.f32.mrf.mxu0
    %v4908 = vadd.f32 %v4625, %v4907
    %4909 = vmatprep.mubr.bf16.mxu0 %v1217
    %4910 = vmatmul.mubr.bf16.gmra.mxu0 %v1216
    %v4911 = vpop.f32.mrf.mxu0
    %v4912 = vadd.f32 %v4629, %v4911
    %v4913 = vpop.f32.mrf.mxu0
    %v4914 = vadd.f32 %v4631, %v4913
    %v4915 = vpop.f32.mrf.mxu0
    %v4916 = vadd.f32 %v4633, %v4915
    %v4917 = vpop.f32.mrf.mxu0
    %v4918 = vadd.f32 %v4635, %v4917
    %4919 = vmatprep.mubr.bf16.mxu0 %v1225
    %4920 = vmatmul.mubr.bf16.gmra.mxu0 %v1224
    %v4921 = vpop.f32.mrf.mxu0
    %v4922 = vadd.f32 %v4639, %v4921
    %v4923 = vpop.f32.mrf.mxu0
    %v4924 = vadd.f32 %v4641, %v4923
    %v4925 = vpop.f32.mrf.mxu0
    %v4926 = vadd.f32 %v4643, %v4925
    %v4927 = vpop.f32.mrf.mxu0
    %v4928 = vadd.f32 %v4645, %v4927
    %4929 = vmatprep.mubr.bf16.mxu0 %v1233
    %4930 = vmatmul.mubr.bf16.gmra.mxu0 %v1232
    %v4931 = vpop.f32.mrf.mxu0
    %v4932 = vadd.f32 %v4649, %v4931
    %v4933 = vpop.f32.mrf.mxu0
    %v4934 = vadd.f32 %v4651, %v4933
    %v4935 = vpop.f32.mrf.mxu0
    %v4936 = vadd.f32 %v4653, %v4935
    %v4937 = vpop.f32.mrf.mxu0
    %v4938 = vadd.f32 %v4655, %v4937
    %4939 = vmatprep.mubr.bf16.mxu0 %v1241
    %4940 = vmatmul.mubr.bf16.gmra.mxu0 %v1240
    %v4941 = vpop.f32.mrf.mxu0
    %v4942 = vadd.f32 %v4659, %v4941
    %v4943 = vpop.f32.mrf.mxu0
    %v4944 = vadd.f32 %v4661, %v4943
    %v4945 = vpop.f32.mrf.mxu0
    %v4946 = vadd.f32 %v4663, %v4945
    %v4947 = vpop.f32.mrf.mxu0
    %v4948 = vadd.f32 %v4665, %v4947
    %4949 = vmatprep.mubr.bf16.mxu0 %v1249
    %4950 = vmatmul.mubr.bf16.gmra.mxu0 %v1248
    %v4951 = vpop.f32.mrf.mxu0
    %v4952 = vadd.f32 %v4669, %v4951
    %v4953 = vpop.f32.mrf.mxu0
    %v4954 = vadd.f32 %v4671, %v4953
    %v4955 = vpop.f32.mrf.mxu0
    %v4956 = vadd.f32 %v4673, %v4955
    %v4957 = vpop.f32.mrf.mxu0
    %v4958 = vadd.f32 %v4675, %v4957
    %4959 = vmatprep.mubr.bf16.mxu0 %v1257
    %4960 = vmatmul.mubr.bf16.gmra.mxu0 %v1256
    %v4961 = vpop.f32.mrf.mxu0
    %v4962 = vadd.f32 %v4679, %v4961
    %v4963 = vpop.f32.mrf.mxu0
    %v4964 = vadd.f32 %v4681, %v4963
    %v4965 = vpop.f32.mrf.mxu0
    %v4966 = vadd.f32 %v4683, %v4965
    %v4967 = vpop.f32.mrf.mxu0
    %v4968 = vadd.f32 %v4685, %v4967
    %4969 = vmatprep.mubr.bf16.mxu0 %v1265
    %4970 = vmatmul.mubr.bf16.gmra.mxu0 %v1264
    %v4971 = vpop.f32.mrf.mxu0
    %v4972 = vadd.f32 %v4689, %v4971
    %v4973 = vpop.f32.mrf.mxu0
    %v4974 = vadd.f32 %v4691, %v4973
    %v4975 = vpop.f32.mrf.mxu0
    %v4976 = vadd.f32 %v4693, %v4975
    %v4977 = vpop.f32.mrf.mxu0
    %v4978 = vadd.f32 %v4695, %v4977
    %4979 = vmatprep.mubr.bf16.mxu0 %v1273
    %4980 = vmatmul.mubr.bf16.gmra.mxu0 %v1272
    %v4981 = vpop.f32.mrf.mxu0
    %v4982 = vadd.f32 %v4699, %v4981
    %v4983 = vpop.f32.mrf.mxu0
    %v4984 = vadd.f32 %v4701, %v4983
    %v4985 = vpop.f32.mrf.mxu0
    %v4986 = vadd.f32 %v4703, %v4985
    %v4987 = vpop.f32.mrf.mxu0
    %v4988 = vadd.f32 %v4705, %v4987
    %4989 = vmatprep.mubr.bf16.mxu0 %v1281
    %4990 = vmatmul.mubr.bf16.gmra.mxu0 %v1280
    %v4991 = vpop.f32.mrf.mxu0
    %v4992 = vadd.f32 %v4709, %v4991
    %v4993 = vpop.f32.mrf.mxu0
    %v4994 = vadd.f32 %v4711, %v4993
    %v4995 = vpop.f32.mrf.mxu0
    %v4996 = vadd.f32 %v4713, %v4995
    %v4997 = vpop.f32.mrf.mxu0
    %v4998 = vadd.f32 %v4715, %v4997
    %4999 = vmatprep.mubr.bf16.mxu0 %v1289
    %5000 = vmatmul.mubr.bf16.gmra.mxu0 %v1288
    %v5001 = vpop.f32.mrf.mxu0
    %v5002 = vadd.f32 %v4719, %v5001
    %v5003 = vpop.f32.mrf.mxu0
    %v5004 = vadd.f32 %v4721, %v5003
    %v5005 = vpop.f32.mrf.mxu0
    %v5006 = vadd.f32 %v4723, %v5005
    %v5007 = vpop.f32.mrf.mxu0
    %v5008 = vadd.f32 %v4725, %v5007
    %5009 = vmatprep.mubr.bf16.mxu0 %v1297
    %5010 = vmatmul.mubr.bf16.gmra.mxu0 %v1296
    %v5011 = vpop.f32.mrf.mxu0
    %v5012 = vadd.f32 %v4729, %v5011
    %v5013 = vpop.f32.mrf.mxu0
    %v5014 = vadd.f32 %v4731, %v5013
    %v5015 = vpop.f32.mrf.mxu0
    %v5016 = vadd.f32 %v4733, %v5015
    %v5017 = vpop.f32.mrf.mxu0
    %v5018 = vadd.f32 %v4735, %v5017
    %5019 = vmatprep.mubr.bf16.mxu0 %v1305
    %5020 = vmatmul.mubr.bf16.gmra.mxu0 %v1304
    %v5021 = vpop.f32.mrf.mxu0
    %v5022 = vadd.f32 %v4739, %v5021
    %v5023 = vpop.f32.mrf.mxu0
    %v5024 = vadd.f32 %v4741, %v5023
    %v5025 = vpop.f32.mrf.mxu0
    %v5026 = vadd.f32 %v4743, %v5025
    %v5027 = vpop.f32.mrf.mxu0
    %v5028 = vadd.f32 %v4745, %v5027
    %5029 = vmatprep.mubr.bf16.mxu0 %v1313
    %5030 = vmatmul.mubr.bf16.gmra.mxu0 %v1312
    %v5031 = vpop.f32.mrf.mxu0
    %v5032 = vadd.f32 %v4749, %v5031
    %v5033 = vpop.f32.mrf.mxu0
    %v5034 = vadd.f32 %v4751, %v5033
    %v5035 = vpop.f32.mrf.mxu0
    %v5036 = vadd.f32 %v4753, %v5035
    %v5037 = vpop.f32.mrf.mxu0
    %v5038 = vadd.f32 %v4755, %v5037
    %5039 = vmatprep.mubr.bf16.mxu0 %v1321
    %5040 = vmatmul.mubr.bf16.gmra.mxu0 %v1320
    %v5041 = vpop.f32.mrf.mxu0
    %v5042 = vadd.f32 %v4759, %v5041
    %v5043 = vpop.f32.mrf.mxu0
    %v5044 = vadd.f32 %v4761, %v5043
    %v5045 = vpop.f32.mrf.mxu0
    %v5046 = vadd.f32 %v4763, %v5045
    %v5047 = vpop.f32.mrf.mxu0
    %v5048 = vadd.f32 %v4765, %v5047
    %5049 = vmatprep.mubr.bf16.mxu0 %v1329
    %5050 = vmatmul.mubr.bf16.gmra.mxu0 %v1328
    %v5051 = vpop.f32.mrf.mxu0
    %v5052 = vadd.f32 %v4769, %v5051
    %v5053 = vpop.f32.mrf.mxu0
    %v5054 = vadd.f32 %v4771, %v5053
    %v5055 = vpop.f32.mrf.mxu0
    %v5056 = vadd.f32 %v4773, %v5055
    %v5057 = vpop.f32.mrf.mxu0
    %v5058 = vadd.f32 %v4775, %v5057
    %5059 = vmatprep.mubr.bf16.mxu0 %v1337
    %5060 = vmatmul.mubr.bf16.gmra.mxu0 %v1336
    %v5061 = vpop.f32.mrf.mxu0
    %v5062 = vadd.f32 %v4779, %v5061
    %v5063 = vpop.f32.mrf.mxu0
    %v5064 = vadd.f32 %v4781, %v5063
    %v5065 = vpop.f32.mrf.mxu0
    %v5066 = vadd.f32 %v4783, %v5065
    %v5067 = vpop.f32.mrf.mxu0
    %v5068 = vadd.f32 %v4785, %v5067
    %5069 = vmatprep.mubr.bf16.mxu0 %v1345
    %5070 = vmatmul.mubr.bf16.gmra.mxu0 %v1344
    %v5071 = vpop.f32.mrf.mxu0
    %v5072 = vadd.f32 %v4789, %v5071
    %v5073 = vpop.f32.mrf.mxu0
    %v5074 = vadd.f32 %v4791, %v5073
    %v5075 = vpop.f32.mrf.mxu0
    %v5076 = vadd.f32 %v4793, %v5075
    %v5077 = vpop.f32.mrf.mxu0
    %v5078 = vadd.f32 %v4795, %v5077
    %5079 = vmatprep.mubr.bf16.mxu0 %v1353
    %5080 = vmatmul.mubr.bf16.gmra.mxu0 %v1352
    %v5081 = vpop.f32.mrf.mxu0
    %v5082 = vadd.f32 %v4799, %v5081
    %v5083 = vpop.f32.mrf.mxu0
    %v5084 = vadd.f32 %v4801, %v5083
    %v5085 = vpop.f32.mrf.mxu0
    %v5086 = vadd.f32 %v4803, %v5085
    %v5087 = vpop.f32.mrf.mxu0
    %v5088 = vadd.f32 %v4805, %v5087
    %5089 = vmatprep.mubr.bf16.mxu0 %v1361
    %5090 = vmatmul.mubr.bf16.gmra.mxu0 %v1360
    %v5091 = vpop.f32.mrf.mxu0
    %v5092 = vadd.f32 %v4809, %v5091
    %v5093 = vpop.f32.mrf.mxu0
    %v5094 = vadd.f32 %v4811, %v5093
    %v5095 = vpop.f32.mrf.mxu0
    %v5096 = vadd.f32 %v4813, %v5095
    %v5097 = vpop.f32.mrf.mxu0
    %v5098 = vadd.f32 %v4815, %v5097
    %5099 = vmatprep.mubr.bf16.mxu0 %v1369
    %5100 = vmatmul.mubr.bf16.gmra.mxu0 %v1368
    %v5101 = vpop.f32.mrf.mxu0
    %v5102 = vadd.f32 %v4819, %v5101
    %v5103 = vpop.f32.mrf.mxu0
    %v5104 = vadd.f32 %v4821, %v5103
    %v5105 = vpop.f32.mrf.mxu0
    %v5106 = vadd.f32 %v4823, %v5105
    %v5107 = vpop.f32.mrf.mxu0
    %v5108 = vadd.f32 %v4825, %v5107
    %5109 = vmatprep.mubr.bf16.mxu0 %v1377
    %5110 = vmatmul.mubr.bf16.gmra.mxu0 %v1376
    %v5111 = vpop.f32.mrf.mxu0
    %v5112 = vadd.f32 %v4829, %v5111
    %v5113 = vpop.f32.mrf.mxu0
    %v5114 = vadd.f32 %v4831, %v5113
    %v5115 = vpop.f32.mrf.mxu0
    %v5116 = vadd.f32 %v4833, %v5115
    %v5117 = vpop.f32.mrf.mxu0
    %v5118 = vadd.f32 %v4835, %v5117
    %5119 = vmatprep.mubr.bf16.mxu0 %v1385
    %5120 = vmatmul.mubr.bf16.gmra.mxu0 %v1384
    %v5121 = vpop.f32.mrf.mxu0
    %v5122 = vadd.f32 %v4839, %v5121
    %v5123 = vpop.f32.mrf.mxu0
    %v5124 = vadd.f32 %v4841, %v5123
    %v5125 = vpop.f32.mrf.mxu0
    %v5126 = vadd.f32 %v4843, %v5125
    %v5127 = vpop.f32.mrf.mxu0
    %v5128 = vadd.f32 %v4845, %v5127
    %5129 = vdwg.mxu0
    %v5130 = vpack.c.bf16 %v3754, %v3750
    %v5131 = vpack.c.bf16 %v3756, %v3752
    %v5132 = vpack.c.bf16 %v4886, %v4882
    %v5133 = vpack.c.bf16 %v4888, %v4884
    %v5134 = vpack.c.bf16 %v3764, %v3760
    %v5135 = vpack.c.bf16 %v3766, %v3762
    %v5136 = vpack.c.bf16 %v4896, %v4892
    %v5137 = vpack.c.bf16 %v4898, %v4894
    %v5138 = vpack.c.bf16 %v3774, %v3770
    %v5139 = vpack.c.bf16 %v3776, %v3772
    %v5140 = vpack.c.bf16 %v4906, %v4902
    %v5141 = vpack.c.bf16 %v4908, %v4904
    %v5142 = vpack.c.bf16 %v3784, %v3780
    %v5143 = vpack.c.bf16 %v3786, %v3782
    %v5144 = vpack.c.bf16 %v4916, %v4912
    %v5145 = vpack.c.bf16 %v4918, %v4914
    %v5146 = vpack.c.bf16 %v3794, %v3790
    %v5147 = vpack.c.bf16 %v3796, %v3792
    %v5148 = vpack.c.bf16 %v4926, %v4922
    %v5149 = vpack.c.bf16 %v4928, %v4924
    %v5150 = vpack.c.bf16 %v3804, %v3800
    %v5151 = vpack.c.bf16 %v3806, %v3802
    %v5152 = vpack.c.bf16 %v4936, %v4932
    %v5153 = vpack.c.bf16 %v4938, %v4934
    %v5154 = vpack.c.bf16 %v3814, %v3810
    %v5155 = vpack.c.bf16 %v3816, %v3812
    %v5156 = vpack.c.bf16 %v4946, %v4942
    %v5157 = vpack.c.bf16 %v4948, %v4944
    %v5158 = vpack.c.bf16 %v3824, %v3820
    %v5159 = vpack.c.bf16 %v3826, %v3822
    %v5160 = vpack.c.bf16 %v4956, %v4952
    %v5161 = vpack.c.bf16 %v4958, %v4954
    %v5162 = vpack.c.bf16 %v3834, %v3830
    %v5163 = vpack.c.bf16 %v3836, %v3832
    %v5164 = vpack.c.bf16 %v4966, %v4962
    %v5165 = vpack.c.bf16 %v4968, %v4964
    %v5166 = vpack.c.bf16 %v3844, %v3840
    %v5167 = vpack.c.bf16 %v3846, %v3842
    %v5168 = vpack.c.bf16 %v4976, %v4972
    %v5169 = vpack.c.bf16 %v4978, %v4974
    %v5170 = vpack.c.bf16 %v3854, %v3850
    %v5171 = vpack.c.bf16 %v3856, %v3852
    %v5172 = vpack.c.bf16 %v4986, %v4982
    %v5173 = vpack.c.bf16 %v4988, %v4984
    %v5174 = vpack.c.bf16 %v3864, %v3860
    %v5175 = vpack.c.bf16 %v3866, %v3862
    %v5176 = vpack.c.bf16 %v4996, %v4992
    %v5177 = vpack.c.bf16 %v4998, %v4994
    %v5178 = vpack.c.bf16 %v3874, %v3870
    %v5179 = vpack.c.bf16 %v3876, %v3872
    %v5180 = vpack.c.bf16 %v5006, %v5002
    %v5181 = vpack.c.bf16 %v5008, %v5004
    %v5182 = vpack.c.bf16 %v3884, %v3880
    %v5183 = vpack.c.bf16 %v3886, %v3882
    %v5184 = vpack.c.bf16 %v5016, %v5012
    %v5185 = vpack.c.bf16 %v5018, %v5014
    %v5186 = vpack.c.bf16 %v3894, %v3890
    %v5187 = vpack.c.bf16 %v3896, %v3892
    %v5188 = vpack.c.bf16 %v5026, %v5022
    %v5189 = vpack.c.bf16 %v5028, %v5024
    %v5190 = vpack.c.bf16 %v3904, %v3900
    %v5191 = vpack.c.bf16 %v3906, %v3902
    %v5192 = vpack.c.bf16 %v5036, %v5032
    %v5193 = vpack.c.bf16 %v5038, %v5034
    %v5194 = vpack.c.bf16 %v3914, %v3910
    %v5195 = vpack.c.bf16 %v3916, %v3912
    %v5196 = vpack.c.bf16 %v5046, %v5042
    %v5197 = vpack.c.bf16 %v5048, %v5044
    %v5198 = vpack.c.bf16 %v3924, %v3920
    %v5199 = vpack.c.bf16 %v3926, %v3922
    %v5200 = vpack.c.bf16 %v5056, %v5052
    %v5201 = vpack.c.bf16 %v5058, %v5054
    %v5202 = vpack.c.bf16 %v3934, %v3930
    %v5203 = vpack.c.bf16 %v3936, %v3932
    %v5204 = vpack.c.bf16 %v5066, %v5062
    %v5205 = vpack.c.bf16 %v5068, %v5064
    %v5206 = vpack.c.bf16 %v3944, %v3940
    %v5207 = vpack.c.bf16 %v3946, %v3942
    %v5208 = vpack.c.bf16 %v5076, %v5072
    %v5209 = vpack.c.bf16 %v5078, %v5074
    %v5210 = vpack.c.bf16 %v3954, %v3950
    %v5211 = vpack.c.bf16 %v3956, %v3952
    %v5212 = vpack.c.bf16 %v5086, %v5082
    %v5213 = vpack.c.bf16 %v5088, %v5084
    %v5214 = vpack.c.bf16 %v3964, %v3960
    %v5215 = vpack.c.bf16 %v3966, %v3962
    %v5216 = vpack.c.bf16 %v5096, %v5092
    %v5217 = vpack.c.bf16 %v5098, %v5094
    %v5218 = vpack.c.bf16 %v3974, %v3970
    %v5219 = vpack.c.bf16 %v3976, %v3972
    %v5220 = vpack.c.bf16 %v5106, %v5102
    %v5221 = vpack.c.bf16 %v5108, %v5104
    %v5222 = vpack.c.bf16 %v3984, %v3980
    %v5223 = vpack.c.bf16 %v3986, %v3982
    %v5224 = vpack.c.bf16 %v5116, %v5112
    %v5225 = vpack.c.bf16 %v5118, %v5114
    %v5226 = vpack.c.bf16 %v3994, %v3990
    %v5227 = vpack.c.bf16 %v3996, %v3992
    %v5228 = vpack.c.bf16 %v5126, %v5122
    %v5229 = vpack.c.bf16 %v5128, %v5124
    %v5230 = vld [vmem:[#allocation8] sm:$0xff]
    %v5231 = vld [vmem:[#allocation8 + $0x8] sm:$0xff]
    %v5232 = vld [vmem:[#allocation8 + $0x10] sm:$0xff]
    %v5233 = vld [vmem:[#allocation8 + $0x18] sm:$0xff]
    %v5234 = vld [vmem:[#allocation8 + $0x20] sm:$0xff]
    %v5235 = vld [vmem:[#allocation8 + $0x28] sm:$0xff]
    %v5236 = vld [vmem:[#allocation8 + $0x30] sm:$0xff]
    %v5237 = vld [vmem:[#allocation8 + $0x38] sm:$0xff]
    %v5238 = vld [vmem:[#allocation8 + $0x40] sm:$0xff]
    %v5239 = vld [vmem:[#allocation8 + $0x48] sm:$0xff]
    %v5240 = vld [vmem:[#allocation8 + $0x50] sm:$0xff]
    %v5241 = vld [vmem:[#allocation8 + $0x58] sm:$0xff]
    %v5242 = vld [vmem:[#allocation8 + $0x60] sm:$0xff]
    %v5243 = vld [vmem:[#allocation8 + $0x68] sm:$0xff]
    %v5244 = vld [vmem:[#allocation8 + $0x70] sm:$0xff]
    %v5245 = vld [vmem:[#allocation8 + $0x78] sm:$0xff]
    %v5246 = vld [vmem:[#allocation8 + $0x80] sm:$0xff]
    %v5247 = vld [vmem:[#allocation8 + $0x88] sm:$0xff]
    %v5248 = vld [vmem:[#allocation8 + $0x90] sm:$0xff]
    %v5249 = vld [vmem:[#allocation8 + $0x98] sm:$0xff]
    %v5250 = vld [vmem:[#allocation8 + $0xa0] sm:$0xff]
    %v5251 = vld [vmem:[#allocation8 + $0xa8] sm:$0xff]
    %v5252 = vld [vmem:[#allocation8 + $0xb0] sm:$0xff]
    %v5253 = vld [vmem:[#allocation8 + $0xb8] sm:$0xff]
    %v5254 = vld [vmem:[#allocation8 + $0xc0] sm:$0xff]
    %v5255 = vld [vmem:[#allocation8 + $0xc8] sm:$0xff]
    %v5256 = vld [vmem:[#allocation8 + $0xd0] sm:$0xff]
    %v5257 = vld [vmem:[#allocation8 + $0xd8] sm:$0xff]
    %v5258 = vld [vmem:[#allocation8 + $0xe0] sm:$0xff]
    %v5259 = vld [vmem:[#allocation8 + $0xe8] sm:$0xff]
    %v5260 = vld [vmem:[#allocation8 + $0xf0] sm:$0xff]
    %v5261 = vld [vmem:[#allocation8 + $0xf8] sm:$0xff]
    %v5262 = vld [vmem:[#allocation8 + $0x100] sm:$0xff]
    %v5263 = vld [vmem:[#allocation8 + $0x108] sm:$0xff]
    %v5264 = vld [vmem:[#allocation8 + $0x110] sm:$0xff]
    %v5265 = vld [vmem:[#allocation8 + $0x118] sm:$0xff]
    %v5266 = vld [vmem:[#allocation8 + $0x120] sm:$0xff]
    %v5267 = vld [vmem:[#allocation8 + $0x128] sm:$0xff]
    %v5268 = vld [vmem:[#allocation8 + $0x130] sm:$0xff]
    %v5269 = vld [vmem:[#allocation8 + $0x138] sm:$0xff]
    %v5270 = vld [vmem:[#allocation8 + $0x140] sm:$0xff]
    %v5271 = vld [vmem:[#allocation8 + $0x148] sm:$0xff]
    %v5272 = vld [vmem:[#allocation8 + $0x150] sm:$0xff]
    %v5273 = vld [vmem:[#allocation8 + $0x158] sm:$0xff]
    %v5274 = vld [vmem:[#allocation8 + $0x160] sm:$0xff]
    %v5275 = vld [vmem:[#allocation8 + $0x168] sm:$0xff]
    %v5276 = vld [vmem:[#allocation8 + $0x170] sm:$0xff]
    %v5277 = vld [vmem:[#allocation8 + $0x178] sm:$0xff]
    %v5278 = vld [vmem:[#allocation8 + $0x180] sm:$0xff]
    %v5279 = vld [vmem:[#allocation8 + $0x188] sm:$0xff]
    %v5280 = vld [vmem:[#allocation8 + $0x190] sm:$0xff]
    %v5281 = vld [vmem:[#allocation8 + $0x198] sm:$0xff]
    %v5282 = vld [vmem:[#allocation8 + $0x1a0] sm:$0xff]
    %v5283 = vld [vmem:[#allocation8 + $0x1a8] sm:$0xff]
    %v5284 = vld [vmem:[#allocation8 + $0x1b0] sm:$0xff]
    %v5285 = vld [vmem:[#allocation8 + $0x1b8] sm:$0xff]
    %v5286 = vld [vmem:[#allocation8 + $0x1c0] sm:$0xff]
    %v5287 = vld [vmem:[#allocation8 + $0x1c8] sm:$0xff]
    %v5288 = vld [vmem:[#allocation8 + $0x1d0] sm:$0xff]
    %v5289 = vld [vmem:[#allocation8 + $0x1d8] sm:$0xff]
    %v5290 = vld [vmem:[#allocation8 + $0x1e0] sm:$0xff]
    %v5291 = vld [vmem:[#allocation8 + $0x1e8] sm:$0xff]
    %v5292 = vld [vmem:[#allocation8 + $0x1f0] sm:$0xff]
    %v5293 = vld [vmem:[#allocation8 + $0x1f8] sm:$0xff]
    %v5294 = vld [vmem:[#allocation8 + $0x200] sm:$0xff]
    %v5295 = vld [vmem:[#allocation8 + $0x208] sm:$0xff]
    %v5296 = vld [vmem:[#allocation8 + $0x210] sm:$0xff]
    %v5297 = vld [vmem:[#allocation8 + $0x218] sm:$0xff]
    %v5298 = vld [vmem:[#allocation8 + $0x220] sm:$0xff]
    %v5299 = vld [vmem:[#allocation8 + $0x228] sm:$0xff]
    %v5300 = vld [vmem:[#allocation8 + $0x230] sm:$0xff]
    %v5301 = vld [vmem:[#allocation8 + $0x238] sm:$0xff]
    %v5302 = vld [vmem:[#allocation8 + $0x240] sm:$0xff]
    %v5303 = vld [vmem:[#allocation8 + $0x248] sm:$0xff]
    %v5304 = vld [vmem:[#allocation8 + $0x250] sm:$0xff]
    %v5305 = vld [vmem:[#allocation8 + $0x258] sm:$0xff]
    %v5306 = vld [vmem:[#allocation8 + $0x260] sm:$0xff]
    %v5307 = vld [vmem:[#allocation8 + $0x268] sm:$0xff]
    %v5308 = vld [vmem:[#allocation8 + $0x270] sm:$0xff]
    %v5309 = vld [vmem:[#allocation8 + $0x278] sm:$0xff]
    %v5310 = vld [vmem:[#allocation8 + $0x280] sm:$0xff]
    %v5311 = vld [vmem:[#allocation8 + $0x288] sm:$0xff]
    %v5312 = vld [vmem:[#allocation8 + $0x290] sm:$0xff]
    %v5313 = vld [vmem:[#allocation8 + $0x298] sm:$0xff]
    %v5314 = vld [vmem:[#allocation8 + $0x2a0] sm:$0xff]
    %v5315 = vld [vmem:[#allocation8 + $0x2a8] sm:$0xff]
    %v5316 = vld [vmem:[#allocation8 + $0x2b0] sm:$0xff]
    %v5317 = vld [vmem:[#allocation8 + $0x2b8] sm:$0xff]
    %v5318 = vld [vmem:[#allocation8 + $0x2c0] sm:$0xff]
    %v5319 = vld [vmem:[#allocation8 + $0x2c8] sm:$0xff]
    %v5320 = vld [vmem:[#allocation8 + $0x2d0] sm:$0xff]
    %v5321 = vld [vmem:[#allocation8 + $0x2d8] sm:$0xff]
    %v5322 = vld [vmem:[#allocation8 + $0x2e0] sm:$0xff]
    %v5323 = vld [vmem:[#allocation8 + $0x2e8] sm:$0xff]
    %v5324 = vld [vmem:[#allocation8 + $0x2f0] sm:$0xff]
    %v5325 = vld [vmem:[#allocation8 + $0x2f8] sm:$0xff]
    %v5326 = vld [vmem:[#allocation8 + $0x300] sm:$0xff]
    %v5327 = vld [vmem:[#allocation8 + $0x308] sm:$0xff]
    %v5328 = vld [vmem:[#allocation8 + $0x310] sm:$0xff]
    %v5329 = vld [vmem:[#allocation8 + $0x318] sm:$0xff]
    %v5330 = vld [vmem:[#allocation8 + $0x320] sm:$0xff]
    %v5331 = vld [vmem:[#allocation8 + $0x328] sm:$0xff]
    %v5332 = vld [vmem:[#allocation8 + $0x330] sm:$0xff]
    %v5333 = vld [vmem:[#allocation8 + $0x338] sm:$0xff]
    %v5334 = vld [vmem:[#allocation8 + $0x340] sm:$0xff]
    %v5335 = vld [vmem:[#allocation8 + $0x348] sm:$0xff]
    %v5336 = vld [vmem:[#allocation8 + $0x350] sm:$0xff]
    %v5337 = vld [vmem:[#allocation8 + $0x358] sm:$0xff]
    %v5338 = vld [vmem:[#allocation8 + $0x360] sm:$0xff]
    %v5339 = vld [vmem:[#allocation8 + $0x368] sm:$0xff]
    %v5340 = vld [vmem:[#allocation8 + $0x370] sm:$0xff]
    %v5341 = vld [vmem:[#allocation8 + $0x378] sm:$0xff]
    %v5342 = vld [vmem:[#allocation8 + $0x380] sm:$0xff]
    %v5343 = vld [vmem:[#allocation8 + $0x388] sm:$0xff]
    %v5344 = vld [vmem:[#allocation8 + $0x390] sm:$0xff]
    %v5345 = vld [vmem:[#allocation8 + $0x398] sm:$0xff]
    %v5346 = vld [vmem:[#allocation8 + $0x3a0] sm:$0xff]
    %v5347 = vld [vmem:[#allocation8 + $0x3a8] sm:$0xff]
    %v5348 = vld [vmem:[#allocation8 + $0x3b0] sm:$0xff]
    %v5349 = vld [vmem:[#allocation8 + $0x3b8] sm:$0xff]
    %v5350 = vld [vmem:[#allocation8 + $0x3c0] sm:$0xff]
    %v5351 = vld [vmem:[#allocation8 + $0x3c8] sm:$0xff]
    %v5352 = vld [vmem:[#allocation8 + $0x3d0] sm:$0xff]
    %v5353 = vld [vmem:[#allocation8 + $0x3d8] sm:$0xff]
    %v5354 = vld [vmem:[#allocation8 + $0x3e0] sm:$0xff]
    %v5355 = vld [vmem:[#allocation8 + $0x3e8] sm:$0xff]
    %v5356 = vld [vmem:[#allocation8 + $0x3f0] sm:$0xff]
    %v5357 = vld [vmem:[#allocation8 + $0x3f8] sm:$0xff]
    %v5358 = vld [vmem:[#allocation10] sm:$0xf]
    %v5360 = vlaneseq
    %v5361 = vshrl.u32 %v5360, 7
    %v5362 = vsub.s32 0, %v5361
    %v5363 = vrot.slane %v5358, %v5362
    %v5364 = vlaneseq
    %v5365 = vshrl.u32 %v5364, 7
    %v5366 = vsub.s32 1, %v5365
    %v5367 = vrot.slane %v5358, %v5366
    %v5368 = vlaneseq
    %v5369 = vshrl.u32 %v5368, 7
    %v5370 = vsub.s32 2, %v5369
    %v5371 = vrot.slane %v5358, %v5370
    %v5372 = vlaneseq
    %v5373 = vshrl.u32 %v5372, 7
    %v5374 = vsub.s32 3, %v5373
    %v5375 = vrot.slane %v5358, %v5374
    %v5508 = vunpack.c.l.b16 %v5230
    %v5509 = vunpack.c.h.b16 %v5230
    %v5510 = vunpack.c.l.b16 %v5231
    %v5511 = vunpack.c.h.b16 %v5231
    %v5512 = vunpack.c.l.b16 %v5232
    %v5513 = vunpack.c.h.b16 %v5232
    %v5514 = vunpack.c.l.b16 %v5233
    %v5515 = vunpack.c.h.b16 %v5233
    %v5516 = vunpack.c.l.b16 %v5234
    %v5517 = vunpack.c.h.b16 %v5234
    %v5518 = vunpack.c.l.b16 %v5235
    %v5519 = vunpack.c.h.b16 %v5235
    %v5520 = vunpack.c.l.b16 %v5236
    %v5521 = vunpack.c.h.b16 %v5236
    %v5522 = vunpack.c.l.b16 %v5237
    %v5523 = vunpack.c.h.b16 %v5237
    %v5524 = vunpack.c.l.b16 %v5238
    %v5525 = vunpack.c.h.b16 %v5238
    %v5526 = vunpack.c.l.b16 %v5239
    %v5527 = vunpack.c.h.b16 %v5239
    %v5528 = vunpack.c.l.b16 %v5240
    %v5529 = vunpack.c.h.b16 %v5240
    %v5530 = vunpack.c.l.b16 %v5241
    %v5531 = vunpack.c.h.b16 %v5241
    %v5532 = vunpack.c.l.b16 %v5242
    %v5533 = vunpack.c.h.b16 %v5242
    %v5534 = vunpack.c.l.b16 %v5243
    %v5535 = vunpack.c.h.b16 %v5243
    %v5536 = vunpack.c.l.b16 %v5244
    %v5537 = vunpack.c.h.b16 %v5244
    %v5538 = vunpack.c.l.b16 %v5245
    %v5539 = vunpack.c.h.b16 %v5245
    %v5540 = vunpack.c.l.b16 %v5246
    %v5541 = vunpack.c.h.b16 %v5246
    %v5542 = vunpack.c.l.b16 %v5247
    %v5543 = vunpack.c.h.b16 %v5247
    %v5544 = vunpack.c.l.b16 %v5248
    %v5545 = vunpack.c.h.b16 %v5248
    %v5546 = vunpack.c.l.b16 %v5249
    %v5547 = vunpack.c.h.b16 %v5249
    %v5548 = vunpack.c.l.b16 %v5250
    %v5549 = vunpack.c.h.b16 %v5250
    %v5550 = vunpack.c.l.b16 %v5251
    %v5551 = vunpack.c.h.b16 %v5251
    %v5552 = vunpack.c.l.b16 %v5252
    %v5553 = vunpack.c.h.b16 %v5252
    %v5554 = vunpack.c.l.b16 %v5253
    %v5555 = vunpack.c.h.b16 %v5253
    %v5556 = vunpack.c.l.b16 %v5254
    %v5557 = vunpack.c.h.b16 %v5254
    %v5558 = vunpack.c.l.b16 %v5255
    %v5559 = vunpack.c.h.b16 %v5255
    %v5560 = vunpack.c.l.b16 %v5256
    %v5561 = vunpack.c.h.b16 %v5256
    %v5562 = vunpack.c.l.b16 %v5257
    %v5563 = vunpack.c.h.b16 %v5257
    %v5564 = vunpack.c.l.b16 %v5258
    %v5565 = vunpack.c.h.b16 %v5258
    %v5566 = vunpack.c.l.b16 %v5259
    %v5567 = vunpack.c.h.b16 %v5259
    %v5568 = vunpack.c.l.b16 %v5260
    %v5569 = vunpack.c.h.b16 %v5260
    %v5570 = vunpack.c.l.b16 %v5261
    %v5571 = vunpack.c.h.b16 %v5261
    %v5572 = vunpack.c.l.b16 %v5262
    %v5573 = vunpack.c.h.b16 %v5262
    %v5574 = vunpack.c.l.b16 %v5263
    %v5575 = vunpack.c.h.b16 %v5263
    %v5576 = vunpack.c.l.b16 %v5264
    %v5577 = vunpack.c.h.b16 %v5264
    %v5578 = vunpack.c.l.b16 %v5265
    %v5579 = vunpack.c.h.b16 %v5265
    %v5580 = vunpack.c.l.b16 %v5266
    %v5581 = vunpack.c.h.b16 %v5266
    %v5582 = vunpack.c.l.b16 %v5267
    %v5583 = vunpack.c.h.b16 %v5267
    %v5584 = vunpack.c.l.b16 %v5268
    %v5585 = vunpack.c.h.b16 %v5268
    %v5586 = vunpack.c.l.b16 %v5269
    %v5587 = vunpack.c.h.b16 %v5269
    %v5588 = vunpack.c.l.b16 %v5270
    %v5589 = vunpack.c.h.b16 %v5270
    %v5590 = vunpack.c.l.b16 %v5271
    %v5591 = vunpack.c.h.b16 %v5271
    %v5592 = vunpack.c.l.b16 %v5272
    %v5593 = vunpack.c.h.b16 %v5272
    %v5594 = vunpack.c.l.b16 %v5273
    %v5595 = vunpack.c.h.b16 %v5273
    %v5596 = vunpack.c.l.b16 %v5274
    %v5597 = vunpack.c.h.b16 %v5274
    %v5598 = vunpack.c.l.b16 %v5275
    %v5599 = vunpack.c.h.b16 %v5275
    %v5600 = vunpack.c.l.b16 %v5276
    %v5601 = vunpack.c.h.b16 %v5276
    %v5602 = vunpack.c.l.b16 %v5277
    %v5603 = vunpack.c.h.b16 %v5277
    %v5604 = vunpack.c.l.b16 %v5278
    %v5605 = vunpack.c.h.b16 %v5278
    %v5606 = vunpack.c.l.b16 %v5279
    %v5607 = vunpack.c.h.b16 %v5279
    %v5608 = vunpack.c.l.b16 %v5280
    %v5609 = vunpack.c.h.b16 %v5280
    %v5610 = vunpack.c.l.b16 %v5281
    %v5611 = vunpack.c.h.b16 %v5281
    %v5612 = vunpack.c.l.b16 %v5282
    %v5613 = vunpack.c.h.b16 %v5282
    %v5614 = vunpack.c.l.b16 %v5283
    %v5615 = vunpack.c.h.b16 %v5283
    %v5616 = vunpack.c.l.b16 %v5284
    %v5617 = vunpack.c.h.b16 %v5284
    %v5618 = vunpack.c.l.b16 %v5285
    %v5619 = vunpack.c.h.b16 %v5285
    %v5620 = vunpack.c.l.b16 %v5286
    %v5621 = vunpack.c.h.b16 %v5286
    %v5622 = vunpack.c.l.b16 %v5287
    %v5623 = vunpack.c.h.b16 %v5287
    %v5624 = vunpack.c.l.b16 %v5288
    %v5625 = vunpack.c.h.b16 %v5288
    %v5626 = vunpack.c.l.b16 %v5289
    %v5627 = vunpack.c.h.b16 %v5289
    %v5628 = vunpack.c.l.b16 %v5290
    %v5629 = vunpack.c.h.b16 %v5290
    %v5630 = vunpack.c.l.b16 %v5291
    %v5631 = vunpack.c.h.b16 %v5291
    %v5632 = vunpack.c.l.b16 %v5292
    %v5633 = vunpack.c.h.b16 %v5292
    %v5634 = vunpack.c.l.b16 %v5293
    %v5635 = vunpack.c.h.b16 %v5293
    %v5636 = vunpack.c.l.b16 %v5294
    %v5637 = vunpack.c.h.b16 %v5294
    %v5638 = vunpack.c.l.b16 %v5295
    %v5639 = vunpack.c.h.b16 %v5295
    %v5640 = vunpack.c.l.b16 %v5296
    %v5641 = vunpack.c.h.b16 %v5296
    %v5642 = vunpack.c.l.b16 %v5297
    %v5643 = vunpack.c.h.b16 %v5297
    %v5644 = vunpack.c.l.b16 %v5298
    %v5645 = vunpack.c.h.b16 %v5298
    %v5646 = vunpack.c.l.b16 %v5299
    %v5647 = vunpack.c.h.b16 %v5299
    %v5648 = vunpack.c.l.b16 %v5300
    %v5649 = vunpack.c.h.b16 %v5300
    %v5650 = vunpack.c.l.b16 %v5301
    %v5651 = vunpack.c.h.b16 %v5301
    %v5652 = vunpack.c.l.b16 %v5302
    %v5653 = vunpack.c.h.b16 %v5302
    %v5654 = vunpack.c.l.b16 %v5303
    %v5655 = vunpack.c.h.b16 %v5303
    %v5656 = vunpack.c.l.b16 %v5304
    %v5657 = vunpack.c.h.b16 %v5304
    %v5658 = vunpack.c.l.b16 %v5305
    %v5659 = vunpack.c.h.b16 %v5305
    %v5660 = vunpack.c.l.b16 %v5306
    %v5661 = vunpack.c.h.b16 %v5306
    %v5662 = vunpack.c.l.b16 %v5307
    %v5663 = vunpack.c.h.b16 %v5307
    %v5664 = vunpack.c.l.b16 %v5308
    %v5665 = vunpack.c.h.b16 %v5308
    %v5666 = vunpack.c.l.b16 %v5309
    %v5667 = vunpack.c.h.b16 %v5309
    %v5668 = vunpack.c.l.b16 %v5310
    %v5669 = vunpack.c.h.b16 %v5310
    %v5670 = vunpack.c.l.b16 %v5311
    %v5671 = vunpack.c.h.b16 %v5311
    %v5672 = vunpack.c.l.b16 %v5312
    %v5673 = vunpack.c.h.b16 %v5312
    %v5674 = vunpack.c.l.b16 %v5313
    %v5675 = vunpack.c.h.b16 %v5313
    %v5676 = vunpack.c.l.b16 %v5314
    %v5677 = vunpack.c.h.b16 %v5314
    %v5678 = vunpack.c.l.b16 %v5315
    %v5679 = vunpack.c.h.b16 %v5315
    %v5680 = vunpack.c.l.b16 %v5316
    %v5681 = vunpack.c.h.b16 %v5316
    %v5682 = vunpack.c.l.b16 %v5317
    %v5683 = vunpack.c.h.b16 %v5317
    %v5684 = vunpack.c.l.b16 %v5318
    %v5685 = vunpack.c.h.b16 %v5318
    %v5686 = vunpack.c.l.b16 %v5319
    %v5687 = vunpack.c.h.b16 %v5319
    %v5688 = vunpack.c.l.b16 %v5320
    %v5689 = vunpack.c.h.b16 %v5320
    %v5690 = vunpack.c.l.b16 %v5321
    %v5691 = vunpack.c.h.b16 %v5321
    %v5692 = vunpack.c.l.b16 %v5322
    %v5693 = vunpack.c.h.b16 %v5322
    %v5694 = vunpack.c.l.b16 %v5323
    %v5695 = vunpack.c.h.b16 %v5323
    %v5696 = vunpack.c.l.b16 %v5324
    %v5697 = vunpack.c.h.b16 %v5324
    %v5698 = vunpack.c.l.b16 %v5325
    %v5699 = vunpack.c.h.b16 %v5325
    %v5700 = vunpack.c.l.b16 %v5326
    %v5701 = vunpack.c.h.b16 %v5326
    %v5702 = vunpack.c.l.b16 %v5327
    %v5703 = vunpack.c.h.b16 %v5327
    %v5704 = vunpack.c.l.b16 %v5328
    %v5705 = vunpack.c.h.b16 %v5328
    %v5706 = vunpack.c.l.b16 %v5329
    %v5707 = vunpack.c.h.b16 %v5329
    %v5708 = vunpack.c.l.b16 %v5330
    %v5709 = vunpack.c.h.b16 %v5330
    %v5710 = vunpack.c.l.b16 %v5331
    %v5711 = vunpack.c.h.b16 %v5331
    %v5712 = vunpack.c.l.b16 %v5332
    %v5713 = vunpack.c.h.b16 %v5332
    %v5714 = vunpack.c.l.b16 %v5333
    %v5715 = vunpack.c.h.b16 %v5333
    %v5716 = vunpack.c.l.b16 %v5334
    %v5717 = vunpack.c.h.b16 %v5334
    %v5718 = vunpack.c.l.b16 %v5335
    %v5719 = vunpack.c.h.b16 %v5335
    %v5720 = vunpack.c.l.b16 %v5336
    %v5721 = vunpack.c.h.b16 %v5336
    %v5722 = vunpack.c.l.b16 %v5337
    %v5723 = vunpack.c.h.b16 %v5337
    %v5724 = vunpack.c.l.b16 %v5338
    %v5725 = vunpack.c.h.b16 %v5338
    %v5726 = vunpack.c.l.b16 %v5339
    %v5727 = vunpack.c.h.b16 %v5339
    %v5728 = vunpack.c.l.b16 %v5340
    %v5729 = vunpack.c.h.b16 %v5340
    %v5730 = vunpack.c.l.b16 %v5341
    %v5731 = vunpack.c.h.b16 %v5341
    %v5732 = vunpack.c.l.b16 %v5342
    %v5733 = vunpack.c.h.b16 %v5342
    %v5734 = vunpack.c.l.b16 %v5343
    %v5735 = vunpack.c.h.b16 %v5343
    %v5736 = vunpack.c.l.b16 %v5344
    %v5737 = vunpack.c.h.b16 %v5344
    %v5738 = vunpack.c.l.b16 %v5345
    %v5739 = vunpack.c.h.b16 %v5345
    %v5740 = vunpack.c.l.b16 %v5346
    %v5741 = vunpack.c.h.b16 %v5346
    %v5742 = vunpack.c.l.b16 %v5347
    %v5743 = vunpack.c.h.b16 %v5347
    %v5744 = vunpack.c.l.b16 %v5348
    %v5745 = vunpack.c.h.b16 %v5348
    %v5746 = vunpack.c.l.b16 %v5349
    %v5747 = vunpack.c.h.b16 %v5349
    %v5748 = vunpack.c.l.b16 %v5350
    %v5749 = vunpack.c.h.b16 %v5350
    %v5750 = vunpack.c.l.b16 %v5351
    %v5751 = vunpack.c.h.b16 %v5351
    %v5752 = vunpack.c.l.b16 %v5352
    %v5753 = vunpack.c.h.b16 %v5352
    %v5754 = vunpack.c.l.b16 %v5353
    %v5755 = vunpack.c.h.b16 %v5353
    %v5756 = vunpack.c.l.b16 %v5354
    %v5757 = vunpack.c.h.b16 %v5354
    %v5758 = vunpack.c.l.b16 %v5355
    %v5759 = vunpack.c.h.b16 %v5355
    %v5760 = vunpack.c.l.b16 %v5356
    %v5761 = vunpack.c.h.b16 %v5356
    %v5762 = vunpack.c.l.b16 %v5357
    %v5763 = vunpack.c.h.b16 %v5357
    %v5764 = vpack.c.b16 %v5512, %v5508
    %v5765 = vpack.c.b16 %v5513, %v5509
    %v5766 = vpack.c.b16 %v5514, %v5510
    %v5767 = vpack.c.b16 %v5515, %v5511
    %v5768 = vpack.c.b16 %v5520, %v5516
    %v5769 = vpack.c.b16 %v5521, %v5517
    %v5770 = vpack.c.b16 %v5522, %v5518
    %v5771 = vpack.c.b16 %v5523, %v5519
    %v5772 = vpack.c.b16 %v5528, %v5524
    %v5773 = vpack.c.b16 %v5529, %v5525
    %v5774 = vpack.c.b16 %v5530, %v5526
    %v5775 = vpack.c.b16 %v5531, %v5527
    %v5776 = vpack.c.b16 %v5536, %v5532
    %v5777 = vpack.c.b16 %v5537, %v5533
    %v5778 = vpack.c.b16 %v5538, %v5534
    %v5779 = vpack.c.b16 %v5539, %v5535
    %v5780 = vpack.c.b16 %v5544, %v5540
    %v5781 = vpack.c.b16 %v5545, %v5541
    %v5782 = vpack.c.b16 %v5546, %v5542
    %v5783 = vpack.c.b16 %v5547, %v5543
    %v5784 = vpack.c.b16 %v5552, %v5548
    %v5785 = vpack.c.b16 %v5553, %v5549
    %v5786 = vpack.c.b16 %v5554, %v5550
    %v5787 = vpack.c.b16 %v5555, %v5551
    %v5788 = vpack.c.b16 %v5560, %v5556
    %v5789 = vpack.c.b16 %v5561, %v5557
    %v5790 = vpack.c.b16 %v5562, %v5558
    %v5791 = vpack.c.b16 %v5563, %v5559
    %v5792 = vpack.c.b16 %v5568, %v5564
    %v5793 = vpack.c.b16 %v5569, %v5565
    %v5794 = vpack.c.b16 %v5570, %v5566
    %v5795 = vpack.c.b16 %v5571, %v5567
    %v5796 = vpack.c.b16 %v5576, %v5572
    %v5797 = vpack.c.b16 %v5577, %v5573
    %v5798 = vpack.c.b16 %v5578, %v5574
    %v5799 = vpack.c.b16 %v5579, %v5575
    %v5800 = vpack.c.b16 %v5584, %v5580
    %v5801 = vpack.c.b16 %v5585, %v5581
    %v5802 = vpack.c.b16 %v5586, %v5582
    %v5803 = vpack.c.b16 %v5587, %v5583
    %v5804 = vpack.c.b16 %v5592, %v5588
    %v5805 = vpack.c.b16 %v5593, %v5589
    %v5806 = vpack.c.b16 %v5594, %v5590
    %v5807 = vpack.c.b16 %v5595, %v5591
    %v5808 = vpack.c.b16 %v5600, %v5596
    %v5809 = vpack.c.b16 %v5601, %v5597
    %v5810 = vpack.c.b16 %v5602, %v5598
    %v5811 = vpack.c.b16 %v5603, %v5599
    %v5812 = vpack.c.b16 %v5608, %v5604
    %v5813 = vpack.c.b16 %v5609, %v5605
    %v5814 = vpack.c.b16 %v5610, %v5606
    %v5815 = vpack.c.b16 %v5611, %v5607
    %v5816 = vpack.c.b16 %v5616, %v5612
    %v5817 = vpack.c.b16 %v5617, %v5613
    %v5818 = vpack.c.b16 %v5618, %v5614
    %v5819 = vpack.c.b16 %v5619, %v5615
    %v5820 = vpack.c.b16 %v5624, %v5620
    %v5821 = vpack.c.b16 %v5625, %v5621
    %v5822 = vpack.c.b16 %v5626, %v5622
    %v5823 = vpack.c.b16 %v5627, %v5623
    %v5824 = vpack.c.b16 %v5632, %v5628
    %v5825 = vpack.c.b16 %v5633, %v5629
    %v5826 = vpack.c.b16 %v5634, %v5630
    %v5827 = vpack.c.b16 %v5635, %v5631
    %v5828 = vpack.c.b16 %v5640, %v5636
    %v5829 = vpack.c.b16 %v5641, %v5637
    %v5830 = vpack.c.b16 %v5642, %v5638
    %v5831 = vpack.c.b16 %v5643, %v5639
    %v5832 = vpack.c.b16 %v5648, %v5644
    %v5833 = vpack.c.b16 %v5649, %v5645
    %v5834 = vpack.c.b16 %v5650, %v5646
    %v5835 = vpack.c.b16 %v5651, %v5647
    %v5836 = vpack.c.b16 %v5656, %v5652
    %v5837 = vpack.c.b16 %v5657, %v5653
    %v5838 = vpack.c.b16 %v5658, %v5654
    %v5839 = vpack.c.b16 %v5659, %v5655
    %v5840 = vpack.c.b16 %v5664, %v5660
    %v5841 = vpack.c.b16 %v5665, %v5661
    %v5842 = vpack.c.b16 %v5666, %v5662
    %v5843 = vpack.c.b16 %v5667, %v5663
    %v5844 = vpack.c.b16 %v5672, %v5668
    %v5845 = vpack.c.b16 %v5673, %v5669
    %v5846 = vpack.c.b16 %v5674, %v5670
    %v5847 = vpack.c.b16 %v5675, %v5671
    %v5848 = vpack.c.b16 %v5680, %v5676
    %v5849 = vpack.c.b16 %v5681, %v5677
    %v5850 = vpack.c.b16 %v5682, %v5678
    %v5851 = vpack.c.b16 %v5683, %v5679
    %v5852 = vpack.c.b16 %v5688, %v5684
    %v5853 = vpack.c.b16 %v5689, %v5685
    %v5854 = vpack.c.b16 %v5690, %v5686
    %v5855 = vpack.c.b16 %v5691, %v5687
    %v5856 = vpack.c.b16 %v5696, %v5692
    %v5857 = vpack.c.b16 %v5697, %v5693
    %v5858 = vpack.c.b16 %v5698, %v5694
    %v5859 = vpack.c.b16 %v5699, %v5695
    %v5860 = vpack.c.b16 %v5704, %v5700
    %v5861 = vpack.c.b16 %v5705, %v5701
    %v5862 = vpack.c.b16 %v5706, %v5702
    %v5863 = vpack.c.b16 %v5707, %v5703
    %v5864 = vpack.c.b16 %v5712, %v5708
    %v5865 = vpack.c.b16 %v5713, %v5709
    %v5866 = vpack.c.b16 %v5714, %v5710
    %v5867 = vpack.c.b16 %v5715, %v5711
    %v5868 = vpack.c.b16 %v5720, %v5716
    %v5869 = vpack.c.b16 %v5721, %v5717
    %v5870 = vpack.c.b16 %v5722, %v5718
    %v5871 = vpack.c.b16 %v5723, %v5719
    %v5872 = vpack.c.b16 %v5728, %v5724
    %v5873 = vpack.c.b16 %v5729, %v5725
    %v5874 = vpack.c.b16 %v5730, %v5726
    %v5875 = vpack.c.b16 %v5731, %v5727
    %v5876 = vpack.c.b16 %v5736, %v5732
    %v5877 = vpack.c.b16 %v5737, %v5733
    %v5878 = vpack.c.b16 %v5738, %v5734
    %v5879 = vpack.c.b16 %v5739, %v5735
    %v5880 = vpack.c.b16 %v5744, %v5740
    %v5881 = vpack.c.b16 %v5745, %v5741
    %v5882 = vpack.c.b16 %v5746, %v5742
    %v5883 = vpack.c.b16 %v5747, %v5743
    %v5884 = vpack.c.b16 %v5752, %v5748
    %v5885 = vpack.c.b16 %v5753, %v5749
    %v5886 = vpack.c.b16 %v5754, %v5750
    %v5887 = vpack.c.b16 %v5755, %v5751
    %v5888 = vpack.c.b16 %v5760, %v5756
    %v5889 = vpack.c.b16 %v5761, %v5757
    %v5890 = vpack.c.b16 %v5762, %v5758
    %v5891 = vpack.c.b16 %v5763, %v5759
    %6020 = vmatprep.subr.bf16.mxu0 %v5793
    %6021 = vmatpush1.bf16.msra.mxu0 %v5792
    %6022 = vmatprep.subr.bf16.mxu0 %v5789
    %6023 = vmatpush1.bf16.msra.mxu0 %v5788
    %6024 = vmatprep.subr.bf16.mxu0 %v5785
    %6025 = vmatpush1.bf16.msra.mxu0 %v5784
    %6026 = vmatprep.subr.bf16.mxu0 %v5781
    %6027 = vmatpush1.bf16.msra.mxu0 %v5780
    %6028 = vmatprep.subr.bf16.mxu0 %v5777
    %6029 = vmatpush1.bf16.msra.mxu0 %v5776
    %6030 = vmatprep.subr.bf16.mxu0 %v5773
    %6031 = vmatpush1.bf16.msra.mxu0 %v5772
    %6032 = vmatprep.subr.bf16.mxu0 %v5769
    %6033 = vmatpush1.bf16.msra.mxu0 %v5768
    %6034 = vmatprep.subr.bf16.mxu0 %v5765
    %6035 = vmatpush1.bf16.msra.mxu0 %v5764
    %6036 = vmatprep.subr.bf16.mxu0 %v5825
    %6037 = vmatpush2.bf16.msra.mxu0 %v5824
    %6038 = vmatprep.subr.bf16.mxu0 %v5821
    %6039 = vmatpush2.bf16.msra.mxu0 %v5820
    %6040 = vmatprep.subr.bf16.mxu0 %v5817
    %6041 = vmatpush2.bf16.msra.mxu0 %v5816
    %6042 = vmatprep.subr.bf16.mxu0 %v5813
    %6043 = vmatpush2.bf16.msra.mxu0 %v5812
    %6044 = vmatprep.subr.bf16.mxu0 %v5809
    %6045 = vmatpush2.bf16.msra.mxu0 %v5808
    %6046 = vmatprep.subr.bf16.mxu0 %v5805
    %6047 = vmatpush2.bf16.msra.mxu0 %v5804
    %6048 = vmatprep.subr.bf16.mxu0 %v5801
    %6049 = vmatpush2.bf16.msra.mxu0 %v5800
    %6050 = vmatprep.subr.bf16.mxu0 %v5797
    %6051 = vmatpush2.bf16.msra.mxu0 %v5796
    %6052 = vmatprep.mubr.bf16.mxu0 %v5131
    %6053 = vmatmul.mubr.bf16.gmra.mxu0 %v5130
    %v6054 = vpop.f32.mrf.mxu0
    %v6055 = vadd.f32 %v5363, %v6054
    %v6056 = vpop.f32.mrf.mxu0
    %v6057 = vadd.f32 %v5367, %v6056
    %v6058 = vpop.f32.mrf.mxu0
    %v6059 = vadd.f32 %v5363, %v6058
    %v6060 = vpop.f32.mrf.mxu0
    %v6061 = vadd.f32 %v5367, %v6060
    %6062 = vmatprep.mubr.bf16.mxu0 %v5135
    %6063 = vmatmul.mubr.bf16.gmra.mxu0 %v5134
    %v6064 = vpop.f32.mrf.mxu0
    %v6065 = vadd.f32 %v5363, %v6064
    %v6066 = vpop.f32.mrf.mxu0
    %v6067 = vadd.f32 %v5367, %v6066
    %v6068 = vpop.f32.mrf.mxu0
    %v6069 = vadd.f32 %v5363, %v6068
    %v6070 = vpop.f32.mrf.mxu0
    %v6071 = vadd.f32 %v5367, %v6070
    %6072 = vmatprep.mubr.bf16.mxu0 %v5139
    %6073 = vmatmul.mubr.bf16.gmra.mxu0 %v5138
    %v6074 = vpop.f32.mrf.mxu0
    %v6075 = vadd.f32 %v5363, %v6074
    %v6076 = vpop.f32.mrf.mxu0
    %v6077 = vadd.f32 %v5367, %v6076
    %v6078 = vpop.f32.mrf.mxu0
    %v6079 = vadd.f32 %v5363, %v6078
    %v6080 = vpop.f32.mrf.mxu0
    %v6081 = vadd.f32 %v5367, %v6080
    %6082 = vmatprep.mubr.bf16.mxu0 %v5143
    %6083 = vmatmul.mubr.bf16.gmra.mxu0 %v5142
    %v6084 = vpop.f32.mrf.mxu0
    %v6085 = vadd.f32 %v5363, %v6084
    %v6086 = vpop.f32.mrf.mxu0
    %v6087 = vadd.f32 %v5367, %v6086
    %v6088 = vpop.f32.mrf.mxu0
    %v6089 = vadd.f32 %v5363, %v6088
    %v6090 = vpop.f32.mrf.mxu0
    %v6091 = vadd.f32 %v5367, %v6090
    %6092 = vmatprep.mubr.bf16.mxu0 %v5147
    %6093 = vmatmul.mubr.bf16.gmra.mxu0 %v5146
    %v6094 = vpop.f32.mrf.mxu0
    %v6095 = vadd.f32 %v5363, %v6094
    %v6096 = vpop.f32.mrf.mxu0
    %v6097 = vadd.f32 %v5367, %v6096
    %v6098 = vpop.f32.mrf.mxu0
    %v6099 = vadd.f32 %v5363, %v6098
    %v6100 = vpop.f32.mrf.mxu0
    %v6101 = vadd.f32 %v5367, %v6100
    %6102 = vmatprep.mubr.bf16.mxu0 %v5151
    %6103 = vmatmul.mubr.bf16.gmra.mxu0 %v5150
    %v6104 = vpop.f32.mrf.mxu0
    %v6105 = vadd.f32 %v5363, %v6104
    %v6106 = vpop.f32.mrf.mxu0
    %v6107 = vadd.f32 %v5367, %v6106
    %v6108 = vpop.f32.mrf.mxu0
    %v6109 = vadd.f32 %v5363, %v6108
    %v6110 = vpop.f32.mrf.mxu0
    %v6111 = vadd.f32 %v5367, %v6110
    %6112 = vmatprep.mubr.bf16.mxu0 %v5155
    %6113 = vmatmul.mubr.bf16.gmra.mxu0 %v5154
    %v6114 = vpop.f32.mrf.mxu0
    %v6115 = vadd.f32 %v5363, %v6114
    %v6116 = vpop.f32.mrf.mxu0
    %v6117 = vadd.f32 %v5367, %v6116
    %v6118 = vpop.f32.mrf.mxu0
    %v6119 = vadd.f32 %v5363, %v6118
    %v6120 = vpop.f32.mrf.mxu0
    %v6121 = vadd.f32 %v5367, %v6120
    %6122 = vmatprep.mubr.bf16.mxu0 %v5159
    %6123 = vmatmul.mubr.bf16.gmra.mxu0 %v5158
    %v6124 = vpop.f32.mrf.mxu0
    %v6125 = vadd.f32 %v5363, %v6124
    %v6126 = vpop.f32.mrf.mxu0
    %v6127 = vadd.f32 %v5367, %v6126
    %v6128 = vpop.f32.mrf.mxu0
    %v6129 = vadd.f32 %v5363, %v6128
    %v6130 = vpop.f32.mrf.mxu0
    %v6131 = vadd.f32 %v5367, %v6130
    %6132 = vmatprep.mubr.bf16.mxu0 %v5163
    %6133 = vmatmul.mubr.bf16.gmra.mxu0 %v5162
    %v6134 = vpop.f32.mrf.mxu0
    %v6135 = vadd.f32 %v5363, %v6134
    %v6136 = vpop.f32.mrf.mxu0
    %v6137 = vadd.f32 %v5367, %v6136
    %v6138 = vpop.f32.mrf.mxu0
    %v6139 = vadd.f32 %v5363, %v6138
    %v6140 = vpop.f32.mrf.mxu0
    %v6141 = vadd.f32 %v5367, %v6140
    %6142 = vmatprep.mubr.bf16.mxu0 %v5167
    %6143 = vmatmul.mubr.bf16.gmra.mxu0 %v5166
    %v6144 = vpop.f32.mrf.mxu0
    %v6145 = vadd.f32 %v5363, %v6144
    %v6146 = vpop.f32.mrf.mxu0
    %v6147 = vadd.f32 %v5367, %v6146
    %v6148 = vpop.f32.mrf.mxu0
    %v6149 = vadd.f32 %v5363, %v6148
    %v6150 = vpop.f32.mrf.mxu0
    %v6151 = vadd.f32 %v5367, %v6150
    %6152 = vmatprep.mubr.bf16.mxu0 %v5171
    %6153 = vmatmul.mubr.bf16.gmra.mxu0 %v5170
    %v6154 = vpop.f32.mrf.mxu0
    %v6155 = vadd.f32 %v5363, %v6154
    %v6156 = vpop.f32.mrf.mxu0
    %v6157 = vadd.f32 %v5367, %v6156
    %v6158 = vpop.f32.mrf.mxu0
    %v6159 = vadd.f32 %v5363, %v6158
    %v6160 = vpop.f32.mrf.mxu0
    %v6161 = vadd.f32 %v5367, %v6160
    %6162 = vmatprep.mubr.bf16.mxu0 %v5175
    %6163 = vmatmul.mubr.bf16.gmra.mxu0 %v5174
    %v6164 = vpop.f32.mrf.mxu0
    %v6165 = vadd.f32 %v5363, %v6164
    %v6166 = vpop.f32.mrf.mxu0
    %v6167 = vadd.f32 %v5367, %v6166
    %v6168 = vpop.f32.mrf.mxu0
    %v6169 = vadd.f32 %v5363, %v6168
    %v6170 = vpop.f32.mrf.mxu0
    %v6171 = vadd.f32 %v5367, %v6170
    %6172 = vmatprep.mubr.bf16.mxu0 %v5179
    %6173 = vmatmul.mubr.bf16.gmra.mxu0 %v5178
    %v6174 = vpop.f32.mrf.mxu0
    %v6175 = vadd.f32 %v5363, %v6174
    %v6176 = vpop.f32.mrf.mxu0
    %v6177 = vadd.f32 %v5367, %v6176
    %v6178 = vpop.f32.mrf.mxu0
    %v6179 = vadd.f32 %v5363, %v6178
    %v6180 = vpop.f32.mrf.mxu0
    %v6181 = vadd.f32 %v5367, %v6180
    %6182 = vmatprep.mubr.bf16.mxu0 %v5183
    %6183 = vmatmul.mubr.bf16.gmra.mxu0 %v5182
    %v6184 = vpop.f32.mrf.mxu0
    %v6185 = vadd.f32 %v5363, %v6184
    %v6186 = vpop.f32.mrf.mxu0
    %v6187 = vadd.f32 %v5367, %v6186
    %v6188 = vpop.f32.mrf.mxu0
    %v6189 = vadd.f32 %v5363, %v6188
    %v6190 = vpop.f32.mrf.mxu0
    %v6191 = vadd.f32 %v5367, %v6190
    %6192 = vmatprep.mubr.bf16.mxu0 %v5187
    %6193 = vmatmul.mubr.bf16.gmra.mxu0 %v5186
    %v6194 = vpop.f32.mrf.mxu0
    %v6195 = vadd.f32 %v5363, %v6194
    %v6196 = vpop.f32.mrf.mxu0
    %v6197 = vadd.f32 %v5367, %v6196
    %v6198 = vpop.f32.mrf.mxu0
    %v6199 = vadd.f32 %v5363, %v6198
    %v6200 = vpop.f32.mrf.mxu0
    %v6201 = vadd.f32 %v5367, %v6200
    %6202 = vmatprep.mubr.bf16.mxu0 %v5191
    %6203 = vmatmul.mubr.bf16.gmra.mxu0 %v5190
    %v6204 = vpop.f32.mrf.mxu0
    %v6205 = vadd.f32 %v5363, %v6204
    %v6206 = vpop.f32.mrf.mxu0
    %v6207 = vadd.f32 %v5367, %v6206
    %v6208 = vpop.f32.mrf.mxu0
    %v6209 = vadd.f32 %v5363, %v6208
    %v6210 = vpop.f32.mrf.mxu0
    %v6211 = vadd.f32 %v5367, %v6210
    %6212 = vmatprep.mubr.bf16.mxu0 %v5195
    %6213 = vmatmul.mubr.bf16.gmra.mxu0 %v5194
    %v6214 = vpop.f32.mrf.mxu0
    %v6215 = vadd.f32 %v5363, %v6214
    %v6216 = vpop.f32.mrf.mxu0
    %v6217 = vadd.f32 %v5367, %v6216
    %v6218 = vpop.f32.mrf.mxu0
    %v6219 = vadd.f32 %v5363, %v6218
    %v6220 = vpop.f32.mrf.mxu0
    %v6221 = vadd.f32 %v5367, %v6220
    %6222 = vmatprep.mubr.bf16.mxu0 %v5199
    %6223 = vmatmul.mubr.bf16.gmra.mxu0 %v5198
    %v6224 = vpop.f32.mrf.mxu0
    %v6225 = vadd.f32 %v5363, %v6224
    %v6226 = vpop.f32.mrf.mxu0
    %v6227 = vadd.f32 %v5367, %v6226
    %v6228 = vpop.f32.mrf.mxu0
    %v6229 = vadd.f32 %v5363, %v6228
    %v6230 = vpop.f32.mrf.mxu0
    %v6231 = vadd.f32 %v5367, %v6230
    %6232 = vmatprep.mubr.bf16.mxu0 %v5203
    %6233 = vmatmul.mubr.bf16.gmra.mxu0 %v5202
    %v6234 = vpop.f32.mrf.mxu0
    %v6235 = vadd.f32 %v5363, %v6234
    %v6236 = vpop.f32.mrf.mxu0
    %v6237 = vadd.f32 %v5367, %v6236
    %v6238 = vpop.f32.mrf.mxu0
    %v6239 = vadd.f32 %v5363, %v6238
    %v6240 = vpop.f32.mrf.mxu0
    %v6241 = vadd.f32 %v5367, %v6240
    %6242 = vmatprep.mubr.bf16.mxu0 %v5207
    %6243 = vmatmul.mubr.bf16.gmra.mxu0 %v5206
    %v6244 = vpop.f32.mrf.mxu0
    %v6245 = vadd.f32 %v5363, %v6244
    %v6246 = vpop.f32.mrf.mxu0
    %v6247 = vadd.f32 %v5367, %v6246
    %v6248 = vpop.f32.mrf.mxu0
    %v6249 = vadd.f32 %v5363, %v6248
    %v6250 = vpop.f32.mrf.mxu0
    %v6251 = vadd.f32 %v5367, %v6250
    %6252 = vmatprep.mubr.bf16.mxu0 %v5211
    %6253 = vmatmul.mubr.bf16.gmra.mxu0 %v5210
    %v6254 = vpop.f32.mrf.mxu0
    %v6255 = vadd.f32 %v5363, %v6254
    %v6256 = vpop.f32.mrf.mxu0
    %v6257 = vadd.f32 %v5367, %v6256
    %v6258 = vpop.f32.mrf.mxu0
    %v6259 = vadd.f32 %v5363, %v6258
    %v6260 = vpop.f32.mrf.mxu0
    %v6261 = vadd.f32 %v5367, %v6260
    %6262 = vmatprep.mubr.bf16.mxu0 %v5215
    %6263 = vmatmul.mubr.bf16.gmra.mxu0 %v5214
    %v6264 = vpop.f32.mrf.mxu0
    %v6265 = vadd.f32 %v5363, %v6264
    %v6266 = vpop.f32.mrf.mxu0
    %v6267 = vadd.f32 %v5367, %v6266
    %v6268 = vpop.f32.mrf.mxu0
    %v6269 = vadd.f32 %v5363, %v6268
    %v6270 = vpop.f32.mrf.mxu0
    %v6271 = vadd.f32 %v5367, %v6270
    %6272 = vmatprep.mubr.bf16.mxu0 %v5219
    %6273 = vmatmul.mubr.bf16.gmra.mxu0 %v5218
    %v6274 = vpop.f32.mrf.mxu0
    %v6275 = vadd.f32 %v5363, %v6274
    %v6276 = vpop.f32.mrf.mxu0
    %v6277 = vadd.f32 %v5367, %v6276
    %v6278 = vpop.f32.mrf.mxu0
    %v6279 = vadd.f32 %v5363, %v6278
    %v6280 = vpop.f32.mrf.mxu0
    %v6281 = vadd.f32 %v5367, %v6280
    %6282 = vmatprep.mubr.bf16.mxu0 %v5223
    %6283 = vmatmul.mubr.bf16.gmra.mxu0 %v5222
    %v6284 = vpop.f32.mrf.mxu0
    %v6285 = vadd.f32 %v5363, %v6284
    %v6286 = vpop.f32.mrf.mxu0
    %v6287 = vadd.f32 %v5367, %v6286
    %v6288 = vpop.f32.mrf.mxu0
    %v6289 = vadd.f32 %v5363, %v6288
    %v6290 = vpop.f32.mrf.mxu0
    %v6291 = vadd.f32 %v5367, %v6290
    %6292 = vmatprep.mubr.bf16.mxu0 %v5227
    %6293 = vmatmul.mubr.bf16.gmra.mxu0 %v5226
    %v6294 = vpop.f32.mrf.mxu0
    %v6295 = vadd.f32 %v5363, %v6294
    %v6296 = vpop.f32.mrf.mxu0
    %v6297 = vadd.f32 %v5367, %v6296
    %v6298 = vpop.f32.mrf.mxu0
    %v6299 = vadd.f32 %v5363, %v6298
    %v6300 = vpop.f32.mrf.mxu0
    %v6301 = vadd.f32 %v5367, %v6300
    %6302 = vdwg.mxu0
    %6303 = vmatprep.subr.bf16.mxu0 %v5857
    %6304 = vmatpush1.bf16.msra.mxu0 %v5856
    %6305 = vmatprep.subr.bf16.mxu0 %v5853
    %6306 = vmatpush1.bf16.msra.mxu0 %v5852
    %6307 = vmatprep.subr.bf16.mxu0 %v5849
    %6308 = vmatpush1.bf16.msra.mxu0 %v5848
    %6309 = vmatprep.subr.bf16.mxu0 %v5845
    %6310 = vmatpush1.bf16.msra.mxu0 %v5844
    %6311 = vmatprep.subr.bf16.mxu0 %v5841
    %6312 = vmatpush1.bf16.msra.mxu0 %v5840
    %6313 = vmatprep.subr.bf16.mxu0 %v5837
    %6314 = vmatpush1.bf16.msra.mxu0 %v5836
    %6315 = vmatprep.subr.bf16.mxu0 %v5833
    %6316 = vmatpush1.bf16.msra.mxu0 %v5832
    %6317 = vmatprep.subr.bf16.mxu0 %v5829
    %6318 = vmatpush1.bf16.msra.mxu0 %v5828
    %6319 = vmatprep.subr.bf16.mxu0 %v5889
    %6320 = vmatpush2.bf16.msra.mxu0 %v5888
    %6321 = vmatprep.subr.bf16.mxu0 %v5885
    %6322 = vmatpush2.bf16.msra.mxu0 %v5884
    %6323 = vmatprep.subr.bf16.mxu0 %v5881
    %6324 = vmatpush2.bf16.msra.mxu0 %v5880
    %6325 = vmatprep.subr.bf16.mxu0 %v5877
    %6326 = vmatpush2.bf16.msra.mxu0 %v5876
    %6327 = vmatprep.subr.bf16.mxu0 %v5873
    %6328 = vmatpush2.bf16.msra.mxu0 %v5872
    %6329 = vmatprep.subr.bf16.mxu0 %v5869
    %6330 = vmatpush2.bf16.msra.mxu0 %v5868
    %6331 = vmatprep.subr.bf16.mxu0 %v5865
    %6332 = vmatpush2.bf16.msra.mxu0 %v5864
    %6333 = vmatprep.subr.bf16.mxu0 %v5861
    %6334 = vmatpush2.bf16.msra.mxu0 %v5860
    %6335 = vmatprep.mubr.bf16.mxu0 %v5133
    %6336 = vmatmul.mubr.bf16.gmra.mxu0 %v5132
    %v6337 = vpop.f32.mrf.mxu0
    %v6338 = vadd.f32 %v6055, %v6337
    %v6339 = vpop.f32.mrf.mxu0
    %v6340 = vadd.f32 %v6057, %v6339
    %v6341 = vpop.f32.mrf.mxu0
    %v6342 = vadd.f32 %v6059, %v6341
    %v6343 = vpop.f32.mrf.mxu0
    %v6344 = vadd.f32 %v6061, %v6343
    %6345 = vmatprep.mubr.bf16.mxu0 %v5137
    %6346 = vmatmul.mubr.bf16.gmra.mxu0 %v5136
    %v6347 = vpop.f32.mrf.mxu0
    %v6348 = vadd.f32 %v6065, %v6347
    %v6349 = vpop.f32.mrf.mxu0
    %v6350 = vadd.f32 %v6067, %v6349
    %v6351 = vpop.f32.mrf.mxu0
    %v6352 = vadd.f32 %v6069, %v6351
    %v6353 = vpop.f32.mrf.mxu0
    %v6354 = vadd.f32 %v6071, %v6353
    %6355 = vmatprep.mubr.bf16.mxu0 %v5141
    %6356 = vmatmul.mubr.bf16.gmra.mxu0 %v5140
    %v6357 = vpop.f32.mrf.mxu0
    %v6358 = vadd.f32 %v6075, %v6357
    %v6359 = vpop.f32.mrf.mxu0
    %v6360 = vadd.f32 %v6077, %v6359
    %v6361 = vpop.f32.mrf.mxu0
    %v6362 = vadd.f32 %v6079, %v6361
    %v6363 = vpop.f32.mrf.mxu0
    %v6364 = vadd.f32 %v6081, %v6363
    %6365 = vmatprep.mubr.bf16.mxu0 %v5145
    %6366 = vmatmul.mubr.bf16.gmra.mxu0 %v5144
    %v6367 = vpop.f32.mrf.mxu0
    %v6368 = vadd.f32 %v6085, %v6367
    %v6369 = vpop.f32.mrf.mxu0
    %v6370 = vadd.f32 %v6087, %v6369
    %v6371 = vpop.f32.mrf.mxu0
    %v6372 = vadd.f32 %v6089, %v6371
    %v6373 = vpop.f32.mrf.mxu0
    %v6374 = vadd.f32 %v6091, %v6373
    %6375 = vmatprep.mubr.bf16.mxu0 %v5149
    %6376 = vmatmul.mubr.bf16.gmra.mxu0 %v5148
    %v6377 = vpop.f32.mrf.mxu0
    %v6378 = vadd.f32 %v6095, %v6377
    %v6379 = vpop.f32.mrf.mxu0
    %v6380 = vadd.f32 %v6097, %v6379
    %v6381 = vpop.f32.mrf.mxu0
    %v6382 = vadd.f32 %v6099, %v6381
    %v6383 = vpop.f32.mrf.mxu0
    %v6384 = vadd.f32 %v6101, %v6383
    %6385 = vmatprep.mubr.bf16.mxu0 %v5153
    %6386 = vmatmul.mubr.bf16.gmra.mxu0 %v5152
    %v6387 = vpop.f32.mrf.mxu0
    %v6388 = vadd.f32 %v6105, %v6387
    %v6389 = vpop.f32.mrf.mxu0
    %v6390 = vadd.f32 %v6107, %v6389
    %v6391 = vpop.f32.mrf.mxu0
    %v6392 = vadd.f32 %v6109, %v6391
    %v6393 = vpop.f32.mrf.mxu0
    %v6394 = vadd.f32 %v6111, %v6393
    %6395 = vmatprep.mubr.bf16.mxu0 %v5157
    %6396 = vmatmul.mubr.bf16.gmra.mxu0 %v5156
    %v6397 = vpop.f32.mrf.mxu0
    %v6398 = vadd.f32 %v6115, %v6397
    %v6399 = vpop.f32.mrf.mxu0
    %v6400 = vadd.f32 %v6117, %v6399
    %v6401 = vpop.f32.mrf.mxu0
    %v6402 = vadd.f32 %v6119, %v6401
    %v6403 = vpop.f32.mrf.mxu0
    %v6404 = vadd.f32 %v6121, %v6403
    %6405 = vmatprep.mubr.bf16.mxu0 %v5161
    %6406 = vmatmul.mubr.bf16.gmra.mxu0 %v5160
    %v6407 = vpop.f32.mrf.mxu0
    %v6408 = vadd.f32 %v6125, %v6407
    %v6409 = vpop.f32.mrf.mxu0
    %v6410 = vadd.f32 %v6127, %v6409
    %v6411 = vpop.f32.mrf.mxu0
    %v6412 = vadd.f32 %v6129, %v6411
    %v6413 = vpop.f32.mrf.mxu0
    %v6414 = vadd.f32 %v6131, %v6413
    %6415 = vmatprep.mubr.bf16.mxu0 %v5165
    %6416 = vmatmul.mubr.bf16.gmra.mxu0 %v5164
    %v6417 = vpop.f32.mrf.mxu0
    %v6418 = vadd.f32 %v6135, %v6417
    %v6419 = vpop.f32.mrf.mxu0
    %v6420 = vadd.f32 %v6137, %v6419
    %v6421 = vpop.f32.mrf.mxu0
    %v6422 = vadd.f32 %v6139, %v6421
    %v6423 = vpop.f32.mrf.mxu0
    %v6424 = vadd.f32 %v6141, %v6423
    %6425 = vmatprep.mubr.bf16.mxu0 %v5169
    %6426 = vmatmul.mubr.bf16.gmra.mxu0 %v5168
    %v6427 = vpop.f32.mrf.mxu0
    %v6428 = vadd.f32 %v6145, %v6427
    %v6429 = vpop.f32.mrf.mxu0
    %v6430 = vadd.f32 %v6147, %v6429
    %v6431 = vpop.f32.mrf.mxu0
    %v6432 = vadd.f32 %v6149, %v6431
    %v6433 = vpop.f32.mrf.mxu0
    %v6434 = vadd.f32 %v6151, %v6433
    %6435 = vmatprep.mubr.bf16.mxu0 %v5173
    %6436 = vmatmul.mubr.bf16.gmra.mxu0 %v5172
    %v6437 = vpop.f32.mrf.mxu0
    %v6438 = vadd.f32 %v6155, %v6437
    %v6439 = vpop.f32.mrf.mxu0
    %v6440 = vadd.f32 %v6157, %v6439
    %v6441 = vpop.f32.mrf.mxu0
    %v6442 = vadd.f32 %v6159, %v6441
    %v6443 = vpop.f32.mrf.mxu0
    %v6444 = vadd.f32 %v6161, %v6443
    %6445 = vmatprep.mubr.bf16.mxu0 %v5177
    %6446 = vmatmul.mubr.bf16.gmra.mxu0 %v5176
    %v6447 = vpop.f32.mrf.mxu0
    %v6448 = vadd.f32 %v6165, %v6447
    %v6449 = vpop.f32.mrf.mxu0
    %v6450 = vadd.f32 %v6167, %v6449
    %v6451 = vpop.f32.mrf.mxu0
    %v6452 = vadd.f32 %v6169, %v6451
    %v6453 = vpop.f32.mrf.mxu0
    %v6454 = vadd.f32 %v6171, %v6453
    %6455 = vmatprep.mubr.bf16.mxu0 %v5181
    %6456 = vmatmul.mubr.bf16.gmra.mxu0 %v5180
    %v6457 = vpop.f32.mrf.mxu0
    %v6458 = vadd.f32 %v6175, %v6457
    %v6459 = vpop.f32.mrf.mxu0
    %v6460 = vadd.f32 %v6177, %v6459
    %v6461 = vpop.f32.mrf.mxu0
    %v6462 = vadd.f32 %v6179, %v6461
    %v6463 = vpop.f32.mrf.mxu0
    %v6464 = vadd.f32 %v6181, %v6463
    %6465 = vmatprep.mubr.bf16.mxu0 %v5185
    %6466 = vmatmul.mubr.bf16.gmra.mxu0 %v5184
    %v6467 = vpop.f32.mrf.mxu0
    %v6468 = vadd.f32 %v6185, %v6467
    %v6469 = vpop.f32.mrf.mxu0
    %v6470 = vadd.f32 %v6187, %v6469
    %v6471 = vpop.f32.mrf.mxu0
    %v6472 = vadd.f32 %v6189, %v6471
    %v6473 = vpop.f32.mrf.mxu0
    %v6474 = vadd.f32 %v6191, %v6473
    %6475 = vmatprep.mubr.bf16.mxu0 %v5189
    %6476 = vmatmul.mubr.bf16.gmra.mxu0 %v5188
    %v6477 = vpop.f32.mrf.mxu0
    %v6478 = vadd.f32 %v6195, %v6477
    %v6479 = vpop.f32.mrf.mxu0
    %v6480 = vadd.f32 %v6197, %v6479
    %v6481 = vpop.f32.mrf.mxu0
    %v6482 = vadd.f32 %v6199, %v6481
    %v6483 = vpop.f32.mrf.mxu0
    %v6484 = vadd.f32 %v6201, %v6483
    %6485 = vmatprep.mubr.bf16.mxu0 %v5193
    %6486 = vmatmul.mubr.bf16.gmra.mxu0 %v5192
    %v6487 = vpop.f32.mrf.mxu0
    %v6488 = vadd.f32 %v6205, %v6487
    %v6489 = vpop.f32.mrf.mxu0
    %v6490 = vadd.f32 %v6207, %v6489
    %v6491 = vpop.f32.mrf.mxu0
    %v6492 = vadd.f32 %v6209, %v6491
    %v6493 = vpop.f32.mrf.mxu0
    %v6494 = vadd.f32 %v6211, %v6493
    %6495 = vmatprep.mubr.bf16.mxu0 %v5197
    %6496 = vmatmul.mubr.bf16.gmra.mxu0 %v5196
    %v6497 = vpop.f32.mrf.mxu0
    %v6498 = vadd.f32 %v6215, %v6497
    %v6499 = vpop.f32.mrf.mxu0
    %v6500 = vadd.f32 %v6217, %v6499
    %v6501 = vpop.f32.mrf.mxu0
    %v6502 = vadd.f32 %v6219, %v6501
    %v6503 = vpop.f32.mrf.mxu0
    %v6504 = vadd.f32 %v6221, %v6503
    %6505 = vmatprep.mubr.bf16.mxu0 %v5201
    %6506 = vmatmul.mubr.bf16.gmra.mxu0 %v5200
    %v6507 = vpop.f32.mrf.mxu0
    %v6508 = vadd.f32 %v6225, %v6507
    %v6509 = vpop.f32.mrf.mxu0
    %v6510 = vadd.f32 %v6227, %v6509
    %v6511 = vpop.f32.mrf.mxu0
    %v6512 = vadd.f32 %v6229, %v6511
    %v6513 = vpop.f32.mrf.mxu0
    %v6514 = vadd.f32 %v6231, %v6513
    %6515 = vmatprep.mubr.bf16.mxu0 %v5205
    %6516 = vmatmul.mubr.bf16.gmra.mxu0 %v5204
    %v6517 = vpop.f32.mrf.mxu0
    %v6518 = vadd.f32 %v6235, %v6517
    %v6519 = vpop.f32.mrf.mxu0
    %v6520 = vadd.f32 %v6237, %v6519
    %v6521 = vpop.f32.mrf.mxu0
    %v6522 = vadd.f32 %v6239, %v6521
    %v6523 = vpop.f32.mrf.mxu0
    %v6524 = vadd.f32 %v6241, %v6523
    %6525 = vmatprep.mubr.bf16.mxu0 %v5209
    %6526 = vmatmul.mubr.bf16.gmra.mxu0 %v5208
    %v6527 = vpop.f32.mrf.mxu0
    %v6528 = vadd.f32 %v6245, %v6527
    %v6529 = vpop.f32.mrf.mxu0
    %v6530 = vadd.f32 %v6247, %v6529
    %v6531 = vpop.f32.mrf.mxu0
    %v6532 = vadd.f32 %v6249, %v6531
    %v6533 = vpop.f32.mrf.mxu0
    %v6534 = vadd.f32 %v6251, %v6533
    %6535 = vmatprep.mubr.bf16.mxu0 %v5213
    %6536 = vmatmul.mubr.bf16.gmra.mxu0 %v5212
    %v6537 = vpop.f32.mrf.mxu0
    %v6538 = vadd.f32 %v6255, %v6537
    %v6539 = vpop.f32.mrf.mxu0
    %v6540 = vadd.f32 %v6257, %v6539
    %v6541 = vpop.f32.mrf.mxu0
    %v6542 = vadd.f32 %v6259, %v6541
    %v6543 = vpop.f32.mrf.mxu0
    %v6544 = vadd.f32 %v6261, %v6543
    %6545 = vmatprep.mubr.bf16.mxu0 %v5217
    %6546 = vmatmul.mubr.bf16.gmra.mxu0 %v5216
    %v6547 = vpop.f32.mrf.mxu0
    %v6548 = vadd.f32 %v6265, %v6547
    %v6549 = vpop.f32.mrf.mxu0
    %v6550 = vadd.f32 %v6267, %v6549
    %v6551 = vpop.f32.mrf.mxu0
    %v6552 = vadd.f32 %v6269, %v6551
    %v6553 = vpop.f32.mrf.mxu0
    %v6554 = vadd.f32 %v6271, %v6553
    %6555 = vmatprep.mubr.bf16.mxu0 %v5221
    %6556 = vmatmul.mubr.bf16.gmra.mxu0 %v5220
    %v6557 = vpop.f32.mrf.mxu0
    %v6558 = vadd.f32 %v6275, %v6557
    %v6559 = vpop.f32.mrf.mxu0
    %v6560 = vadd.f32 %v6277, %v6559
    %v6561 = vpop.f32.mrf.mxu0
    %v6562 = vadd.f32 %v6279, %v6561
    %v6563 = vpop.f32.mrf.mxu0
    %v6564 = vadd.f32 %v6281, %v6563
    %6565 = vmatprep.mubr.bf16.mxu0 %v5225
    %6566 = vmatmul.mubr.bf16.gmra.mxu0 %v5224
    %v6567 = vpop.f32.mrf.mxu0
    %v6568 = vadd.f32 %v6285, %v6567
    %v6569 = vpop.f32.mrf.mxu0
    %v6570 = vadd.f32 %v6287, %v6569
    %v6571 = vpop.f32.mrf.mxu0
    %v6572 = vadd.f32 %v6289, %v6571
    %v6573 = vpop.f32.mrf.mxu0
    %v6574 = vadd.f32 %v6291, %v6573
    %6575 = vmatprep.mubr.bf16.mxu0 %v5229
    %6576 = vmatmul.mubr.bf16.gmra.mxu0 %v5228
    %v6577 = vpop.f32.mrf.mxu0
    %v6578 = vadd.f32 %v6295, %v6577
    %v6579 = vpop.f32.mrf.mxu0
    %v6580 = vadd.f32 %v6297, %v6579
    %v6581 = vpop.f32.mrf.mxu0
    %v6582 = vadd.f32 %v6299, %v6581
    %v6583 = vpop.f32.mrf.mxu0
    %v6584 = vadd.f32 %v6301, %v6583
    %6585 = vdwg.mxu0
    %6586 = vmatprep.subr.bf16.mxu0 %v5795
    %6587 = vmatpush1.bf16.msra.mxu0 %v5794
    %6588 = vmatprep.subr.bf16.mxu0 %v5791
    %6589 = vmatpush1.bf16.msra.mxu0 %v5790
    %6590 = vmatprep.subr.bf16.mxu0 %v5787
    %6591 = vmatpush1.bf16.msra.mxu0 %v5786
    %6592 = vmatprep.subr.bf16.mxu0 %v5783
    %6593 = vmatpush1.bf16.msra.mxu0 %v5782
    %6594 = vmatprep.subr.bf16.mxu0 %v5779
    %6595 = vmatpush1.bf16.msra.mxu0 %v5778
    %6596 = vmatprep.subr.bf16.mxu0 %v5775
    %6597 = vmatpush1.bf16.msra.mxu0 %v5774
    %6598 = vmatprep.subr.bf16.mxu0 %v5771
    %6599 = vmatpush1.bf16.msra.mxu0 %v5770
    %6600 = vmatprep.subr.bf16.mxu0 %v5767
    %6601 = vmatpush1.bf16.msra.mxu0 %v5766
    %6602 = vmatprep.subr.bf16.mxu0 %v5827
    %6603 = vmatpush2.bf16.msra.mxu0 %v5826
    %6604 = vmatprep.subr.bf16.mxu0 %v5823
    %6605 = vmatpush2.bf16.msra.mxu0 %v5822
    %6606 = vmatprep.subr.bf16.mxu0 %v5819
    %6607 = vmatpush2.bf16.msra.mxu0 %v5818
    %6608 = vmatprep.subr.bf16.mxu0 %v5815
    %6609 = vmatpush2.bf16.msra.mxu0 %v5814
    %6610 = vmatprep.subr.bf16.mxu0 %v5811
    %6611 = vmatpush2.bf16.msra.mxu0 %v5810
    %6612 = vmatprep.subr.bf16.mxu0 %v5807
    %6613 = vmatpush2.bf16.msra.mxu0 %v5806
    %6614 = vmatprep.subr.bf16.mxu0 %v5803
    %6615 = vmatpush2.bf16.msra.mxu0 %v5802
    %6616 = vmatprep.subr.bf16.mxu0 %v5799
    %6617 = vmatpush2.bf16.msra.mxu0 %v5798
    %6618 = vmatprep.mubr.bf16.mxu0 %v5131
    %6619 = vmatmul.mubr.bf16.gmra.mxu0 %v5130
    %v6620 = vpop.f32.mrf.mxu0
    %v6621 = vadd.f32 %v5371, %v6620
    %v6622 = vpop.f32.mrf.mxu0
    %v6623 = vadd.f32 %v5375, %v6622
    %v6624 = vpop.f32.mrf.mxu0
    %v6625 = vadd.f32 %v5371, %v6624
    %v6626 = vpop.f32.mrf.mxu0
    %v6627 = vadd.f32 %v5375, %v6626
    %6628 = vmatprep.mubr.bf16.mxu0 %v5135
    %6629 = vmatmul.mubr.bf16.gmra.mxu0 %v5134
    %v6630 = vpop.f32.mrf.mxu0
    %v6631 = vadd.f32 %v5371, %v6630
    %v6632 = vpop.f32.mrf.mxu0
    %v6633 = vadd.f32 %v5375, %v6632
    %v6634 = vpop.f32.mrf.mxu0
    %v6635 = vadd.f32 %v5371, %v6634
    %v6636 = vpop.f32.mrf.mxu0
    %v6637 = vadd.f32 %v5375, %v6636
    %6638 = vmatprep.mubr.bf16.mxu0 %v5139
    %6639 = vmatmul.mubr.bf16.gmra.mxu0 %v5138
    %v6640 = vpop.f32.mrf.mxu0
    %v6641 = vadd.f32 %v5371, %v6640
    %v6642 = vpop.f32.mrf.mxu0
    %v6643 = vadd.f32 %v5375, %v6642
    %v6644 = vpop.f32.mrf.mxu0
    %v6645 = vadd.f32 %v5371, %v6644
    %v6646 = vpop.f32.mrf.mxu0
    %v6647 = vadd.f32 %v5375, %v6646
    %6648 = vmatprep.mubr.bf16.mxu0 %v5143
    %6649 = vmatmul.mubr.bf16.gmra.mxu0 %v5142
    %v6650 = vpop.f32.mrf.mxu0
    %v6651 = vadd.f32 %v5371, %v6650
    %v6652 = vpop.f32.mrf.mxu0
    %v6653 = vadd.f32 %v5375, %v6652
    %v6654 = vpop.f32.mrf.mxu0
    %v6655 = vadd.f32 %v5371, %v6654
    %v6656 = vpop.f32.mrf.mxu0
    %v6657 = vadd.f32 %v5375, %v6656
    %6658 = vmatprep.mubr.bf16.mxu0 %v5147
    %6659 = vmatmul.mubr.bf16.gmra.mxu0 %v5146
    %v6660 = vpop.f32.mrf.mxu0
    %v6661 = vadd.f32 %v5371, %v6660
    %v6662 = vpop.f32.mrf.mxu0
    %v6663 = vadd.f32 %v5375, %v6662
    %v6664 = vpop.f32.mrf.mxu0
    %v6665 = vadd.f32 %v5371, %v6664
    %v6666 = vpop.f32.mrf.mxu0
    %v6667 = vadd.f32 %v5375, %v6666
    %6668 = vmatprep.mubr.bf16.mxu0 %v5151
    %6669 = vmatmul.mubr.bf16.gmra.mxu0 %v5150
    %v6670 = vpop.f32.mrf.mxu0
    %v6671 = vadd.f32 %v5371, %v6670
    %v6672 = vpop.f32.mrf.mxu0
    %v6673 = vadd.f32 %v5375, %v6672
    %v6674 = vpop.f32.mrf.mxu0
    %v6675 = vadd.f32 %v5371, %v6674
    %v6676 = vpop.f32.mrf.mxu0
    %v6677 = vadd.f32 %v5375, %v6676
    %6678 = vmatprep.mubr.bf16.mxu0 %v5155
    %6679 = vmatmul.mubr.bf16.gmra.mxu0 %v5154
    %v6680 = vpop.f32.mrf.mxu0
    %v6681 = vadd.f32 %v5371, %v6680
    %v6682 = vpop.f32.mrf.mxu0
    %v6683 = vadd.f32 %v5375, %v6682
    %v6684 = vpop.f32.mrf.mxu0
    %v6685 = vadd.f32 %v5371, %v6684
    %v6686 = vpop.f32.mrf.mxu0
    %v6687 = vadd.f32 %v5375, %v6686
    %6688 = vmatprep.mubr.bf16.mxu0 %v5159
    %6689 = vmatmul.mubr.bf16.gmra.mxu0 %v5158
    %v6690 = vpop.f32.mrf.mxu0
    %v6691 = vadd.f32 %v5371, %v6690
    %v6692 = vpop.f32.mrf.mxu0
    %v6693 = vadd.f32 %v5375, %v6692
    %v6694 = vpop.f32.mrf.mxu0
    %v6695 = vadd.f32 %v5371, %v6694
    %v6696 = vpop.f32.mrf.mxu0
    %v6697 = vadd.f32 %v5375, %v6696
    %6698 = vmatprep.mubr.bf16.mxu0 %v5163
    %6699 = vmatmul.mubr.bf16.gmra.mxu0 %v5162
    %v6700 = vpop.f32.mrf.mxu0
    %v6701 = vadd.f32 %v5371, %v6700
    %v6702 = vpop.f32.mrf.mxu0
    %v6703 = vadd.f32 %v5375, %v6702
    %v6704 = vpop.f32.mrf.mxu0
    %v6705 = vadd.f32 %v5371, %v6704
    %v6706 = vpop.f32.mrf.mxu0
    %v6707 = vadd.f32 %v5375, %v6706
    %6708 = vmatprep.mubr.bf16.mxu0 %v5167
    %6709 = vmatmul.mubr.bf16.gmra.mxu0 %v5166
    %v6710 = vpop.f32.mrf.mxu0
    %v6711 = vadd.f32 %v5371, %v6710
    %v6712 = vpop.f32.mrf.mxu0
    %v6713 = vadd.f32 %v5375, %v6712
    %v6714 = vpop.f32.mrf.mxu0
    %v6715 = vadd.f32 %v5371, %v6714
    %v6716 = vpop.f32.mrf.mxu0
    %v6717 = vadd.f32 %v5375, %v6716
    %6718 = vmatprep.mubr.bf16.mxu0 %v5171
    %6719 = vmatmul.mubr.bf16.gmra.mxu0 %v5170
    %v6720 = vpop.f32.mrf.mxu0
    %v6721 = vadd.f32 %v5371, %v6720
    %v6722 = vpop.f32.mrf.mxu0
    %v6723 = vadd.f32 %v5375, %v6722
    %v6724 = vpop.f32.mrf.mxu0
    %v6725 = vadd.f32 %v5371, %v6724
    %v6726 = vpop.f32.mrf.mxu0
    %v6727 = vadd.f32 %v5375, %v6726
    %6728 = vmatprep.mubr.bf16.mxu0 %v5175
    %6729 = vmatmul.mubr.bf16.gmra.mxu0 %v5174
    %v6730 = vpop.f32.mrf.mxu0
    %v6731 = vadd.f32 %v5371, %v6730
    %v6732 = vpop.f32.mrf.mxu0
    %v6733 = vadd.f32 %v5375, %v6732
    %v6734 = vpop.f32.mrf.mxu0
    %v6735 = vadd.f32 %v5371, %v6734
    %v6736 = vpop.f32.mrf.mxu0
    %v6737 = vadd.f32 %v5375, %v6736
    %6738 = vmatprep.mubr.bf16.mxu0 %v5179
    %6739 = vmatmul.mubr.bf16.gmra.mxu0 %v5178
    %v6740 = vpop.f32.mrf.mxu0
    %v6741 = vadd.f32 %v5371, %v6740
    %v6742 = vpop.f32.mrf.mxu0
    %v6743 = vadd.f32 %v5375, %v6742
    %v6744 = vpop.f32.mrf.mxu0
    %v6745 = vadd.f32 %v5371, %v6744
    %v6746 = vpop.f32.mrf.mxu0
    %v6747 = vadd.f32 %v5375, %v6746
    %6748 = vmatprep.mubr.bf16.mxu0 %v5183
    %6749 = vmatmul.mubr.bf16.gmra.mxu0 %v5182
    %v6750 = vpop.f32.mrf.mxu0
    %v6751 = vadd.f32 %v5371, %v6750
    %v6752 = vpop.f32.mrf.mxu0
    %v6753 = vadd.f32 %v5375, %v6752
    %v6754 = vpop.f32.mrf.mxu0
    %v6755 = vadd.f32 %v5371, %v6754
    %v6756 = vpop.f32.mrf.mxu0
    %v6757 = vadd.f32 %v5375, %v6756
    %6758 = vmatprep.mubr.bf16.mxu0 %v5187
    %6759 = vmatmul.mubr.bf16.gmra.mxu0 %v5186
    %v6760 = vpop.f32.mrf.mxu0
    %v6761 = vadd.f32 %v5371, %v6760
    %v6762 = vpop.f32.mrf.mxu0
    %v6763 = vadd.f32 %v5375, %v6762
    %v6764 = vpop.f32.mrf.mxu0
    %v6765 = vadd.f32 %v5371, %v6764
    %v6766 = vpop.f32.mrf.mxu0
    %v6767 = vadd.f32 %v5375, %v6766
    %6768 = vmatprep.mubr.bf16.mxu0 %v5191
    %6769 = vmatmul.mubr.bf16.gmra.mxu0 %v5190
    %v6770 = vpop.f32.mrf.mxu0
    %v6771 = vadd.f32 %v5371, %v6770
    %v6772 = vpop.f32.mrf.mxu0
    %v6773 = vadd.f32 %v5375, %v6772
    %v6774 = vpop.f32.mrf.mxu0
    %v6775 = vadd.f32 %v5371, %v6774
    %v6776 = vpop.f32.mrf.mxu0
    %v6777 = vadd.f32 %v5375, %v6776
    %6778 = vmatprep.mubr.bf16.mxu0 %v5195
    %6779 = vmatmul.mubr.bf16.gmra.mxu0 %v5194
    %v6780 = vpop.f32.mrf.mxu0
    %v6781 = vadd.f32 %v5371, %v6780
    %v6782 = vpop.f32.mrf.mxu0
    %v6783 = vadd.f32 %v5375, %v6782
    %v6784 = vpop.f32.mrf.mxu0
    %v6785 = vadd.f32 %v5371, %v6784
    %v6786 = vpop.f32.mrf.mxu0
    %v6787 = vadd.f32 %v5375, %v6786
    %6788 = vmatprep.mubr.bf16.mxu0 %v5199
    %6789 = vmatmul.mubr.bf16.gmra.mxu0 %v5198
    %v6790 = vpop.f32.mrf.mxu0
    %v6791 = vadd.f32 %v5371, %v6790
    %v6792 = vpop.f32.mrf.mxu0
    %v6793 = vadd.f32 %v5375, %v6792
    %v6794 = vpop.f32.mrf.mxu0
    %v6795 = vadd.f32 %v5371, %v6794
    %v6796 = vpop.f32.mrf.mxu0
    %v6797 = vadd.f32 %v5375, %v6796
    %6798 = vmatprep.mubr.bf16.mxu0 %v5203
    %6799 = vmatmul.mubr.bf16.gmra.mxu0 %v5202
    %v6800 = vpop.f32.mrf.mxu0
    %v6801 = vadd.f32 %v5371, %v6800
    %v6802 = vpop.f32.mrf.mxu0
    %v6803 = vadd.f32 %v5375, %v6802
    %v6804 = vpop.f32.mrf.mxu0
    %v6805 = vadd.f32 %v5371, %v6804
    %v6806 = vpop.f32.mrf.mxu0
    %v6807 = vadd.f32 %v5375, %v6806
    %6808 = vmatprep.mubr.bf16.mxu0 %v5207
    %6809 = vmatmul.mubr.bf16.gmra.mxu0 %v5206
    %v6810 = vpop.f32.mrf.mxu0
    %v6811 = vadd.f32 %v5371, %v6810
    %v6812 = vpop.f32.mrf.mxu0
    %v6813 = vadd.f32 %v5375, %v6812
    %v6814 = vpop.f32.mrf.mxu0
    %v6815 = vadd.f32 %v5371, %v6814
    %v6816 = vpop.f32.mrf.mxu0
    %v6817 = vadd.f32 %v5375, %v6816
    %6818 = vmatprep.mubr.bf16.mxu0 %v5211
    %6819 = vmatmul.mubr.bf16.gmra.mxu0 %v5210
    %v6820 = vpop.f32.mrf.mxu0
    %v6821 = vadd.f32 %v5371, %v6820
    %v6822 = vpop.f32.mrf.mxu0
    %v6823 = vadd.f32 %v5375, %v6822
    %v6824 = vpop.f32.mrf.mxu0
    %v6825 = vadd.f32 %v5371, %v6824
    %v6826 = vpop.f32.mrf.mxu0
    %v6827 = vadd.f32 %v5375, %v6826
    %6828 = vmatprep.mubr.bf16.mxu0 %v5215
    %6829 = vmatmul.mubr.bf16.gmra.mxu0 %v5214
    %v6830 = vpop.f32.mrf.mxu0
    %v6831 = vadd.f32 %v5371, %v6830
    %v6832 = vpop.f32.mrf.mxu0
    %v6833 = vadd.f32 %v5375, %v6832
    %v6834 = vpop.f32.mrf.mxu0
    %v6835 = vadd.f32 %v5371, %v6834
    %v6836 = vpop.f32.mrf.mxu0
    %v6837 = vadd.f32 %v5375, %v6836
    %6838 = vmatprep.mubr.bf16.mxu0 %v5219
    %6839 = vmatmul.mubr.bf16.gmra.mxu0 %v5218
    %v6840 = vpop.f32.mrf.mxu0
    %v6841 = vadd.f32 %v5371, %v6840
    %v6842 = vpop.f32.mrf.mxu0
    %v6843 = vadd.f32 %v5375, %v6842
    %v6844 = vpop.f32.mrf.mxu0
    %v6845 = vadd.f32 %v5371, %v6844
    %v6846 = vpop.f32.mrf.mxu0
    %v6847 = vadd.f32 %v5375, %v6846
    %6848 = vmatprep.mubr.bf16.mxu0 %v5223
    %6849 = vmatmul.mubr.bf16.gmra.mxu0 %v5222
    %v6850 = vpop.f32.mrf.mxu0
    %v6851 = vadd.f32 %v5371, %v6850
    %v6852 = vpop.f32.mrf.mxu0
    %v6853 = vadd.f32 %v5375, %v6852
    %v6854 = vpop.f32.mrf.mxu0
    %v6855 = vadd.f32 %v5371, %v6854
    %v6856 = vpop.f32.mrf.mxu0
    %v6857 = vadd.f32 %v5375, %v6856
    %6858 = vmatprep.mubr.bf16.mxu0 %v5227
    %6859 = vmatmul.mubr.bf16.gmra.mxu0 %v5226
    %v6860 = vpop.f32.mrf.mxu0
    %v6861 = vadd.f32 %v5371, %v6860
    %v6862 = vpop.f32.mrf.mxu0
    %v6863 = vadd.f32 %v5375, %v6862
    %v6864 = vpop.f32.mrf.mxu0
    %v6865 = vadd.f32 %v5371, %v6864
    %v6866 = vpop.f32.mrf.mxu0
    %v6867 = vadd.f32 %v5375, %v6866
    %6868 = vdwg.mxu0
    %6869 = vmatprep.subr.bf16.mxu0 %v5859
    %6870 = vmatpush1.bf16.msra.mxu0 %v5858
    %6871 = vmatprep.subr.bf16.mxu0 %v5855
    %6872 = vmatpush1.bf16.msra.mxu0 %v5854
    %6873 = vmatprep.subr.bf16.mxu0 %v5851
    %6874 = vmatpush1.bf16.msra.mxu0 %v5850
    %6875 = vmatprep.subr.bf16.mxu0 %v5847
    %6876 = vmatpush1.bf16.msra.mxu0 %v5846
    %6877 = vmatprep.subr.bf16.mxu0 %v5843
    %6878 = vmatpush1.bf16.msra.mxu0 %v5842
    %6879 = vmatprep.subr.bf16.mxu0 %v5839
    %6880 = vmatpush1.bf16.msra.mxu0 %v5838
    %6881 = vmatprep.subr.bf16.mxu0 %v5835
    %6882 = vmatpush1.bf16.msra.mxu0 %v5834
    %6883 = vmatprep.subr.bf16.mxu0 %v5831
    %6884 = vmatpush1.bf16.msra.mxu0 %v5830
    %6885 = vmatprep.subr.bf16.mxu0 %v5891
    %6886 = vmatpush2.bf16.msra.mxu0 %v5890
    %6887 = vmatprep.subr.bf16.mxu0 %v5887
    %6888 = vmatpush2.bf16.msra.mxu0 %v5886
    %6889 = vmatprep.subr.bf16.mxu0 %v5883
    %6890 = vmatpush2.bf16.msra.mxu0 %v5882
    %6891 = vmatprep.subr.bf16.mxu0 %v5879
    %6892 = vmatpush2.bf16.msra.mxu0 %v5878
    %6893 = vmatprep.subr.bf16.mxu0 %v5875
    %6894 = vmatpush2.bf16.msra.mxu0 %v5874
    %6895 = vmatprep.subr.bf16.mxu0 %v5871
    %6896 = vmatpush2.bf16.msra.mxu0 %v5870
    %6897 = vmatprep.subr.bf16.mxu0 %v5867
    %6898 = vmatpush2.bf16.msra.mxu0 %v5866
    %6899 = vmatprep.subr.bf16.mxu0 %v5863
    %6900 = vmatpush2.bf16.msra.mxu0 %v5862
    %6901 = vmatprep.mubr.bf16.mxu0 %v5133
    %6902 = vmatmul.mubr.bf16.gmra.mxu0 %v5132
    %v6903 = vpop.f32.mrf.mxu0
    %v6904 = vadd.f32 %v6621, %v6903
    %v6905 = vpop.f32.mrf.mxu0
    %v6906 = vadd.f32 %v6623, %v6905
    %v6907 = vpop.f32.mrf.mxu0
    %v6908 = vadd.f32 %v6625, %v6907
    %v6909 = vpop.f32.mrf.mxu0
    %v6910 = vadd.f32 %v6627, %v6909
    %6911 = vmatprep.mubr.bf16.mxu0 %v5137
    %6912 = vmatmul.mubr.bf16.gmra.mxu0 %v5136
    %v6913 = vpop.f32.mrf.mxu0
    %v6914 = vadd.f32 %v6631, %v6913
    %v6915 = vpop.f32.mrf.mxu0
    %v6916 = vadd.f32 %v6633, %v6915
    %v6917 = vpop.f32.mrf.mxu0
    %v6918 = vadd.f32 %v6635, %v6917
    %v6919 = vpop.f32.mrf.mxu0
    %v6920 = vadd.f32 %v6637, %v6919
    %6921 = vmatprep.mubr.bf16.mxu0 %v5141
    %6922 = vmatmul.mubr.bf16.gmra.mxu0 %v5140
    %v6923 = vpop.f32.mrf.mxu0
    %v6924 = vadd.f32 %v6641, %v6923
    %v6925 = vpop.f32.mrf.mxu0
    %v6926 = vadd.f32 %v6643, %v6925
    %v6927 = vpop.f32.mrf.mxu0
    %v6928 = vadd.f32 %v6645, %v6927
    %v6929 = vpop.f32.mrf.mxu0
    %v6930 = vadd.f32 %v6647, %v6929
    %6931 = vmatprep.mubr.bf16.mxu0 %v5145
    %6932 = vmatmul.mubr.bf16.gmra.mxu0 %v5144
    %v6933 = vpop.f32.mrf.mxu0
    %v6934 = vadd.f32 %v6651, %v6933
    %v6935 = vpop.f32.mrf.mxu0
    %v6936 = vadd.f32 %v6653, %v6935
    %v6937 = vpop.f32.mrf.mxu0
    %v6938 = vadd.f32 %v6655, %v6937
    %v6939 = vpop.f32.mrf.mxu0
    %v6940 = vadd.f32 %v6657, %v6939
    %6941 = vmatprep.mubr.bf16.mxu0 %v5149
    %6942 = vmatmul.mubr.bf16.gmra.mxu0 %v5148
    %v6943 = vpop.f32.mrf.mxu0
    %v6944 = vadd.f32 %v6661, %v6943
    %v6945 = vpop.f32.mrf.mxu0
    %v6946 = vadd.f32 %v6663, %v6945
    %v6947 = vpop.f32.mrf.mxu0
    %v6948 = vadd.f32 %v6665, %v6947
    %v6949 = vpop.f32.mrf.mxu0
    %v6950 = vadd.f32 %v6667, %v6949
    %6951 = vmatprep.mubr.bf16.mxu0 %v5153
    %6952 = vmatmul.mubr.bf16.gmra.mxu0 %v5152
    %v6953 = vpop.f32.mrf.mxu0
    %v6954 = vadd.f32 %v6671, %v6953
    %v6955 = vpop.f32.mrf.mxu0
    %v6956 = vadd.f32 %v6673, %v6955
    %v6957 = vpop.f32.mrf.mxu0
    %v6958 = vadd.f32 %v6675, %v6957
    %v6959 = vpop.f32.mrf.mxu0
    %v6960 = vadd.f32 %v6677, %v6959
    %6961 = vmatprep.mubr.bf16.mxu0 %v5157
    %6962 = vmatmul.mubr.bf16.gmra.mxu0 %v5156
    %v6963 = vpop.f32.mrf.mxu0
    %v6964 = vadd.f32 %v6681, %v6963
    %v6965 = vpop.f32.mrf.mxu0
    %v6966 = vadd.f32 %v6683, %v6965
    %v6967 = vpop.f32.mrf.mxu0
    %v6968 = vadd.f32 %v6685, %v6967
    %v6969 = vpop.f32.mrf.mxu0
    %v6970 = vadd.f32 %v6687, %v6969
    %6971 = vmatprep.mubr.bf16.mxu0 %v5161
    %6972 = vmatmul.mubr.bf16.gmra.mxu0 %v5160
    %v6973 = vpop.f32.mrf.mxu0
    %v6974 = vadd.f32 %v6691, %v6973
    %v6975 = vpop.f32.mrf.mxu0
    %v6976 = vadd.f32 %v6693, %v6975
    %v6977 = vpop.f32.mrf.mxu0
    %v6978 = vadd.f32 %v6695, %v6977
    %v6979 = vpop.f32.mrf.mxu0
    %v6980 = vadd.f32 %v6697, %v6979
    %6981 = vmatprep.mubr.bf16.mxu0 %v5165
    %6982 = vmatmul.mubr.bf16.gmra.mxu0 %v5164
    %v6983 = vpop.f32.mrf.mxu0
    %v6984 = vadd.f32 %v6701, %v6983
    %v6985 = vpop.f32.mrf.mxu0
    %v6986 = vadd.f32 %v6703, %v6985
    %v6987 = vpop.f32.mrf.mxu0
    %v6988 = vadd.f32 %v6705, %v6987
    %v6989 = vpop.f32.mrf.mxu0
    %v6990 = vadd.f32 %v6707, %v6989
    %6991 = vmatprep.mubr.bf16.mxu0 %v5169
    %6992 = vmatmul.mubr.bf16.gmra.mxu0 %v5168
    %v6993 = vpop.f32.mrf.mxu0
    %v6994 = vadd.f32 %v6711, %v6993
    %v6995 = vpop.f32.mrf.mxu0
    %v6996 = vadd.f32 %v6713, %v6995
    %v6997 = vpop.f32.mrf.mxu0
    %v6998 = vadd.f32 %v6715, %v6997
    %v6999 = vpop.f32.mrf.mxu0
    %v7000 = vadd.f32 %v6717, %v6999
    %7001 = vmatprep.mubr.bf16.mxu0 %v5173
    %7002 = vmatmul.mubr.bf16.gmra.mxu0 %v5172
    %v7003 = vpop.f32.mrf.mxu0
    %v7004 = vadd.f32 %v6721, %v7003
    %v7005 = vpop.f32.mrf.mxu0
    %v7006 = vadd.f32 %v6723, %v7005
    %v7007 = vpop.f32.mrf.mxu0
    %v7008 = vadd.f32 %v6725, %v7007
    %v7009 = vpop.f32.mrf.mxu0
    %v7010 = vadd.f32 %v6727, %v7009
    %7011 = vmatprep.mubr.bf16.mxu0 %v5177
    %7012 = vmatmul.mubr.bf16.gmra.mxu0 %v5176
    %v7013 = vpop.f32.mrf.mxu0
    %v7014 = vadd.f32 %v6731, %v7013
    %v7015 = vpop.f32.mrf.mxu0
    %v7016 = vadd.f32 %v6733, %v7015
    %v7017 = vpop.f32.mrf.mxu0
    %v7018 = vadd.f32 %v6735, %v7017
    %v7019 = vpop.f32.mrf.mxu0
    %v7020 = vadd.f32 %v6737, %v7019
    %7021 = vmatprep.mubr.bf16.mxu0 %v5181
    %7022 = vmatmul.mubr.bf16.gmra.mxu0 %v5180
    %v7023 = vpop.f32.mrf.mxu0
    %v7024 = vadd.f32 %v6741, %v7023
    %v7025 = vpop.f32.mrf.mxu0
    %v7026 = vadd.f32 %v6743, %v7025
    %v7027 = vpop.f32.mrf.mxu0
    %v7028 = vadd.f32 %v6745, %v7027
    %v7029 = vpop.f32.mrf.mxu0
    %v7030 = vadd.f32 %v6747, %v7029
    %7031 = vmatprep.mubr.bf16.mxu0 %v5185
    %7032 = vmatmul.mubr.bf16.gmra.mxu0 %v5184
    %v7033 = vpop.f32.mrf.mxu0
    %v7034 = vadd.f32 %v6751, %v7033
    %v7035 = vpop.f32.mrf.mxu0
    %v7036 = vadd.f32 %v6753, %v7035
    %v7037 = vpop.f32.mrf.mxu0
    %v7038 = vadd.f32 %v6755, %v7037
    %v7039 = vpop.f32.mrf.mxu0
    %v7040 = vadd.f32 %v6757, %v7039
    %7041 = vmatprep.mubr.bf16.mxu0 %v5189
    %7042 = vmatmul.mubr.bf16.gmra.mxu0 %v5188
    %v7043 = vpop.f32.mrf.mxu0
    %v7044 = vadd.f32 %v6761, %v7043
    %v7045 = vpop.f32.mrf.mxu0
    %v7046 = vadd.f32 %v6763, %v7045
    %v7047 = vpop.f32.mrf.mxu0
    %v7048 = vadd.f32 %v6765, %v7047
    %v7049 = vpop.f32.mrf.mxu0
    %v7050 = vadd.f32 %v6767, %v7049
    %7051 = vmatprep.mubr.bf16.mxu0 %v5193
    %7052 = vmatmul.mubr.bf16.gmra.mxu0 %v5192
    %v7053 = vpop.f32.mrf.mxu0
    %v7054 = vadd.f32 %v6771, %v7053
    %v7055 = vpop.f32.mrf.mxu0
    %v7056 = vadd.f32 %v6773, %v7055
    %v7057 = vpop.f32.mrf.mxu0
    %v7058 = vadd.f32 %v6775, %v7057
    %v7059 = vpop.f32.mrf.mxu0
    %v7060 = vadd.f32 %v6777, %v7059
    %7061 = vmatprep.mubr.bf16.mxu0 %v5197
    %7062 = vmatmul.mubr.bf16.gmra.mxu0 %v5196
    %v7063 = vpop.f32.mrf.mxu0
    %v7064 = vadd.f32 %v6781, %v7063
    %v7065 = vpop.f32.mrf.mxu0
    %v7066 = vadd.f32 %v6783, %v7065
    %v7067 = vpop.f32.mrf.mxu0
    %v7068 = vadd.f32 %v6785, %v7067
    %v7069 = vpop.f32.mrf.mxu0
    %v7070 = vadd.f32 %v6787, %v7069
    %7071 = vmatprep.mubr.bf16.mxu0 %v5201
    %7072 = vmatmul.mubr.bf16.gmra.mxu0 %v5200
    %v7073 = vpop.f32.mrf.mxu0
    %v7074 = vadd.f32 %v6791, %v7073
    %v7075 = vpop.f32.mrf.mxu0
    %v7076 = vadd.f32 %v6793, %v7075
    %v7077 = vpop.f32.mrf.mxu0
    %v7078 = vadd.f32 %v6795, %v7077
    %v7079 = vpop.f32.mrf.mxu0
    %v7080 = vadd.f32 %v6797, %v7079
    %7081 = vmatprep.mubr.bf16.mxu0 %v5205
    %7082 = vmatmul.mubr.bf16.gmra.mxu0 %v5204
    %v7083 = vpop.f32.mrf.mxu0
    %v7084 = vadd.f32 %v6801, %v7083
    %v7085 = vpop.f32.mrf.mxu0
    %v7086 = vadd.f32 %v6803, %v7085
    %v7087 = vpop.f32.mrf.mxu0
    %v7088 = vadd.f32 %v6805, %v7087
    %v7089 = vpop.f32.mrf.mxu0
    %v7090 = vadd.f32 %v6807, %v7089
    %7091 = vmatprep.mubr.bf16.mxu0 %v5209
    %7092 = vmatmul.mubr.bf16.gmra.mxu0 %v5208
    %v7093 = vpop.f32.mrf.mxu0
    %v7094 = vadd.f32 %v6811, %v7093
    %v7095 = vpop.f32.mrf.mxu0
    %v7096 = vadd.f32 %v6813, %v7095
    %v7097 = vpop.f32.mrf.mxu0
    %v7098 = vadd.f32 %v6815, %v7097
    %v7099 = vpop.f32.mrf.mxu0
    %v7100 = vadd.f32 %v6817, %v7099
    %7101 = vmatprep.mubr.bf16.mxu0 %v5213
    %7102 = vmatmul.mubr.bf16.gmra.mxu0 %v5212
    %v7103 = vpop.f32.mrf.mxu0
    %v7104 = vadd.f32 %v6821, %v7103
    %v7105 = vpop.f32.mrf.mxu0
    %v7106 = vadd.f32 %v6823, %v7105
    %v7107 = vpop.f32.mrf.mxu0
    %v7108 = vadd.f32 %v6825, %v7107
    %v7109 = vpop.f32.mrf.mxu0
    %v7110 = vadd.f32 %v6827, %v7109
    %7111 = vmatprep.mubr.bf16.mxu0 %v5217
    %7112 = vmatmul.mubr.bf16.gmra.mxu0 %v5216
    %v7113 = vpop.f32.mrf.mxu0
    %v7114 = vadd.f32 %v6831, %v7113
    %v7115 = vpop.f32.mrf.mxu0
    %v7116 = vadd.f32 %v6833, %v7115
    %v7117 = vpop.f32.mrf.mxu0
    %v7118 = vadd.f32 %v6835, %v7117
    %v7119 = vpop.f32.mrf.mxu0
    %v7120 = vadd.f32 %v6837, %v7119
    %7121 = vmatprep.mubr.bf16.mxu0 %v5221
    %7122 = vmatmul.mubr.bf16.gmra.mxu0 %v5220
    %v7123 = vpop.f32.mrf.mxu0
    %v7124 = vadd.f32 %v6841, %v7123
    %v7125 = vpop.f32.mrf.mxu0
    %v7126 = vadd.f32 %v6843, %v7125
    %v7127 = vpop.f32.mrf.mxu0
    %v7128 = vadd.f32 %v6845, %v7127
    %v7129 = vpop.f32.mrf.mxu0
    %v7130 = vadd.f32 %v6847, %v7129
    %7131 = vmatprep.mubr.bf16.mxu0 %v5225
    %7132 = vmatmul.mubr.bf16.gmra.mxu0 %v5224
    %v7133 = vpop.f32.mrf.mxu0
    %v7134 = vadd.f32 %v6851, %v7133
    %v7135 = vpop.f32.mrf.mxu0
    %v7136 = vadd.f32 %v6853, %v7135
    %v7137 = vpop.f32.mrf.mxu0
    %v7138 = vadd.f32 %v6855, %v7137
    %v7139 = vpop.f32.mrf.mxu0
    %v7140 = vadd.f32 %v6857, %v7139
    %7141 = vmatprep.mubr.bf16.mxu0 %v5229
    %7142 = vmatmul.mubr.bf16.gmra.mxu0 %v5228
    %v7143 = vpop.f32.mrf.mxu0
    %v7144 = vadd.f32 %v6861, %v7143
    %v7145 = vpop.f32.mrf.mxu0
    %v7146 = vadd.f32 %v6863, %v7145
    %v7147 = vpop.f32.mrf.mxu0
    %v7148 = vadd.f32 %v6865, %v7147
    %v7149 = vpop.f32.mrf.mxu0
    %v7150 = vadd.f32 %v6867, %v7149
    %7151 = vdwg.mxu0
    %v7152 = vpack.c.bf16 %v6342, %v6338
    %v7153 = vpack.c.bf16 %v6344, %v6340
    %v7154 = vpack.c.bf16 %v6908, %v6904
    %v7155 = vpack.c.bf16 %v6910, %v6906
    %v7156 = vpack.c.bf16 %v6352, %v6348
    %v7157 = vpack.c.bf16 %v6354, %v6350
    %v7158 = vpack.c.bf16 %v6918, %v6914
    %v7159 = vpack.c.bf16 %v6920, %v6916
    %v7160 = vpack.c.bf16 %v6362, %v6358
    %v7161 = vpack.c.bf16 %v6364, %v6360
    %v7162 = vpack.c.bf16 %v6928, %v6924
    %v7163 = vpack.c.bf16 %v6930, %v6926
    %v7164 = vpack.c.bf16 %v6372, %v6368
    %v7165 = vpack.c.bf16 %v6374, %v6370
    %v7166 = vpack.c.bf16 %v6938, %v6934
    %v7167 = vpack.c.bf16 %v6940, %v6936
    %v7168 = vpack.c.bf16 %v6382, %v6378
    %v7169 = vpack.c.bf16 %v6384, %v6380
    %v7170 = vpack.c.bf16 %v6948, %v6944
    %v7171 = vpack.c.bf16 %v6950, %v6946
    %v7172 = vpack.c.bf16 %v6392, %v6388
    %v7173 = vpack.c.bf16 %v6394, %v6390
    %v7174 = vpack.c.bf16 %v6958, %v6954
    %v7175 = vpack.c.bf16 %v6960, %v6956
    %v7176 = vpack.c.bf16 %v6402, %v6398
    %v7177 = vpack.c.bf16 %v6404, %v6400
    %v7178 = vpack.c.bf16 %v6968, %v6964
    %v7179 = vpack.c.bf16 %v6970, %v6966
    %v7180 = vpack.c.bf16 %v6412, %v6408
    %v7181 = vpack.c.bf16 %v6414, %v6410
    %v7182 = vpack.c.bf16 %v6978, %v6974
    %v7183 = vpack.c.bf16 %v6980, %v6976
    %v7184 = vpack.c.bf16 %v6422, %v6418
    %v7185 = vpack.c.bf16 %v6424, %v6420
    %v7186 = vpack.c.bf16 %v6988, %v6984
    %v7187 = vpack.c.bf16 %v6990, %v6986
    %v7188 = vpack.c.bf16 %v6432, %v6428
    %v7189 = vpack.c.bf16 %v6434, %v6430
    %v7190 = vpack.c.bf16 %v6998, %v6994
    %v7191 = vpack.c.bf16 %v7000, %v6996
    %v7192 = vpack.c.bf16 %v6442, %v6438
    %v7193 = vpack.c.bf16 %v6444, %v6440
    %v7194 = vpack.c.bf16 %v7008, %v7004
    %v7195 = vpack.c.bf16 %v7010, %v7006
    %v7196 = vpack.c.bf16 %v6452, %v6448
    %v7197 = vpack.c.bf16 %v6454, %v6450
    %v7198 = vpack.c.bf16 %v7018, %v7014
    %v7199 = vpack.c.bf16 %v7020, %v7016
    %v7200 = vpack.c.bf16 %v6462, %v6458
    %v7201 = vpack.c.bf16 %v6464, %v6460
    %v7202 = vpack.c.bf16 %v7028, %v7024
    %v7203 = vpack.c.bf16 %v7030, %v7026
    %v7204 = vpack.c.bf16 %v6472, %v6468
    %v7205 = vpack.c.bf16 %v6474, %v6470
    %v7206 = vpack.c.bf16 %v7038, %v7034
    %v7207 = vpack.c.bf16 %v7040, %v7036
    %v7208 = vpack.c.bf16 %v6482, %v6478
    %v7209 = vpack.c.bf16 %v6484, %v6480
    %v7210 = vpack.c.bf16 %v7048, %v7044
    %v7211 = vpack.c.bf16 %v7050, %v7046
    %v7212 = vpack.c.bf16 %v6492, %v6488
    %v7213 = vpack.c.bf16 %v6494, %v6490
    %v7214 = vpack.c.bf16 %v7058, %v7054
    %v7215 = vpack.c.bf16 %v7060, %v7056
    %v7216 = vpack.c.bf16 %v6502, %v6498
    %v7217 = vpack.c.bf16 %v6504, %v6500
    %v7218 = vpack.c.bf16 %v7068, %v7064
    %v7219 = vpack.c.bf16 %v7070, %v7066
    %v7220 = vpack.c.bf16 %v6512, %v6508
    %v7221 = vpack.c.bf16 %v6514, %v6510
    %v7222 = vpack.c.bf16 %v7078, %v7074
    %v7223 = vpack.c.bf16 %v7080, %v7076
    %v7224 = vpack.c.bf16 %v6522, %v6518
    %v7225 = vpack.c.bf16 %v6524, %v6520
    %v7226 = vpack.c.bf16 %v7088, %v7084
    %v7227 = vpack.c.bf16 %v7090, %v7086
    %v7228 = vpack.c.bf16 %v6532, %v6528
    %v7229 = vpack.c.bf16 %v6534, %v6530
    %v7230 = vpack.c.bf16 %v7098, %v7094
    %v7231 = vpack.c.bf16 %v7100, %v7096
    %v7232 = vpack.c.bf16 %v6542, %v6538
    %v7233 = vpack.c.bf16 %v6544, %v6540
    %v7234 = vpack.c.bf16 %v7108, %v7104
    %v7235 = vpack.c.bf16 %v7110, %v7106
    %v7236 = vpack.c.bf16 %v6552, %v6548
    %v7237 = vpack.c.bf16 %v6554, %v6550
    %v7238 = vpack.c.bf16 %v7118, %v7114
    %v7239 = vpack.c.bf16 %v7120, %v7116
    %v7240 = vpack.c.bf16 %v6562, %v6558
    %v7241 = vpack.c.bf16 %v6564, %v6560
    %v7242 = vpack.c.bf16 %v7128, %v7124
    %v7243 = vpack.c.bf16 %v7130, %v7126
    %v7244 = vpack.c.bf16 %v6572, %v6568
    %v7245 = vpack.c.bf16 %v6574, %v6570
    %v7246 = vpack.c.bf16 %v7138, %v7134
    %v7247 = vpack.c.bf16 %v7140, %v7136
    %v7248 = vpack.c.bf16 %v6582, %v6578
    %v7249 = vpack.c.bf16 %v6584, %v6580
    %v7250 = vpack.c.bf16 %v7148, %v7144
    %v7251 = vpack.c.bf16 %v7150, %v7146
    %v7252 = vld [vmem:[#allocation11] sm:$0xff]
    %v7253 = vld [vmem:[#allocation11 + $0x8] sm:$0xff]
    %v7254 = vld [vmem:[#allocation11 + $0x10] sm:$0xff]
    %v7255 = vld [vmem:[#allocation11 + $0x18] sm:$0xff]
    %v7256 = vld [vmem:[#allocation11 + $0x20] sm:$0xff]
    %v7257 = vld [vmem:[#allocation11 + $0x28] sm:$0xff]
    %v7258 = vld [vmem:[#allocation11 + $0x30] sm:$0xff]
    %v7259 = vld [vmem:[#allocation11 + $0x38] sm:$0xff]
    %v7260 = vld [vmem:[#allocation11 + $0x40] sm:$0xff]
    %v7261 = vld [vmem:[#allocation11 + $0x48] sm:$0xff]
    %v7262 = vld [vmem:[#allocation11 + $0x50] sm:$0xff]
    %v7263 = vld [vmem:[#allocation11 + $0x58] sm:$0xff]
    %v7264 = vld [vmem:[#allocation11 + $0x60] sm:$0xff]
    %v7265 = vld [vmem:[#allocation11 + $0x68] sm:$0xff]
    %v7266 = vld [vmem:[#allocation11 + $0x70] sm:$0xff]
    %v7267 = vld [vmem:[#allocation11 + $0x78] sm:$0xff]
    %v7268 = vld [vmem:[#allocation11 + $0x80] sm:$0xff]
    %v7269 = vld [vmem:[#allocation11 + $0x88] sm:$0xff]
    %v7270 = vld [vmem:[#allocation11 + $0x90] sm:$0xff]
    %v7271 = vld [vmem:[#allocation11 + $0x98] sm:$0xff]
    %v7272 = vld [vmem:[#allocation11 + $0xa0] sm:$0xff]
    %v7273 = vld [vmem:[#allocation11 + $0xa8] sm:$0xff]
    %v7274 = vld [vmem:[#allocation11 + $0xb0] sm:$0xff]
    %v7275 = vld [vmem:[#allocation11 + $0xb8] sm:$0xff]
    %v7276 = vld [vmem:[#allocation11 + $0xc0] sm:$0xff]
    %v7277 = vld [vmem:[#allocation11 + $0xc8] sm:$0xff]
    %v7278 = vld [vmem:[#allocation11 + $0xd0] sm:$0xff]
    %v7279 = vld [vmem:[#allocation11 + $0xd8] sm:$0xff]
    %v7280 = vld [vmem:[#allocation11 + $0xe0] sm:$0xff]
    %v7281 = vld [vmem:[#allocation11 + $0xe8] sm:$0xff]
    %v7282 = vld [vmem:[#allocation11 + $0xf0] sm:$0xff]
    %v7283 = vld [vmem:[#allocation11 + $0xf8] sm:$0xff]
    %v7284 = vld [vmem:[#allocation11 + $0x100] sm:$0xff]
    %v7285 = vld [vmem:[#allocation11 + $0x108] sm:$0xff]
    %v7286 = vld [vmem:[#allocation11 + $0x110] sm:$0xff]
    %v7287 = vld [vmem:[#allocation11 + $0x118] sm:$0xff]
    %v7288 = vld [vmem:[#allocation11 + $0x120] sm:$0xff]
    %v7289 = vld [vmem:[#allocation11 + $0x128] sm:$0xff]
    %v7290 = vld [vmem:[#allocation11 + $0x130] sm:$0xff]
    %v7291 = vld [vmem:[#allocation11 + $0x138] sm:$0xff]
    %v7292 = vld [vmem:[#allocation11 + $0x140] sm:$0xff]
    %v7293 = vld [vmem:[#allocation11 + $0x148] sm:$0xff]
    %v7294 = vld [vmem:[#allocation11 + $0x150] sm:$0xff]
    %v7295 = vld [vmem:[#allocation11 + $0x158] sm:$0xff]
    %v7296 = vld [vmem:[#allocation11 + $0x160] sm:$0xff]
    %v7297 = vld [vmem:[#allocation11 + $0x168] sm:$0xff]
    %v7298 = vld [vmem:[#allocation11 + $0x170] sm:$0xff]
    %v7299 = vld [vmem:[#allocation11 + $0x178] sm:$0xff]
    %v7300 = vld [vmem:[#allocation11 + $0x180] sm:$0xff]
    %v7301 = vld [vmem:[#allocation11 + $0x188] sm:$0xff]
    %v7302 = vld [vmem:[#allocation11 + $0x190] sm:$0xff]
    %v7303 = vld [vmem:[#allocation11 + $0x198] sm:$0xff]
    %v7304 = vld [vmem:[#allocation11 + $0x1a0] sm:$0xff]
    %v7305 = vld [vmem:[#allocation11 + $0x1a8] sm:$0xff]
    %v7306 = vld [vmem:[#allocation11 + $0x1b0] sm:$0xff]
    %v7307 = vld [vmem:[#allocation11 + $0x1b8] sm:$0xff]
    %v7308 = vld [vmem:[#allocation11 + $0x1c0] sm:$0xff]
    %v7309 = vld [vmem:[#allocation11 + $0x1c8] sm:$0xff]
    %v7310 = vld [vmem:[#allocation11 + $0x1d0] sm:$0xff]
    %v7311 = vld [vmem:[#allocation11 + $0x1d8] sm:$0xff]
    %v7312 = vld [vmem:[#allocation11 + $0x1e0] sm:$0xff]
    %v7313 = vld [vmem:[#allocation11 + $0x1e8] sm:$0xff]
    %v7314 = vld [vmem:[#allocation11 + $0x1f0] sm:$0xff]
    %v7315 = vld [vmem:[#allocation11 + $0x1f8] sm:$0xff]
    %v7316 = vld [vmem:[#allocation11 + $0x200] sm:$0xff]
    %v7317 = vld [vmem:[#allocation11 + $0x208] sm:$0xff]
    %v7318 = vld [vmem:[#allocation11 + $0x210] sm:$0xff]
    %v7319 = vld [vmem:[#allocation11 + $0x218] sm:$0xff]
    %v7320 = vld [vmem:[#allocation11 + $0x220] sm:$0xff]
    %v7321 = vld [vmem:[#allocation11 + $0x228] sm:$0xff]
    %v7322 = vld [vmem:[#allocation11 + $0x230] sm:$0xff]
    %v7323 = vld [vmem:[#allocation11 + $0x238] sm:$0xff]
    %v7324 = vld [vmem:[#allocation11 + $0x240] sm:$0xff]
    %v7325 = vld [vmem:[#allocation11 + $0x248] sm:$0xff]
    %v7326 = vld [vmem:[#allocation11 + $0x250] sm:$0xff]
    %v7327 = vld [vmem:[#allocation11 + $0x258] sm:$0xff]
    %v7328 = vld [vmem:[#allocation11 + $0x260] sm:$0xff]
    %v7329 = vld [vmem:[#allocation11 + $0x268] sm:$0xff]
    %v7330 = vld [vmem:[#allocation11 + $0x270] sm:$0xff]
    %v7331 = vld [vmem:[#allocation11 + $0x278] sm:$0xff]
    %v7332 = vld [vmem:[#allocation11 + $0x280] sm:$0xff]
    %v7333 = vld [vmem:[#allocation11 + $0x288] sm:$0xff]
    %v7334 = vld [vmem:[#allocation11 + $0x290] sm:$0xff]
    %v7335 = vld [vmem:[#allocation11 + $0x298] sm:$0xff]
    %v7336 = vld [vmem:[#allocation11 + $0x2a0] sm:$0xff]
    %v7337 = vld [vmem:[#allocation11 + $0x2a8] sm:$0xff]
    %v7338 = vld [vmem:[#allocation11 + $0x2b0] sm:$0xff]
    %v7339 = vld [vmem:[#allocation11 + $0x2b8] sm:$0xff]
    %v7340 = vld [vmem:[#allocation11 + $0x2c0] sm:$0xff]
    %v7341 = vld [vmem:[#allocation11 + $0x2c8] sm:$0xff]
    %v7342 = vld [vmem:[#allocation11 + $0x2d0] sm:$0xff]
    %v7343 = vld [vmem:[#allocation11 + $0x2d8] sm:$0xff]
    %v7344 = vld [vmem:[#allocation11 + $0x2e0] sm:$0xff]
    %v7345 = vld [vmem:[#allocation11 + $0x2e8] sm:$0xff]
    %v7346 = vld [vmem:[#allocation11 + $0x2f0] sm:$0xff]
    %v7347 = vld [vmem:[#allocation11 + $0x2f8] sm:$0xff]
    %v7348 = vld [vmem:[#allocation11 + $0x300] sm:$0xff]
    %v7349 = vld [vmem:[#allocation11 + $0x308] sm:$0xff]
    %v7350 = vld [vmem:[#allocation11 + $0x310] sm:$0xff]
    %v7351 = vld [vmem:[#allocation11 + $0x318] sm:$0xff]
    %v7352 = vld [vmem:[#allocation11 + $0x320] sm:$0xff]
    %v7353 = vld [vmem:[#allocation11 + $0x328] sm:$0xff]
    %v7354 = vld [vmem:[#allocation11 + $0x330] sm:$0xff]
    %v7355 = vld [vmem:[#allocation11 + $0x338] sm:$0xff]
    %v7356 = vld [vmem:[#allocation11 + $0x340] sm:$0xff]
    %v7357 = vld [vmem:[#allocation11 + $0x348] sm:$0xff]
    %v7358 = vld [vmem:[#allocation11 + $0x350] sm:$0xff]
    %v7359 = vld [vmem:[#allocation11 + $0x358] sm:$0xff]
    %v7360 = vld [vmem:[#allocation11 + $0x360] sm:$0xff]
    %v7361 = vld [vmem:[#allocation11 + $0x368] sm:$0xff]
    %v7362 = vld [vmem:[#allocation11 + $0x370] sm:$0xff]
    %v7363 = vld [vmem:[#allocation11 + $0x378] sm:$0xff]
    %v7364 = vld [vmem:[#allocation11 + $0x380] sm:$0xff]
    %v7365 = vld [vmem:[#allocation11 + $0x388] sm:$0xff]
    %v7366 = vld [vmem:[#allocation11 + $0x390] sm:$0xff]
    %v7367 = vld [vmem:[#allocation11 + $0x398] sm:$0xff]
    %v7368 = vld [vmem:[#allocation11 + $0x3a0] sm:$0xff]
    %v7369 = vld [vmem:[#allocation11 + $0x3a8] sm:$0xff]
    %v7370 = vld [vmem:[#allocation11 + $0x3b0] sm:$0xff]
    %v7371 = vld [vmem:[#allocation11 + $0x3b8] sm:$0xff]
    %v7372 = vld [vmem:[#allocation11 + $0x3c0] sm:$0xff]
    %v7373 = vld [vmem:[#allocation11 + $0x3c8] sm:$0xff]
    %v7374 = vld [vmem:[#allocation11 + $0x3d0] sm:$0xff]
    %v7375 = vld [vmem:[#allocation11 + $0x3d8] sm:$0xff]
    %v7376 = vld [vmem:[#allocation11 + $0x3e0] sm:$0xff]
    %v7377 = vld [vmem:[#allocation11 + $0x3e8] sm:$0xff]
    %v7378 = vld [vmem:[#allocation11 + $0x3f0] sm:$0xff]
    %v7379 = vld [vmem:[#allocation11 + $0x3f8] sm:$0xff]
    %v7380 = vld [vmem:[#allocation11 + $0x400] sm:$0xff]
    %v7381 = vld [vmem:[#allocation11 + $0x408] sm:$0xff]
    %v7382 = vld [vmem:[#allocation11 + $0x410] sm:$0xff]
    %v7383 = vld [vmem:[#allocation11 + $0x418] sm:$0xff]
    %v7384 = vld [vmem:[#allocation11 + $0x420] sm:$0xff]
    %v7385 = vld [vmem:[#allocation11 + $0x428] sm:$0xff]
    %v7386 = vld [vmem:[#allocation11 + $0x430] sm:$0xff]
    %v7387 = vld [vmem:[#allocation11 + $0x438] sm:$0xff]
    %v7388 = vld [vmem:[#allocation11 + $0x440] sm:$0xff]
    %v7389 = vld [vmem:[#allocation11 + $0x448] sm:$0xff]
    %v7390 = vld [vmem:[#allocation11 + $0x450] sm:$0xff]
    %v7391 = vld [vmem:[#allocation11 + $0x458] sm:$0xff]
    %v7392 = vld [vmem:[#allocation11 + $0x460] sm:$0xff]
    %v7393 = vld [vmem:[#allocation11 + $0x468] sm:$0xff]
    %v7394 = vld [vmem:[#allocation11 + $0x470] sm:$0xff]
    %v7395 = vld [vmem:[#allocation11 + $0x478] sm:$0xff]
    %v7396 = vld [vmem:[#allocation11 + $0x480] sm:$0xff]
    %v7397 = vld [vmem:[#allocation11 + $0x488] sm:$0xff]
    %v7398 = vld [vmem:[#allocation11 + $0x490] sm:$0xff]
    %v7399 = vld [vmem:[#allocation11 + $0x498] sm:$0xff]
    %v7400 = vld [vmem:[#allocation11 + $0x4a0] sm:$0xff]
    %v7401 = vld [vmem:[#allocation11 + $0x4a8] sm:$0xff]
    %v7402 = vld [vmem:[#allocation11 + $0x4b0] sm:$0xff]
    %v7403 = vld [vmem:[#allocation11 + $0x4b8] sm:$0xff]
    %v7404 = vld [vmem:[#allocation11 + $0x4c0] sm:$0xff]
    %v7405 = vld [vmem:[#allocation11 + $0x4c8] sm:$0xff]
    %v7406 = vld [vmem:[#allocation11 + $0x4d0] sm:$0xff]
    %v7407 = vld [vmem:[#allocation11 + $0x4d8] sm:$0xff]
    %v7408 = vld [vmem:[#allocation11 + $0x4e0] sm:$0xff]
    %v7409 = vld [vmem:[#allocation11 + $0x4e8] sm:$0xff]
    %v7410 = vld [vmem:[#allocation11 + $0x4f0] sm:$0xff]
    %v7411 = vld [vmem:[#allocation11 + $0x4f8] sm:$0xff]
    %v7412 = vld [vmem:[#allocation11 + $0x500] sm:$0xff]
    %v7413 = vld [vmem:[#allocation11 + $0x508] sm:$0xff]
    %v7414 = vld [vmem:[#allocation11 + $0x510] sm:$0xff]
    %v7415 = vld [vmem:[#allocation11 + $0x518] sm:$0xff]
    %v7416 = vld [vmem:[#allocation11 + $0x520] sm:$0xff]
    %v7417 = vld [vmem:[#allocation11 + $0x528] sm:$0xff]
    %v7418 = vld [vmem:[#allocation11 + $0x530] sm:$0xff]
    %v7419 = vld [vmem:[#allocation11 + $0x538] sm:$0xff]
    %v7420 = vld [vmem:[#allocation11 + $0x540] sm:$0xff]
    %v7421 = vld [vmem:[#allocation11 + $0x548] sm:$0xff]
    %v7422 = vld [vmem:[#allocation11 + $0x550] sm:$0xff]
    %v7423 = vld [vmem:[#allocation11 + $0x558] sm:$0xff]
    %v7424 = vld [vmem:[#allocation11 + $0x560] sm:$0xff]
    %v7425 = vld [vmem:[#allocation11 + $0x568] sm:$0xff]
    %v7426 = vld [vmem:[#allocation11 + $0x570] sm:$0xff]
    %v7427 = vld [vmem:[#allocation11 + $0x578] sm:$0xff]
    %v7428 = vld [vmem:[#allocation11 + $0x580] sm:$0xff]
    %v7429 = vld [vmem:[#allocation11 + $0x588] sm:$0xff]
    %v7430 = vld [vmem:[#allocation11 + $0x590] sm:$0xff]
    %v7431 = vld [vmem:[#allocation11 + $0x598] sm:$0xff]
    %v7432 = vld [vmem:[#allocation11 + $0x5a0] sm:$0xff]
    %v7433 = vld [vmem:[#allocation11 + $0x5a8] sm:$0xff]
    %v7434 = vld [vmem:[#allocation11 + $0x5b0] sm:$0xff]
    %v7435 = vld [vmem:[#allocation11 + $0x5b8] sm:$0xff]
    %v7436 = vld [vmem:[#allocation11 + $0x5c0] sm:$0xff]
    %v7437 = vld [vmem:[#allocation11 + $0x5c8] sm:$0xff]
    %v7438 = vld [vmem:[#allocation11 + $0x5d0] sm:$0xff]
    %v7439 = vld [vmem:[#allocation11 + $0x5d8] sm:$0xff]
    %v7440 = vld [vmem:[#allocation11 + $0x5e0] sm:$0xff]
    %v7441 = vld [vmem:[#allocation11 + $0x5e8] sm:$0xff]
    %v7442 = vld [vmem:[#allocation11 + $0x5f0] sm:$0xff]
    %v7443 = vld [vmem:[#allocation11 + $0x5f8] sm:$0xff]
    %v7444 = vld [vmem:[#allocation11 + $0x600] sm:$0xff]
    %v7445 = vld [vmem:[#allocation11 + $0x608] sm:$0xff]
    %v7446 = vld [vmem:[#allocation11 + $0x610] sm:$0xff]
    %v7447 = vld [vmem:[#allocation11 + $0x618] sm:$0xff]
    %v7448 = vld [vmem:[#allocation11 + $0x620] sm:$0xff]
    %v7449 = vld [vmem:[#allocation11 + $0x628] sm:$0xff]
    %v7450 = vld [vmem:[#allocation11 + $0x630] sm:$0xff]
    %v7451 = vld [vmem:[#allocation11 + $0x638] sm:$0xff]
    %v7452 = vld [vmem:[#allocation11 + $0x640] sm:$0xff]
    %v7453 = vld [vmem:[#allocation11 + $0x648] sm:$0xff]
    %v7454 = vld [vmem:[#allocation11 + $0x650] sm:$0xff]
    %v7455 = vld [vmem:[#allocation11 + $0x658] sm:$0xff]
    %v7456 = vld [vmem:[#allocation11 + $0x660] sm:$0xff]
    %v7457 = vld [vmem:[#allocation11 + $0x668] sm:$0xff]
    %v7458 = vld [vmem:[#allocation11 + $0x670] sm:$0xff]
    %v7459 = vld [vmem:[#allocation11 + $0x678] sm:$0xff]
    %v7460 = vld [vmem:[#allocation11 + $0x680] sm:$0xff]
    %v7461 = vld [vmem:[#allocation11 + $0x688] sm:$0xff]
    %v7462 = vld [vmem:[#allocation11 + $0x690] sm:$0xff]
    %v7463 = vld [vmem:[#allocation11 + $0x698] sm:$0xff]
    %v7464 = vld [vmem:[#allocation11 + $0x6a0] sm:$0xff]
    %v7465 = vld [vmem:[#allocation11 + $0x6a8] sm:$0xff]
    %v7466 = vld [vmem:[#allocation11 + $0x6b0] sm:$0xff]
    %v7467 = vld [vmem:[#allocation11 + $0x6b8] sm:$0xff]
    %v7468 = vld [vmem:[#allocation11 + $0x6c0] sm:$0xff]
    %v7469 = vld [vmem:[#allocation11 + $0x6c8] sm:$0xff]
    %v7470 = vld [vmem:[#allocation11 + $0x6d0] sm:$0xff]
    %v7471 = vld [vmem:[#allocation11 + $0x6d8] sm:$0xff]
    %v7472 = vld [vmem:[#allocation11 + $0x6e0] sm:$0xff]
    %v7473 = vld [vmem:[#allocation11 + $0x6e8] sm:$0xff]
    %v7474 = vld [vmem:[#allocation11 + $0x6f0] sm:$0xff]
    %v7475 = vld [vmem:[#allocation11 + $0x6f8] sm:$0xff]
    %v7476 = vld [vmem:[#allocation11 + $0x700] sm:$0xff]
    %v7477 = vld [vmem:[#allocation11 + $0x708] sm:$0xff]
    %v7478 = vld [vmem:[#allocation11 + $0x710] sm:$0xff]
    %v7479 = vld [vmem:[#allocation11 + $0x718] sm:$0xff]
    %v7480 = vld [vmem:[#allocation11 + $0x720] sm:$0xff]
    %v7481 = vld [vmem:[#allocation11 + $0x728] sm:$0xff]
    %v7482 = vld [vmem:[#allocation11 + $0x730] sm:$0xff]
    %v7483 = vld [vmem:[#allocation11 + $0x738] sm:$0xff]
    %v7484 = vld [vmem:[#allocation11 + $0x740] sm:$0xff]
    %v7485 = vld [vmem:[#allocation11 + $0x748] sm:$0xff]
    %v7486 = vld [vmem:[#allocation11 + $0x750] sm:$0xff]
    %v7487 = vld [vmem:[#allocation11 + $0x758] sm:$0xff]
    %v7488 = vld [vmem:[#allocation11 + $0x760] sm:$0xff]
    %v7489 = vld [vmem:[#allocation11 + $0x768] sm:$0xff]
    %v7490 = vld [vmem:[#allocation11 + $0x770] sm:$0xff]
    %v7491 = vld [vmem:[#allocation11 + $0x778] sm:$0xff]
    %v7492 = vld [vmem:[#allocation11 + $0x780] sm:$0xff]
    %v7493 = vld [vmem:[#allocation11 + $0x788] sm:$0xff]
    %v7494 = vld [vmem:[#allocation11 + $0x790] sm:$0xff]
    %v7495 = vld [vmem:[#allocation11 + $0x798] sm:$0xff]
    %v7496 = vld [vmem:[#allocation11 + $0x7a0] sm:$0xff]
    %v7497 = vld [vmem:[#allocation11 + $0x7a8] sm:$0xff]
    %v7498 = vld [vmem:[#allocation11 + $0x7b0] sm:$0xff]
    %v7499 = vld [vmem:[#allocation11 + $0x7b8] sm:$0xff]
    %v7500 = vld [vmem:[#allocation11 + $0x7c0] sm:$0xff]
    %v7501 = vld [vmem:[#allocation11 + $0x7c8] sm:$0xff]
    %v7502 = vld [vmem:[#allocation11 + $0x7d0] sm:$0xff]
    %v7503 = vld [vmem:[#allocation11 + $0x7d8] sm:$0xff]
    %v7504 = vld [vmem:[#allocation11 + $0x7e0] sm:$0xff]
    %v7505 = vld [vmem:[#allocation11 + $0x7e8] sm:$0xff]
    %v7506 = vld [vmem:[#allocation11 + $0x7f0] sm:$0xff]
    %v7507 = vld [vmem:[#allocation11 + $0x7f8] sm:$0xff]
    %v7508 = vld [vmem:[%s7] sm:$0xff]
    %v7510 = vlaneseq
    %v7511 = vshrl.u32 %v7510, 7
    %v7512 = vsub.s32 0, %v7511
    %v7513 = vrot.slane %v7508, %v7512
    %v7514 = vlaneseq
    %v7515 = vshrl.u32 %v7514, 7
    %v7516 = vsub.s32 1, %v7515
    %v7517 = vrot.slane %v7508, %v7516
    %v7518 = vlaneseq
    %v7519 = vshrl.u32 %v7518, 7
    %v7520 = vsub.s32 2, %v7519
    %v7521 = vrot.slane %v7508, %v7520
    %v7522 = vlaneseq
    %v7523 = vshrl.u32 %v7522, 7
    %v7524 = vsub.s32 3, %v7523
    %v7525 = vrot.slane %v7508, %v7524
    %v7526 = vlaneseq
    %v7527 = vshrl.u32 %v7526, 7
    %v7528 = vsub.s32 4, %v7527
    %v7529 = vrot.slane %v7508, %v7528
    %v7530 = vlaneseq
    %v7531 = vshrl.u32 %v7530, 7
    %v7532 = vsub.s32 5, %v7531
    %v7533 = vrot.slane %v7508, %v7532
    %v7534 = vlaneseq
    %v7535 = vshrl.u32 %v7534, 7
    %v7536 = vsub.s32 6, %v7535
    %v7537 = vrot.slane %v7508, %v7536
    %v7538 = vlaneseq
    %v7539 = vshrl.u32 %v7538, 7
    %v7540 = vsub.s32 7, %v7539
    %v7541 = vrot.slane %v7508, %v7540
    %v7806 = vunpack.c.l.b16 %v7252
    %v7807 = vunpack.c.h.b16 %v7252
    %v7808 = vunpack.c.l.b16 %v7253
    %v7809 = vunpack.c.h.b16 %v7253
    %v7810 = vunpack.c.l.b16 %v7254
    %v7811 = vunpack.c.h.b16 %v7254
    %v7812 = vunpack.c.l.b16 %v7255
    %v7813 = vunpack.c.h.b16 %v7255
    %v7814 = vunpack.c.l.b16 %v7256
    %v7815 = vunpack.c.h.b16 %v7256
    %v7816 = vunpack.c.l.b16 %v7257
    %v7817 = vunpack.c.h.b16 %v7257
    %v7818 = vunpack.c.l.b16 %v7258
    %v7819 = vunpack.c.h.b16 %v7258
    %v7820 = vunpack.c.l.b16 %v7259
    %v7821 = vunpack.c.h.b16 %v7259
    %v7822 = vunpack.c.l.b16 %v7260
    %v7823 = vunpack.c.h.b16 %v7260
    %v7824 = vunpack.c.l.b16 %v7261
    %v7825 = vunpack.c.h.b16 %v7261
    %v7826 = vunpack.c.l.b16 %v7262
    %v7827 = vunpack.c.h.b16 %v7262
    %v7828 = vunpack.c.l.b16 %v7263
    %v7829 = vunpack.c.h.b16 %v7263
    %v7830 = vunpack.c.l.b16 %v7264
    %v7831 = vunpack.c.h.b16 %v7264
    %v7832 = vunpack.c.l.b16 %v7265
    %v7833 = vunpack.c.h.b16 %v7265
    %v7834 = vunpack.c.l.b16 %v7266
    %v7835 = vunpack.c.h.b16 %v7266
    %v7836 = vunpack.c.l.b16 %v7267
    %v7837 = vunpack.c.h.b16 %v7267
    %v7838 = vunpack.c.l.b16 %v7268
    %v7839 = vunpack.c.h.b16 %v7268
    %v7840 = vunpack.c.l.b16 %v7269
    %v7841 = vunpack.c.h.b16 %v7269
    %v7842 = vunpack.c.l.b16 %v7270
    %v7843 = vunpack.c.h.b16 %v7270
    %v7844 = vunpack.c.l.b16 %v7271
    %v7845 = vunpack.c.h.b16 %v7271
    %v7846 = vunpack.c.l.b16 %v7272
    %v7847 = vunpack.c.h.b16 %v7272
    %v7848 = vunpack.c.l.b16 %v7273
    %v7849 = vunpack.c.h.b16 %v7273
    %v7850 = vunpack.c.l.b16 %v7274
    %v7851 = vunpack.c.h.b16 %v7274
    %v7852 = vunpack.c.l.b16 %v7275
    %v7853 = vunpack.c.h.b16 %v7275
    %v7854 = vunpack.c.l.b16 %v7276
    %v7855 = vunpack.c.h.b16 %v7276
    %v7856 = vunpack.c.l.b16 %v7277
    %v7857 = vunpack.c.h.b16 %v7277
    %v7858 = vunpack.c.l.b16 %v7278
    %v7859 = vunpack.c.h.b16 %v7278
    %v7860 = vunpack.c.l.b16 %v7279
    %v7861 = vunpack.c.h.b16 %v7279
    %v7862 = vunpack.c.l.b16 %v7280
    %v7863 = vunpack.c.h.b16 %v7280
    %v7864 = vunpack.c.l.b16 %v7281
    %v7865 = vunpack.c.h.b16 %v7281
    %v7866 = vunpack.c.l.b16 %v7282
    %v7867 = vunpack.c.h.b16 %v7282
    %v7868 = vunpack.c.l.b16 %v7283
    %v7869 = vunpack.c.h.b16 %v7283
    %v7870 = vunpack.c.l.b16 %v7284
    %v7871 = vunpack.c.h.b16 %v7284
    %v7872 = vunpack.c.l.b16 %v7285
    %v7873 = vunpack.c.h.b16 %v7285
    %v7874 = vunpack.c.l.b16 %v7286
    %v7875 = vunpack.c.h.b16 %v7286
    %v7876 = vunpack.c.l.b16 %v7287
    %v7877 = vunpack.c.h.b16 %v7287
    %v7878 = vunpack.c.l.b16 %v7288
    %v7879 = vunpack.c.h.b16 %v7288
    %v7880 = vunpack.c.l.b16 %v7289
    %v7881 = vunpack.c.h.b16 %v7289
    %v7882 = vunpack.c.l.b16 %v7290
    %v7883 = vunpack.c.h.b16 %v7290
    %v7884 = vunpack.c.l.b16 %v7291
    %v7885 = vunpack.c.h.b16 %v7291
    %v7886 = vunpack.c.l.b16 %v7292
    %v7887 = vunpack.c.h.b16 %v7292
    %v7888 = vunpack.c.l.b16 %v7293
    %v7889 = vunpack.c.h.b16 %v7293
    %v7890 = vunpack.c.l.b16 %v7294
    %v7891 = vunpack.c.h.b16 %v7294
    %v7892 = vunpack.c.l.b16 %v7295
    %v7893 = vunpack.c.h.b16 %v7295
    %v7894 = vunpack.c.l.b16 %v7296
    %v7895 = vunpack.c.h.b16 %v7296
    %v7896 = vunpack.c.l.b16 %v7297
    %v7897 = vunpack.c.h.b16 %v7297
    %v7898 = vunpack.c.l.b16 %v7298
    %v7899 = vunpack.c.h.b16 %v7298
    %v7900 = vunpack.c.l.b16 %v7299
    %v7901 = vunpack.c.h.b16 %v7299
    %v7902 = vunpack.c.l.b16 %v7300
    %v7903 = vunpack.c.h.b16 %v7300
    %v7904 = vunpack.c.l.b16 %v7301
    %v7905 = vunpack.c.h.b16 %v7301
    %v7906 = vunpack.c.l.b16 %v7302
    %v7907 = vunpack.c.h.b16 %v7302
    %v7908 = vunpack.c.l.b16 %v7303
    %v7909 = vunpack.c.h.b16 %v7303
    %v7910 = vunpack.c.l.b16 %v7304
    %v7911 = vunpack.c.h.b16 %v7304
    %v7912 = vunpack.c.l.b16 %v7305
    %v7913 = vunpack.c.h.b16 %v7305
    %v7914 = vunpack.c.l.b16 %v7306
    %v7915 = vunpack.c.h.b16 %v7306
    %v7916 = vunpack.c.l.b16 %v7307
    %v7917 = vunpack.c.h.b16 %v7307
    %v7918 = vunpack.c.l.b16 %v7308
    %v7919 = vunpack.c.h.b16 %v7308
    %v7920 = vunpack.c.l.b16 %v7309
    %v7921 = vunpack.c.h.b16 %v7309
    %v7922 = vunpack.c.l.b16 %v7310
    %v7923 = vunpack.c.h.b16 %v7310
    %v7924 = vunpack.c.l.b16 %v7311
    %v7925 = vunpack.c.h.b16 %v7311
    %v7926 = vunpack.c.l.b16 %v7312
    %v7927 = vunpack.c.h.b16 %v7312
    %v7928 = vunpack.c.l.b16 %v7313
    %v7929 = vunpack.c.h.b16 %v7313
    %v7930 = vunpack.c.l.b16 %v7314
    %v7931 = vunpack.c.h.b16 %v7314
    %v7932 = vunpack.c.l.b16 %v7315
    %v7933 = vunpack.c.h.b16 %v7315
    %v7934 = vunpack.c.l.b16 %v7316
    %v7935 = vunpack.c.h.b16 %v7316
    %v7936 = vunpack.c.l.b16 %v7317
    %v7937 = vunpack.c.h.b16 %v7317
    %v7938 = vunpack.c.l.b16 %v7318
    %v7939 = vunpack.c.h.b16 %v7318
    %v7940 = vunpack.c.l.b16 %v7319
    %v7941 = vunpack.c.h.b16 %v7319
    %v7942 = vunpack.c.l.b16 %v7320
    %v7943 = vunpack.c.h.b16 %v7320
    %v7944 = vunpack.c.l.b16 %v7321
    %v7945 = vunpack.c.h.b16 %v7321
    %v7946 = vunpack.c.l.b16 %v7322
    %v7947 = vunpack.c.h.b16 %v7322
    %v7948 = vunpack.c.l.b16 %v7323
    %v7949 = vunpack.c.h.b16 %v7323
    %v7950 = vunpack.c.l.b16 %v7324
    %v7951 = vunpack.c.h.b16 %v7324
    %v7952 = vunpack.c.l.b16 %v7325
    %v7953 = vunpack.c.h.b16 %v7325
    %v7954 = vunpack.c.l.b16 %v7326
    %v7955 = vunpack.c.h.b16 %v7326
    %v7956 = vunpack.c.l.b16 %v7327
    %v7957 = vunpack.c.h.b16 %v7327
    %v7958 = vunpack.c.l.b16 %v7328
    %v7959 = vunpack.c.h.b16 %v7328
    %v7960 = vunpack.c.l.b16 %v7329
    %v7961 = vunpack.c.h.b16 %v7329
    %v7962 = vunpack.c.l.b16 %v7330
    %v7963 = vunpack.c.h.b16 %v7330
    %v7964 = vunpack.c.l.b16 %v7331
    %v7965 = vunpack.c.h.b16 %v7331
    %v7966 = vunpack.c.l.b16 %v7332
    %v7967 = vunpack.c.h.b16 %v7332
    %v7968 = vunpack.c.l.b16 %v7333
    %v7969 = vunpack.c.h.b16 %v7333
    %v7970 = vunpack.c.l.b16 %v7334
    %v7971 = vunpack.c.h.b16 %v7334
    %v7972 = vunpack.c.l.b16 %v7335
    %v7973 = vunpack.c.h.b16 %v7335
    %v7974 = vunpack.c.l.b16 %v7336
    %v7975 = vunpack.c.h.b16 %v7336
    %v7976 = vunpack.c.l.b16 %v7337
    %v7977 = vunpack.c.h.b16 %v7337
    %v7978 = vunpack.c.l.b16 %v7338
    %v7979 = vunpack.c.h.b16 %v7338
    %v7980 = vunpack.c.l.b16 %v7339
    %v7981 = vunpack.c.h.b16 %v7339
    %v7982 = vunpack.c.l.b16 %v7340
    %v7983 = vunpack.c.h.b16 %v7340
    %v7984 = vunpack.c.l.b16 %v7341
    %v7985 = vunpack.c.h.b16 %v7341
    %v7986 = vunpack.c.l.b16 %v7342
    %v7987 = vunpack.c.h.b16 %v7342
    %v7988 = vunpack.c.l.b16 %v7343
    %v7989 = vunpack.c.h.b16 %v7343
    %v7990 = vunpack.c.l.b16 %v7344
    %v7991 = vunpack.c.h.b16 %v7344
    %v7992 = vunpack.c.l.b16 %v7345
    %v7993 = vunpack.c.h.b16 %v7345
    %v7994 = vunpack.c.l.b16 %v7346
    %v7995 = vunpack.c.h.b16 %v7346
    %v7996 = vunpack.c.l.b16 %v7347
    %v7997 = vunpack.c.h.b16 %v7347
    %v7998 = vunpack.c.l.b16 %v7348
    %v7999 = vunpack.c.h.b16 %v7348
    %v8000 = vunpack.c.l.b16 %v7349
    %v8001 = vunpack.c.h.b16 %v7349
    %v8002 = vunpack.c.l.b16 %v7350
    %v8003 = vunpack.c.h.b16 %v7350
    %v8004 = vunpack.c.l.b16 %v7351
    %v8005 = vunpack.c.h.b16 %v7351
    %v8006 = vunpack.c.l.b16 %v7352
    %v8007 = vunpack.c.h.b16 %v7352
    %v8008 = vunpack.c.l.b16 %v7353
    %v8009 = vunpack.c.h.b16 %v7353
    %v8010 = vunpack.c.l.b16 %v7354
    %v8011 = vunpack.c.h.b16 %v7354
    %v8012 = vunpack.c.l.b16 %v7355
    %v8013 = vunpack.c.h.b16 %v7355
    %v8014 = vunpack.c.l.b16 %v7356
    %v8015 = vunpack.c.h.b16 %v7356
    %v8016 = vunpack.c.l.b16 %v7357
    %v8017 = vunpack.c.h.b16 %v7357
    %v8018 = vunpack.c.l.b16 %v7358
    %v8019 = vunpack.c.h.b16 %v7358
    %v8020 = vunpack.c.l.b16 %v7359
    %v8021 = vunpack.c.h.b16 %v7359
    %v8022 = vunpack.c.l.b16 %v7360
    %v8023 = vunpack.c.h.b16 %v7360
    %v8024 = vunpack.c.l.b16 %v7361
    %v8025 = vunpack.c.h.b16 %v7361
    %v8026 = vunpack.c.l.b16 %v7362
    %v8027 = vunpack.c.h.b16 %v7362
    %v8028 = vunpack.c.l.b16 %v7363
    %v8029 = vunpack.c.h.b16 %v7363
    %v8030 = vunpack.c.l.b16 %v7364
    %v8031 = vunpack.c.h.b16 %v7364
    %v8032 = vunpack.c.l.b16 %v7365
    %v8033 = vunpack.c.h.b16 %v7365
    %v8034 = vunpack.c.l.b16 %v7366
    %v8035 = vunpack.c.h.b16 %v7366
    %v8036 = vunpack.c.l.b16 %v7367
    %v8037 = vunpack.c.h.b16 %v7367
    %v8038 = vunpack.c.l.b16 %v7368
    %v8039 = vunpack.c.h.b16 %v7368
    %v8040 = vunpack.c.l.b16 %v7369
    %v8041 = vunpack.c.h.b16 %v7369
    %v8042 = vunpack.c.l.b16 %v7370
    %v8043 = vunpack.c.h.b16 %v7370
    %v8044 = vunpack.c.l.b16 %v7371
    %v8045 = vunpack.c.h.b16 %v7371
    %v8046 = vunpack.c.l.b16 %v7372
    %v8047 = vunpack.c.h.b16 %v7372
    %v8048 = vunpack.c.l.b16 %v7373
    %v8049 = vunpack.c.h.b16 %v7373
    %v8050 = vunpack.c.l.b16 %v7374
    %v8051 = vunpack.c.h.b16 %v7374
    %v8052 = vunpack.c.l.b16 %v7375
    %v8053 = vunpack.c.h.b16 %v7375
    %v8054 = vunpack.c.l.b16 %v7376
    %v8055 = vunpack.c.h.b16 %v7376
    %v8056 = vunpack.c.l.b16 %v7377
    %v8057 = vunpack.c.h.b16 %v7377
    %v8058 = vunpack.c.l.b16 %v7378
    %v8059 = vunpack.c.h.b16 %v7378
    %v8060 = vunpack.c.l.b16 %v7379
    %v8061 = vunpack.c.h.b16 %v7379
    %v8062 = vunpack.c.l.b16 %v7380
    %v8063 = vunpack.c.h.b16 %v7380
    %v8064 = vunpack.c.l.b16 %v7381
    %v8065 = vunpack.c.h.b16 %v7381
    %v8066 = vunpack.c.l.b16 %v7382
    %v8067 = vunpack.c.h.b16 %v7382
    %v8068 = vunpack.c.l.b16 %v7383
    %v8069 = vunpack.c.h.b16 %v7383
    %v8070 = vunpack.c.l.b16 %v7384
    %v8071 = vunpack.c.h.b16 %v7384
    %v8072 = vunpack.c.l.b16 %v7385
    %v8073 = vunpack.c.h.b16 %v7385
    %v8074 = vunpack.c.l.b16 %v7386
    %v8075 = vunpack.c.h.b16 %v7386
    %v8076 = vunpack.c.l.b16 %v7387
    %v8077 = vunpack.c.h.b16 %v7387
    %v8078 = vunpack.c.l.b16 %v7388
    %v8079 = vunpack.c.h.b16 %v7388
    %v8080 = vunpack.c.l.b16 %v7389
    %v8081 = vunpack.c.h.b16 %v7389
    %v8082 = vunpack.c.l.b16 %v7390
    %v8083 = vunpack.c.h.b16 %v7390
    %v8084 = vunpack.c.l.b16 %v7391
    %v8085 = vunpack.c.h.b16 %v7391
    %v8086 = vunpack.c.l.b16 %v7392
    %v8087 = vunpack.c.h.b16 %v7392
    %v8088 = vunpack.c.l.b16 %v7393
    %v8089 = vunpack.c.h.b16 %v7393
    %v8090 = vunpack.c.l.b16 %v7394
    %v8091 = vunpack.c.h.b16 %v7394
    %v8092 = vunpack.c.l.b16 %v7395
    %v8093 = vunpack.c.h.b16 %v7395
    %v8094 = vunpack.c.l.b16 %v7396
    %v8095 = vunpack.c.h.b16 %v7396
    %v8096 = vunpack.c.l.b16 %v7397
    %v8097 = vunpack.c.h.b16 %v7397
    %v8098 = vunpack.c.l.b16 %v7398
    %v8099 = vunpack.c.h.b16 %v7398
    %v8100 = vunpack.c.l.b16 %v7399
    %v8101 = vunpack.c.h.b16 %v7399
    %v8102 = vunpack.c.l.b16 %v7400
    %v8103 = vunpack.c.h.b16 %v7400
    %v8104 = vunpack.c.l.b16 %v7401
    %v8105 = vunpack.c.h.b16 %v7401
    %v8106 = vunpack.c.l.b16 %v7402
    %v8107 = vunpack.c.h.b16 %v7402
    %v8108 = vunpack.c.l.b16 %v7403
    %v8109 = vunpack.c.h.b16 %v7403
    %v8110 = vunpack.c.l.b16 %v7404
    %v8111 = vunpack.c.h.b16 %v7404
    %v8112 = vunpack.c.l.b16 %v7405
    %v8113 = vunpack.c.h.b16 %v7405
    %v8114 = vunpack.c.l.b16 %v7406
    %v8115 = vunpack.c.h.b16 %v7406
    %v8116 = vunpack.c.l.b16 %v7407
    %v8117 = vunpack.c.h.b16 %v7407
    %v8118 = vunpack.c.l.b16 %v7408
    %v8119 = vunpack.c.h.b16 %v7408
    %v8120 = vunpack.c.l.b16 %v7409
    %v8121 = vunpack.c.h.b16 %v7409
    %v8122 = vunpack.c.l.b16 %v7410
    %v8123 = vunpack.c.h.b16 %v7410
    %v8124 = vunpack.c.l.b16 %v7411
    %v8125 = vunpack.c.h.b16 %v7411
    %v8126 = vunpack.c.l.b16 %v7412
    %v8127 = vunpack.c.h.b16 %v7412
    %v8128 = vunpack.c.l.b16 %v7413
    %v8129 = vunpack.c.h.b16 %v7413
    %v8130 = vunpack.c.l.b16 %v7414
    %v8131 = vunpack.c.h.b16 %v7414
    %v8132 = vunpack.c.l.b16 %v7415
    %v8133 = vunpack.c.h.b16 %v7415
    %v8134 = vunpack.c.l.b16 %v7416
    %v8135 = vunpack.c.h.b16 %v7416
    %v8136 = vunpack.c.l.b16 %v7417
    %v8137 = vunpack.c.h.b16 %v7417
    %v8138 = vunpack.c.l.b16 %v7418
    %v8139 = vunpack.c.h.b16 %v7418
    %v8140 = vunpack.c.l.b16 %v7419
    %v8141 = vunpack.c.h.b16 %v7419
    %v8142 = vunpack.c.l.b16 %v7420
    %v8143 = vunpack.c.h.b16 %v7420
    %v8144 = vunpack.c.l.b16 %v7421
    %v8145 = vunpack.c.h.b16 %v7421
    %v8146 = vunpack.c.l.b16 %v7422
    %v8147 = vunpack.c.h.b16 %v7422
    %v8148 = vunpack.c.l.b16 %v7423
    %v8149 = vunpack.c.h.b16 %v7423
    %v8150 = vunpack.c.l.b16 %v7424
    %v8151 = vunpack.c.h.b16 %v7424
    %v8152 = vunpack.c.l.b16 %v7425
    %v8153 = vunpack.c.h.b16 %v7425
    %v8154 = vunpack.c.l.b16 %v7426
    %v8155 = vunpack.c.h.b16 %v7426
    %v8156 = vunpack.c.l.b16 %v7427
    %v8157 = vunpack.c.h.b16 %v7427
    %v8158 = vunpack.c.l.b16 %v7428
    %v8159 = vunpack.c.h.b16 %v7428
    %v8160 = vunpack.c.l.b16 %v7429
    %v8161 = vunpack.c.h.b16 %v7429
    %v8162 = vunpack.c.l.b16 %v7430
    %v8163 = vunpack.c.h.b16 %v7430
    %v8164 = vunpack.c.l.b16 %v7431
    %v8165 = vunpack.c.h.b16 %v7431
    %v8166 = vunpack.c.l.b16 %v7432
    %v8167 = vunpack.c.h.b16 %v7432
    %v8168 = vunpack.c.l.b16 %v7433
    %v8169 = vunpack.c.h.b16 %v7433
    %v8170 = vunpack.c.l.b16 %v7434
    %v8171 = vunpack.c.h.b16 %v7434
    %v8172 = vunpack.c.l.b16 %v7435
    %v8173 = vunpack.c.h.b16 %v7435
    %v8174 = vunpack.c.l.b16 %v7436
    %v8175 = vunpack.c.h.b16 %v7436
    %v8176 = vunpack.c.l.b16 %v7437
    %v8177 = vunpack.c.h.b16 %v7437
    %v8178 = vunpack.c.l.b16 %v7438
    %v8179 = vunpack.c.h.b16 %v7438
    %v8180 = vunpack.c.l.b16 %v7439
    %v8181 = vunpack.c.h.b16 %v7439
    %v8182 = vunpack.c.l.b16 %v7440
    %v8183 = vunpack.c.h.b16 %v7440
    %v8184 = vunpack.c.l.b16 %v7441
    %v8185 = vunpack.c.h.b16 %v7441
    %v8186 = vunpack.c.l.b16 %v7442
    %v8187 = vunpack.c.h.b16 %v7442
    %v8188 = vunpack.c.l.b16 %v7443
    %v8189 = vunpack.c.h.b16 %v7443
    %v8190 = vunpack.c.l.b16 %v7444
    %v8191 = vunpack.c.h.b16 %v7444
    %v8192 = vunpack.c.l.b16 %v7445
    %v8193 = vunpack.c.h.b16 %v7445
    %v8194 = vunpack.c.l.b16 %v7446
    %v8195 = vunpack.c.h.b16 %v7446
    %v8196 = vunpack.c.l.b16 %v7447
    %v8197 = vunpack.c.h.b16 %v7447
    %v8198 = vunpack.c.l.b16 %v7448
    %v8199 = vunpack.c.h.b16 %v7448
    %v8200 = vunpack.c.l.b16 %v7449
    %v8201 = vunpack.c.h.b16 %v7449
    %v8202 = vunpack.c.l.b16 %v7450
    %v8203 = vunpack.c.h.b16 %v7450
    %v8204 = vunpack.c.l.b16 %v7451
    %v8205 = vunpack.c.h.b16 %v7451
    %v8206 = vunpack.c.l.b16 %v7452
    %v8207 = vunpack.c.h.b16 %v7452
    %v8208 = vunpack.c.l.b16 %v7453
    %v8209 = vunpack.c.h.b16 %v7453
    %v8210 = vunpack.c.l.b16 %v7454
    %v8211 = vunpack.c.h.b16 %v7454
    %v8212 = vunpack.c.l.b16 %v7455
    %v8213 = vunpack.c.h.b16 %v7455
    %v8214 = vunpack.c.l.b16 %v7456
    %v8215 = vunpack.c.h.b16 %v7456
    %v8216 = vunpack.c.l.b16 %v7457
    %v8217 = vunpack.c.h.b16 %v7457
    %v8218 = vunpack.c.l.b16 %v7458
    %v8219 = vunpack.c.h.b16 %v7458
    %v8220 = vunpack.c.l.b16 %v7459
    %v8221 = vunpack.c.h.b16 %v7459
    %v8222 = vunpack.c.l.b16 %v7460
    %v8223 = vunpack.c.h.b16 %v7460
    %v8224 = vunpack.c.l.b16 %v7461
    %v8225 = vunpack.c.h.b16 %v7461
    %v8226 = vunpack.c.l.b16 %v7462
    %v8227 = vunpack.c.h.b16 %v7462
    %v8228 = vunpack.c.l.b16 %v7463
    %v8229 = vunpack.c.h.b16 %v7463
    %v8230 = vunpack.c.l.b16 %v7464
    %v8231 = vunpack.c.h.b16 %v7464
    %v8232 = vunpack.c.l.b16 %v7465
    %v8233 = vunpack.c.h.b16 %v7465
    %v8234 = vunpack.c.l.b16 %v7466
    %v8235 = vunpack.c.h.b16 %v7466
    %v8236 = vunpack.c.l.b16 %v7467
    %v8237 = vunpack.c.h.b16 %v7467
    %v8238 = vunpack.c.l.b16 %v7468
    %v8239 = vunpack.c.h.b16 %v7468
    %v8240 = vunpack.c.l.b16 %v7469
    %v8241 = vunpack.c.h.b16 %v7469
    %v8242 = vunpack.c.l.b16 %v7470
    %v8243 = vunpack.c.h.b16 %v7470
    %v8244 = vunpack.c.l.b16 %v7471
    %v8245 = vunpack.c.h.b16 %v7471
    %v8246 = vunpack.c.l.b16 %v7472
    %v8247 = vunpack.c.h.b16 %v7472
    %v8248 = vunpack.c.l.b16 %v7473
    %v8249 = vunpack.c.h.b16 %v7473
    %v8250 = vunpack.c.l.b16 %v7474
    %v8251 = vunpack.c.h.b16 %v7474
    %v8252 = vunpack.c.l.b16 %v7475
    %v8253 = vunpack.c.h.b16 %v7475
    %v8254 = vunpack.c.l.b16 %v7476
    %v8255 = vunpack.c.h.b16 %v7476
    %v8256 = vunpack.c.l.b16 %v7477
    %v8257 = vunpack.c.h.b16 %v7477
    %v8258 = vunpack.c.l.b16 %v7478
    %v8259 = vunpack.c.h.b16 %v7478
    %v8260 = vunpack.c.l.b16 %v7479
    %v8261 = vunpack.c.h.b16 %v7479
    %v8262 = vunpack.c.l.b16 %v7480
    %v8263 = vunpack.c.h.b16 %v7480
    %v8264 = vunpack.c.l.b16 %v7481
    %v8265 = vunpack.c.h.b16 %v7481
    %v8266 = vunpack.c.l.b16 %v7482
    %v8267 = vunpack.c.h.b16 %v7482
    %v8268 = vunpack.c.l.b16 %v7483
    %v8269 = vunpack.c.h.b16 %v7483
    %v8270 = vunpack.c.l.b16 %v7484
    %v8271 = vunpack.c.h.b16 %v7484
    %v8272 = vunpack.c.l.b16 %v7485
    %v8273 = vunpack.c.h.b16 %v7485
    %v8274 = vunpack.c.l.b16 %v7486
    %v8275 = vunpack.c.h.b16 %v7486
    %v8276 = vunpack.c.l.b16 %v7487
    %v8277 = vunpack.c.h.b16 %v7487
    %v8278 = vunpack.c.l.b16 %v7488
    %v8279 = vunpack.c.h.b16 %v7488
    %v8280 = vunpack.c.l.b16 %v7489
    %v8281 = vunpack.c.h.b16 %v7489
    %v8282 = vunpack.c.l.b16 %v7490
    %v8283 = vunpack.c.h.b16 %v7490
    %v8284 = vunpack.c.l.b16 %v7491
    %v8285 = vunpack.c.h.b16 %v7491
    %v8286 = vunpack.c.l.b16 %v7492
    %v8287 = vunpack.c.h.b16 %v7492
    %v8288 = vunpack.c.l.b16 %v7493
    %v8289 = vunpack.c.h.b16 %v7493
    %v8290 = vunpack.c.l.b16 %v7494
    %v8291 = vunpack.c.h.b16 %v7494
    %v8292 = vunpack.c.l.b16 %v7495
    %v8293 = vunpack.c.h.b16 %v7495
    %v8294 = vunpack.c.l.b16 %v7496
    %v8295 = vunpack.c.h.b16 %v7496
    %v8296 = vunpack.c.l.b16 %v7497
    %v8297 = vunpack.c.h.b16 %v7497
    %v8298 = vunpack.c.l.b16 %v7498
    %v8299 = vunpack.c.h.b16 %v7498
    %v8300 = vunpack.c.l.b16 %v7499
    %v8301 = vunpack.c.h.b16 %v7499
    %v8302 = vunpack.c.l.b16 %v7500
    %v8303 = vunpack.c.h.b16 %v7500
    %v8304 = vunpack.c.l.b16 %v7501
    %v8305 = vunpack.c.h.b16 %v7501
    %v8306 = vunpack.c.l.b16 %v7502
    %v8307 = vunpack.c.h.b16 %v7502
    %v8308 = vunpack.c.l.b16 %v7503
    %v8309 = vunpack.c.h.b16 %v7503
    %v8310 = vunpack.c.l.b16 %v7504
    %v8311 = vunpack.c.h.b16 %v7504
    %v8312 = vunpack.c.l.b16 %v7505
    %v8313 = vunpack.c.h.b16 %v7505
    %v8314 = vunpack.c.l.b16 %v7506
    %v8315 = vunpack.c.h.b16 %v7506
    %v8316 = vunpack.c.l.b16 %v7507
    %v8317 = vunpack.c.h.b16 %v7507
    %v8318 = vpack.c.b16 %v7814, %v7806
    %v8319 = vpack.c.b16 %v7815, %v7807
    %v8320 = vpack.c.b16 %v7816, %v7808
    %v8321 = vpack.c.b16 %v7817, %v7809
    %v8322 = vpack.c.b16 %v7818, %v7810
    %v8323 = vpack.c.b16 %v7819, %v7811
    %v8324 = vpack.c.b16 %v7820, %v7812
    %v8325 = vpack.c.b16 %v7821, %v7813
    %v8326 = vpack.c.b16 %v7830, %v7822
    %v8327 = vpack.c.b16 %v7831, %v7823
    %v8328 = vpack.c.b16 %v7832, %v7824
    %v8329 = vpack.c.b16 %v7833, %v7825
    %v8330 = vpack.c.b16 %v7834, %v7826
    %v8331 = vpack.c.b16 %v7835, %v7827
    %v8332 = vpack.c.b16 %v7836, %v7828
    %v8333 = vpack.c.b16 %v7837, %v7829
    %v8334 = vpack.c.b16 %v7846, %v7838
    %v8335 = vpack.c.b16 %v7847, %v7839
    %v8336 = vpack.c.b16 %v7848, %v7840
    %v8337 = vpack.c.b16 %v7849, %v7841
    %v8338 = vpack.c.b16 %v7850, %v7842
    %v8339 = vpack.c.b16 %v7851, %v7843
    %v8340 = vpack.c.b16 %v7852, %v7844
    %v8341 = vpack.c.b16 %v7853, %v7845
    %v8342 = vpack.c.b16 %v7862, %v7854
    %v8343 = vpack.c.b16 %v7863, %v7855
    %v8344 = vpack.c.b16 %v7864, %v7856
    %v8345 = vpack.c.b16 %v7865, %v7857
    %v8346 = vpack.c.b16 %v7866, %v7858
    %v8347 = vpack.c.b16 %v7867, %v7859
    %v8348 = vpack.c.b16 %v7868, %v7860
    %v8349 = vpack.c.b16 %v7869, %v7861
    %v8350 = vpack.c.b16 %v7878, %v7870
    %v8351 = vpack.c.b16 %v7879, %v7871
    %v8352 = vpack.c.b16 %v7880, %v7872
    %v8353 = vpack.c.b16 %v7881, %v7873
    %v8354 = vpack.c.b16 %v7882, %v7874
    %v8355 = vpack.c.b16 %v7883, %v7875
    %v8356 = vpack.c.b16 %v7884, %v7876
    %v8357 = vpack.c.b16 %v7885, %v7877
    %v8358 = vpack.c.b16 %v7894, %v7886
    %v8359 = vpack.c.b16 %v7895, %v7887
    %v8360 = vpack.c.b16 %v7896, %v7888
    %v8361 = vpack.c.b16 %v7897, %v7889
    %v8362 = vpack.c.b16 %v7898, %v7890
    %v8363 = vpack.c.b16 %v7899, %v7891
    %v8364 = vpack.c.b16 %v7900, %v7892
    %v8365 = vpack.c.b16 %v7901, %v7893
    %v8366 = vpack.c.b16 %v7910, %v7902
    %v8367 = vpack.c.b16 %v7911, %v7903
    %v8368 = vpack.c.b16 %v7912, %v7904
    %v8369 = vpack.c.b16 %v7913, %v7905
    %v8370 = vpack.c.b16 %v7914, %v7906
    %v8371 = vpack.c.b16 %v7915, %v7907
    %v8372 = vpack.c.b16 %v7916, %v7908
    %v8373 = vpack.c.b16 %v7917, %v7909
    %v8374 = vpack.c.b16 %v7926, %v7918
    %v8375 = vpack.c.b16 %v7927, %v7919
    %v8376 = vpack.c.b16 %v7928, %v7920
    %v8377 = vpack.c.b16 %v7929, %v7921
    %v8378 = vpack.c.b16 %v7930, %v7922
    %v8379 = vpack.c.b16 %v7931, %v7923
    %v8380 = vpack.c.b16 %v7932, %v7924
    %v8381 = vpack.c.b16 %v7933, %v7925
    %v8382 = vpack.c.b16 %v7942, %v7934
    %v8383 = vpack.c.b16 %v7943, %v7935
    %v8384 = vpack.c.b16 %v7944, %v7936
    %v8385 = vpack.c.b16 %v7945, %v7937
    %v8386 = vpack.c.b16 %v7946, %v7938
    %v8387 = vpack.c.b16 %v7947, %v7939
    %v8388 = vpack.c.b16 %v7948, %v7940
    %v8389 = vpack.c.b16 %v7949, %v7941
    %v8390 = vpack.c.b16 %v7958, %v7950
    %v8391 = vpack.c.b16 %v7959, %v7951
    %v8392 = vpack.c.b16 %v7960, %v7952
    %v8393 = vpack.c.b16 %v7961, %v7953
    %v8394 = vpack.c.b16 %v7962, %v7954
    %v8395 = vpack.c.b16 %v7963, %v7955
    %v8396 = vpack.c.b16 %v7964, %v7956
    %v8397 = vpack.c.b16 %v7965, %v7957
    %v8398 = vpack.c.b16 %v7974, %v7966
    %v8399 = vpack.c.b16 %v7975, %v7967
    %v8400 = vpack.c.b16 %v7976, %v7968
    %v8401 = vpack.c.b16 %v7977, %v7969
    %v8402 = vpack.c.b16 %v7978, %v7970
    %v8403 = vpack.c.b16 %v7979, %v7971
    %v8404 = vpack.c.b16 %v7980, %v7972
    %v8405 = vpack.c.b16 %v7981, %v7973
    %v8406 = vpack.c.b16 %v7990, %v7982
    %v8407 = vpack.c.b16 %v7991, %v7983
    %v8408 = vpack.c.b16 %v7992, %v7984
    %v8409 = vpack.c.b16 %v7993, %v7985
    %v8410 = vpack.c.b16 %v7994, %v7986
    %v8411 = vpack.c.b16 %v7995, %v7987
    %v8412 = vpack.c.b16 %v7996, %v7988
    %v8413 = vpack.c.b16 %v7997, %v7989
    %v8414 = vpack.c.b16 %v8006, %v7998
    %v8415 = vpack.c.b16 %v8007, %v7999
    %v8416 = vpack.c.b16 %v8008, %v8000
    %v8417 = vpack.c.b16 %v8009, %v8001
    %v8418 = vpack.c.b16 %v8010, %v8002
    %v8419 = vpack.c.b16 %v8011, %v8003
    %v8420 = vpack.c.b16 %v8012, %v8004
    %v8421 = vpack.c.b16 %v8013, %v8005
    %v8422 = vpack.c.b16 %v8022, %v8014
    %v8423 = vpack.c.b16 %v8023, %v8015
    %v8424 = vpack.c.b16 %v8024, %v8016
    %v8425 = vpack.c.b16 %v8025, %v8017
    %v8426 = vpack.c.b16 %v8026, %v8018
    %v8427 = vpack.c.b16 %v8027, %v8019
    %v8428 = vpack.c.b16 %v8028, %v8020
    %v8429 = vpack.c.b16 %v8029, %v8021
    %v8430 = vpack.c.b16 %v8038, %v8030
    %v8431 = vpack.c.b16 %v8039, %v8031
    %v8432 = vpack.c.b16 %v8040, %v8032
    %v8433 = vpack.c.b16 %v8041, %v8033
    %v8434 = vpack.c.b16 %v8042, %v8034
    %v8435 = vpack.c.b16 %v8043, %v8035
    %v8436 = vpack.c.b16 %v8044, %v8036
    %v8437 = vpack.c.b16 %v8045, %v8037
    %v8438 = vpack.c.b16 %v8054, %v8046
    %v8439 = vpack.c.b16 %v8055, %v8047
    %v8440 = vpack.c.b16 %v8056, %v8048
    %v8441 = vpack.c.b16 %v8057, %v8049
    %v8442 = vpack.c.b16 %v8058, %v8050
    %v8443 = vpack.c.b16 %v8059, %v8051
    %v8444 = vpack.c.b16 %v8060, %v8052
    %v8445 = vpack.c.b16 %v8061, %v8053
    %v8446 = vpack.c.b16 %v8070, %v8062
    %v8447 = vpack.c.b16 %v8071, %v8063
    %v8448 = vpack.c.b16 %v8072, %v8064
    %v8449 = vpack.c.b16 %v8073, %v8065
    %v8450 = vpack.c.b16 %v8074, %v8066
    %v8451 = vpack.c.b16 %v8075, %v8067
    %v8452 = vpack.c.b16 %v8076, %v8068
    %v8453 = vpack.c.b16 %v8077, %v8069
    %v8454 = vpack.c.b16 %v8086, %v8078
    %v8455 = vpack.c.b16 %v8087, %v8079
    %v8456 = vpack.c.b16 %v8088, %v8080
    %v8457 = vpack.c.b16 %v8089, %v8081
    %v8458 = vpack.c.b16 %v8090, %v8082
    %v8459 = vpack.c.b16 %v8091, %v8083
    %v8460 = vpack.c.b16 %v8092, %v8084
    %v8461 = vpack.c.b16 %v8093, %v8085
    %v8462 = vpack.c.b16 %v8102, %v8094
    %v8463 = vpack.c.b16 %v8103, %v8095
    %v8464 = vpack.c.b16 %v8104, %v8096
    %v8465 = vpack.c.b16 %v8105, %v8097
    %v8466 = vpack.c.b16 %v8106, %v8098
    %v8467 = vpack.c.b16 %v8107, %v8099
    %v8468 = vpack.c.b16 %v8108, %v8100
    %v8469 = vpack.c.b16 %v8109, %v8101
    %v8470 = vpack.c.b16 %v8118, %v8110
    %v8471 = vpack.c.b16 %v8119, %v8111
    %v8472 = vpack.c.b16 %v8120, %v8112
    %v8473 = vpack.c.b16 %v8121, %v8113
    %v8474 = vpack.c.b16 %v8122, %v8114
    %v8475 = vpack.c.b16 %v8123, %v8115
    %v8476 = vpack.c.b16 %v8124, %v8116
    %v8477 = vpack.c.b16 %v8125, %v8117
    %v8478 = vpack.c.b16 %v8134, %v8126
    %v8479 = vpack.c.b16 %v8135, %v8127
    %v8480 = vpack.c.b16 %v8136, %v8128
    %v8481 = vpack.c.b16 %v8137, %v8129
    %v8482 = vpack.c.b16 %v8138, %v8130
    %v8483 = vpack.c.b16 %v8139, %v8131
    %v8484 = vpack.c.b16 %v8140, %v8132
    %v8485 = vpack.c.b16 %v8141, %v8133
    %v8486 = vpack.c.b16 %v8150, %v8142
    %v8487 = vpack.c.b16 %v8151, %v8143
    %v8488 = vpack.c.b16 %v8152, %v8144
    %v8489 = vpack.c.b16 %v8153, %v8145
    %v8490 = vpack.c.b16 %v8154, %v8146
    %v8491 = vpack.c.b16 %v8155, %v8147
    %v8492 = vpack.c.b16 %v8156, %v8148
    %v8493 = vpack.c.b16 %v8157, %v8149
    %v8494 = vpack.c.b16 %v8166, %v8158
    %v8495 = vpack.c.b16 %v8167, %v8159
    %v8496 = vpack.c.b16 %v8168, %v8160
    %v8497 = vpack.c.b16 %v8169, %v8161
    %v8498 = vpack.c.b16 %v8170, %v8162
    %v8499 = vpack.c.b16 %v8171, %v8163
    %v8500 = vpack.c.b16 %v8172, %v8164
    %v8501 = vpack.c.b16 %v8173, %v8165
    %v8502 = vpack.c.b16 %v8182, %v8174
    %v8503 = vpack.c.b16 %v8183, %v8175
    %v8504 = vpack.c.b16 %v8184, %v8176
    %v8505 = vpack.c.b16 %v8185, %v8177
    %v8506 = vpack.c.b16 %v8186, %v8178
    %v8507 = vpack.c.b16 %v8187, %v8179
    %v8508 = vpack.c.b16 %v8188, %v8180
    %v8509 = vpack.c.b16 %v8189, %v8181
    %v8510 = vpack.c.b16 %v8198, %v8190
    %v8511 = vpack.c.b16 %v8199, %v8191
    %v8512 = vpack.c.b16 %v8200, %v8192
    %v8513 = vpack.c.b16 %v8201, %v8193
    %v8514 = vpack.c.b16 %v8202, %v8194
    %v8515 = vpack.c.b16 %v8203, %v8195
    %v8516 = vpack.c.b16 %v8204, %v8196
    %v8517 = vpack.c.b16 %v8205, %v8197
    %v8518 = vpack.c.b16 %v8214, %v8206
    %v8519 = vpack.c.b16 %v8215, %v8207
    %v8520 = vpack.c.b16 %v8216, %v8208
    %v8521 = vpack.c.b16 %v8217, %v8209
    %v8522 = vpack.c.b16 %v8218, %v8210
    %v8523 = vpack.c.b16 %v8219, %v8211
    %v8524 = vpack.c.b16 %v8220, %v8212
    %v8525 = vpack.c.b16 %v8221, %v8213
    %v8526 = vpack.c.b16 %v8230, %v8222
    %v8527 = vpack.c.b16 %v8231, %v8223
    %v8528 = vpack.c.b16 %v8232, %v8224
    %v8529 = vpack.c.b16 %v8233, %v8225
    %v8530 = vpack.c.b16 %v8234, %v8226
    %v8531 = vpack.c.b16 %v8235, %v8227
    %v8532 = vpack.c.b16 %v8236, %v8228
    %v8533 = vpack.c.b16 %v8237, %v8229
    %v8534 = vpack.c.b16 %v8246, %v8238
    %v8535 = vpack.c.b16 %v8247, %v8239
    %v8536 = vpack.c.b16 %v8248, %v8240
    %v8537 = vpack.c.b16 %v8249, %v8241
    %v8538 = vpack.c.b16 %v8250, %v8242
    %v8539 = vpack.c.b16 %v8251, %v8243
    %v8540 = vpack.c.b16 %v8252, %v8244
    %v8541 = vpack.c.b16 %v8253, %v8245
    %v8542 = vpack.c.b16 %v8262, %v8254
    %v8543 = vpack.c.b16 %v8263, %v8255
    %v8544 = vpack.c.b16 %v8264, %v8256
    %v8545 = vpack.c.b16 %v8265, %v8257
    %v8546 = vpack.c.b16 %v8266, %v8258
    %v8547 = vpack.c.b16 %v8267, %v8259
    %v8548 = vpack.c.b16 %v8268, %v8260
    %v8549 = vpack.c.b16 %v8269, %v8261
    %v8550 = vpack.c.b16 %v8278, %v8270
    %v8551 = vpack.c.b16 %v8279, %v8271
    %v8552 = vpack.c.b16 %v8280, %v8272
    %v8553 = vpack.c.b16 %v8281, %v8273
    %v8554 = vpack.c.b16 %v8282, %v8274
    %v8555 = vpack.c.b16 %v8283, %v8275
    %v8556 = vpack.c.b16 %v8284, %v8276
    %v8557 = vpack.c.b16 %v8285, %v8277
    %v8558 = vpack.c.b16 %v8294, %v8286
    %v8559 = vpack.c.b16 %v8295, %v8287
    %v8560 = vpack.c.b16 %v8296, %v8288
    %v8561 = vpack.c.b16 %v8297, %v8289
    %v8562 = vpack.c.b16 %v8298, %v8290
    %v8563 = vpack.c.b16 %v8299, %v8291
    %v8564 = vpack.c.b16 %v8300, %v8292
    %v8565 = vpack.c.b16 %v8301, %v8293
    %v8566 = vpack.c.b16 %v8310, %v8302
    %v8567 = vpack.c.b16 %v8311, %v8303
    %v8568 = vpack.c.b16 %v8312, %v8304
    %v8569 = vpack.c.b16 %v8313, %v8305
    %v8570 = vpack.c.b16 %v8314, %v8306
    %v8571 = vpack.c.b16 %v8315, %v8307
    %v8572 = vpack.c.b16 %v8316, %v8308
    %v8573 = vpack.c.b16 %v8317, %v8309
    %8830 = vmatprep.subr.bf16.mxu0 %v8375
    %8831 = vmatpush1.bf16.msra.mxu0 %v8374
    %8832 = vmatprep.subr.bf16.mxu0 %v8367
    %8833 = vmatpush1.bf16.msra.mxu0 %v8366
    %8834 = vmatprep.subr.bf16.mxu0 %v8359
    %8835 = vmatpush1.bf16.msra.mxu0 %v8358
    %8836 = vmatprep.subr.bf16.mxu0 %v8351
    %8837 = vmatpush1.bf16.msra.mxu0 %v8350
    %8838 = vmatprep.subr.bf16.mxu0 %v8343
    %8839 = vmatpush1.bf16.msra.mxu0 %v8342
    %8840 = vmatprep.subr.bf16.mxu0 %v8335
    %8841 = vmatpush1.bf16.msra.mxu0 %v8334
    %8842 = vmatprep.subr.bf16.mxu0 %v8327
    %8843 = vmatpush1.bf16.msra.mxu0 %v8326
    %8844 = vmatprep.subr.bf16.mxu0 %v8319
    %8845 = vmatpush1.bf16.msra.mxu0 %v8318
    %8846 = vmatprep.subr.bf16.mxu0 %v8439
    %8847 = vmatpush2.bf16.msra.mxu0 %v8438
    %8848 = vmatprep.subr.bf16.mxu0 %v8431
    %8849 = vmatpush2.bf16.msra.mxu0 %v8430
    %8850 = vmatprep.subr.bf16.mxu0 %v8423
    %8851 = vmatpush2.bf16.msra.mxu0 %v8422
    %8852 = vmatprep.subr.bf16.mxu0 %v8415
    %8853 = vmatpush2.bf16.msra.mxu0 %v8414
    %8854 = vmatprep.subr.bf16.mxu0 %v8407
    %8855 = vmatpush2.bf16.msra.mxu0 %v8406
    %8856 = vmatprep.subr.bf16.mxu0 %v8399
    %8857 = vmatpush2.bf16.msra.mxu0 %v8398
    %8858 = vmatprep.subr.bf16.mxu0 %v8391
    %8859 = vmatpush2.bf16.msra.mxu0 %v8390
    %8860 = vmatprep.subr.bf16.mxu0 %v8383
    %8861 = vmatpush2.bf16.msra.mxu0 %v8382
    %8862 = vmatprep.mubr.bf16.mxu0 %v7153
    %8863 = vmatmul.mubr.bf16.gmra.mxu0 %v7152
    %v8864 = vpop.f32.mrf.mxu0
    %v8865 = vadd.f32 %v7513, %v8864
    %v8866 = vpop.f32.mrf.mxu0
    %v8867 = vadd.f32 %v7517, %v8866
    %v8868 = vpop.f32.mrf.mxu0
    %v8869 = vadd.f32 %v7513, %v8868
    %v8870 = vpop.f32.mrf.mxu0
    %v8871 = vadd.f32 %v7517, %v8870
    %8872 = vmatprep.mubr.bf16.mxu0 %v7157
    %8873 = vmatmul.mubr.bf16.gmra.mxu0 %v7156
    %v8874 = vpop.f32.mrf.mxu0
    %v8875 = vadd.f32 %v7513, %v8874
    %v8876 = vpop.f32.mrf.mxu0
    %v8877 = vadd.f32 %v7517, %v8876
    %v8878 = vpop.f32.mrf.mxu0
    %v8879 = vadd.f32 %v7513, %v8878
    %v8880 = vpop.f32.mrf.mxu0
    %v8881 = vadd.f32 %v7517, %v8880
    %8882 = vmatprep.mubr.bf16.mxu0 %v7161
    %8883 = vmatmul.mubr.bf16.gmra.mxu0 %v7160
    %v8884 = vpop.f32.mrf.mxu0
    %v8885 = vadd.f32 %v7513, %v8884
    %v8886 = vpop.f32.mrf.mxu0
    %v8887 = vadd.f32 %v7517, %v8886
    %v8888 = vpop.f32.mrf.mxu0
    %v8889 = vadd.f32 %v7513, %v8888
    %v8890 = vpop.f32.mrf.mxu0
    %v8891 = vadd.f32 %v7517, %v8890
    %8892 = vmatprep.mubr.bf16.mxu0 %v7165
    %8893 = vmatmul.mubr.bf16.gmra.mxu0 %v7164
    %v8894 = vpop.f32.mrf.mxu0
    %v8895 = vadd.f32 %v7513, %v8894
    %v8896 = vpop.f32.mrf.mxu0
    %v8897 = vadd.f32 %v7517, %v8896
    %v8898 = vpop.f32.mrf.mxu0
    %v8899 = vadd.f32 %v7513, %v8898
    %v8900 = vpop.f32.mrf.mxu0
    %v8901 = vadd.f32 %v7517, %v8900
    %8902 = vmatprep.mubr.bf16.mxu0 %v7169
    %8903 = vmatmul.mubr.bf16.gmra.mxu0 %v7168
    %v8904 = vpop.f32.mrf.mxu0
    %v8905 = vadd.f32 %v7513, %v8904
    %v8906 = vpop.f32.mrf.mxu0
    %v8907 = vadd.f32 %v7517, %v8906
    %v8908 = vpop.f32.mrf.mxu0
    %v8909 = vadd.f32 %v7513, %v8908
    %v8910 = vpop.f32.mrf.mxu0
    %v8911 = vadd.f32 %v7517, %v8910
    %8912 = vmatprep.mubr.bf16.mxu0 %v7173
    %8913 = vmatmul.mubr.bf16.gmra.mxu0 %v7172
    %v8914 = vpop.f32.mrf.mxu0
    %v8915 = vadd.f32 %v7513, %v8914
    %v8916 = vpop.f32.mrf.mxu0
    %v8917 = vadd.f32 %v7517, %v8916
    %v8918 = vpop.f32.mrf.mxu0
    %v8919 = vadd.f32 %v7513, %v8918
    %v8920 = vpop.f32.mrf.mxu0
    %v8921 = vadd.f32 %v7517, %v8920
    %8922 = vmatprep.mubr.bf16.mxu0 %v7177
    %8923 = vmatmul.mubr.bf16.gmra.mxu0 %v7176
    %v8924 = vpop.f32.mrf.mxu0
    %v8925 = vadd.f32 %v7513, %v8924
    %v8926 = vpop.f32.mrf.mxu0
    %v8927 = vadd.f32 %v7517, %v8926
    %v8928 = vpop.f32.mrf.mxu0
    %v8929 = vadd.f32 %v7513, %v8928
    %v8930 = vpop.f32.mrf.mxu0
    %v8931 = vadd.f32 %v7517, %v8930
    %8932 = vmatprep.mubr.bf16.mxu0 %v7181
    %8933 = vmatmul.mubr.bf16.gmra.mxu0 %v7180
    %v8934 = vpop.f32.mrf.mxu0
    %v8935 = vadd.f32 %v7513, %v8934
    %v8936 = vpop.f32.mrf.mxu0
    %v8937 = vadd.f32 %v7517, %v8936
    %v8938 = vpop.f32.mrf.mxu0
    %v8939 = vadd.f32 %v7513, %v8938
    %v8940 = vpop.f32.mrf.mxu0
    %v8941 = vadd.f32 %v7517, %v8940
    %8942 = vmatprep.mubr.bf16.mxu0 %v7185
    %8943 = vmatmul.mubr.bf16.gmra.mxu0 %v7184
    %v8944 = vpop.f32.mrf.mxu0
    %v8945 = vadd.f32 %v7513, %v8944
    %v8946 = vpop.f32.mrf.mxu0
    %v8947 = vadd.f32 %v7517, %v8946
    %v8948 = vpop.f32.mrf.mxu0
    %v8949 = vadd.f32 %v7513, %v8948
    %v8950 = vpop.f32.mrf.mxu0
    %v8951 = vadd.f32 %v7517, %v8950
    %8952 = vmatprep.mubr.bf16.mxu0 %v7189
    %8953 = vmatmul.mubr.bf16.gmra.mxu0 %v7188
    %v8954 = vpop.f32.mrf.mxu0
    %v8955 = vadd.f32 %v7513, %v8954
    %v8956 = vpop.f32.mrf.mxu0
    %v8957 = vadd.f32 %v7517, %v8956
    %v8958 = vpop.f32.mrf.mxu0
    %v8959 = vadd.f32 %v7513, %v8958
    %v8960 = vpop.f32.mrf.mxu0
    %v8961 = vadd.f32 %v7517, %v8960
    %8962 = vmatprep.mubr.bf16.mxu0 %v7193
    %8963 = vmatmul.mubr.bf16.gmra.mxu0 %v7192
    %v8964 = vpop.f32.mrf.mxu0
    %v8965 = vadd.f32 %v7513, %v8964
    %v8966 = vpop.f32.mrf.mxu0
    %v8967 = vadd.f32 %v7517, %v8966
    %v8968 = vpop.f32.mrf.mxu0
    %v8969 = vadd.f32 %v7513, %v8968
    %v8970 = vpop.f32.mrf.mxu0
    %v8971 = vadd.f32 %v7517, %v8970
    %8972 = vmatprep.mubr.bf16.mxu0 %v7197
    %8973 = vmatmul.mubr.bf16.gmra.mxu0 %v7196
    %v8974 = vpop.f32.mrf.mxu0
    %v8975 = vadd.f32 %v7513, %v8974
    %v8976 = vpop.f32.mrf.mxu0
    %v8977 = vadd.f32 %v7517, %v8976
    %v8978 = vpop.f32.mrf.mxu0
    %v8979 = vadd.f32 %v7513, %v8978
    %v8980 = vpop.f32.mrf.mxu0
    %v8981 = vadd.f32 %v7517, %v8980
    %8982 = vmatprep.mubr.bf16.mxu0 %v7201
    %8983 = vmatmul.mubr.bf16.gmra.mxu0 %v7200
    %v8984 = vpop.f32.mrf.mxu0
    %v8985 = vadd.f32 %v7513, %v8984
    %v8986 = vpop.f32.mrf.mxu0
    %v8987 = vadd.f32 %v7517, %v8986
    %v8988 = vpop.f32.mrf.mxu0
    %v8989 = vadd.f32 %v7513, %v8988
    %v8990 = vpop.f32.mrf.mxu0
    %v8991 = vadd.f32 %v7517, %v8990
    %8992 = vmatprep.mubr.bf16.mxu0 %v7205
    %8993 = vmatmul.mubr.bf16.gmra.mxu0 %v7204
    %v8994 = vpop.f32.mrf.mxu0
    %v8995 = vadd.f32 %v7513, %v8994
    %v8996 = vpop.f32.mrf.mxu0
    %v8997 = vadd.f32 %v7517, %v8996
    %v8998 = vpop.f32.mrf.mxu0
    %v8999 = vadd.f32 %v7513, %v8998
    %v9000 = vpop.f32.mrf.mxu0
    %v9001 = vadd.f32 %v7517, %v9000
    %9002 = vmatprep.mubr.bf16.mxu0 %v7209
    %9003 = vmatmul.mubr.bf16.gmra.mxu0 %v7208
    %v9004 = vpop.f32.mrf.mxu0
    %v9005 = vadd.f32 %v7513, %v9004
    %v9006 = vpop.f32.mrf.mxu0
    %v9007 = vadd.f32 %v7517, %v9006
    %v9008 = vpop.f32.mrf.mxu0
    %v9009 = vadd.f32 %v7513, %v9008
    %v9010 = vpop.f32.mrf.mxu0
    %v9011 = vadd.f32 %v7517, %v9010
    %9012 = vmatprep.mubr.bf16.mxu0 %v7213
    %9013 = vmatmul.mubr.bf16.gmra.mxu0 %v7212
    %v9014 = vpop.f32.mrf.mxu0
    %v9015 = vadd.f32 %v7513, %v9014
    %v9016 = vpop.f32.mrf.mxu0
    %v9017 = vadd.f32 %v7517, %v9016
    %v9018 = vpop.f32.mrf.mxu0
    %v9019 = vadd.f32 %v7513, %v9018
    %v9020 = vpop.f32.mrf.mxu0
    %v9021 = vadd.f32 %v7517, %v9020
    %9022 = vmatprep.mubr.bf16.mxu0 %v7217
    %9023 = vmatmul.mubr.bf16.gmra.mxu0 %v7216
    %v9024 = vpop.f32.mrf.mxu0
    %v9025 = vadd.f32 %v7513, %v9024
    %v9026 = vpop.f32.mrf.mxu0
    %v9027 = vadd.f32 %v7517, %v9026
    %v9028 = vpop.f32.mrf.mxu0
    %v9029 = vadd.f32 %v7513, %v9028
    %v9030 = vpop.f32.mrf.mxu0
    %v9031 = vadd.f32 %v7517, %v9030
    %9032 = vmatprep.mubr.bf16.mxu0 %v7221
    %9033 = vmatmul.mubr.bf16.gmra.mxu0 %v7220
    %v9034 = vpop.f32.mrf.mxu0
    %v9035 = vadd.f32 %v7513, %v9034
    %v9036 = vpop.f32.mrf.mxu0
    %v9037 = vadd.f32 %v7517, %v9036
    %v9038 = vpop.f32.mrf.mxu0
    %v9039 = vadd.f32 %v7513, %v9038
    %v9040 = vpop.f32.mrf.mxu0
    %v9041 = vadd.f32 %v7517, %v9040
    %9042 = vmatprep.mubr.bf16.mxu0 %v7225
    %9043 = vmatmul.mubr.bf16.gmra.mxu0 %v7224
    %v9044 = vpop.f32.mrf.mxu0
    %v9045 = vadd.f32 %v7513, %v9044
    %v9046 = vpop.f32.mrf.mxu0
    %v9047 = vadd.f32 %v7517, %v9046
    %v9048 = vpop.f32.mrf.mxu0
    %v9049 = vadd.f32 %v7513, %v9048
    %v9050 = vpop.f32.mrf.mxu0
    %v9051 = vadd.f32 %v7517, %v9050
    %9052 = vmatprep.mubr.bf16.mxu0 %v7229
    %9053 = vmatmul.mubr.bf16.gmra.mxu0 %v7228
    %v9054 = vpop.f32.mrf.mxu0
    %v9055 = vadd.f32 %v7513, %v9054
    %v9056 = vpop.f32.mrf.mxu0
    %v9057 = vadd.f32 %v7517, %v9056
    %v9058 = vpop.f32.mrf.mxu0
    %v9059 = vadd.f32 %v7513, %v9058
    %v9060 = vpop.f32.mrf.mxu0
    %v9061 = vadd.f32 %v7517, %v9060
    %9062 = vmatprep.mubr.bf16.mxu0 %v7233
    %9063 = vmatmul.mubr.bf16.gmra.mxu0 %v7232
    %v9064 = vpop.f32.mrf.mxu0
    %v9065 = vadd.f32 %v7513, %v9064
    %v9066 = vpop.f32.mrf.mxu0
    %v9067 = vadd.f32 %v7517, %v9066
    %v9068 = vpop.f32.mrf.mxu0
    %v9069 = vadd.f32 %v7513, %v9068
    %v9070 = vpop.f32.mrf.mxu0
    %v9071 = vadd.f32 %v7517, %v9070
    %9072 = vmatprep.mubr.bf16.mxu0 %v7237
    %9073 = vmatmul.mubr.bf16.gmra.mxu0 %v7236
    %v9074 = vpop.f32.mrf.mxu0
    %v9075 = vadd.f32 %v7513, %v9074
    %v9076 = vpop.f32.mrf.mxu0
    %v9077 = vadd.f32 %v7517, %v9076
    %v9078 = vpop.f32.mrf.mxu0
    %v9079 = vadd.f32 %v7513, %v9078
    %v9080 = vpop.f32.mrf.mxu0
    %v9081 = vadd.f32 %v7517, %v9080
    %9082 = vmatprep.mubr.bf16.mxu0 %v7241
    %9083 = vmatmul.mubr.bf16.gmra.mxu0 %v7240
    %v9084 = vpop.f32.mrf.mxu0
    %v9085 = vadd.f32 %v7513, %v9084
    %v9086 = vpop.f32.mrf.mxu0
    %v9087 = vadd.f32 %v7517, %v9086
    %v9088 = vpop.f32.mrf.mxu0
    %v9089 = vadd.f32 %v7513, %v9088
    %v9090 = vpop.f32.mrf.mxu0
    %v9091 = vadd.f32 %v7517, %v9090
    %9092 = vmatprep.mubr.bf16.mxu0 %v7245
    %9093 = vmatmul.mubr.bf16.gmra.mxu0 %v7244
    %v9094 = vpop.f32.mrf.mxu0
    %v9095 = vadd.f32 %v7513, %v9094
    %v9096 = vpop.f32.mrf.mxu0
    %v9097 = vadd.f32 %v7517, %v9096
    %v9098 = vpop.f32.mrf.mxu0
    %v9099 = vadd.f32 %v7513, %v9098
    %v9100 = vpop.f32.mrf.mxu0
    %v9101 = vadd.f32 %v7517, %v9100
    %9102 = vmatprep.mubr.bf16.mxu0 %v7249
    %9103 = vmatmul.mubr.bf16.gmra.mxu0 %v7248
    %v9104 = vpop.f32.mrf.mxu0
    %v9105 = vadd.f32 %v7513, %v9104
    %v9106 = vpop.f32.mrf.mxu0
    %v9107 = vadd.f32 %v7517, %v9106
    %v9108 = vpop.f32.mrf.mxu0
    %v9109 = vadd.f32 %v7513, %v9108
    %v9110 = vpop.f32.mrf.mxu0
    %v9111 = vadd.f32 %v7517, %v9110
    %9112 = vdwg.mxu0
    %9113 = vmatprep.subr.bf16.mxu0 %v8503
    %9114 = vmatpush1.bf16.msra.mxu0 %v8502
    %9115 = vmatprep.subr.bf16.mxu0 %v8495
    %9116 = vmatpush1.bf16.msra.mxu0 %v8494
    %9117 = vmatprep.subr.bf16.mxu0 %v8487
    %9118 = vmatpush1.bf16.msra.mxu0 %v8486
    %9119 = vmatprep.subr.bf16.mxu0 %v8479
    %9120 = vmatpush1.bf16.msra.mxu0 %v8478
    %9121 = vmatprep.subr.bf16.mxu0 %v8471
    %9122 = vmatpush1.bf16.msra.mxu0 %v8470
    %9123 = vmatprep.subr.bf16.mxu0 %v8463
    %9124 = vmatpush1.bf16.msra.mxu0 %v8462
    %9125 = vmatprep.subr.bf16.mxu0 %v8455
    %9126 = vmatpush1.bf16.msra.mxu0 %v8454
    %9127 = vmatprep.subr.bf16.mxu0 %v8447
    %9128 = vmatpush1.bf16.msra.mxu0 %v8446
    %9129 = vmatprep.subr.bf16.mxu0 %v8567
    %9130 = vmatpush2.bf16.msra.mxu0 %v8566
    %9131 = vmatprep.subr.bf16.mxu0 %v8559
    %9132 = vmatpush2.bf16.msra.mxu0 %v8558
    %9133 = vmatprep.subr.bf16.mxu0 %v8551
    %9134 = vmatpush2.bf16.msra.mxu0 %v8550
    %9135 = vmatprep.subr.bf16.mxu0 %v8543
    %9136 = vmatpush2.bf16.msra.mxu0 %v8542
    %9137 = vmatprep.subr.bf16.mxu0 %v8535
    %9138 = vmatpush2.bf16.msra.mxu0 %v8534
    %9139 = vmatprep.subr.bf16.mxu0 %v8527
    %9140 = vmatpush2.bf16.msra.mxu0 %v8526
    %9141 = vmatprep.subr.bf16.mxu0 %v8519
    %9142 = vmatpush2.bf16.msra.mxu0 %v8518
    %9143 = vmatprep.subr.bf16.mxu0 %v8511
    %9144 = vmatpush2.bf16.msra.mxu0 %v8510
    %9145 = vmatprep.mubr.bf16.mxu0 %v7155
    %9146 = vmatmul.mubr.bf16.gmra.mxu0 %v7154
    %v9147 = vpop.f32.mrf.mxu0
    %v9148 = vadd.f32 %v8865, %v9147
    %v9149 = vpop.f32.mrf.mxu0
    %v9150 = vadd.f32 %v8867, %v9149
    %v9151 = vpop.f32.mrf.mxu0
    %v9152 = vadd.f32 %v8869, %v9151
    %v9153 = vpop.f32.mrf.mxu0
    %v9154 = vadd.f32 %v8871, %v9153
    %9155 = vmatprep.mubr.bf16.mxu0 %v7159
    %9156 = vmatmul.mubr.bf16.gmra.mxu0 %v7158
    %v9157 = vpop.f32.mrf.mxu0
    %v9158 = vadd.f32 %v8875, %v9157
    %v9159 = vpop.f32.mrf.mxu0
    %v9160 = vadd.f32 %v8877, %v9159
    %v9161 = vpop.f32.mrf.mxu0
    %v9162 = vadd.f32 %v8879, %v9161
    %v9163 = vpop.f32.mrf.mxu0
    %v9164 = vadd.f32 %v8881, %v9163
    %9165 = vmatprep.mubr.bf16.mxu0 %v7163
    %9166 = vmatmul.mubr.bf16.gmra.mxu0 %v7162
    %v9167 = vpop.f32.mrf.mxu0
    %v9168 = vadd.f32 %v8885, %v9167
    %v9169 = vpop.f32.mrf.mxu0
    %v9170 = vadd.f32 %v8887, %v9169
    %v9171 = vpop.f32.mrf.mxu0
    %v9172 = vadd.f32 %v8889, %v9171
    %v9173 = vpop.f32.mrf.mxu0
    %v9174 = vadd.f32 %v8891, %v9173
    %9175 = vmatprep.mubr.bf16.mxu0 %v7167
    %9176 = vmatmul.mubr.bf16.gmra.mxu0 %v7166
    %v9177 = vpop.f32.mrf.mxu0
    %v9178 = vadd.f32 %v8895, %v9177
    %v9179 = vpop.f32.mrf.mxu0
    %v9180 = vadd.f32 %v8897, %v9179
    %v9181 = vpop.f32.mrf.mxu0
    %v9182 = vadd.f32 %v8899, %v9181
    %v9183 = vpop.f32.mrf.mxu0
    %v9184 = vadd.f32 %v8901, %v9183
    %9185 = vmatprep.mubr.bf16.mxu0 %v7171
    %9186 = vmatmul.mubr.bf16.gmra.mxu0 %v7170
    %v9187 = vpop.f32.mrf.mxu0
    %v9188 = vadd.f32 %v8905, %v9187
    %v9189 = vpop.f32.mrf.mxu0
    %v9190 = vadd.f32 %v8907, %v9189
    %v9191 = vpop.f32.mrf.mxu0
    %v9192 = vadd.f32 %v8909, %v9191
    %v9193 = vpop.f32.mrf.mxu0
    %v9194 = vadd.f32 %v8911, %v9193
    %9195 = vmatprep.mubr.bf16.mxu0 %v7175
    %9196 = vmatmul.mubr.bf16.gmra.mxu0 %v7174
    %v9197 = vpop.f32.mrf.mxu0
    %v9198 = vadd.f32 %v8915, %v9197
    %v9199 = vpop.f32.mrf.mxu0
    %v9200 = vadd.f32 %v8917, %v9199
    %v9201 = vpop.f32.mrf.mxu0
    %v9202 = vadd.f32 %v8919, %v9201
    %v9203 = vpop.f32.mrf.mxu0
    %v9204 = vadd.f32 %v8921, %v9203
    %9205 = vmatprep.mubr.bf16.mxu0 %v7179
    %9206 = vmatmul.mubr.bf16.gmra.mxu0 %v7178
    %v9207 = vpop.f32.mrf.mxu0
    %v9208 = vadd.f32 %v8925, %v9207
    %v9209 = vpop.f32.mrf.mxu0
    %v9210 = vadd.f32 %v8927, %v9209
    %v9211 = vpop.f32.mrf.mxu0
    %v9212 = vadd.f32 %v8929, %v9211
    %v9213 = vpop.f32.mrf.mxu0
    %v9214 = vadd.f32 %v8931, %v9213
    %9215 = vmatprep.mubr.bf16.mxu0 %v7183
    %9216 = vmatmul.mubr.bf16.gmra.mxu0 %v7182
    %v9217 = vpop.f32.mrf.mxu0
    %v9218 = vadd.f32 %v8935, %v9217
    %v9219 = vpop.f32.mrf.mxu0
    %v9220 = vadd.f32 %v8937, %v9219
    %v9221 = vpop.f32.mrf.mxu0
    %v9222 = vadd.f32 %v8939, %v9221
    %v9223 = vpop.f32.mrf.mxu0
    %v9224 = vadd.f32 %v8941, %v9223
    %9225 = vmatprep.mubr.bf16.mxu0 %v7187
    %9226 = vmatmul.mubr.bf16.gmra.mxu0 %v7186
    %v9227 = vpop.f32.mrf.mxu0
    %v9228 = vadd.f32 %v8945, %v9227
    %v9229 = vpop.f32.mrf.mxu0
    %v9230 = vadd.f32 %v8947, %v9229
    %v9231 = vpop.f32.mrf.mxu0
    %v9232 = vadd.f32 %v8949, %v9231
    %v9233 = vpop.f32.mrf.mxu0
    %v9234 = vadd.f32 %v8951, %v9233
    %9235 = vmatprep.mubr.bf16.mxu0 %v7191
    %9236 = vmatmul.mubr.bf16.gmra.mxu0 %v7190
    %v9237 = vpop.f32.mrf.mxu0
    %v9238 = vadd.f32 %v8955, %v9237
    %v9239 = vpop.f32.mrf.mxu0
    %v9240 = vadd.f32 %v8957, %v9239
    %v9241 = vpop.f32.mrf.mxu0
    %v9242 = vadd.f32 %v8959, %v9241
    %v9243 = vpop.f32.mrf.mxu0
    %v9244 = vadd.f32 %v8961, %v9243
    %9245 = vmatprep.mubr.bf16.mxu0 %v7195
    %9246 = vmatmul.mubr.bf16.gmra.mxu0 %v7194
    %v9247 = vpop.f32.mrf.mxu0
    %v9248 = vadd.f32 %v8965, %v9247
    %v9249 = vpop.f32.mrf.mxu0
    %v9250 = vadd.f32 %v8967, %v9249
    %v9251 = vpop.f32.mrf.mxu0
    %v9252 = vadd.f32 %v8969, %v9251
    %v9253 = vpop.f32.mrf.mxu0
    %v9254 = vadd.f32 %v8971, %v9253
    %9255 = vmatprep.mubr.bf16.mxu0 %v7199
    %9256 = vmatmul.mubr.bf16.gmra.mxu0 %v7198
    %v9257 = vpop.f32.mrf.mxu0
    %v9258 = vadd.f32 %v8975, %v9257
    %v9259 = vpop.f32.mrf.mxu0
    %v9260 = vadd.f32 %v8977, %v9259
    %v9261 = vpop.f32.mrf.mxu0
    %v9262 = vadd.f32 %v8979, %v9261
    %v9263 = vpop.f32.mrf.mxu0
    %v9264 = vadd.f32 %v8981, %v9263
    %9265 = vmatprep.mubr.bf16.mxu0 %v7203
    %9266 = vmatmul.mubr.bf16.gmra.mxu0 %v7202
    %v9267 = vpop.f32.mrf.mxu0
    %v9268 = vadd.f32 %v8985, %v9267
    %v9269 = vpop.f32.mrf.mxu0
    %v9270 = vadd.f32 %v8987, %v9269
    %v9271 = vpop.f32.mrf.mxu0
    %v9272 = vadd.f32 %v8989, %v9271
    %v9273 = vpop.f32.mrf.mxu0
    %v9274 = vadd.f32 %v8991, %v9273
    %9275 = vmatprep.mubr.bf16.mxu0 %v7207
    %9276 = vmatmul.mubr.bf16.gmra.mxu0 %v7206
    %v9277 = vpop.f32.mrf.mxu0
    %v9278 = vadd.f32 %v8995, %v9277
    %v9279 = vpop.f32.mrf.mxu0
    %v9280 = vadd.f32 %v8997, %v9279
    %v9281 = vpop.f32.mrf.mxu0
    %v9282 = vadd.f32 %v8999, %v9281
    %v9283 = vpop.f32.mrf.mxu0
    %v9284 = vadd.f32 %v9001, %v9283
    %9285 = vmatprep.mubr.bf16.mxu0 %v7211
    %9286 = vmatmul.mubr.bf16.gmra.mxu0 %v7210
    %v9287 = vpop.f32.mrf.mxu0
    %v9288 = vadd.f32 %v9005, %v9287
    %v9289 = vpop.f32.mrf.mxu0
    %v9290 = vadd.f32 %v9007, %v9289
    %v9291 = vpop.f32.mrf.mxu0
    %v9292 = vadd.f32 %v9009, %v9291
    %v9293 = vpop.f32.mrf.mxu0
    %v9294 = vadd.f32 %v9011, %v9293
    %9295 = vmatprep.mubr.bf16.mxu0 %v7215
    %9296 = vmatmul.mubr.bf16.gmra.mxu0 %v7214
    %v9297 = vpop.f32.mrf.mxu0
    %v9298 = vadd.f32 %v9015, %v9297
    %v9299 = vpop.f32.mrf.mxu0
    %v9300 = vadd.f32 %v9017, %v9299
    %v9301 = vpop.f32.mrf.mxu0
    %v9302 = vadd.f32 %v9019, %v9301
    %v9303 = vpop.f32.mrf.mxu0
    %v9304 = vadd.f32 %v9021, %v9303
    %9305 = vmatprep.mubr.bf16.mxu0 %v7219
    %9306 = vmatmul.mubr.bf16.gmra.mxu0 %v7218
    %v9307 = vpop.f32.mrf.mxu0
    %v9308 = vadd.f32 %v9025, %v9307
    %v9309 = vpop.f32.mrf.mxu0
    %v9310 = vadd.f32 %v9027, %v9309
    %v9311 = vpop.f32.mrf.mxu0
    %v9312 = vadd.f32 %v9029, %v9311
    %v9313 = vpop.f32.mrf.mxu0
    %v9314 = vadd.f32 %v9031, %v9313
    %9315 = vmatprep.mubr.bf16.mxu0 %v7223
    %9316 = vmatmul.mubr.bf16.gmra.mxu0 %v7222
    %v9317 = vpop.f32.mrf.mxu0
    %v9318 = vadd.f32 %v9035, %v9317
    %v9319 = vpop.f32.mrf.mxu0
    %v9320 = vadd.f32 %v9037, %v9319
    %v9321 = vpop.f32.mrf.mxu0
    %v9322 = vadd.f32 %v9039, %v9321
    %v9323 = vpop.f32.mrf.mxu0
    %v9324 = vadd.f32 %v9041, %v9323
    %9325 = vmatprep.mubr.bf16.mxu0 %v7227
    %9326 = vmatmul.mubr.bf16.gmra.mxu0 %v7226
    %v9327 = vpop.f32.mrf.mxu0
    %v9328 = vadd.f32 %v9045, %v9327
    %v9329 = vpop.f32.mrf.mxu0
    %v9330 = vadd.f32 %v9047, %v9329
    %v9331 = vpop.f32.mrf.mxu0
    %v9332 = vadd.f32 %v9049, %v9331
    %v9333 = vpop.f32.mrf.mxu0
    %v9334 = vadd.f32 %v9051, %v9333
    %9335 = vmatprep.mubr.bf16.mxu0 %v7231
    %9336 = vmatmul.mubr.bf16.gmra.mxu0 %v7230
    %v9337 = vpop.f32.mrf.mxu0
    %v9338 = vadd.f32 %v9055, %v9337
    %v9339 = vpop.f32.mrf.mxu0
    %v9340 = vadd.f32 %v9057, %v9339
    %v9341 = vpop.f32.mrf.mxu0
    %v9342 = vadd.f32 %v9059, %v9341
    %v9343 = vpop.f32.mrf.mxu0
    %v9344 = vadd.f32 %v9061, %v9343
    %9345 = vmatprep.mubr.bf16.mxu0 %v7235
    %9346 = vmatmul.mubr.bf16.gmra.mxu0 %v7234
    %v9347 = vpop.f32.mrf.mxu0
    %v9348 = vadd.f32 %v9065, %v9347
    %v9349 = vpop.f32.mrf.mxu0
    %v9350 = vadd.f32 %v9067, %v9349
    %v9351 = vpop.f32.mrf.mxu0
    %v9352 = vadd.f32 %v9069, %v9351
    %v9353 = vpop.f32.mrf.mxu0
    %v9354 = vadd.f32 %v9071, %v9353
    %9355 = vmatprep.mubr.bf16.mxu0 %v7239
    %9356 = vmatmul.mubr.bf16.gmra.mxu0 %v7238
    %v9357 = vpop.f32.mrf.mxu0
    %v9358 = vadd.f32 %v9075, %v9357
    %v9359 = vpop.f32.mrf.mxu0
    %v9360 = vadd.f32 %v9077, %v9359
    %v9361 = vpop.f32.mrf.mxu0
    %v9362 = vadd.f32 %v9079, %v9361
    %v9363 = vpop.f32.mrf.mxu0
    %v9364 = vadd.f32 %v9081, %v9363
    %9365 = vmatprep.mubr.bf16.mxu0 %v7243
    %9366 = vmatmul.mubr.bf16.gmra.mxu0 %v7242
    %v9367 = vpop.f32.mrf.mxu0
    %v9368 = vadd.f32 %v9085, %v9367
    %v9369 = vpop.f32.mrf.mxu0
    %v9370 = vadd.f32 %v9087, %v9369
    %v9371 = vpop.f32.mrf.mxu0
    %v9372 = vadd.f32 %v9089, %v9371
    %v9373 = vpop.f32.mrf.mxu0
    %v9374 = vadd.f32 %v9091, %v9373
    %9375 = vmatprep.mubr.bf16.mxu0 %v7247
    %9376 = vmatmul.mubr.bf16.gmra.mxu0 %v7246
    %v9377 = vpop.f32.mrf.mxu0
    %v9378 = vadd.f32 %v9095, %v9377
    %v9379 = vpop.f32.mrf.mxu0
    %v9380 = vadd.f32 %v9097, %v9379
    %v9381 = vpop.f32.mrf.mxu0
    %v9382 = vadd.f32 %v9099, %v9381
    %v9383 = vpop.f32.mrf.mxu0
    %v9384 = vadd.f32 %v9101, %v9383
    %9385 = vmatprep.mubr.bf16.mxu0 %v7251
    %9386 = vmatmul.mubr.bf16.gmra.mxu0 %v7250
    %v9387 = vpop.f32.mrf.mxu0
    %v9388 = vadd.f32 %v9105, %v9387
    %v9389 = vpop.f32.mrf.mxu0
    %v9390 = vadd.f32 %v9107, %v9389
    %v9391 = vpop.f32.mrf.mxu0
    %v9392 = vadd.f32 %v9109, %v9391
    %v9393 = vpop.f32.mrf.mxu0
    %v9394 = vadd.f32 %v9111, %v9393
    %9395 = vdwg.mxu0
    %9396 = vmatprep.subr.bf16.mxu0 %v8377
    %9397 = vmatpush1.bf16.msra.mxu0 %v8376
    %9398 = vmatprep.subr.bf16.mxu0 %v8369
    %9399 = vmatpush1.bf16.msra.mxu0 %v8368
    %9400 = vmatprep.subr.bf16.mxu0 %v8361
    %9401 = vmatpush1.bf16.msra.mxu0 %v8360
    %9402 = vmatprep.subr.bf16.mxu0 %v8353
    %9403 = vmatpush1.bf16.msra.mxu0 %v8352
    %9404 = vmatprep.subr.bf16.mxu0 %v8345
    %9405 = vmatpush1.bf16.msra.mxu0 %v8344
    %9406 = vmatprep.subr.bf16.mxu0 %v8337
    %9407 = vmatpush1.bf16.msra.mxu0 %v8336
    %9408 = vmatprep.subr.bf16.mxu0 %v8329
    %9409 = vmatpush1.bf16.msra.mxu0 %v8328
    %9410 = vmatprep.subr.bf16.mxu0 %v8321
    %9411 = vmatpush1.bf16.msra.mxu0 %v8320
    %9412 = vmatprep.subr.bf16.mxu0 %v8441
    %9413 = vmatpush2.bf16.msra.mxu0 %v8440
    %9414 = vmatprep.subr.bf16.mxu0 %v8433
    %9415 = vmatpush2.bf16.msra.mxu0 %v8432
    %9416 = vmatprep.subr.bf16.mxu0 %v8425
    %9417 = vmatpush2.bf16.msra.mxu0 %v8424
    %9418 = vmatprep.subr.bf16.mxu0 %v8417
    %9419 = vmatpush2.bf16.msra.mxu0 %v8416
    %9420 = vmatprep.subr.bf16.mxu0 %v8409
    %9421 = vmatpush2.bf16.msra.mxu0 %v8408
    %9422 = vmatprep.subr.bf16.mxu0 %v8401
    %9423 = vmatpush2.bf16.msra.mxu0 %v8400
    %9424 = vmatprep.subr.bf16.mxu0 %v8393
    %9425 = vmatpush2.bf16.msra.mxu0 %v8392
    %9426 = vmatprep.subr.bf16.mxu0 %v8385
    %9427 = vmatpush2.bf16.msra.mxu0 %v8384
    %9428 = vmatprep.mubr.bf16.mxu0 %v7153
    %9429 = vmatmul.mubr.bf16.gmra.mxu0 %v7152
    %v9430 = vpop.f32.mrf.mxu0
    %v9431 = vadd.f32 %v7521, %v9430
    %v9432 = vpop.f32.mrf.mxu0
    %v9433 = vadd.f32 %v7525, %v9432
    %v9434 = vpop.f32.mrf.mxu0
    %v9435 = vadd.f32 %v7521, %v9434
    %v9436 = vpop.f32.mrf.mxu0
    %v9437 = vadd.f32 %v7525, %v9436
    %9438 = vmatprep.mubr.bf16.mxu0 %v7157
    %9439 = vmatmul.mubr.bf16.gmra.mxu0 %v7156
    %v9440 = vpop.f32.mrf.mxu0
    %v9441 = vadd.f32 %v7521, %v9440
    %v9442 = vpop.f32.mrf.mxu0
    %v9443 = vadd.f32 %v7525, %v9442
    %v9444 = vpop.f32.mrf.mxu0
    %v9445 = vadd.f32 %v7521, %v9444
    %v9446 = vpop.f32.mrf.mxu0
    %v9447 = vadd.f32 %v7525, %v9446
    %9448 = vmatprep.mubr.bf16.mxu0 %v7161
    %9449 = vmatmul.mubr.bf16.gmra.mxu0 %v7160
    %v9450 = vpop.f32.mrf.mxu0
    %v9451 = vadd.f32 %v7521, %v9450
    %v9452 = vpop.f32.mrf.mxu0
    %v9453 = vadd.f32 %v7525, %v9452
    %v9454 = vpop.f32.mrf.mxu0
    %v9455 = vadd.f32 %v7521, %v9454
    %v9456 = vpop.f32.mrf.mxu0
    %v9457 = vadd.f32 %v7525, %v9456
    %9458 = vmatprep.mubr.bf16.mxu0 %v7165
    %9459 = vmatmul.mubr.bf16.gmra.mxu0 %v7164
    %v9460 = vpop.f32.mrf.mxu0
    %v9461 = vadd.f32 %v7521, %v9460
    %v9462 = vpop.f32.mrf.mxu0
    %v9463 = vadd.f32 %v7525, %v9462
    %v9464 = vpop.f32.mrf.mxu0
    %v9465 = vadd.f32 %v7521, %v9464
    %v9466 = vpop.f32.mrf.mxu0
    %v9467 = vadd.f32 %v7525, %v9466
    %9468 = vmatprep.mubr.bf16.mxu0 %v7169
    %9469 = vmatmul.mubr.bf16.gmra.mxu0 %v7168
    %v9470 = vpop.f32.mrf.mxu0
    %v9471 = vadd.f32 %v7521, %v9470
    %v9472 = vpop.f32.mrf.mxu0
    %v9473 = vadd.f32 %v7525, %v9472
    %v9474 = vpop.f32.mrf.mxu0
    %v9475 = vadd.f32 %v7521, %v9474
    %v9476 = vpop.f32.mrf.mxu0
    %v9477 = vadd.f32 %v7525, %v9476
    %9478 = vmatprep.mubr.bf16.mxu0 %v7173
    %9479 = vmatmul.mubr.bf16.gmra.mxu0 %v7172
    %v9480 = vpop.f32.mrf.mxu0
    %v9481 = vadd.f32 %v7521, %v9480
    %v9482 = vpop.f32.mrf.mxu0
    %v9483 = vadd.f32 %v7525, %v9482
    %v9484 = vpop.f32.mrf.mxu0
    %v9485 = vadd.f32 %v7521, %v9484
    %v9486 = vpop.f32.mrf.mxu0
    %v9487 = vadd.f32 %v7525, %v9486
    %9488 = vmatprep.mubr.bf16.mxu0 %v7177
    %9489 = vmatmul.mubr.bf16.gmra.mxu0 %v7176
    %v9490 = vpop.f32.mrf.mxu0
    %v9491 = vadd.f32 %v7521, %v9490
    %v9492 = vpop.f32.mrf.mxu0
    %v9493 = vadd.f32 %v7525, %v9492
    %v9494 = vpop.f32.mrf.mxu0
    %v9495 = vadd.f32 %v7521, %v9494
    %v9496 = vpop.f32.mrf.mxu0
    %v9497 = vadd.f32 %v7525, %v9496
    %9498 = vmatprep.mubr.bf16.mxu0 %v7181
    %9499 = vmatmul.mubr.bf16.gmra.mxu0 %v7180
    %v9500 = vpop.f32.mrf.mxu0
    %v9501 = vadd.f32 %v7521, %v9500
    %v9502 = vpop.f32.mrf.mxu0
    %v9503 = vadd.f32 %v7525, %v9502
    %v9504 = vpop.f32.mrf.mxu0
    %v9505 = vadd.f32 %v7521, %v9504
    %v9506 = vpop.f32.mrf.mxu0
    %v9507 = vadd.f32 %v7525, %v9506
    %9508 = vmatprep.mubr.bf16.mxu0 %v7185
    %9509 = vmatmul.mubr.bf16.gmra.mxu0 %v7184
    %v9510 = vpop.f32.mrf.mxu0
    %v9511 = vadd.f32 %v7521, %v9510
    %v9512 = vpop.f32.mrf.mxu0
    %v9513 = vadd.f32 %v7525, %v9512
    %v9514 = vpop.f32.mrf.mxu0
    %v9515 = vadd.f32 %v7521, %v9514
    %v9516 = vpop.f32.mrf.mxu0
    %v9517 = vadd.f32 %v7525, %v9516
    %9518 = vmatprep.mubr.bf16.mxu0 %v7189
    %9519 = vmatmul.mubr.bf16.gmra.mxu0 %v7188
    %v9520 = vpop.f32.mrf.mxu0
    %v9521 = vadd.f32 %v7521, %v9520
    %v9522 = vpop.f32.mrf.mxu0
    %v9523 = vadd.f32 %v7525, %v9522
    %v9524 = vpop.f32.mrf.mxu0
    %v9525 = vadd.f32 %v7521, %v9524
    %v9526 = vpop.f32.mrf.mxu0
    %v9527 = vadd.f32 %v7525, %v9526
    %9528 = vmatprep.mubr.bf16.mxu0 %v7193
    %9529 = vmatmul.mubr.bf16.gmra.mxu0 %v7192
    %v9530 = vpop.f32.mrf.mxu0
    %v9531 = vadd.f32 %v7521, %v9530
    %v9532 = vpop.f32.mrf.mxu0
    %v9533 = vadd.f32 %v7525, %v9532
    %v9534 = vpop.f32.mrf.mxu0
    %v9535 = vadd.f32 %v7521, %v9534
    %v9536 = vpop.f32.mrf.mxu0
    %v9537 = vadd.f32 %v7525, %v9536
    %9538 = vmatprep.mubr.bf16.mxu0 %v7197
    %9539 = vmatmul.mubr.bf16.gmra.mxu0 %v7196
    %v9540 = vpop.f32.mrf.mxu0
    %v9541 = vadd.f32 %v7521, %v9540
    %v9542 = vpop.f32.mrf.mxu0
    %v9543 = vadd.f32 %v7525, %v9542
    %v9544 = vpop.f32.mrf.mxu0
    %v9545 = vadd.f32 %v7521, %v9544
    %v9546 = vpop.f32.mrf.mxu0
    %v9547 = vadd.f32 %v7525, %v9546
    %9548 = vmatprep.mubr.bf16.mxu0 %v7201
    %9549 = vmatmul.mubr.bf16.gmra.mxu0 %v7200
    %v9550 = vpop.f32.mrf.mxu0
    %v9551 = vadd.f32 %v7521, %v9550
    %v9552 = vpop.f32.mrf.mxu0
    %v9553 = vadd.f32 %v7525, %v9552
    %v9554 = vpop.f32.mrf.mxu0
    %v9555 = vadd.f32 %v7521, %v9554
    %v9556 = vpop.f32.mrf.mxu0
    %v9557 = vadd.f32 %v7525, %v9556
    %9558 = vmatprep.mubr.bf16.mxu0 %v7205
    %9559 = vmatmul.mubr.bf16.gmra.mxu0 %v7204
    %v9560 = vpop.f32.mrf.mxu0
    %v9561 = vadd.f32 %v7521, %v9560
    %v9562 = vpop.f32.mrf.mxu0
    %v9563 = vadd.f32 %v7525, %v9562
    %v9564 = vpop.f32.mrf.mxu0
    %v9565 = vadd.f32 %v7521, %v9564
    %v9566 = vpop.f32.mrf.mxu0
    %v9567 = vadd.f32 %v7525, %v9566
    %9568 = vmatprep.mubr.bf16.mxu0 %v7209
    %9569 = vmatmul.mubr.bf16.gmra.mxu0 %v7208
    %v9570 = vpop.f32.mrf.mxu0
    %v9571 = vadd.f32 %v7521, %v9570
    %v9572 = vpop.f32.mrf.mxu0
    %v9573 = vadd.f32 %v7525, %v9572
    %v9574 = vpop.f32.mrf.mxu0
    %v9575 = vadd.f32 %v7521, %v9574
    %v9576 = vpop.f32.mrf.mxu0
    %v9577 = vadd.f32 %v7525, %v9576
    %9578 = vmatprep.mubr.bf16.mxu0 %v7213
    %9579 = vmatmul.mubr.bf16.gmra.mxu0 %v7212
    %v9580 = vpop.f32.mrf.mxu0
    %v9581 = vadd.f32 %v7521, %v9580
    %v9582 = vpop.f32.mrf.mxu0
    %v9583 = vadd.f32 %v7525, %v9582
    %v9584 = vpop.f32.mrf.mxu0
    %v9585 = vadd.f32 %v7521, %v9584
    %v9586 = vpop.f32.mrf.mxu0
    %v9587 = vadd.f32 %v7525, %v9586
    %9588 = vmatprep.mubr.bf16.mxu0 %v7217
    %9589 = vmatmul.mubr.bf16.gmra.mxu0 %v7216
    %v9590 = vpop.f32.mrf.mxu0
    %v9591 = vadd.f32 %v7521, %v9590
    %v9592 = vpop.f32.mrf.mxu0
    %v9593 = vadd.f32 %v7525, %v9592
    %v9594 = vpop.f32.mrf.mxu0
    %v9595 = vadd.f32 %v7521, %v9594
    %v9596 = vpop.f32.mrf.mxu0
    %v9597 = vadd.f32 %v7525, %v9596
    %9598 = vmatprep.mubr.bf16.mxu0 %v7221
    %9599 = vmatmul.mubr.bf16.gmra.mxu0 %v7220
    %v9600 = vpop.f32.mrf.mxu0
    %v9601 = vadd.f32 %v7521, %v9600
    %v9602 = vpop.f32.mrf.mxu0
    %v9603 = vadd.f32 %v7525, %v9602
    %v9604 = vpop.f32.mrf.mxu0
    %v9605 = vadd.f32 %v7521, %v9604
    %v9606 = vpop.f32.mrf.mxu0
    %v9607 = vadd.f32 %v7525, %v9606
    %9608 = vmatprep.mubr.bf16.mxu0 %v7225
    %9609 = vmatmul.mubr.bf16.gmra.mxu0 %v7224
    %v9610 = vpop.f32.mrf.mxu0
    %v9611 = vadd.f32 %v7521, %v9610
    %v9612 = vpop.f32.mrf.mxu0
    %v9613 = vadd.f32 %v7525, %v9612
    %v9614 = vpop.f32.mrf.mxu0
    %v9615 = vadd.f32 %v7521, %v9614
    %v9616 = vpop.f32.mrf.mxu0
    %v9617 = vadd.f32 %v7525, %v9616
    %9618 = vmatprep.mubr.bf16.mxu0 %v7229
    %9619 = vmatmul.mubr.bf16.gmra.mxu0 %v7228
    %v9620 = vpop.f32.mrf.mxu0
    %v9621 = vadd.f32 %v7521, %v9620
    %v9622 = vpop.f32.mrf.mxu0
    %v9623 = vadd.f32 %v7525, %v9622
    %v9624 = vpop.f32.mrf.mxu0
    %v9625 = vadd.f32 %v7521, %v9624
    %v9626 = vpop.f32.mrf.mxu0
    %v9627 = vadd.f32 %v7525, %v9626
    %9628 = vmatprep.mubr.bf16.mxu0 %v7233
    %9629 = vmatmul.mubr.bf16.gmra.mxu0 %v7232
    %v9630 = vpop.f32.mrf.mxu0
    %v9631 = vadd.f32 %v7521, %v9630
    %v9632 = vpop.f32.mrf.mxu0
    %v9633 = vadd.f32 %v7525, %v9632
    %v9634 = vpop.f32.mrf.mxu0
    %v9635 = vadd.f32 %v7521, %v9634
    %v9636 = vpop.f32.mrf.mxu0
    %v9637 = vadd.f32 %v7525, %v9636
    %9638 = vmatprep.mubr.bf16.mxu0 %v7237
    %9639 = vmatmul.mubr.bf16.gmra.mxu0 %v7236
    %v9640 = vpop.f32.mrf.mxu0
    %v9641 = vadd.f32 %v7521, %v9640
    %v9642 = vpop.f32.mrf.mxu0
    %v9643 = vadd.f32 %v7525, %v9642
    %v9644 = vpop.f32.mrf.mxu0
    %v9645 = vadd.f32 %v7521, %v9644
    %v9646 = vpop.f32.mrf.mxu0
    %v9647 = vadd.f32 %v7525, %v9646
    %9648 = vmatprep.mubr.bf16.mxu0 %v7241
    %9649 = vmatmul.mubr.bf16.gmra.mxu0 %v7240
    %v9650 = vpop.f32.mrf.mxu0
    %v9651 = vadd.f32 %v7521, %v9650
    %v9652 = vpop.f32.mrf.mxu0
    %v9653 = vadd.f32 %v7525, %v9652
    %v9654 = vpop.f32.mrf.mxu0
    %v9655 = vadd.f32 %v7521, %v9654
    %v9656 = vpop.f32.mrf.mxu0
    %v9657 = vadd.f32 %v7525, %v9656
    %9658 = vmatprep.mubr.bf16.mxu0 %v7245
    %9659 = vmatmul.mubr.bf16.gmra.mxu0 %v7244
    %v9660 = vpop.f32.mrf.mxu0
    %v9661 = vadd.f32 %v7521, %v9660
    %v9662 = vpop.f32.mrf.mxu0
    %v9663 = vadd.f32 %v7525, %v9662
    %v9664 = vpop.f32.mrf.mxu0
    %v9665 = vadd.f32 %v7521, %v9664
    %v9666 = vpop.f32.mrf.mxu0
    %v9667 = vadd.f32 %v7525, %v9666
    %9668 = vmatprep.mubr.bf16.mxu0 %v7249
    %9669 = vmatmul.mubr.bf16.gmra.mxu0 %v7248
    %v9670 = vpop.f32.mrf.mxu0
    %v9671 = vadd.f32 %v7521, %v9670
    %v9672 = vpop.f32.mrf.mxu0
    %v9673 = vadd.f32 %v7525, %v9672
    %v9674 = vpop.f32.mrf.mxu0
    %v9675 = vadd.f32 %v7521, %v9674
    %v9676 = vpop.f32.mrf.mxu0
    %v9677 = vadd.f32 %v7525, %v9676
    %9678 = vdwg.mxu0
    %9679 = vmatprep.subr.bf16.mxu0 %v8505
    %9680 = vmatpush1.bf16.msra.mxu0 %v8504
    %9681 = vmatprep.subr.bf16.mxu0 %v8497
    %9682 = vmatpush1.bf16.msra.mxu0 %v8496
    %9683 = vmatprep.subr.bf16.mxu0 %v8489
    %9684 = vmatpush1.bf16.msra.mxu0 %v8488
    %9685 = vmatprep.subr.bf16.mxu0 %v8481
    %9686 = vmatpush1.bf16.msra.mxu0 %v8480
    %9687 = vmatprep.subr.bf16.mxu0 %v8473
    %9688 = vmatpush1.bf16.msra.mxu0 %v8472
    %9689 = vmatprep.subr.bf16.mxu0 %v8465
    %9690 = vmatpush1.bf16.msra.mxu0 %v8464
    %9691 = vmatprep.subr.bf16.mxu0 %v8457
    %9692 = vmatpush1.bf16.msra.mxu0 %v8456
    %9693 = vmatprep.subr.bf16.mxu0 %v8449
    %9694 = vmatpush1.bf16.msra.mxu0 %v8448
    %9695 = vmatprep.subr.bf16.mxu0 %v8569
    %9696 = vmatpush2.bf16.msra.mxu0 %v8568
    %9697 = vmatprep.subr.bf16.mxu0 %v8561
    %9698 = vmatpush2.bf16.msra.mxu0 %v8560
    %9699 = vmatprep.subr.bf16.mxu0 %v8553
    %9700 = vmatpush2.bf16.msra.mxu0 %v8552
    %9701 = vmatprep.subr.bf16.mxu0 %v8545
    %9702 = vmatpush2.bf16.msra.mxu0 %v8544
    %9703 = vmatprep.subr.bf16.mxu0 %v8537
    %9704 = vmatpush2.bf16.msra.mxu0 %v8536
    %9705 = vmatprep.subr.bf16.mxu0 %v8529
    %9706 = vmatpush2.bf16.msra.mxu0 %v8528
    %9707 = vmatprep.subr.bf16.mxu0 %v8521
    %9708 = vmatpush2.bf16.msra.mxu0 %v8520
    %9709 = vmatprep.subr.bf16.mxu0 %v8513
    %9710 = vmatpush2.bf16.msra.mxu0 %v8512
    %9711 = vmatprep.mubr.bf16.mxu0 %v7155
    %9712 = vmatmul.mubr.bf16.gmra.mxu0 %v7154
    %v9713 = vpop.f32.mrf.mxu0
    %v9714 = vadd.f32 %v9431, %v9713
    %v9715 = vpop.f32.mrf.mxu0
    %v9716 = vadd.f32 %v9433, %v9715
    %v9717 = vpop.f32.mrf.mxu0
    %v9718 = vadd.f32 %v9435, %v9717
    %v9719 = vpop.f32.mrf.mxu0
    %v9720 = vadd.f32 %v9437, %v9719
    %9721 = vmatprep.mubr.bf16.mxu0 %v7159
    %9722 = vmatmul.mubr.bf16.gmra.mxu0 %v7158
    %v9723 = vpop.f32.mrf.mxu0
    %v9724 = vadd.f32 %v9441, %v9723
    %v9725 = vpop.f32.mrf.mxu0
    %v9726 = vadd.f32 %v9443, %v9725
    %v9727 = vpop.f32.mrf.mxu0
    %v9728 = vadd.f32 %v9445, %v9727
    %v9729 = vpop.f32.mrf.mxu0
    %v9730 = vadd.f32 %v9447, %v9729
    %9731 = vmatprep.mubr.bf16.mxu0 %v7163
    %9732 = vmatmul.mubr.bf16.gmra.mxu0 %v7162
    %v9733 = vpop.f32.mrf.mxu0
    %v9734 = vadd.f32 %v9451, %v9733
    %v9735 = vpop.f32.mrf.mxu0
    %v9736 = vadd.f32 %v9453, %v9735
    %v9737 = vpop.f32.mrf.mxu0
    %v9738 = vadd.f32 %v9455, %v9737
    %v9739 = vpop.f32.mrf.mxu0
    %v9740 = vadd.f32 %v9457, %v9739
    %9741 = vmatprep.mubr.bf16.mxu0 %v7167
    %9742 = vmatmul.mubr.bf16.gmra.mxu0 %v7166
    %v9743 = vpop.f32.mrf.mxu0
    %v9744 = vadd.f32 %v9461, %v9743
    %v9745 = vpop.f32.mrf.mxu0
    %v9746 = vadd.f32 %v9463, %v9745
    %v9747 = vpop.f32.mrf.mxu0
    %v9748 = vadd.f32 %v9465, %v9747
    %v9749 = vpop.f32.mrf.mxu0
    %v9750 = vadd.f32 %v9467, %v9749
    %9751 = vmatprep.mubr.bf16.mxu0 %v7171
    %9752 = vmatmul.mubr.bf16.gmra.mxu0 %v7170
    %v9753 = vpop.f32.mrf.mxu0
    %v9754 = vadd.f32 %v9471, %v9753
    %v9755 = vpop.f32.mrf.mxu0
    %v9756 = vadd.f32 %v9473, %v9755
    %v9757 = vpop.f32.mrf.mxu0
    %v9758 = vadd.f32 %v9475, %v9757
    %v9759 = vpop.f32.mrf.mxu0
    %v9760 = vadd.f32 %v9477, %v9759
    %9761 = vmatprep.mubr.bf16.mxu0 %v7175
    %9762 = vmatmul.mubr.bf16.gmra.mxu0 %v7174
    %v9763 = vpop.f32.mrf.mxu0
    %v9764 = vadd.f32 %v9481, %v9763
    %v9765 = vpop.f32.mrf.mxu0
    %v9766 = vadd.f32 %v9483, %v9765
    %v9767 = vpop.f32.mrf.mxu0
    %v9768 = vadd.f32 %v9485, %v9767
    %v9769 = vpop.f32.mrf.mxu0
    %v9770 = vadd.f32 %v9487, %v9769
    %9771 = vmatprep.mubr.bf16.mxu0 %v7179
    %9772 = vmatmul.mubr.bf16.gmra.mxu0 %v7178
    %v9773 = vpop.f32.mrf.mxu0
    %v9774 = vadd.f32 %v9491, %v9773
    %v9775 = vpop.f32.mrf.mxu0
    %v9776 = vadd.f32 %v9493, %v9775
    %v9777 = vpop.f32.mrf.mxu0
    %v9778 = vadd.f32 %v9495, %v9777
    %v9779 = vpop.f32.mrf.mxu0
    %v9780 = vadd.f32 %v9497, %v9779
    %9781 = vmatprep.mubr.bf16.mxu0 %v7183
    %9782 = vmatmul.mubr.bf16.gmra.mxu0 %v7182
    %v9783 = vpop.f32.mrf.mxu0
    %v9784 = vadd.f32 %v9501, %v9783
    %v9785 = vpop.f32.mrf.mxu0
    %v9786 = vadd.f32 %v9503, %v9785
    %v9787 = vpop.f32.mrf.mxu0
    %v9788 = vadd.f32 %v9505, %v9787
    %v9789 = vpop.f32.mrf.mxu0
    %v9790 = vadd.f32 %v9507, %v9789
    %9791 = vmatprep.mubr.bf16.mxu0 %v7187
    %9792 = vmatmul.mubr.bf16.gmra.mxu0 %v7186
    %v9793 = vpop.f32.mrf.mxu0
    %v9794 = vadd.f32 %v9511, %v9793
    %v9795 = vpop.f32.mrf.mxu0
    %v9796 = vadd.f32 %v9513, %v9795
    %v9797 = vpop.f32.mrf.mxu0
    %v9798 = vadd.f32 %v9515, %v9797
    %v9799 = vpop.f32.mrf.mxu0
    %v9800 = vadd.f32 %v9517, %v9799
    %9801 = vmatprep.mubr.bf16.mxu0 %v7191
    %9802 = vmatmul.mubr.bf16.gmra.mxu0 %v7190
    %v9803 = vpop.f32.mrf.mxu0
    %v9804 = vadd.f32 %v9521, %v9803
    %v9805 = vpop.f32.mrf.mxu0
    %v9806 = vadd.f32 %v9523, %v9805
    %v9807 = vpop.f32.mrf.mxu0
    %v9808 = vadd.f32 %v9525, %v9807
    %v9809 = vpop.f32.mrf.mxu0
    %v9810 = vadd.f32 %v9527, %v9809
    %9811 = vmatprep.mubr.bf16.mxu0 %v7195
    %9812 = vmatmul.mubr.bf16.gmra.mxu0 %v7194
    %v9813 = vpop.f32.mrf.mxu0
    %v9814 = vadd.f32 %v9531, %v9813
    %v9815 = vpop.f32.mrf.mxu0
    %v9816 = vadd.f32 %v9533, %v9815
    %v9817 = vpop.f32.mrf.mxu0
    %v9818 = vadd.f32 %v9535, %v9817
    %v9819 = vpop.f32.mrf.mxu0
    %v9820 = vadd.f32 %v9537, %v9819
    %9821 = vmatprep.mubr.bf16.mxu0 %v7199
    %9822 = vmatmul.mubr.bf16.gmra.mxu0 %v7198
    %v9823 = vpop.f32.mrf.mxu0
    %v9824 = vadd.f32 %v9541, %v9823
    %v9825 = vpop.f32.mrf.mxu0
    %v9826 = vadd.f32 %v9543, %v9825
    %v9827 = vpop.f32.mrf.mxu0
    %v9828 = vadd.f32 %v9545, %v9827
    %v9829 = vpop.f32.mrf.mxu0
    %v9830 = vadd.f32 %v9547, %v9829
    %9831 = vmatprep.mubr.bf16.mxu0 %v7203
    %9832 = vmatmul.mubr.bf16.gmra.mxu0 %v7202
    %v9833 = vpop.f32.mrf.mxu0
    %v9834 = vadd.f32 %v9551, %v9833
    %v9835 = vpop.f32.mrf.mxu0
    %v9836 = vadd.f32 %v9553, %v9835
    %v9837 = vpop.f32.mrf.mxu0
    %v9838 = vadd.f32 %v9555, %v9837
    %v9839 = vpop.f32.mrf.mxu0
    %v9840 = vadd.f32 %v9557, %v9839
    %9841 = vmatprep.mubr.bf16.mxu0 %v7207
    %9842 = vmatmul.mubr.bf16.gmra.mxu0 %v7206
    %v9843 = vpop.f32.mrf.mxu0
    %v9844 = vadd.f32 %v9561, %v9843
    %v9845 = vpop.f32.mrf.mxu0
    %v9846 = vadd.f32 %v9563, %v9845
    %v9847 = vpop.f32.mrf.mxu0
    %v9848 = vadd.f32 %v9565, %v9847
    %v9849 = vpop.f32.mrf.mxu0
    %v9850 = vadd.f32 %v9567, %v9849
    %9851 = vmatprep.mubr.bf16.mxu0 %v7211
    %9852 = vmatmul.mubr.bf16.gmra.mxu0 %v7210
    %v9853 = vpop.f32.mrf.mxu0
    %v9854 = vadd.f32 %v9571, %v9853
    %v9855 = vpop.f32.mrf.mxu0
    %v9856 = vadd.f32 %v9573, %v9855
    %v9857 = vpop.f32.mrf.mxu0
    %v9858 = vadd.f32 %v9575, %v9857
    %v9859 = vpop.f32.mrf.mxu0
    %v9860 = vadd.f32 %v9577, %v9859
    %9861 = vmatprep.mubr.bf16.mxu0 %v7215
    %9862 = vmatmul.mubr.bf16.gmra.mxu0 %v7214
    %v9863 = vpop.f32.mrf.mxu0
    %v9864 = vadd.f32 %v9581, %v9863
    %v9865 = vpop.f32.mrf.mxu0
    %v9866 = vadd.f32 %v9583, %v9865
    %v9867 = vpop.f32.mrf.mxu0
    %v9868 = vadd.f32 %v9585, %v9867
    %v9869 = vpop.f32.mrf.mxu0
    %v9870 = vadd.f32 %v9587, %v9869
    %9871 = vmatprep.mubr.bf16.mxu0 %v7219
    %9872 = vmatmul.mubr.bf16.gmra.mxu0 %v7218
    %v9873 = vpop.f32.mrf.mxu0
    %v9874 = vadd.f32 %v9591, %v9873
    %v9875 = vpop.f32.mrf.mxu0
    %v9876 = vadd.f32 %v9593, %v9875
    %v9877 = vpop.f32.mrf.mxu0
    %v9878 = vadd.f32 %v9595, %v9877
    %v9879 = vpop.f32.mrf.mxu0
    %v9880 = vadd.f32 %v9597, %v9879
    %9881 = vmatprep.mubr.bf16.mxu0 %v7223
    %9882 = vmatmul.mubr.bf16.gmra.mxu0 %v7222
    %v9883 = vpop.f32.mrf.mxu0
    %v9884 = vadd.f32 %v9601, %v9883
    %v9885 = vpop.f32.mrf.mxu0
    %v9886 = vadd.f32 %v9603, %v9885
    %v9887 = vpop.f32.mrf.mxu0
    %v9888 = vadd.f32 %v9605, %v9887
    %v9889 = vpop.f32.mrf.mxu0
    %v9890 = vadd.f32 %v9607, %v9889
    %9891 = vmatprep.mubr.bf16.mxu0 %v7227
    %9892 = vmatmul.mubr.bf16.gmra.mxu0 %v7226
    %v9893 = vpop.f32.mrf.mxu0
    %v9894 = vadd.f32 %v9611, %v9893
    %v9895 = vpop.f32.mrf.mxu0
    %v9896 = vadd.f32 %v9613, %v9895
    %v9897 = vpop.f32.mrf.mxu0
    %v9898 = vadd.f32 %v9615, %v9897
    %v9899 = vpop.f32.mrf.mxu0
    %v9900 = vadd.f32 %v9617, %v9899
    %9901 = vmatprep.mubr.bf16.mxu0 %v7231
    %9902 = vmatmul.mubr.bf16.gmra.mxu0 %v7230
    %v9903 = vpop.f32.mrf.mxu0
    %v9904 = vadd.f32 %v9621, %v9903
    %v9905 = vpop.f32.mrf.mxu0
    %v9906 = vadd.f32 %v9623, %v9905
    %v9907 = vpop.f32.mrf.mxu0
    %v9908 = vadd.f32 %v9625, %v9907
    %v9909 = vpop.f32.mrf.mxu0
    %v9910 = vadd.f32 %v9627, %v9909
    %9911 = vmatprep.mubr.bf16.mxu0 %v7235
    %9912 = vmatmul.mubr.bf16.gmra.mxu0 %v7234
    %v9913 = vpop.f32.mrf.mxu0
    %v9914 = vadd.f32 %v9631, %v9913
    %v9915 = vpop.f32.mrf.mxu0
    %v9916 = vadd.f32 %v9633, %v9915
    %v9917 = vpop.f32.mrf.mxu0
    %v9918 = vadd.f32 %v9635, %v9917
    %v9919 = vpop.f32.mrf.mxu0
    %v9920 = vadd.f32 %v9637, %v9919
    %9921 = vmatprep.mubr.bf16.mxu0 %v7239
    %9922 = vmatmul.mubr.bf16.gmra.mxu0 %v7238
    %v9923 = vpop.f32.mrf.mxu0
    %v9924 = vadd.f32 %v9641, %v9923
    %v9925 = vpop.f32.mrf.mxu0
    %v9926 = vadd.f32 %v9643, %v9925
    %v9927 = vpop.f32.mrf.mxu0
    %v9928 = vadd.f32 %v9645, %v9927
    %v9929 = vpop.f32.mrf.mxu0
    %v9930 = vadd.f32 %v9647, %v9929
    %9931 = vmatprep.mubr.bf16.mxu0 %v7243
    %9932 = vmatmul.mubr.bf16.gmra.mxu0 %v7242
    %v9933 = vpop.f32.mrf.mxu0
    %v9934 = vadd.f32 %v9651, %v9933
    %v9935 = vpop.f32.mrf.mxu0
    %v9936 = vadd.f32 %v9653, %v9935
    %v9937 = vpop.f32.mrf.mxu0
    %v9938 = vadd.f32 %v9655, %v9937
    %v9939 = vpop.f32.mrf.mxu0
    %v9940 = vadd.f32 %v9657, %v9939
    %9941 = vmatprep.mubr.bf16.mxu0 %v7247
    %9942 = vmatmul.mubr.bf16.gmra.mxu0 %v7246
    %v9943 = vpop.f32.mrf.mxu0
    %v9944 = vadd.f32 %v9661, %v9943
    %v9945 = vpop.f32.mrf.mxu0
    %v9946 = vadd.f32 %v9663, %v9945
    %v9947 = vpop.f32.mrf.mxu0
    %v9948 = vadd.f32 %v9665, %v9947
    %v9949 = vpop.f32.mrf.mxu0
    %v9950 = vadd.f32 %v9667, %v9949
    %9951 = vmatprep.mubr.bf16.mxu0 %v7251
    %9952 = vmatmul.mubr.bf16.gmra.mxu0 %v7250
    %v9953 = vpop.f32.mrf.mxu0
    %v9954 = vadd.f32 %v9671, %v9953
    %v9955 = vpop.f32.mrf.mxu0
    %v9956 = vadd.f32 %v9673, %v9955
    %v9957 = vpop.f32.mrf.mxu0
    %v9958 = vadd.f32 %v9675, %v9957
    %v9959 = vpop.f32.mrf.mxu0
    %v9960 = vadd.f32 %v9677, %v9959
    %9961 = vdwg.mxu0
    %9962 = vmatprep.subr.bf16.mxu0 %v8379
    %9963 = vmatpush1.bf16.msra.mxu0 %v8378
    %9964 = vmatprep.subr.bf16.mxu0 %v8371
    %9965 = vmatpush1.bf16.msra.mxu0 %v8370
    %9966 = vmatprep.subr.bf16.mxu0 %v8363
    %9967 = vmatpush1.bf16.msra.mxu0 %v8362
    %9968 = vmatprep.subr.bf16.mxu0 %v8355
    %9969 = vmatpush1.bf16.msra.mxu0 %v8354
    %9970 = vmatprep.subr.bf16.mxu0 %v8347
    %9971 = vmatpush1.bf16.msra.mxu0 %v8346
    %9972 = vmatprep.subr.bf16.mxu0 %v8339
    %9973 = vmatpush1.bf16.msra.mxu0 %v8338
    %9974 = vmatprep.subr.bf16.mxu0 %v8331
    %9975 = vmatpush1.bf16.msra.mxu0 %v8330
    %9976 = vmatprep.subr.bf16.mxu0 %v8323
    %9977 = vmatpush1.bf16.msra.mxu0 %v8322
    %9978 = vmatprep.subr.bf16.mxu0 %v8443
    %9979 = vmatpush2.bf16.msra.mxu0 %v8442
    %9980 = vmatprep.subr.bf16.mxu0 %v8435
    %9981 = vmatpush2.bf16.msra.mxu0 %v8434
    %9982 = vmatprep.subr.bf16.mxu0 %v8427
    %9983 = vmatpush2.bf16.msra.mxu0 %v8426
    %9984 = vmatprep.subr.bf16.mxu0 %v8419
    %9985 = vmatpush2.bf16.msra.mxu0 %v8418
    %9986 = vmatprep.subr.bf16.mxu0 %v8411
    %9987 = vmatpush2.bf16.msra.mxu0 %v8410
    %9988 = vmatprep.subr.bf16.mxu0 %v8403
    %9989 = vmatpush2.bf16.msra.mxu0 %v8402
    %9990 = vmatprep.subr.bf16.mxu0 %v8395
    %9991 = vmatpush2.bf16.msra.mxu0 %v8394
    %9992 = vmatprep.subr.bf16.mxu0 %v8387
    %9993 = vmatpush2.bf16.msra.mxu0 %v8386
    %9994 = vmatprep.mubr.bf16.mxu0 %v7153
    %9995 = vmatmul.mubr.bf16.gmra.mxu0 %v7152
    %v9996 = vpop.f32.mrf.mxu0
    %v9997 = vadd.f32 %v7529, %v9996
    %v9998 = vpop.f32.mrf.mxu0
    %v9999 = vadd.f32 %v7533, %v9998
    %v10000 = vpop.f32.mrf.mxu0
    %v10001 = vadd.f32 %v7529, %v10000
    %v10002 = vpop.f32.mrf.mxu0
    %v10003 = vadd.f32 %v7533, %v10002
    %10004 = vmatprep.mubr.bf16.mxu0 %v7157
    %10005 = vmatmul.mubr.bf16.gmra.mxu0 %v7156
    %v10006 = vpop.f32.mrf.mxu0
    %v10007 = vadd.f32 %v7529, %v10006
    %v10008 = vpop.f32.mrf.mxu0
    %v10009 = vadd.f32 %v7533, %v10008
    %v10010 = vpop.f32.mrf.mxu0
    %v10011 = vadd.f32 %v7529, %v10010
    %v10012 = vpop.f32.mrf.mxu0
    %v10013 = vadd.f32 %v7533, %v10012
    %10014 = vmatprep.mubr.bf16.mxu0 %v7161
    %10015 = vmatmul.mubr.bf16.gmra.mxu0 %v7160
    %v10016 = vpop.f32.mrf.mxu0
    %v10017 = vadd.f32 %v7529, %v10016
    %v10018 = vpop.f32.mrf.mxu0
    %v10019 = vadd.f32 %v7533, %v10018
    %v10020 = vpop.f32.mrf.mxu0
    %v10021 = vadd.f32 %v7529, %v10020
    %v10022 = vpop.f32.mrf.mxu0
    %v10023 = vadd.f32 %v7533, %v10022
    %10024 = vmatprep.mubr.bf16.mxu0 %v7165
    %10025 = vmatmul.mubr.bf16.gmra.mxu0 %v7164
    %v10026 = vpop.f32.mrf.mxu0
    %v10027 = vadd.f32 %v7529, %v10026
    %v10028 = vpop.f32.mrf.mxu0
    %v10029 = vadd.f32 %v7533, %v10028
    %v10030 = vpop.f32.mrf.mxu0
    %v10031 = vadd.f32 %v7529, %v10030
    %v10032 = vpop.f32.mrf.mxu0
    %v10033 = vadd.f32 %v7533, %v10032
    %10034 = vmatprep.mubr.bf16.mxu0 %v7169
    %10035 = vmatmul.mubr.bf16.gmra.mxu0 %v7168
    %v10036 = vpop.f32.mrf.mxu0
    %v10037 = vadd.f32 %v7529, %v10036
    %v10038 = vpop.f32.mrf.mxu0
    %v10039 = vadd.f32 %v7533, %v10038
    %v10040 = vpop.f32.mrf.mxu0
    %v10041 = vadd.f32 %v7529, %v10040
    %v10042 = vpop.f32.mrf.mxu0
    %v10043 = vadd.f32 %v7533, %v10042
    %10044 = vmatprep.mubr.bf16.mxu0 %v7173
    %10045 = vmatmul.mubr.bf16.gmra.mxu0 %v7172
    %v10046 = vpop.f32.mrf.mxu0
    %v10047 = vadd.f32 %v7529, %v10046
    %v10048 = vpop.f32.mrf.mxu0
    %v10049 = vadd.f32 %v7533, %v10048
    %v10050 = vpop.f32.mrf.mxu0
    %v10051 = vadd.f32 %v7529, %v10050
    %v10052 = vpop.f32.mrf.mxu0
    %v10053 = vadd.f32 %v7533, %v10052
    %10054 = vmatprep.mubr.bf16.mxu0 %v7177
    %10055 = vmatmul.mubr.bf16.gmra.mxu0 %v7176
    %v10056 = vpop.f32.mrf.mxu0
    %v10057 = vadd.f32 %v7529, %v10056
    %v10058 = vpop.f32.mrf.mxu0
    %v10059 = vadd.f32 %v7533, %v10058
    %v10060 = vpop.f32.mrf.mxu0
    %v10061 = vadd.f32 %v7529, %v10060
    %v10062 = vpop.f32.mrf.mxu0
    %v10063 = vadd.f32 %v7533, %v10062
    %10064 = vmatprep.mubr.bf16.mxu0 %v7181
    %10065 = vmatmul.mubr.bf16.gmra.mxu0 %v7180
    %v10066 = vpop.f32.mrf.mxu0
    %v10067 = vadd.f32 %v7529, %v10066
    %v10068 = vpop.f32.mrf.mxu0
    %v10069 = vadd.f32 %v7533, %v10068
    %v10070 = vpop.f32.mrf.mxu0
    %v10071 = vadd.f32 %v7529, %v10070
    %v10072 = vpop.f32.mrf.mxu0
    %v10073 = vadd.f32 %v7533, %v10072
    %10074 = vmatprep.mubr.bf16.mxu0 %v7185
    %10075 = vmatmul.mubr.bf16.gmra.mxu0 %v7184
    %v10076 = vpop.f32.mrf.mxu0
    %v10077 = vadd.f32 %v7529, %v10076
    %v10078 = vpop.f32.mrf.mxu0
    %v10079 = vadd.f32 %v7533, %v10078
    %v10080 = vpop.f32.mrf.mxu0
    %v10081 = vadd.f32 %v7529, %v10080
    %v10082 = vpop.f32.mrf.mxu0
    %v10083 = vadd.f32 %v7533, %v10082
    %10084 = vmatprep.mubr.bf16.mxu0 %v7189
    %10085 = vmatmul.mubr.bf16.gmra.mxu0 %v7188
    %v10086 = vpop.f32.mrf.mxu0
    %v10087 = vadd.f32 %v7529, %v10086
    %v10088 = vpop.f32.mrf.mxu0
    %v10089 = vadd.f32 %v7533, %v10088
    %v10090 = vpop.f32.mrf.mxu0
    %v10091 = vadd.f32 %v7529, %v10090
    %v10092 = vpop.f32.mrf.mxu0
    %v10093 = vadd.f32 %v7533, %v10092
    %10094 = vmatprep.mubr.bf16.mxu0 %v7193
    %10095 = vmatmul.mubr.bf16.gmra.mxu0 %v7192
    %v10096 = vpop.f32.mrf.mxu0
    %v10097 = vadd.f32 %v7529, %v10096
    %v10098 = vpop.f32.mrf.mxu0
    %v10099 = vadd.f32 %v7533, %v10098
    %v10100 = vpop.f32.mrf.mxu0
    %v10101 = vadd.f32 %v7529, %v10100
    %v10102 = vpop.f32.mrf.mxu0
    %v10103 = vadd.f32 %v7533, %v10102
    %10104 = vmatprep.mubr.bf16.mxu0 %v7197
    %10105 = vmatmul.mubr.bf16.gmra.mxu0 %v7196
    %v10106 = vpop.f32.mrf.mxu0
    %v10107 = vadd.f32 %v7529, %v10106
    %v10108 = vpop.f32.mrf.mxu0
    %v10109 = vadd.f32 %v7533, %v10108
    %v10110 = vpop.f32.mrf.mxu0
    %v10111 = vadd.f32 %v7529, %v10110
    %v10112 = vpop.f32.mrf.mxu0
    %v10113 = vadd.f32 %v7533, %v10112
    %10114 = vmatprep.mubr.bf16.mxu0 %v7201
    %10115 = vmatmul.mubr.bf16.gmra.mxu0 %v7200
    %v10116 = vpop.f32.mrf.mxu0
    %v10117 = vadd.f32 %v7529, %v10116
    %v10118 = vpop.f32.mrf.mxu0
    %v10119 = vadd.f32 %v7533, %v10118
    %v10120 = vpop.f32.mrf.mxu0
    %v10121 = vadd.f32 %v7529, %v10120
    %v10122 = vpop.f32.mrf.mxu0
    %v10123 = vadd.f32 %v7533, %v10122
    %10124 = vmatprep.mubr.bf16.mxu0 %v7205
    %10125 = vmatmul.mubr.bf16.gmra.mxu0 %v7204
    %v10126 = vpop.f32.mrf.mxu0
    %v10127 = vadd.f32 %v7529, %v10126
    %v10128 = vpop.f32.mrf.mxu0
    %v10129 = vadd.f32 %v7533, %v10128
    %v10130 = vpop.f32.mrf.mxu0
    %v10131 = vadd.f32 %v7529, %v10130
    %v10132 = vpop.f32.mrf.mxu0
    %v10133 = vadd.f32 %v7533, %v10132
    %10134 = vmatprep.mubr.bf16.mxu0 %v7209
    %10135 = vmatmul.mubr.bf16.gmra.mxu0 %v7208
    %v10136 = vpop.f32.mrf.mxu0
    %v10137 = vadd.f32 %v7529, %v10136
    %v10138 = vpop.f32.mrf.mxu0
    %v10139 = vadd.f32 %v7533, %v10138
    %v10140 = vpop.f32.mrf.mxu0
    %v10141 = vadd.f32 %v7529, %v10140
    %v10142 = vpop.f32.mrf.mxu0
    %v10143 = vadd.f32 %v7533, %v10142
    %10144 = vmatprep.mubr.bf16.mxu0 %v7213
    %10145 = vmatmul.mubr.bf16.gmra.mxu0 %v7212
    %v10146 = vpop.f32.mrf.mxu0
    %v10147 = vadd.f32 %v7529, %v10146
    %v10148 = vpop.f32.mrf.mxu0
    %v10149 = vadd.f32 %v7533, %v10148
    %v10150 = vpop.f32.mrf.mxu0
    %v10151 = vadd.f32 %v7529, %v10150
    %v10152 = vpop.f32.mrf.mxu0
    %v10153 = vadd.f32 %v7533, %v10152
    %10154 = vmatprep.mubr.bf16.mxu0 %v7217
    %10155 = vmatmul.mubr.bf16.gmra.mxu0 %v7216
    %v10156 = vpop.f32.mrf.mxu0
    %v10157 = vadd.f32 %v7529, %v10156
    %v10158 = vpop.f32.mrf.mxu0
    %v10159 = vadd.f32 %v7533, %v10158
    %v10160 = vpop.f32.mrf.mxu0
    %v10161 = vadd.f32 %v7529, %v10160
    %v10162 = vpop.f32.mrf.mxu0
    %v10163 = vadd.f32 %v7533, %v10162
    %10164 = vmatprep.mubr.bf16.mxu0 %v7221
    %10165 = vmatmul.mubr.bf16.gmra.mxu0 %v7220
    %v10166 = vpop.f32.mrf.mxu0
    %v10167 = vadd.f32 %v7529, %v10166
    %v10168 = vpop.f32.mrf.mxu0
    %v10169 = vadd.f32 %v7533, %v10168
    %v10170 = vpop.f32.mrf.mxu0
    %v10171 = vadd.f32 %v7529, %v10170
    %v10172 = vpop.f32.mrf.mxu0
    %v10173 = vadd.f32 %v7533, %v10172
    %10174 = vmatprep.mubr.bf16.mxu0 %v7225
    %10175 = vmatmul.mubr.bf16.gmra.mxu0 %v7224
    %v10176 = vpop.f32.mrf.mxu0
    %v10177 = vadd.f32 %v7529, %v10176
    %v10178 = vpop.f32.mrf.mxu0
    %v10179 = vadd.f32 %v7533, %v10178
    %v10180 = vpop.f32.mrf.mxu0
    %v10181 = vadd.f32 %v7529, %v10180
    %v10182 = vpop.f32.mrf.mxu0
    %v10183 = vadd.f32 %v7533, %v10182
    %10184 = vmatprep.mubr.bf16.mxu0 %v7229
    %10185 = vmatmul.mubr.bf16.gmra.mxu0 %v7228
    %v10186 = vpop.f32.mrf.mxu0
    %v10187 = vadd.f32 %v7529, %v10186
    %v10188 = vpop.f32.mrf.mxu0
    %v10189 = vadd.f32 %v7533, %v10188
    %v10190 = vpop.f32.mrf.mxu0
    %v10191 = vadd.f32 %v7529, %v10190
    %v10192 = vpop.f32.mrf.mxu0
    %v10193 = vadd.f32 %v7533, %v10192
    %10194 = vmatprep.mubr.bf16.mxu0 %v7233
    %10195 = vmatmul.mubr.bf16.gmra.mxu0 %v7232
    %v10196 = vpop.f32.mrf.mxu0
    %v10197 = vadd.f32 %v7529, %v10196
    %v10198 = vpop.f32.mrf.mxu0
    %v10199 = vadd.f32 %v7533, %v10198
    %v10200 = vpop.f32.mrf.mxu0
    %v10201 = vadd.f32 %v7529, %v10200
    %v10202 = vpop.f32.mrf.mxu0
    %v10203 = vadd.f32 %v7533, %v10202
    %10204 = vmatprep.mubr.bf16.mxu0 %v7237
    %10205 = vmatmul.mubr.bf16.gmra.mxu0 %v7236
    %v10206 = vpop.f32.mrf.mxu0
    %v10207 = vadd.f32 %v7529, %v10206
    %v10208 = vpop.f32.mrf.mxu0
    %v10209 = vadd.f32 %v7533, %v10208
    %v10210 = vpop.f32.mrf.mxu0
    %v10211 = vadd.f32 %v7529, %v10210
    %v10212 = vpop.f32.mrf.mxu0
    %v10213 = vadd.f32 %v7533, %v10212
    %10214 = vmatprep.mubr.bf16.mxu0 %v7241
    %10215 = vmatmul.mubr.bf16.gmra.mxu0 %v7240
    %v10216 = vpop.f32.mrf.mxu0
    %v10217 = vadd.f32 %v7529, %v10216
    %v10218 = vpop.f32.mrf.mxu0
    %v10219 = vadd.f32 %v7533, %v10218
    %v10220 = vpop.f32.mrf.mxu0
    %v10221 = vadd.f32 %v7529, %v10220
    %v10222 = vpop.f32.mrf.mxu0
    %v10223 = vadd.f32 %v7533, %v10222
    %10224 = vmatprep.mubr.bf16.mxu0 %v7245
    %10225 = vmatmul.mubr.bf16.gmra.mxu0 %v7244
    %v10226 = vpop.f32.mrf.mxu0
    %v10227 = vadd.f32 %v7529, %v10226
    %v10228 = vpop.f32.mrf.mxu0
    %v10229 = vadd.f32 %v7533, %v10228
    %v10230 = vpop.f32.mrf.mxu0
    %v10231 = vadd.f32 %v7529, %v10230
    %v10232 = vpop.f32.mrf.mxu0
    %v10233 = vadd.f32 %v7533, %v10232
    %10234 = vmatprep.mubr.bf16.mxu0 %v7249
    %10235 = vmatmul.mubr.bf16.gmra.mxu0 %v7248
    %v10236 = vpop.f32.mrf.mxu0
    %v10237 = vadd.f32 %v7529, %v10236
    %v10238 = vpop.f32.mrf.mxu0
    %v10239 = vadd.f32 %v7533, %v10238
    %v10240 = vpop.f32.mrf.mxu0
    %v10241 = vadd.f32 %v7529, %v10240
    %v10242 = vpop.f32.mrf.mxu0
    %v10243 = vadd.f32 %v7533, %v10242
    %10244 = vdwg.mxu0
    %10245 = vmatprep.subr.bf16.mxu0 %v8507
    %10246 = vmatpush1.bf16.msra.mxu0 %v8506
    %10247 = vmatprep.subr.bf16.mxu0 %v8499
    %10248 = vmatpush1.bf16.msra.mxu0 %v8498
    %10249 = vmatprep.subr.bf16.mxu0 %v8491
    %10250 = vmatpush1.bf16.msra.mxu0 %v8490
    %10251 = vmatprep.subr.bf16.mxu0 %v8483
    %10252 = vmatpush1.bf16.msra.mxu0 %v8482
    %10253 = vmatprep.subr.bf16.mxu0 %v8475
    %10254 = vmatpush1.bf16.msra.mxu0 %v8474
    %10255 = vmatprep.subr.bf16.mxu0 %v8467
    %10256 = vmatpush1.bf16.msra.mxu0 %v8466
    %10257 = vmatprep.subr.bf16.mxu0 %v8459
    %10258 = vmatpush1.bf16.msra.mxu0 %v8458
    %10259 = vmatprep.subr.bf16.mxu0 %v8451
    %10260 = vmatpush1.bf16.msra.mxu0 %v8450
    %10261 = vmatprep.subr.bf16.mxu0 %v8571
    %10262 = vmatpush2.bf16.msra.mxu0 %v8570
    %10263 = vmatprep.subr.bf16.mxu0 %v8563
    %10264 = vmatpush2.bf16.msra.mxu0 %v8562
    %10265 = vmatprep.subr.bf16.mxu0 %v8555
    %10266 = vmatpush2.bf16.msra.mxu0 %v8554
    %10267 = vmatprep.subr.bf16.mxu0 %v8547
    %10268 = vmatpush2.bf16.msra.mxu0 %v8546
    %10269 = vmatprep.subr.bf16.mxu0 %v8539
    %10270 = vmatpush2.bf16.msra.mxu0 %v8538
    %10271 = vmatprep.subr.bf16.mxu0 %v8531
    %10272 = vmatpush2.bf16.msra.mxu0 %v8530
    %10273 = vmatprep.subr.bf16.mxu0 %v8523
    %10274 = vmatpush2.bf16.msra.mxu0 %v8522
    %10275 = vmatprep.subr.bf16.mxu0 %v8515
    %10276 = vmatpush2.bf16.msra.mxu0 %v8514
    %10277 = vmatprep.mubr.bf16.mxu0 %v7155
    %10278 = vmatmul.mubr.bf16.gmra.mxu0 %v7154
    %v10279 = vpop.f32.mrf.mxu0
    %v10280 = vadd.f32 %v9997, %v10279
    %v10281 = vpop.f32.mrf.mxu0
    %v10282 = vadd.f32 %v9999, %v10281
    %v10283 = vpop.f32.mrf.mxu0
    %v10284 = vadd.f32 %v10001, %v10283
    %v10285 = vpop.f32.mrf.mxu0
    %v10286 = vadd.f32 %v10003, %v10285
    %10287 = vmatprep.mubr.bf16.mxu0 %v7159
    %10288 = vmatmul.mubr.bf16.gmra.mxu0 %v7158
    %v10289 = vpop.f32.mrf.mxu0
    %v10290 = vadd.f32 %v10007, %v10289
    %v10291 = vpop.f32.mrf.mxu0
    %v10292 = vadd.f32 %v10009, %v10291
    %v10293 = vpop.f32.mrf.mxu0
    %v10294 = vadd.f32 %v10011, %v10293
    %v10295 = vpop.f32.mrf.mxu0
    %v10296 = vadd.f32 %v10013, %v10295
    %10297 = vmatprep.mubr.bf16.mxu0 %v7163
    %10298 = vmatmul.mubr.bf16.gmra.mxu0 %v7162
    %v10299 = vpop.f32.mrf.mxu0
    %v10300 = vadd.f32 %v10017, %v10299
    %v10301 = vpop.f32.mrf.mxu0
    %v10302 = vadd.f32 %v10019, %v10301
    %v10303 = vpop.f32.mrf.mxu0
    %v10304 = vadd.f32 %v10021, %v10303
    %v10305 = vpop.f32.mrf.mxu0
    %v10306 = vadd.f32 %v10023, %v10305
    %10307 = vmatprep.mubr.bf16.mxu0 %v7167
    %10308 = vmatmul.mubr.bf16.gmra.mxu0 %v7166
    %v10309 = vpop.f32.mrf.mxu0
    %v10310 = vadd.f32 %v10027, %v10309
    %v10311 = vpop.f32.mrf.mxu0
    %v10312 = vadd.f32 %v10029, %v10311
    %v10313 = vpop.f32.mrf.mxu0
    %v10314 = vadd.f32 %v10031, %v10313
    %v10315 = vpop.f32.mrf.mxu0
    %v10316 = vadd.f32 %v10033, %v10315
    %10317 = vmatprep.mubr.bf16.mxu0 %v7171
    %10318 = vmatmul.mubr.bf16.gmra.mxu0 %v7170
    %v10319 = vpop.f32.mrf.mxu0
    %v10320 = vadd.f32 %v10037, %v10319
    %v10321 = vpop.f32.mrf.mxu0
    %v10322 = vadd.f32 %v10039, %v10321
    %v10323 = vpop.f32.mrf.mxu0
    %v10324 = vadd.f32 %v10041, %v10323
    %v10325 = vpop.f32.mrf.mxu0
    %v10326 = vadd.f32 %v10043, %v10325
    %10327 = vmatprep.mubr.bf16.mxu0 %v7175
    %10328 = vmatmul.mubr.bf16.gmra.mxu0 %v7174
    %v10329 = vpop.f32.mrf.mxu0
    %v10330 = vadd.f32 %v10047, %v10329
    %v10331 = vpop.f32.mrf.mxu0
    %v10332 = vadd.f32 %v10049, %v10331
    %v10333 = vpop.f32.mrf.mxu0
    %v10334 = vadd.f32 %v10051, %v10333
    %v10335 = vpop.f32.mrf.mxu0
    %v10336 = vadd.f32 %v10053, %v10335
    %10337 = vmatprep.mubr.bf16.mxu0 %v7179
    %10338 = vmatmul.mubr.bf16.gmra.mxu0 %v7178
    %v10339 = vpop.f32.mrf.mxu0
    %v10340 = vadd.f32 %v10057, %v10339
    %v10341 = vpop.f32.mrf.mxu0
    %v10342 = vadd.f32 %v10059, %v10341
    %v10343 = vpop.f32.mrf.mxu0
    %v10344 = vadd.f32 %v10061, %v10343
    %v10345 = vpop.f32.mrf.mxu0
    %v10346 = vadd.f32 %v10063, %v10345
    %10347 = vmatprep.mubr.bf16.mxu0 %v7183
    %10348 = vmatmul.mubr.bf16.gmra.mxu0 %v7182
    %v10349 = vpop.f32.mrf.mxu0
    %v10350 = vadd.f32 %v10067, %v10349
    %v10351 = vpop.f32.mrf.mxu0
    %v10352 = vadd.f32 %v10069, %v10351
    %v10353 = vpop.f32.mrf.mxu0
    %v10354 = vadd.f32 %v10071, %v10353
    %v10355 = vpop.f32.mrf.mxu0
    %v10356 = vadd.f32 %v10073, %v10355
    %10357 = vmatprep.mubr.bf16.mxu0 %v7187
    %10358 = vmatmul.mubr.bf16.gmra.mxu0 %v7186
    %v10359 = vpop.f32.mrf.mxu0
    %v10360 = vadd.f32 %v10077, %v10359
    %v10361 = vpop.f32.mrf.mxu0
    %v10362 = vadd.f32 %v10079, %v10361
    %v10363 = vpop.f32.mrf.mxu0
    %v10364 = vadd.f32 %v10081, %v10363
    %v10365 = vpop.f32.mrf.mxu0
    %v10366 = vadd.f32 %v10083, %v10365
    %10367 = vmatprep.mubr.bf16.mxu0 %v7191
    %10368 = vmatmul.mubr.bf16.gmra.mxu0 %v7190
    %v10369 = vpop.f32.mrf.mxu0
    %v10370 = vadd.f32 %v10087, %v10369
    %v10371 = vpop.f32.mrf.mxu0
    %v10372 = vadd.f32 %v10089, %v10371
    %v10373 = vpop.f32.mrf.mxu0
    %v10374 = vadd.f32 %v10091, %v10373
    %v10375 = vpop.f32.mrf.mxu0
    %v10376 = vadd.f32 %v10093, %v10375
    %10377 = vmatprep.mubr.bf16.mxu0 %v7195
    %10378 = vmatmul.mubr.bf16.gmra.mxu0 %v7194
    %v10379 = vpop.f32.mrf.mxu0
    %v10380 = vadd.f32 %v10097, %v10379
    %v10381 = vpop.f32.mrf.mxu0
    %v10382 = vadd.f32 %v10099, %v10381
    %v10383 = vpop.f32.mrf.mxu0
    %v10384 = vadd.f32 %v10101, %v10383
    %v10385 = vpop.f32.mrf.mxu0
    %v10386 = vadd.f32 %v10103, %v10385
    %10387 = vmatprep.mubr.bf16.mxu0 %v7199
    %10388 = vmatmul.mubr.bf16.gmra.mxu0 %v7198
    %v10389 = vpop.f32.mrf.mxu0
    %v10390 = vadd.f32 %v10107, %v10389
    %v10391 = vpop.f32.mrf.mxu0
    %v10392 = vadd.f32 %v10109, %v10391
    %v10393 = vpop.f32.mrf.mxu0
    %v10394 = vadd.f32 %v10111, %v10393
    %v10395 = vpop.f32.mrf.mxu0
    %v10396 = vadd.f32 %v10113, %v10395
    %10397 = vmatprep.mubr.bf16.mxu0 %v7203
    %10398 = vmatmul.mubr.bf16.gmra.mxu0 %v7202
    %v10399 = vpop.f32.mrf.mxu0
    %v10400 = vadd.f32 %v10117, %v10399
    %v10401 = vpop.f32.mrf.mxu0
    %v10402 = vadd.f32 %v10119, %v10401
    %v10403 = vpop.f32.mrf.mxu0
    %v10404 = vadd.f32 %v10121, %v10403
    %v10405 = vpop.f32.mrf.mxu0
    %v10406 = vadd.f32 %v10123, %v10405
    %10407 = vmatprep.mubr.bf16.mxu0 %v7207
    %10408 = vmatmul.mubr.bf16.gmra.mxu0 %v7206
    %v10409 = vpop.f32.mrf.mxu0
    %v10410 = vadd.f32 %v10127, %v10409
    %v10411 = vpop.f32.mrf.mxu0
    %v10412 = vadd.f32 %v10129, %v10411
    %v10413 = vpop.f32.mrf.mxu0
    %v10414 = vadd.f32 %v10131, %v10413
    %v10415 = vpop.f32.mrf.mxu0
    %v10416 = vadd.f32 %v10133, %v10415
    %10417 = vmatprep.mubr.bf16.mxu0 %v7211
    %10418 = vmatmul.mubr.bf16.gmra.mxu0 %v7210
    %v10419 = vpop.f32.mrf.mxu0
    %v10420 = vadd.f32 %v10137, %v10419
    %v10421 = vpop.f32.mrf.mxu0
    %v10422 = vadd.f32 %v10139, %v10421
    %v10423 = vpop.f32.mrf.mxu0
    %v10424 = vadd.f32 %v10141, %v10423
    %v10425 = vpop.f32.mrf.mxu0
    %v10426 = vadd.f32 %v10143, %v10425
    %10427 = vmatprep.mubr.bf16.mxu0 %v7215
    %10428 = vmatmul.mubr.bf16.gmra.mxu0 %v7214
    %v10429 = vpop.f32.mrf.mxu0
    %v10430 = vadd.f32 %v10147, %v10429
    %v10431 = vpop.f32.mrf.mxu0
    %v10432 = vadd.f32 %v10149, %v10431
    %v10433 = vpop.f32.mrf.mxu0
    %v10434 = vadd.f32 %v10151, %v10433
    %v10435 = vpop.f32.mrf.mxu0
    %v10436 = vadd.f32 %v10153, %v10435
    %10437 = vmatprep.mubr.bf16.mxu0 %v7219
    %10438 = vmatmul.mubr.bf16.gmra.mxu0 %v7218
    %v10439 = vpop.f32.mrf.mxu0
    %v10440 = vadd.f32 %v10157, %v10439
    %v10441 = vpop.f32.mrf.mxu0
    %v10442 = vadd.f32 %v10159, %v10441
    %v10443 = vpop.f32.mrf.mxu0
    %v10444 = vadd.f32 %v10161, %v10443
    %v10445 = vpop.f32.mrf.mxu0
    %v10446 = vadd.f32 %v10163, %v10445
    %10447 = vmatprep.mubr.bf16.mxu0 %v7223
    %10448 = vmatmul.mubr.bf16.gmra.mxu0 %v7222
    %v10449 = vpop.f32.mrf.mxu0
    %v10450 = vadd.f32 %v10167, %v10449
    %v10451 = vpop.f32.mrf.mxu0
    %v10452 = vadd.f32 %v10169, %v10451
    %v10453 = vpop.f32.mrf.mxu0
    %v10454 = vadd.f32 %v10171, %v10453
    %v10455 = vpop.f32.mrf.mxu0
    %v10456 = vadd.f32 %v10173, %v10455
    %10457 = vmatprep.mubr.bf16.mxu0 %v7227
    %10458 = vmatmul.mubr.bf16.gmra.mxu0 %v7226
    %v10459 = vpop.f32.mrf.mxu0
    %v10460 = vadd.f32 %v10177, %v10459
    %v10461 = vpop.f32.mrf.mxu0
    %v10462 = vadd.f32 %v10179, %v10461
    %v10463 = vpop.f32.mrf.mxu0
    %v10464 = vadd.f32 %v10181, %v10463
    %v10465 = vpop.f32.mrf.mxu0
    %v10466 = vadd.f32 %v10183, %v10465
    %10467 = vmatprep.mubr.bf16.mxu0 %v7231
    %10468 = vmatmul.mubr.bf16.gmra.mxu0 %v7230
    %v10469 = vpop.f32.mrf.mxu0
    %v10470 = vadd.f32 %v10187, %v10469
    %v10471 = vpop.f32.mrf.mxu0
    %v10472 = vadd.f32 %v10189, %v10471
    %v10473 = vpop.f32.mrf.mxu0
    %v10474 = vadd.f32 %v10191, %v10473
    %v10475 = vpop.f32.mrf.mxu0
    %v10476 = vadd.f32 %v10193, %v10475
    %10477 = vmatprep.mubr.bf16.mxu0 %v7235
    %10478 = vmatmul.mubr.bf16.gmra.mxu0 %v7234
    %v10479 = vpop.f32.mrf.mxu0
    %v10480 = vadd.f32 %v10197, %v10479
    %v10481 = vpop.f32.mrf.mxu0
    %v10482 = vadd.f32 %v10199, %v10481
    %v10483 = vpop.f32.mrf.mxu0
    %v10484 = vadd.f32 %v10201, %v10483
    %v10485 = vpop.f32.mrf.mxu0
    %v10486 = vadd.f32 %v10203, %v10485
    %10487 = vmatprep.mubr.bf16.mxu0 %v7239
    %10488 = vmatmul.mubr.bf16.gmra.mxu0 %v7238
    %v10489 = vpop.f32.mrf.mxu0
    %v10490 = vadd.f32 %v10207, %v10489
    %v10491 = vpop.f32.mrf.mxu0
    %v10492 = vadd.f32 %v10209, %v10491
    %v10493 = vpop.f32.mrf.mxu0
    %v10494 = vadd.f32 %v10211, %v10493
    %v10495 = vpop.f32.mrf.mxu0
    %v10496 = vadd.f32 %v10213, %v10495
    %10497 = vmatprep.mubr.bf16.mxu0 %v7243
    %10498 = vmatmul.mubr.bf16.gmra.mxu0 %v7242
    %v10499 = vpop.f32.mrf.mxu0
    %v10500 = vadd.f32 %v10217, %v10499
    %v10501 = vpop.f32.mrf.mxu0
    %v10502 = vadd.f32 %v10219, %v10501
    %v10503 = vpop.f32.mrf.mxu0
    %v10504 = vadd.f32 %v10221, %v10503
    %v10505 = vpop.f32.mrf.mxu0
    %v10506 = vadd.f32 %v10223, %v10505
    %10507 = vmatprep.mubr.bf16.mxu0 %v7247
    %10508 = vmatmul.mubr.bf16.gmra.mxu0 %v7246
    %v10509 = vpop.f32.mrf.mxu0
    %v10510 = vadd.f32 %v10227, %v10509
    %v10511 = vpop.f32.mrf.mxu0
    %v10512 = vadd.f32 %v10229, %v10511
    %v10513 = vpop.f32.mrf.mxu0
    %v10514 = vadd.f32 %v10231, %v10513
    %v10515 = vpop.f32.mrf.mxu0
    %v10516 = vadd.f32 %v10233, %v10515
    %10517 = vmatprep.mubr.bf16.mxu0 %v7251
    %10518 = vmatmul.mubr.bf16.gmra.mxu0 %v7250
    %v10519 = vpop.f32.mrf.mxu0
    %v10520 = vadd.f32 %v10237, %v10519
    %v10521 = vpop.f32.mrf.mxu0
    %v10522 = vadd.f32 %v10239, %v10521
    %v10523 = vpop.f32.mrf.mxu0
    %v10524 = vadd.f32 %v10241, %v10523
    %v10525 = vpop.f32.mrf.mxu0
    %v10526 = vadd.f32 %v10243, %v10525
    %10527 = vdwg.mxu0
    %10528 = vmatprep.subr.bf16.mxu0 %v8381
    %10529 = vmatpush1.bf16.msra.mxu0 %v8380
    %10530 = vmatprep.subr.bf16.mxu0 %v8373
    %10531 = vmatpush1.bf16.msra.mxu0 %v8372
    %10532 = vmatprep.subr.bf16.mxu0 %v8365
    %10533 = vmatpush1.bf16.msra.mxu0 %v8364
    %10534 = vmatprep.subr.bf16.mxu0 %v8357
    %10535 = vmatpush1.bf16.msra.mxu0 %v8356
    %10536 = vmatprep.subr.bf16.mxu0 %v8349
    %10537 = vmatpush1.bf16.msra.mxu0 %v8348
    %10538 = vmatprep.subr.bf16.mxu0 %v8341
    %10539 = vmatpush1.bf16.msra.mxu0 %v8340
    %10540 = vmatprep.subr.bf16.mxu0 %v8333
    %10541 = vmatpush1.bf16.msra.mxu0 %v8332
    %10542 = vmatprep.subr.bf16.mxu0 %v8325
    %10543 = vmatpush1.bf16.msra.mxu0 %v8324
    %10544 = vmatprep.subr.bf16.mxu0 %v8445
    %10545 = vmatpush2.bf16.msra.mxu0 %v8444
    %10546 = vmatprep.subr.bf16.mxu0 %v8437
    %10547 = vmatpush2.bf16.msra.mxu0 %v8436
    %10548 = vmatprep.subr.bf16.mxu0 %v8429
    %10549 = vmatpush2.bf16.msra.mxu0 %v8428
    %10550 = vmatprep.subr.bf16.mxu0 %v8421
    %10551 = vmatpush2.bf16.msra.mxu0 %v8420
    %10552 = vmatprep.subr.bf16.mxu0 %v8413
    %10553 = vmatpush2.bf16.msra.mxu0 %v8412
    %10554 = vmatprep.subr.bf16.mxu0 %v8405
    %10555 = vmatpush2.bf16.msra.mxu0 %v8404
    %10556 = vmatprep.subr.bf16.mxu0 %v8397
    %10557 = vmatpush2.bf16.msra.mxu0 %v8396
    %10558 = vmatprep.subr.bf16.mxu0 %v8389
    %10559 = vmatpush2.bf16.msra.mxu0 %v8388
    %10560 = vmatprep.mubr.bf16.mxu0 %v7153
    %10561 = vmatmul.mubr.bf16.gmra.mxu0 %v7152
    %v10562 = vpop.f32.mrf.mxu0
    %v10563 = vadd.f32 %v7537, %v10562
    %v10564 = vpop.f32.mrf.mxu0
    %v10565 = vadd.f32 %v7541, %v10564
    %v10566 = vpop.f32.mrf.mxu0
    %v10567 = vadd.f32 %v7537, %v10566
    %v10568 = vpop.f32.mrf.mxu0
    %v10569 = vadd.f32 %v7541, %v10568
    %10570 = vmatprep.mubr.bf16.mxu0 %v7157
    %10571 = vmatmul.mubr.bf16.gmra.mxu0 %v7156
    %v10572 = vpop.f32.mrf.mxu0
    %v10573 = vadd.f32 %v7537, %v10572
    %v10574 = vpop.f32.mrf.mxu0
    %v10575 = vadd.f32 %v7541, %v10574
    %v10576 = vpop.f32.mrf.mxu0
    %v10577 = vadd.f32 %v7537, %v10576
    %v10578 = vpop.f32.mrf.mxu0
    %v10579 = vadd.f32 %v7541, %v10578
    %10580 = vmatprep.mubr.bf16.mxu0 %v7161
    %10581 = vmatmul.mubr.bf16.gmra.mxu0 %v7160
    %v10582 = vpop.f32.mrf.mxu0
    %v10583 = vadd.f32 %v7537, %v10582
    %v10584 = vpop.f32.mrf.mxu0
    %v10585 = vadd.f32 %v7541, %v10584
    %v10586 = vpop.f32.mrf.mxu0
    %v10587 = vadd.f32 %v7537, %v10586
    %v10588 = vpop.f32.mrf.mxu0
    %v10589 = vadd.f32 %v7541, %v10588
    %10590 = vmatprep.mubr.bf16.mxu0 %v7165
    %10591 = vmatmul.mubr.bf16.gmra.mxu0 %v7164
    %v10592 = vpop.f32.mrf.mxu0
    %v10593 = vadd.f32 %v7537, %v10592
    %v10594 = vpop.f32.mrf.mxu0
    %v10595 = vadd.f32 %v7541, %v10594
    %v10596 = vpop.f32.mrf.mxu0
    %v10597 = vadd.f32 %v7537, %v10596
    %v10598 = vpop.f32.mrf.mxu0
    %v10599 = vadd.f32 %v7541, %v10598
    %10600 = vmatprep.mubr.bf16.mxu0 %v7169
    %10601 = vmatmul.mubr.bf16.gmra.mxu0 %v7168
    %v10602 = vpop.f32.mrf.mxu0
    %v10603 = vadd.f32 %v7537, %v10602
    %v10604 = vpop.f32.mrf.mxu0
    %v10605 = vadd.f32 %v7541, %v10604
    %v10606 = vpop.f32.mrf.mxu0
    %v10607 = vadd.f32 %v7537, %v10606
    %v10608 = vpop.f32.mrf.mxu0
    %v10609 = vadd.f32 %v7541, %v10608
    %10610 = vmatprep.mubr.bf16.mxu0 %v7173
    %10611 = vmatmul.mubr.bf16.gmra.mxu0 %v7172
    %v10612 = vpop.f32.mrf.mxu0
    %v10613 = vadd.f32 %v7537, %v10612
    %v10614 = vpop.f32.mrf.mxu0
    %v10615 = vadd.f32 %v7541, %v10614
    %v10616 = vpop.f32.mrf.mxu0
    %v10617 = vadd.f32 %v7537, %v10616
    %v10618 = vpop.f32.mrf.mxu0
    %v10619 = vadd.f32 %v7541, %v10618
    %10620 = vmatprep.mubr.bf16.mxu0 %v7177
    %10621 = vmatmul.mubr.bf16.gmra.mxu0 %v7176
    %v10622 = vpop.f32.mrf.mxu0
    %v10623 = vadd.f32 %v7537, %v10622
    %v10624 = vpop.f32.mrf.mxu0
    %v10625 = vadd.f32 %v7541, %v10624
    %v10626 = vpop.f32.mrf.mxu0
    %v10627 = vadd.f32 %v7537, %v10626
    %v10628 = vpop.f32.mrf.mxu0
    %v10629 = vadd.f32 %v7541, %v10628
    %10630 = vmatprep.mubr.bf16.mxu0 %v7181
    %10631 = vmatmul.mubr.bf16.gmra.mxu0 %v7180
    %v10632 = vpop.f32.mrf.mxu0
    %v10633 = vadd.f32 %v7537, %v10632
    %v10634 = vpop.f32.mrf.mxu0
    %v10635 = vadd.f32 %v7541, %v10634
    %v10636 = vpop.f32.mrf.mxu0
    %v10637 = vadd.f32 %v7537, %v10636
    %v10638 = vpop.f32.mrf.mxu0
    %v10639 = vadd.f32 %v7541, %v10638
    %10640 = vmatprep.mubr.bf16.mxu0 %v7185
    %10641 = vmatmul.mubr.bf16.gmra.mxu0 %v7184
    %v10642 = vpop.f32.mrf.mxu0
    %v10643 = vadd.f32 %v7537, %v10642
    %v10644 = vpop.f32.mrf.mxu0
    %v10645 = vadd.f32 %v7541, %v10644
    %v10646 = vpop.f32.mrf.mxu0
    %v10647 = vadd.f32 %v7537, %v10646
    %v10648 = vpop.f32.mrf.mxu0
    %v10649 = vadd.f32 %v7541, %v10648
    %10650 = vmatprep.mubr.bf16.mxu0 %v7189
    %10651 = vmatmul.mubr.bf16.gmra.mxu0 %v7188
    %v10652 = vpop.f32.mrf.mxu0
    %v10653 = vadd.f32 %v7537, %v10652
    %v10654 = vpop.f32.mrf.mxu0
    %v10655 = vadd.f32 %v7541, %v10654
    %v10656 = vpop.f32.mrf.mxu0
    %v10657 = vadd.f32 %v7537, %v10656
    %v10658 = vpop.f32.mrf.mxu0
    %v10659 = vadd.f32 %v7541, %v10658
    %10660 = vmatprep.mubr.bf16.mxu0 %v7193
    %10661 = vmatmul.mubr.bf16.gmra.mxu0 %v7192
    %v10662 = vpop.f32.mrf.mxu0
    %v10663 = vadd.f32 %v7537, %v10662
    %v10664 = vpop.f32.mrf.mxu0
    %v10665 = vadd.f32 %v7541, %v10664
    %v10666 = vpop.f32.mrf.mxu0
    %v10667 = vadd.f32 %v7537, %v10666
    %v10668 = vpop.f32.mrf.mxu0
    %v10669 = vadd.f32 %v7541, %v10668
    %10670 = vmatprep.mubr.bf16.mxu0 %v7197
    %10671 = vmatmul.mubr.bf16.gmra.mxu0 %v7196
    %v10672 = vpop.f32.mrf.mxu0
    %v10673 = vadd.f32 %v7537, %v10672
    %v10674 = vpop.f32.mrf.mxu0
    %v10675 = vadd.f32 %v7541, %v10674
    %v10676 = vpop.f32.mrf.mxu0
    %v10677 = vadd.f32 %v7537, %v10676
    %v10678 = vpop.f32.mrf.mxu0
    %v10679 = vadd.f32 %v7541, %v10678
    %10680 = vmatprep.mubr.bf16.mxu0 %v7201
    %10681 = vmatmul.mubr.bf16.gmra.mxu0 %v7200
    %v10682 = vpop.f32.mrf.mxu0
    %v10683 = vadd.f32 %v7537, %v10682
    %v10684 = vpop.f32.mrf.mxu0
    %v10685 = vadd.f32 %v7541, %v10684
    %v10686 = vpop.f32.mrf.mxu0
    %v10687 = vadd.f32 %v7537, %v10686
    %v10688 = vpop.f32.mrf.mxu0
    %v10689 = vadd.f32 %v7541, %v10688
    %10690 = vmatprep.mubr.bf16.mxu0 %v7205
    %10691 = vmatmul.mubr.bf16.gmra.mxu0 %v7204
    %v10692 = vpop.f32.mrf.mxu0
    %v10693 = vadd.f32 %v7537, %v10692
    %v10694 = vpop.f32.mrf.mxu0
    %v10695 = vadd.f32 %v7541, %v10694
    %v10696 = vpop.f32.mrf.mxu0
    %v10697 = vadd.f32 %v7537, %v10696
    %v10698 = vpop.f32.mrf.mxu0
    %v10699 = vadd.f32 %v7541, %v10698
    %10700 = vmatprep.mubr.bf16.mxu0 %v7209
    %10701 = vmatmul.mubr.bf16.gmra.mxu0 %v7208
    %v10702 = vpop.f32.mrf.mxu0
    %v10703 = vadd.f32 %v7537, %v10702
    %v10704 = vpop.f32.mrf.mxu0
    %v10705 = vadd.f32 %v7541, %v10704
    %v10706 = vpop.f32.mrf.mxu0
    %v10707 = vadd.f32 %v7537, %v10706
    %v10708 = vpop.f32.mrf.mxu0
    %v10709 = vadd.f32 %v7541, %v10708
    %10710 = vmatprep.mubr.bf16.mxu0 %v7213
    %10711 = vmatmul.mubr.bf16.gmra.mxu0 %v7212
    %v10712 = vpop.f32.mrf.mxu0
    %v10713 = vadd.f32 %v7537, %v10712
    %v10714 = vpop.f32.mrf.mxu0
    %v10715 = vadd.f32 %v7541, %v10714
    %v10716 = vpop.f32.mrf.mxu0
    %v10717 = vadd.f32 %v7537, %v10716
    %v10718 = vpop.f32.mrf.mxu0
    %v10719 = vadd.f32 %v7541, %v10718
    %10720 = vmatprep.mubr.bf16.mxu0 %v7217
    %10721 = vmatmul.mubr.bf16.gmra.mxu0 %v7216
    %v10722 = vpop.f32.mrf.mxu0
    %v10723 = vadd.f32 %v7537, %v10722
    %v10724 = vpop.f32.mrf.mxu0
    %v10725 = vadd.f32 %v7541, %v10724
    %v10726 = vpop.f32.mrf.mxu0
    %v10727 = vadd.f32 %v7537, %v10726
    %v10728 = vpop.f32.mrf.mxu0
    %v10729 = vadd.f32 %v7541, %v10728
    %10730 = vmatprep.mubr.bf16.mxu0 %v7221
    %10731 = vmatmul.mubr.bf16.gmra.mxu0 %v7220
    %v10732 = vpop.f32.mrf.mxu0
    %v10733 = vadd.f32 %v7537, %v10732
    %v10734 = vpop.f32.mrf.mxu0
    %v10735 = vadd.f32 %v7541, %v10734
    %v10736 = vpop.f32.mrf.mxu0
    %v10737 = vadd.f32 %v7537, %v10736
    %v10738 = vpop.f32.mrf.mxu0
    %v10739 = vadd.f32 %v7541, %v10738
    %10740 = vmatprep.mubr.bf16.mxu0 %v7225
    %10741 = vmatmul.mubr.bf16.gmra.mxu0 %v7224
    %v10742 = vpop.f32.mrf.mxu0
    %v10743 = vadd.f32 %v7537, %v10742
    %v10744 = vpop.f32.mrf.mxu0
    %v10745 = vadd.f32 %v7541, %v10744
    %v10746 = vpop.f32.mrf.mxu0
    %v10747 = vadd.f32 %v7537, %v10746
    %v10748 = vpop.f32.mrf.mxu0
    %v10749 = vadd.f32 %v7541, %v10748
    %10750 = vmatprep.mubr.bf16.mxu0 %v7229
    %10751 = vmatmul.mubr.bf16.gmra.mxu0 %v7228
    %v10752 = vpop.f32.mrf.mxu0
    %v10753 = vadd.f32 %v7537, %v10752
    %v10754 = vpop.f32.mrf.mxu0
    %v10755 = vadd.f32 %v7541, %v10754
    %v10756 = vpop.f32.mrf.mxu0
    %v10757 = vadd.f32 %v7537, %v10756
    %v10758 = vpop.f32.mrf.mxu0
    %v10759 = vadd.f32 %v7541, %v10758
    %10760 = vmatprep.mubr.bf16.mxu0 %v7233
    %10761 = vmatmul.mubr.bf16.gmra.mxu0 %v7232
    %v10762 = vpop.f32.mrf.mxu0
    %v10763 = vadd.f32 %v7537, %v10762
    %v10764 = vpop.f32.mrf.mxu0
    %v10765 = vadd.f32 %v7541, %v10764
    %v10766 = vpop.f32.mrf.mxu0
    %v10767 = vadd.f32 %v7537, %v10766
    %v10768 = vpop.f32.mrf.mxu0
    %v10769 = vadd.f32 %v7541, %v10768
    %10770 = vmatprep.mubr.bf16.mxu0 %v7237
    %10771 = vmatmul.mubr.bf16.gmra.mxu0 %v7236
    %v10772 = vpop.f32.mrf.mxu0
    %v10773 = vadd.f32 %v7537, %v10772
    %v10774 = vpop.f32.mrf.mxu0
    %v10775 = vadd.f32 %v7541, %v10774
    %v10776 = vpop.f32.mrf.mxu0
    %v10777 = vadd.f32 %v7537, %v10776
    %v10778 = vpop.f32.mrf.mxu0
    %v10779 = vadd.f32 %v7541, %v10778
    %10780 = vmatprep.mubr.bf16.mxu0 %v7241
    %10781 = vmatmul.mubr.bf16.gmra.mxu0 %v7240
    %v10782 = vpop.f32.mrf.mxu0
    %v10783 = vadd.f32 %v7537, %v10782
    %v10784 = vpop.f32.mrf.mxu0
    %v10785 = vadd.f32 %v7541, %v10784
    %v10786 = vpop.f32.mrf.mxu0
    %v10787 = vadd.f32 %v7537, %v10786
    %v10788 = vpop.f32.mrf.mxu0
    %v10789 = vadd.f32 %v7541, %v10788
    %10790 = vmatprep.mubr.bf16.mxu0 %v7245
    %10791 = vmatmul.mubr.bf16.gmra.mxu0 %v7244
    %v10792 = vpop.f32.mrf.mxu0
    %v10793 = vadd.f32 %v7537, %v10792
    %v10794 = vpop.f32.mrf.mxu0
    %v10795 = vadd.f32 %v7541, %v10794
    %v10796 = vpop.f32.mrf.mxu0
    %v10797 = vadd.f32 %v7537, %v10796
    %v10798 = vpop.f32.mrf.mxu0
    %v10799 = vadd.f32 %v7541, %v10798
    %10800 = vmatprep.mubr.bf16.mxu0 %v7249
    %10801 = vmatmul.mubr.bf16.gmra.mxu0 %v7248
    %v10802 = vpop.f32.mrf.mxu0
    %v10803 = vadd.f32 %v7537, %v10802
    %v10804 = vpop.f32.mrf.mxu0
    %v10805 = vadd.f32 %v7541, %v10804
    %v10806 = vpop.f32.mrf.mxu0
    %v10807 = vadd.f32 %v7537, %v10806
    %v10808 = vpop.f32.mrf.mxu0
    %v10809 = vadd.f32 %v7541, %v10808
    %10810 = vdwg.mxu0
    %10811 = vmatprep.subr.bf16.mxu0 %v8509
    %10812 = vmatpush1.bf16.msra.mxu0 %v8508
    %10813 = vmatprep.subr.bf16.mxu0 %v8501
    %10814 = vmatpush1.bf16.msra.mxu0 %v8500
    %10815 = vmatprep.subr.bf16.mxu0 %v8493
    %10816 = vmatpush1.bf16.msra.mxu0 %v8492
    %10817 = vmatprep.subr.bf16.mxu0 %v8485
    %10818 = vmatpush1.bf16.msra.mxu0 %v8484
    %10819 = vmatprep.subr.bf16.mxu0 %v8477
    %10820 = vmatpush1.bf16.msra.mxu0 %v8476
    %10821 = vmatprep.subr.bf16.mxu0 %v8469
    %10822 = vmatpush1.bf16.msra.mxu0 %v8468
    %10823 = vmatprep.subr.bf16.mxu0 %v8461
    %10824 = vmatpush1.bf16.msra.mxu0 %v8460
    %10825 = vmatprep.subr.bf16.mxu0 %v8453
    %10826 = vmatpush1.bf16.msra.mxu0 %v8452
    %10827 = vmatprep.subr.bf16.mxu0 %v8573
    %10828 = vmatpush2.bf16.msra.mxu0 %v8572
    %10829 = vmatprep.subr.bf16.mxu0 %v8565
    %10830 = vmatpush2.bf16.msra.mxu0 %v8564
    %10831 = vmatprep.subr.bf16.mxu0 %v8557
    %10832 = vmatpush2.bf16.msra.mxu0 %v8556
    %10833 = vmatprep.subr.bf16.mxu0 %v8549
    %10834 = vmatpush2.bf16.msra.mxu0 %v8548
    %10835 = vmatprep.subr.bf16.mxu0 %v8541
    %10836 = vmatpush2.bf16.msra.mxu0 %v8540
    %10837 = vmatprep.subr.bf16.mxu0 %v8533
    %10838 = vmatpush2.bf16.msra.mxu0 %v8532
    %10839 = vmatprep.subr.bf16.mxu0 %v8525
    %10840 = vmatpush2.bf16.msra.mxu0 %v8524
    %10841 = vmatprep.subr.bf16.mxu0 %v8517
    %10842 = vmatpush2.bf16.msra.mxu0 %v8516
    %10843 = vmatprep.mubr.bf16.mxu0 %v7155
    %10844 = vmatmul.mubr.bf16.gmra.mxu0 %v7154
    %v10845 = vpop.f32.mrf.mxu0
    %v10846 = vadd.f32 %v10563, %v10845
    %v10847 = vpop.f32.mrf.mxu0
    %v10848 = vadd.f32 %v10565, %v10847
    %v10849 = vpop.f32.mrf.mxu0
    %v10850 = vadd.f32 %v10567, %v10849
    %v10851 = vpop.f32.mrf.mxu0
    %v10852 = vadd.f32 %v10569, %v10851
    %10853 = vmatprep.mubr.bf16.mxu0 %v7159
    %10854 = vmatmul.mubr.bf16.gmra.mxu0 %v7158
    %v10855 = vpop.f32.mrf.mxu0
    %v10856 = vadd.f32 %v10573, %v10855
    %v10857 = vpop.f32.mrf.mxu0
    %v10858 = vadd.f32 %v10575, %v10857
    %v10859 = vpop.f32.mrf.mxu0
    %v10860 = vadd.f32 %v10577, %v10859
    %v10861 = vpop.f32.mrf.mxu0
    %v10862 = vadd.f32 %v10579, %v10861
    %10863 = vmatprep.mubr.bf16.mxu0 %v7163
    %10864 = vmatmul.mubr.bf16.gmra.mxu0 %v7162
    %v10865 = vpop.f32.mrf.mxu0
    %v10866 = vadd.f32 %v10583, %v10865
    %v10867 = vpop.f32.mrf.mxu0
    %v10868 = vadd.f32 %v10585, %v10867
    %v10869 = vpop.f32.mrf.mxu0
    %v10870 = vadd.f32 %v10587, %v10869
    %v10871 = vpop.f32.mrf.mxu0
    %v10872 = vadd.f32 %v10589, %v10871
    %10873 = vmatprep.mubr.bf16.mxu0 %v7167
    %10874 = vmatmul.mubr.bf16.gmra.mxu0 %v7166
    %v10875 = vpop.f32.mrf.mxu0
    %v10876 = vadd.f32 %v10593, %v10875
    %v10877 = vpop.f32.mrf.mxu0
    %v10878 = vadd.f32 %v10595, %v10877
    %v10879 = vpop.f32.mrf.mxu0
    %v10880 = vadd.f32 %v10597, %v10879
    %v10881 = vpop.f32.mrf.mxu0
    %v10882 = vadd.f32 %v10599, %v10881
    %10883 = vmatprep.mubr.bf16.mxu0 %v7171
    %10884 = vmatmul.mubr.bf16.gmra.mxu0 %v7170
    %v10885 = vpop.f32.mrf.mxu0
    %v10886 = vadd.f32 %v10603, %v10885
    %v10887 = vpop.f32.mrf.mxu0
    %v10888 = vadd.f32 %v10605, %v10887
    %v10889 = vpop.f32.mrf.mxu0
    %v10890 = vadd.f32 %v10607, %v10889
    %v10891 = vpop.f32.mrf.mxu0
    %v10892 = vadd.f32 %v10609, %v10891
    %10893 = vmatprep.mubr.bf16.mxu0 %v7175
    %10894 = vmatmul.mubr.bf16.gmra.mxu0 %v7174
    %v10895 = vpop.f32.mrf.mxu0
    %v10896 = vadd.f32 %v10613, %v10895
    %v10897 = vpop.f32.mrf.mxu0
    %v10898 = vadd.f32 %v10615, %v10897
    %v10899 = vpop.f32.mrf.mxu0
    %v10900 = vadd.f32 %v10617, %v10899
    %v10901 = vpop.f32.mrf.mxu0
    %v10902 = vadd.f32 %v10619, %v10901
    %10903 = vmatprep.mubr.bf16.mxu0 %v7179
    %10904 = vmatmul.mubr.bf16.gmra.mxu0 %v7178
    %v10905 = vpop.f32.mrf.mxu0
    %v10906 = vadd.f32 %v10623, %v10905
    %v10907 = vpop.f32.mrf.mxu0
    %v10908 = vadd.f32 %v10625, %v10907
    %v10909 = vpop.f32.mrf.mxu0
    %v10910 = vadd.f32 %v10627, %v10909
    %v10911 = vpop.f32.mrf.mxu0
    %v10912 = vadd.f32 %v10629, %v10911
    %10913 = vmatprep.mubr.bf16.mxu0 %v7183
    %10914 = vmatmul.mubr.bf16.gmra.mxu0 %v7182
    %v10915 = vpop.f32.mrf.mxu0
    %v10916 = vadd.f32 %v10633, %v10915
    %v10917 = vpop.f32.mrf.mxu0
    %v10918 = vadd.f32 %v10635, %v10917
    %v10919 = vpop.f32.mrf.mxu0
    %v10920 = vadd.f32 %v10637, %v10919
    %v10921 = vpop.f32.mrf.mxu0
    %v10922 = vadd.f32 %v10639, %v10921
    %10923 = vmatprep.mubr.bf16.mxu0 %v7187
    %10924 = vmatmul.mubr.bf16.gmra.mxu0 %v7186
    %v10925 = vpop.f32.mrf.mxu0
    %v10926 = vadd.f32 %v10643, %v10925
    %v10927 = vpop.f32.mrf.mxu0
    %v10928 = vadd.f32 %v10645, %v10927
    %v10929 = vpop.f32.mrf.mxu0
    %v10930 = vadd.f32 %v10647, %v10929
    %v10931 = vpop.f32.mrf.mxu0
    %v10932 = vadd.f32 %v10649, %v10931
    %10933 = vmatprep.mubr.bf16.mxu0 %v7191
    %10934 = vmatmul.mubr.bf16.gmra.mxu0 %v7190
    %v10935 = vpop.f32.mrf.mxu0
    %v10936 = vadd.f32 %v10653, %v10935
    %v10937 = vpop.f32.mrf.mxu0
    %v10938 = vadd.f32 %v10655, %v10937
    %v10939 = vpop.f32.mrf.mxu0
    %v10940 = vadd.f32 %v10657, %v10939
    %v10941 = vpop.f32.mrf.mxu0
    %v10942 = vadd.f32 %v10659, %v10941
    %10943 = vmatprep.mubr.bf16.mxu0 %v7195
    %10944 = vmatmul.mubr.bf16.gmra.mxu0 %v7194
    %v10945 = vpop.f32.mrf.mxu0
    %v10946 = vadd.f32 %v10663, %v10945
    %v10947 = vpop.f32.mrf.mxu0
    %v10948 = vadd.f32 %v10665, %v10947
    %v10949 = vpop.f32.mrf.mxu0
    %v10950 = vadd.f32 %v10667, %v10949
    %v10951 = vpop.f32.mrf.mxu0
    %v10952 = vadd.f32 %v10669, %v10951
    %10953 = vmatprep.mubr.bf16.mxu0 %v7199
    %10954 = vmatmul.mubr.bf16.gmra.mxu0 %v7198
    %v10955 = vpop.f32.mrf.mxu0
    %v10956 = vadd.f32 %v10673, %v10955
    %v10957 = vpop.f32.mrf.mxu0
    %v10958 = vadd.f32 %v10675, %v10957
    %v10959 = vpop.f32.mrf.mxu0
    %v10960 = vadd.f32 %v10677, %v10959
    %v10961 = vpop.f32.mrf.mxu0
    %v10962 = vadd.f32 %v10679, %v10961
    %10963 = vmatprep.mubr.bf16.mxu0 %v7203
    %10964 = vmatmul.mubr.bf16.gmra.mxu0 %v7202
    %v10965 = vpop.f32.mrf.mxu0
    %v10966 = vadd.f32 %v10683, %v10965
    %v10967 = vpop.f32.mrf.mxu0
    %v10968 = vadd.f32 %v10685, %v10967
    %v10969 = vpop.f32.mrf.mxu0
    %v10970 = vadd.f32 %v10687, %v10969
    %v10971 = vpop.f32.mrf.mxu0
    %v10972 = vadd.f32 %v10689, %v10971
    %10973 = vmatprep.mubr.bf16.mxu0 %v7207
    %10974 = vmatmul.mubr.bf16.gmra.mxu0 %v7206
    %v10975 = vpop.f32.mrf.mxu0
    %v10976 = vadd.f32 %v10693, %v10975
    %v10977 = vpop.f32.mrf.mxu0
    %v10978 = vadd.f32 %v10695, %v10977
    %v10979 = vpop.f32.mrf.mxu0
    %v10980 = vadd.f32 %v10697, %v10979
    %v10981 = vpop.f32.mrf.mxu0
    %v10982 = vadd.f32 %v10699, %v10981
    %10983 = vmatprep.mubr.bf16.mxu0 %v7211
    %10984 = vmatmul.mubr.bf16.gmra.mxu0 %v7210
    %v10985 = vpop.f32.mrf.mxu0
    %v10986 = vadd.f32 %v10703, %v10985
    %v10987 = vpop.f32.mrf.mxu0
    %v10988 = vadd.f32 %v10705, %v10987
    %v10989 = vpop.f32.mrf.mxu0
    %v10990 = vadd.f32 %v10707, %v10989
    %v10991 = vpop.f32.mrf.mxu0
    %v10992 = vadd.f32 %v10709, %v10991
    %10993 = vmatprep.mubr.bf16.mxu0 %v7215
    %10994 = vmatmul.mubr.bf16.gmra.mxu0 %v7214
    %v10995 = vpop.f32.mrf.mxu0
    %v10996 = vadd.f32 %v10713, %v10995
    %v10997 = vpop.f32.mrf.mxu0
    %v10998 = vadd.f32 %v10715, %v10997
    %v10999 = vpop.f32.mrf.mxu0
    %v11000 = vadd.f32 %v10717, %v10999
    %v11001 = vpop.f32.mrf.mxu0
    %v11002 = vadd.f32 %v10719, %v11001
    %11003 = vmatprep.mubr.bf16.mxu0 %v7219
    %11004 = vmatmul.mubr.bf16.gmra.mxu0 %v7218
    %v11005 = vpop.f32.mrf.mxu0
    %v11006 = vadd.f32 %v10723, %v11005
    %v11007 = vpop.f32.mrf.mxu0
    %v11008 = vadd.f32 %v10725, %v11007
    %v11009 = vpop.f32.mrf.mxu0
    %v11010 = vadd.f32 %v10727, %v11009
    %v11011 = vpop.f32.mrf.mxu0
    %v11012 = vadd.f32 %v10729, %v11011
    %11013 = vmatprep.mubr.bf16.mxu0 %v7223
    %11014 = vmatmul.mubr.bf16.gmra.mxu0 %v7222
    %v11015 = vpop.f32.mrf.mxu0
    %v11016 = vadd.f32 %v10733, %v11015
    %v11017 = vpop.f32.mrf.mxu0
    %v11018 = vadd.f32 %v10735, %v11017
    %v11019 = vpop.f32.mrf.mxu0
    %v11020 = vadd.f32 %v10737, %v11019
    %v11021 = vpop.f32.mrf.mxu0
    %v11022 = vadd.f32 %v10739, %v11021
    %11023 = vmatprep.mubr.bf16.mxu0 %v7227
    %11024 = vmatmul.mubr.bf16.gmra.mxu0 %v7226
    %v11025 = vpop.f32.mrf.mxu0
    %v11026 = vadd.f32 %v10743, %v11025
    %v11027 = vpop.f32.mrf.mxu0
    %v11028 = vadd.f32 %v10745, %v11027
    %v11029 = vpop.f32.mrf.mxu0
    %v11030 = vadd.f32 %v10747, %v11029
    %v11031 = vpop.f32.mrf.mxu0
    %v11032 = vadd.f32 %v10749, %v11031
    %11033 = vmatprep.mubr.bf16.mxu0 %v7231
    %11034 = vmatmul.mubr.bf16.gmra.mxu0 %v7230
    %v11035 = vpop.f32.mrf.mxu0
    %v11036 = vadd.f32 %v10753, %v11035
    %v11037 = vpop.f32.mrf.mxu0
    %v11038 = vadd.f32 %v10755, %v11037
    %v11039 = vpop.f32.mrf.mxu0
    %v11040 = vadd.f32 %v10757, %v11039
    %v11041 = vpop.f32.mrf.mxu0
    %v11042 = vadd.f32 %v10759, %v11041
    %11043 = vmatprep.mubr.bf16.mxu0 %v7235
    %11044 = vmatmul.mubr.bf16.gmra.mxu0 %v7234
    %v11045 = vpop.f32.mrf.mxu0
    %v11046 = vadd.f32 %v10763, %v11045
    %v11047 = vpop.f32.mrf.mxu0
    %v11048 = vadd.f32 %v10765, %v11047
    %v11049 = vpop.f32.mrf.mxu0
    %v11050 = vadd.f32 %v10767, %v11049
    %v11051 = vpop.f32.mrf.mxu0
    %v11052 = vadd.f32 %v10769, %v11051
    %11053 = vmatprep.mubr.bf16.mxu0 %v7239
    %11054 = vmatmul.mubr.bf16.gmra.mxu0 %v7238
    %v11055 = vpop.f32.mrf.mxu0
    %v11056 = vadd.f32 %v10773, %v11055
    %v11057 = vpop.f32.mrf.mxu0
    %v11058 = vadd.f32 %v10775, %v11057
    %v11059 = vpop.f32.mrf.mxu0
    %v11060 = vadd.f32 %v10777, %v11059
    %v11061 = vpop.f32.mrf.mxu0
    %v11062 = vadd.f32 %v10779, %v11061
    %11063 = vmatprep.mubr.bf16.mxu0 %v7243
    %11064 = vmatmul.mubr.bf16.gmra.mxu0 %v7242
    %v11065 = vpop.f32.mrf.mxu0
    %v11066 = vadd.f32 %v10783, %v11065
    %v11067 = vpop.f32.mrf.mxu0
    %v11068 = vadd.f32 %v10785, %v11067
    %v11069 = vpop.f32.mrf.mxu0
    %v11070 = vadd.f32 %v10787, %v11069
    %v11071 = vpop.f32.mrf.mxu0
    %v11072 = vadd.f32 %v10789, %v11071
    %11073 = vmatprep.mubr.bf16.mxu0 %v7247
    %11074 = vmatmul.mubr.bf16.gmra.mxu0 %v7246
    %v11075 = vpop.f32.mrf.mxu0
    %v11076 = vadd.f32 %v10793, %v11075
    %v11077 = vpop.f32.mrf.mxu0
    %v11078 = vadd.f32 %v10795, %v11077
    %v11079 = vpop.f32.mrf.mxu0
    %v11080 = vadd.f32 %v10797, %v11079
    %v11081 = vpop.f32.mrf.mxu0
    %v11082 = vadd.f32 %v10799, %v11081
    %11083 = vmatprep.mubr.bf16.mxu0 %v7251
    %11084 = vmatmul.mubr.bf16.gmra.mxu0 %v7250
    %v11085 = vpop.f32.mrf.mxu0
    %v11086 = vadd.f32 %v10803, %v11085
    %v11087 = vpop.f32.mrf.mxu0
    %v11088 = vadd.f32 %v10805, %v11087
    %v11089 = vpop.f32.mrf.mxu0
    %v11090 = vadd.f32 %v10807, %v11089
    %v11091 = vpop.f32.mrf.mxu0
    %v11092 = vadd.f32 %v10809, %v11091
    %11093 = vdwg.mxu0
    %v11094 = vmax.f32 %v9148, 0.0
    %v11095 = vmax.f32 %v9150, 0.0
    %v11096 = vmax.f32 %v9714, 0.0
    %v11097 = vmax.f32 %v9716, 0.0
    %v11098 = vmax.f32 %v10280, 0.0
    %v11099 = vmax.f32 %v10282, 0.0
    %v11100 = vmax.f32 %v10846, 0.0
    %v11101 = vmax.f32 %v10848, 0.0
    %v11102 = vmax.f32 %v9152, 0.0
    %v11103 = vmax.f32 %v9154, 0.0
    %v11104 = vmax.f32 %v9718, 0.0
    %v11105 = vmax.f32 %v9720, 0.0
    %v11106 = vmax.f32 %v10284, 0.0
    %v11107 = vmax.f32 %v10286, 0.0
    %v11108 = vmax.f32 %v10850, 0.0
    %v11109 = vmax.f32 %v10852, 0.0
    %v11110 = vmax.f32 %v9158, 0.0
    %v11111 = vmax.f32 %v9160, 0.0
    %v11112 = vmax.f32 %v9724, 0.0
    %v11113 = vmax.f32 %v9726, 0.0
    %v11114 = vmax.f32 %v10290, 0.0
    %v11115 = vmax.f32 %v10292, 0.0
    %v11116 = vmax.f32 %v10856, 0.0
    %v11117 = vmax.f32 %v10858, 0.0
    %v11118 = vmax.f32 %v9162, 0.0
    %v11119 = vmax.f32 %v9164, 0.0
    %v11120 = vmax.f32 %v9728, 0.0
    %v11121 = vmax.f32 %v9730, 0.0
    %v11122 = vmax.f32 %v10294, 0.0
    %v11123 = vmax.f32 %v10296, 0.0
    %v11124 = vmax.f32 %v10860, 0.0
    %v11125 = vmax.f32 %v10862, 0.0
    %v11126 = vmax.f32 %v9168, 0.0
    %v11127 = vmax.f32 %v9170, 0.0
    %v11128 = vmax.f32 %v9734, 0.0
    %v11129 = vmax.f32 %v9736, 0.0
    %v11130 = vmax.f32 %v10300, 0.0
    %v11131 = vmax.f32 %v10302, 0.0
    %v11132 = vmax.f32 %v10866, 0.0
    %v11133 = vmax.f32 %v10868, 0.0
    %v11134 = vmax.f32 %v9172, 0.0
    %v11135 = vmax.f32 %v9174, 0.0
    %v11136 = vmax.f32 %v9738, 0.0
    %v11137 = vmax.f32 %v9740, 0.0
    %v11138 = vmax.f32 %v10304, 0.0
    %v11139 = vmax.f32 %v10306, 0.0
    %v11140 = vmax.f32 %v10870, 0.0
    %v11141 = vmax.f32 %v10872, 0.0
    %v11142 = vmax.f32 %v9178, 0.0
    %v11143 = vmax.f32 %v9180, 0.0
    %v11144 = vmax.f32 %v9744, 0.0
    %v11145 = vmax.f32 %v9746, 0.0
    %v11146 = vmax.f32 %v10310, 0.0
    %v11147 = vmax.f32 %v10312, 0.0
    %v11148 = vmax.f32 %v10876, 0.0
    %v11149 = vmax.f32 %v10878, 0.0
    %v11150 = vmax.f32 %v9182, 0.0
    %v11151 = vmax.f32 %v9184, 0.0
    %v11152 = vmax.f32 %v9748, 0.0
    %v11153 = vmax.f32 %v9750, 0.0
    %v11154 = vmax.f32 %v10314, 0.0
    %v11155 = vmax.f32 %v10316, 0.0
    %v11156 = vmax.f32 %v10880, 0.0
    %v11157 = vmax.f32 %v10882, 0.0
    %v11158 = vmax.f32 %v9188, 0.0
    %v11159 = vmax.f32 %v9190, 0.0
    %v11160 = vmax.f32 %v9754, 0.0
    %v11161 = vmax.f32 %v9756, 0.0
    %v11162 = vmax.f32 %v10320, 0.0
    %v11163 = vmax.f32 %v10322, 0.0
    %v11164 = vmax.f32 %v10886, 0.0
    %v11165 = vmax.f32 %v10888, 0.0
    %v11166 = vmax.f32 %v9192, 0.0
    %v11167 = vmax.f32 %v9194, 0.0
    %v11168 = vmax.f32 %v9758, 0.0
    %v11169 = vmax.f32 %v9760, 0.0
    %v11170 = vmax.f32 %v10324, 0.0
    %v11171 = vmax.f32 %v10326, 0.0
    %v11172 = vmax.f32 %v10890, 0.0
    %v11173 = vmax.f32 %v10892, 0.0
    %v11174 = vmax.f32 %v9198, 0.0
    %v11175 = vmax.f32 %v9200, 0.0
    %v11176 = vmax.f32 %v9764, 0.0
    %v11177 = vmax.f32 %v9766, 0.0
    %v11178 = vmax.f32 %v10330, 0.0
    %v11179 = vmax.f32 %v10332, 0.0
    %v11180 = vmax.f32 %v10896, 0.0
    %v11181 = vmax.f32 %v10898, 0.0
    %v11182 = vmax.f32 %v9202, 0.0
    %v11183 = vmax.f32 %v9204, 0.0
    %v11184 = vmax.f32 %v9768, 0.0
    %v11185 = vmax.f32 %v9770, 0.0
    %v11186 = vmax.f32 %v10334, 0.0
    %v11187 = vmax.f32 %v10336, 0.0
    %v11188 = vmax.f32 %v10900, 0.0
    %v11189 = vmax.f32 %v10902, 0.0
    %v11190 = vmax.f32 %v9208, 0.0
    %v11191 = vmax.f32 %v9210, 0.0
    %v11192 = vmax.f32 %v9774, 0.0
    %v11193 = vmax.f32 %v9776, 0.0
    %v11194 = vmax.f32 %v10340, 0.0
    %v11195 = vmax.f32 %v10342, 0.0
    %v11196 = vmax.f32 %v10906, 0.0
    %v11197 = vmax.f32 %v10908, 0.0
    %v11198 = vmax.f32 %v9212, 0.0
    %v11199 = vmax.f32 %v9214, 0.0
    %v11200 = vmax.f32 %v9778, 0.0
    %v11201 = vmax.f32 %v9780, 0.0
    %v11202 = vmax.f32 %v10344, 0.0
    %v11203 = vmax.f32 %v10346, 0.0
    %v11204 = vmax.f32 %v10910, 0.0
    %v11205 = vmax.f32 %v10912, 0.0
    %v11206 = vmax.f32 %v9218, 0.0
    %v11207 = vmax.f32 %v9220, 0.0
    %v11208 = vmax.f32 %v9784, 0.0
    %v11209 = vmax.f32 %v9786, 0.0
    %v11210 = vmax.f32 %v10350, 0.0
    %v11211 = vmax.f32 %v10352, 0.0
    %v11212 = vmax.f32 %v10916, 0.0
    %v11213 = vmax.f32 %v10918, 0.0
    %v11214 = vmax.f32 %v9222, 0.0
    %v11215 = vmax.f32 %v9224, 0.0
    %v11216 = vmax.f32 %v9788, 0.0
    %v11217 = vmax.f32 %v9790, 0.0
    %v11218 = vmax.f32 %v10354, 0.0
    %v11219 = vmax.f32 %v10356, 0.0
    %v11220 = vmax.f32 %v10920, 0.0
    %v11221 = vmax.f32 %v10922, 0.0
    %v11222 = vmax.f32 %v9228, 0.0
    %v11223 = vmax.f32 %v9230, 0.0
    %v11224 = vmax.f32 %v9794, 0.0
    %v11225 = vmax.f32 %v9796, 0.0
    %v11226 = vmax.f32 %v10360, 0.0
    %v11227 = vmax.f32 %v10362, 0.0
    %v11228 = vmax.f32 %v10926, 0.0
    %v11229 = vmax.f32 %v10928, 0.0
    %v11230 = vmax.f32 %v9232, 0.0
    %v11231 = vmax.f32 %v9234, 0.0
    %v11232 = vmax.f32 %v9798, 0.0
    %v11233 = vmax.f32 %v9800, 0.0
    %v11234 = vmax.f32 %v10364, 0.0
    %v11235 = vmax.f32 %v10366, 0.0
    %v11236 = vmax.f32 %v10930, 0.0
    %v11237 = vmax.f32 %v10932, 0.0
    %v11238 = vmax.f32 %v9238, 0.0
    %v11239 = vmax.f32 %v9240, 0.0
    %v11240 = vmax.f32 %v9804, 0.0
    %v11241 = vmax.f32 %v9806, 0.0
    %v11242 = vmax.f32 %v10370, 0.0
    %v11243 = vmax.f32 %v10372, 0.0
    %v11244 = vmax.f32 %v10936, 0.0
    %v11245 = vmax.f32 %v10938, 0.0
    %v11246 = vmax.f32 %v9242, 0.0
    %v11247 = vmax.f32 %v9244, 0.0
    %v11248 = vmax.f32 %v9808, 0.0
    %v11249 = vmax.f32 %v9810, 0.0
    %v11250 = vmax.f32 %v10374, 0.0
    %v11251 = vmax.f32 %v10376, 0.0
    %v11252 = vmax.f32 %v10940, 0.0
    %v11253 = vmax.f32 %v10942, 0.0
    %v11254 = vmax.f32 %v9248, 0.0
    %v11255 = vmax.f32 %v9250, 0.0
    %v11256 = vmax.f32 %v9814, 0.0
    %v11257 = vmax.f32 %v9816, 0.0
    %v11258 = vmax.f32 %v10380, 0.0
    %v11259 = vmax.f32 %v10382, 0.0
    %v11260 = vmax.f32 %v10946, 0.0
    %v11261 = vmax.f32 %v10948, 0.0
    %v11262 = vmax.f32 %v9252, 0.0
    %v11263 = vmax.f32 %v9254, 0.0
    %v11264 = vmax.f32 %v9818, 0.0
    %v11265 = vmax.f32 %v9820, 0.0
    %v11266 = vmax.f32 %v10384, 0.0
    %v11267 = vmax.f32 %v10386, 0.0
    %v11268 = vmax.f32 %v10950, 0.0
    %v11269 = vmax.f32 %v10952, 0.0
    %v11270 = vmax.f32 %v9258, 0.0
    %v11271 = vmax.f32 %v9260, 0.0
    %v11272 = vmax.f32 %v9824, 0.0
    %v11273 = vmax.f32 %v9826, 0.0
    %v11274 = vmax.f32 %v10390, 0.0
    %v11275 = vmax.f32 %v10392, 0.0
    %v11276 = vmax.f32 %v10956, 0.0
    %v11277 = vmax.f32 %v10958, 0.0
    %v11278 = vmax.f32 %v9262, 0.0
    %v11279 = vmax.f32 %v9264, 0.0
    %v11280 = vmax.f32 %v9828, 0.0
    %v11281 = vmax.f32 %v9830, 0.0
    %v11282 = vmax.f32 %v10394, 0.0
    %v11283 = vmax.f32 %v10396, 0.0
    %v11284 = vmax.f32 %v10960, 0.0
    %v11285 = vmax.f32 %v10962, 0.0
    %v11286 = vmax.f32 %v9268, 0.0
    %v11287 = vmax.f32 %v9270, 0.0
    %v11288 = vmax.f32 %v9834, 0.0
    %v11289 = vmax.f32 %v9836, 0.0
    %v11290 = vmax.f32 %v10400, 0.0
    %v11291 = vmax.f32 %v10402, 0.0
    %v11292 = vmax.f32 %v10966, 0.0
    %v11293 = vmax.f32 %v10968, 0.0
    %v11294 = vmax.f32 %v9272, 0.0
    %v11295 = vmax.f32 %v9274, 0.0
    %v11296 = vmax.f32 %v9838, 0.0
    %v11297 = vmax.f32 %v9840, 0.0
    %v11298 = vmax.f32 %v10404, 0.0
    %v11299 = vmax.f32 %v10406, 0.0
    %v11300 = vmax.f32 %v10970, 0.0
    %v11301 = vmax.f32 %v10972, 0.0
    %v11302 = vmax.f32 %v9278, 0.0
    %v11303 = vmax.f32 %v9280, 0.0
    %v11304 = vmax.f32 %v9844, 0.0
    %v11305 = vmax.f32 %v9846, 0.0
    %v11306 = vmax.f32 %v10410, 0.0
    %v11307 = vmax.f32 %v10412, 0.0
    %v11308 = vmax.f32 %v10976, 0.0
    %v11309 = vmax.f32 %v10978, 0.0
    %v11310 = vmax.f32 %v9282, 0.0
    %v11311 = vmax.f32 %v9284, 0.0
    %v11312 = vmax.f32 %v9848, 0.0
    %v11313 = vmax.f32 %v9850, 0.0
    %v11314 = vmax.f32 %v10414, 0.0
    %v11315 = vmax.f32 %v10416, 0.0
    %v11316 = vmax.f32 %v10980, 0.0
    %v11317 = vmax.f32 %v10982, 0.0
    %v11318 = vmax.f32 %v9288, 0.0
    %v11319 = vmax.f32 %v9290, 0.0
    %v11320 = vmax.f32 %v9854, 0.0
    %v11321 = vmax.f32 %v9856, 0.0
    %v11322 = vmax.f32 %v10420, 0.0
    %v11323 = vmax.f32 %v10422, 0.0
    %v11324 = vmax.f32 %v10986, 0.0
    %v11325 = vmax.f32 %v10988, 0.0
    %v11326 = vmax.f32 %v9292, 0.0
    %v11327 = vmax.f32 %v9294, 0.0
    %v11328 = vmax.f32 %v9858, 0.0
    %v11329 = vmax.f32 %v9860, 0.0
    %v11330 = vmax.f32 %v10424, 0.0
    %v11331 = vmax.f32 %v10426, 0.0
    %v11332 = vmax.f32 %v10990, 0.0
    %v11333 = vmax.f32 %v10992, 0.0
    %v11334 = vmax.f32 %v9298, 0.0
    %v11335 = vmax.f32 %v9300, 0.0
    %v11336 = vmax.f32 %v9864, 0.0
    %v11337 = vmax.f32 %v9866, 0.0
    %v11338 = vmax.f32 %v10430, 0.0
    %v11339 = vmax.f32 %v10432, 0.0
    %v11340 = vmax.f32 %v10996, 0.0
    %v11341 = vmax.f32 %v10998, 0.0
    %v11342 = vmax.f32 %v9302, 0.0
    %v11343 = vmax.f32 %v9304, 0.0
    %v11344 = vmax.f32 %v9868, 0.0
    %v11345 = vmax.f32 %v9870, 0.0
    %v11346 = vmax.f32 %v10434, 0.0
    %v11347 = vmax.f32 %v10436, 0.0
    %v11348 = vmax.f32 %v11000, 0.0
    %v11349 = vmax.f32 %v11002, 0.0
    %v11350 = vmax.f32 %v9308, 0.0
    %v11351 = vmax.f32 %v9310, 0.0
    %v11352 = vmax.f32 %v9874, 0.0
    %v11353 = vmax.f32 %v9876, 0.0
    %v11354 = vmax.f32 %v10440, 0.0
    %v11355 = vmax.f32 %v10442, 0.0
    %v11356 = vmax.f32 %v11006, 0.0
    %v11357 = vmax.f32 %v11008, 0.0
    %v11358 = vmax.f32 %v9312, 0.0
    %v11359 = vmax.f32 %v9314, 0.0
    %v11360 = vmax.f32 %v9878, 0.0
    %v11361 = vmax.f32 %v9880, 0.0
    %v11362 = vmax.f32 %v10444, 0.0
    %v11363 = vmax.f32 %v10446, 0.0
    %v11364 = vmax.f32 %v11010, 0.0
    %v11365 = vmax.f32 %v11012, 0.0
    %v11366 = vmax.f32 %v9318, 0.0
    %v11367 = vmax.f32 %v9320, 0.0
    %v11368 = vmax.f32 %v9884, 0.0
    %v11369 = vmax.f32 %v9886, 0.0
    %v11370 = vmax.f32 %v10450, 0.0
    %v11371 = vmax.f32 %v10452, 0.0
    %v11372 = vmax.f32 %v11016, 0.0
    %v11373 = vmax.f32 %v11018, 0.0
    %v11374 = vmax.f32 %v9322, 0.0
    %v11375 = vmax.f32 %v9324, 0.0
    %v11376 = vmax.f32 %v9888, 0.0
    %v11377 = vmax.f32 %v9890, 0.0
    %v11378 = vmax.f32 %v10454, 0.0
    %v11379 = vmax.f32 %v10456, 0.0
    %v11380 = vmax.f32 %v11020, 0.0
    %v11381 = vmax.f32 %v11022, 0.0
    %v11382 = vmax.f32 %v9328, 0.0
    %v11383 = vmax.f32 %v9330, 0.0
    %v11384 = vmax.f32 %v9894, 0.0
    %v11385 = vmax.f32 %v9896, 0.0
    %v11386 = vmax.f32 %v10460, 0.0
    %v11387 = vmax.f32 %v10462, 0.0
    %v11388 = vmax.f32 %v11026, 0.0
    %v11389 = vmax.f32 %v11028, 0.0
    %v11390 = vmax.f32 %v9332, 0.0
    %v11391 = vmax.f32 %v9334, 0.0
    %v11392 = vmax.f32 %v9898, 0.0
    %v11393 = vmax.f32 %v9900, 0.0
    %v11394 = vmax.f32 %v10464, 0.0
    %v11395 = vmax.f32 %v10466, 0.0
    %v11396 = vmax.f32 %v11030, 0.0
    %v11397 = vmax.f32 %v11032, 0.0
    %v11398 = vmax.f32 %v9338, 0.0
    %v11399 = vmax.f32 %v9340, 0.0
    %v11400 = vmax.f32 %v9904, 0.0
    %v11401 = vmax.f32 %v9906, 0.0
    %v11402 = vmax.f32 %v10470, 0.0
    %v11403 = vmax.f32 %v10472, 0.0
    %v11404 = vmax.f32 %v11036, 0.0
    %v11405 = vmax.f32 %v11038, 0.0
    %v11406 = vmax.f32 %v9342, 0.0
    %v11407 = vmax.f32 %v9344, 0.0
    %v11408 = vmax.f32 %v9908, 0.0
    %v11409 = vmax.f32 %v9910, 0.0
    %v11410 = vmax.f32 %v10474, 0.0
    %v11411 = vmax.f32 %v10476, 0.0
    %v11412 = vmax.f32 %v11040, 0.0
    %v11413 = vmax.f32 %v11042, 0.0
    %v11414 = vmax.f32 %v9348, 0.0
    %v11415 = vmax.f32 %v9350, 0.0
    %v11416 = vmax.f32 %v9914, 0.0
    %v11417 = vmax.f32 %v9916, 0.0
    %v11418 = vmax.f32 %v10480, 0.0
    %v11419 = vmax.f32 %v10482, 0.0
    %v11420 = vmax.f32 %v11046, 0.0
    %v11421 = vmax.f32 %v11048, 0.0
    %v11422 = vmax.f32 %v9352, 0.0
    %v11423 = vmax.f32 %v9354, 0.0
    %v11424 = vmax.f32 %v9918, 0.0
    %v11425 = vmax.f32 %v9920, 0.0
    %v11426 = vmax.f32 %v10484, 0.0
    %v11427 = vmax.f32 %v10486, 0.0
    %v11428 = vmax.f32 %v11050, 0.0
    %v11429 = vmax.f32 %v11052, 0.0
    %v11430 = vmax.f32 %v9358, 0.0
    %v11431 = vmax.f32 %v9360, 0.0
    %v11432 = vmax.f32 %v9924, 0.0
    %v11433 = vmax.f32 %v9926, 0.0
    %v11434 = vmax.f32 %v10490, 0.0
    %v11435 = vmax.f32 %v10492, 0.0
    %v11436 = vmax.f32 %v11056, 0.0
    %v11437 = vmax.f32 %v11058, 0.0
    %v11438 = vmax.f32 %v9362, 0.0
    %v11439 = vmax.f32 %v9364, 0.0
    %v11440 = vmax.f32 %v9928, 0.0
    %v11441 = vmax.f32 %v9930, 0.0
    %v11442 = vmax.f32 %v10494, 0.0
    %v11443 = vmax.f32 %v10496, 0.0
    %v11444 = vmax.f32 %v11060, 0.0
    %v11445 = vmax.f32 %v11062, 0.0
    %v11446 = vmax.f32 %v9368, 0.0
    %v11447 = vmax.f32 %v9370, 0.0
    %v11448 = vmax.f32 %v9934, 0.0
    %v11449 = vmax.f32 %v9936, 0.0
    %v11450 = vmax.f32 %v10500, 0.0
    %v11451 = vmax.f32 %v10502, 0.0
    %v11452 = vmax.f32 %v11066, 0.0
    %v11453 = vmax.f32 %v11068, 0.0
    %v11454 = vmax.f32 %v9372, 0.0
    %v11455 = vmax.f32 %v9374, 0.0
    %v11456 = vmax.f32 %v9938, 0.0
    %v11457 = vmax.f32 %v9940, 0.0
    %v11458 = vmax.f32 %v10504, 0.0
    %v11459 = vmax.f32 %v10506, 0.0
    %v11460 = vmax.f32 %v11070, 0.0
    %v11461 = vmax.f32 %v11072, 0.0
    %v11462 = vmax.f32 %v9378, 0.0
    %v11463 = vmax.f32 %v9380, 0.0
    %v11464 = vmax.f32 %v9944, 0.0
    %v11465 = vmax.f32 %v9946, 0.0
    %v11466 = vmax.f32 %v10510, 0.0
    %v11467 = vmax.f32 %v10512, 0.0
    %v11468 = vmax.f32 %v11076, 0.0
    %v11469 = vmax.f32 %v11078, 0.0
    %v11470 = vmax.f32 %v9382, 0.0
    %v11471 = vmax.f32 %v9384, 0.0
    %v11472 = vmax.f32 %v9948, 0.0
    %v11473 = vmax.f32 %v9950, 0.0
    %v11474 = vmax.f32 %v10514, 0.0
    %v11475 = vmax.f32 %v10516, 0.0
    %v11476 = vmax.f32 %v11080, 0.0
    %v11477 = vmax.f32 %v11082, 0.0
    %v11478 = vmax.f32 %v9388, 0.0
    %v11479 = vmax.f32 %v9390, 0.0
    %v11480 = vmax.f32 %v9954, 0.0
    %v11481 = vmax.f32 %v9956, 0.0
    %v11482 = vmax.f32 %v10520, 0.0
    %v11483 = vmax.f32 %v10522, 0.0
    %v11484 = vmax.f32 %v11086, 0.0
    %v11485 = vmax.f32 %v11088, 0.0
    %v11486 = vmax.f32 %v9392, 0.0
    %v11487 = vmax.f32 %v9394, 0.0
    %v11488 = vmax.f32 %v9958, 0.0
    %v11489 = vmax.f32 %v9960, 0.0
    %v11490 = vmax.f32 %v10524, 0.0
    %v11491 = vmax.f32 %v10526, 0.0
    %v11492 = vmax.f32 %v11090, 0.0
    %v11493 = vmax.f32 %v11092, 0.0
    %v11494 = vunpack.c.l.bf16 %v108
    %v11495 = vunpack.c.h.bf16 %v108
    %v11496 = vunpack.c.l.bf16 %v109
    %v11497 = vunpack.c.h.bf16 %v109
    %v11498 = vunpack.c.l.bf16 %v110
    %v11499 = vunpack.c.h.bf16 %v110
    %v11500 = vunpack.c.l.bf16 %v111
    %v11501 = vunpack.c.h.bf16 %v111
    %v11502 = vunpack.c.l.bf16 %v112
    %v11503 = vunpack.c.h.bf16 %v112
    %v11504 = vunpack.c.l.bf16 %v113
    %v11505 = vunpack.c.h.bf16 %v113
    %v11506 = vunpack.c.l.bf16 %v114
    %v11507 = vunpack.c.h.bf16 %v114
    %v11508 = vunpack.c.l.bf16 %v115
    %v11509 = vunpack.c.h.bf16 %v115
    %v11510 = vunpack.c.l.bf16 %v116
    %v11511 = vunpack.c.h.bf16 %v116
    %v11512 = vunpack.c.l.bf16 %v117
    %v11513 = vunpack.c.h.bf16 %v117
    %v11514 = vunpack.c.l.bf16 %v118
    %v11515 = vunpack.c.h.bf16 %v118
    %v11516 = vunpack.c.l.bf16 %v119
    %v11517 = vunpack.c.h.bf16 %v119
    %v11518 = vunpack.c.l.bf16 %v120
    %v11519 = vunpack.c.h.bf16 %v120
    %v11520 = vunpack.c.l.bf16 %v121
    %v11521 = vunpack.c.h.bf16 %v121
    %v11522 = vunpack.c.l.bf16 %v122
    %v11523 = vunpack.c.h.bf16 %v122
    %v11524 = vunpack.c.l.bf16 %v123
    %v11525 = vunpack.c.h.bf16 %v123
    %v11526 = vunpack.c.l.bf16 %v124
    %v11527 = vunpack.c.h.bf16 %v124
    %v11528 = vunpack.c.l.bf16 %v125
    %v11529 = vunpack.c.h.bf16 %v125
    %v11530 = vunpack.c.l.bf16 %v126
    %v11531 = vunpack.c.h.bf16 %v126
    %v11532 = vunpack.c.l.bf16 %v127
    %v11533 = vunpack.c.h.bf16 %v127
    %v11534 = vunpack.c.l.bf16 %v128
    %v11535 = vunpack.c.h.bf16 %v128
    %v11536 = vunpack.c.l.bf16 %v129
    %v11537 = vunpack.c.h.bf16 %v129
    %v11538 = vunpack.c.l.bf16 %v130
    %v11539 = vunpack.c.h.bf16 %v130
    %v11540 = vunpack.c.l.bf16 %v131
    %v11541 = vunpack.c.h.bf16 %v131
    %v11542 = vunpack.c.l.bf16 %v132
    %v11543 = vunpack.c.h.bf16 %v132
    %v11544 = vunpack.c.l.bf16 %v133
    %v11545 = vunpack.c.h.bf16 %v133
    %v11546 = vunpack.c.l.bf16 %v134
    %v11547 = vunpack.c.h.bf16 %v134
    %v11548 = vunpack.c.l.bf16 %v135
    %v11549 = vunpack.c.h.bf16 %v135
    %v11550 = vunpack.c.l.bf16 %v136
    %v11551 = vunpack.c.h.bf16 %v136
    %v11552 = vunpack.c.l.bf16 %v137
    %v11553 = vunpack.c.h.bf16 %v137
    %v11554 = vunpack.c.l.bf16 %v138
    %v11555 = vunpack.c.h.bf16 %v138
    %v11556 = vunpack.c.l.bf16 %v139
    %v11557 = vunpack.c.h.bf16 %v139
    %v11558 = vunpack.c.l.bf16 %v140
    %v11559 = vunpack.c.h.bf16 %v140
    %v11560 = vunpack.c.l.bf16 %v141
    %v11561 = vunpack.c.h.bf16 %v141
    %v11562 = vunpack.c.l.bf16 %v142
    %v11563 = vunpack.c.h.bf16 %v142
    %v11564 = vunpack.c.l.bf16 %v143
    %v11565 = vunpack.c.h.bf16 %v143
    %v11566 = vunpack.c.l.bf16 %v144
    %v11567 = vunpack.c.h.bf16 %v144
    %v11568 = vunpack.c.l.bf16 %v145
    %v11569 = vunpack.c.h.bf16 %v145
    %v11570 = vunpack.c.l.bf16 %v146
    %v11571 = vunpack.c.h.bf16 %v146
    %v11572 = vunpack.c.l.bf16 %v147
    %v11573 = vunpack.c.h.bf16 %v147
    %v11574 = vunpack.c.l.bf16 %v148
    %v11575 = vunpack.c.h.bf16 %v148
    %v11576 = vunpack.c.l.bf16 %v149
    %v11577 = vunpack.c.h.bf16 %v149
    %v11578 = vunpack.c.l.bf16 %v150
    %v11579 = vunpack.c.h.bf16 %v150
    %v11580 = vunpack.c.l.bf16 %v151
    %v11581 = vunpack.c.h.bf16 %v151
    %v11582 = vunpack.c.l.bf16 %v152
    %v11583 = vunpack.c.h.bf16 %v152
    %v11584 = vunpack.c.l.bf16 %v153
    %v11585 = vunpack.c.h.bf16 %v153
    %v11586 = vunpack.c.l.bf16 %v154
    %v11587 = vunpack.c.h.bf16 %v154
    %v11588 = vunpack.c.l.bf16 %v155
    %v11589 = vunpack.c.h.bf16 %v155
    %v11590 = vunpack.c.l.bf16 %v156
    %v11591 = vunpack.c.h.bf16 %v156
    %v11592 = vunpack.c.l.bf16 %v157
    %v11593 = vunpack.c.h.bf16 %v157
    %v11594 = vunpack.c.l.bf16 %v158
    %v11595 = vunpack.c.h.bf16 %v158
    %v11596 = vunpack.c.l.bf16 %v159
    %v11597 = vunpack.c.h.bf16 %v159
    %v11598 = vunpack.c.l.bf16 %v160
    %v11599 = vunpack.c.h.bf16 %v160
    %v11600 = vunpack.c.l.bf16 %v161
    %v11601 = vunpack.c.h.bf16 %v161
    %v11602 = vunpack.c.l.bf16 %v162
    %v11603 = vunpack.c.h.bf16 %v162
    %v11604 = vunpack.c.l.bf16 %v163
    %v11605 = vunpack.c.h.bf16 %v163
    %v11606 = vunpack.c.l.bf16 %v164
    %v11607 = vunpack.c.h.bf16 %v164
    %v11608 = vunpack.c.l.bf16 %v165
    %v11609 = vunpack.c.h.bf16 %v165
    %v11610 = vunpack.c.l.bf16 %v166
    %v11611 = vunpack.c.h.bf16 %v166
    %v11612 = vunpack.c.l.bf16 %v167
    %v11613 = vunpack.c.h.bf16 %v167
    %v11614 = vunpack.c.l.bf16 %v168
    %v11615 = vunpack.c.h.bf16 %v168
    %v11616 = vunpack.c.l.bf16 %v169
    %v11617 = vunpack.c.h.bf16 %v169
    %v11618 = vunpack.c.l.bf16 %v170
    %v11619 = vunpack.c.h.bf16 %v170
    %v11620 = vunpack.c.l.bf16 %v171
    %v11621 = vunpack.c.h.bf16 %v171
    %v11622 = vunpack.c.l.bf16 %v172
    %v11623 = vunpack.c.h.bf16 %v172
    %v11624 = vunpack.c.l.bf16 %v173
    %v11625 = vunpack.c.h.bf16 %v173
    %v11626 = vunpack.c.l.bf16 %v174
    %v11627 = vunpack.c.h.bf16 %v174
    %v11628 = vunpack.c.l.bf16 %v175
    %v11629 = vunpack.c.h.bf16 %v175
    %v11630 = vunpack.c.l.bf16 %v176
    %v11631 = vunpack.c.h.bf16 %v176
    %v11632 = vunpack.c.l.bf16 %v177
    %v11633 = vunpack.c.h.bf16 %v177
    %v11634 = vunpack.c.l.bf16 %v178
    %v11635 = vunpack.c.h.bf16 %v178
    %v11636 = vunpack.c.l.bf16 %v179
    %v11637 = vunpack.c.h.bf16 %v179
    %v11638 = vunpack.c.l.bf16 %v180
    %v11639 = vunpack.c.h.bf16 %v180
    %v11640 = vunpack.c.l.bf16 %v181
    %v11641 = vunpack.c.h.bf16 %v181
    %v11642 = vunpack.c.l.bf16 %v182
    %v11643 = vunpack.c.h.bf16 %v182
    %v11644 = vunpack.c.l.bf16 %v183
    %v11645 = vunpack.c.h.bf16 %v183
    %v11646 = vunpack.c.l.bf16 %v184
    %v11647 = vunpack.c.h.bf16 %v184
    %v11648 = vunpack.c.l.bf16 %v185
    %v11649 = vunpack.c.h.bf16 %v185
    %v11650 = vunpack.c.l.bf16 %v186
    %v11651 = vunpack.c.h.bf16 %v186
    %v11652 = vunpack.c.l.bf16 %v187
    %v11653 = vunpack.c.h.bf16 %v187
    %v11654 = vunpack.c.l.bf16 %v188
    %v11655 = vunpack.c.h.bf16 %v188
    %v11656 = vunpack.c.l.bf16 %v189
    %v11657 = vunpack.c.h.bf16 %v189
    %v11658 = vunpack.c.l.bf16 %v190
    %v11659 = vunpack.c.h.bf16 %v190
    %v11660 = vunpack.c.l.bf16 %v191
    %v11661 = vunpack.c.h.bf16 %v191
    %v11662 = vunpack.c.l.bf16 %v192
    %v11663 = vunpack.c.h.bf16 %v192
    %v11664 = vunpack.c.l.bf16 %v193
    %v11665 = vunpack.c.h.bf16 %v193
    %v11666 = vunpack.c.l.bf16 %v194
    %v11667 = vunpack.c.h.bf16 %v194
    %v11668 = vunpack.c.l.bf16 %v195
    %v11669 = vunpack.c.h.bf16 %v195
    %v11670 = vunpack.c.l.bf16 %v196
    %v11671 = vunpack.c.h.bf16 %v196
    %v11672 = vunpack.c.l.bf16 %v197
    %v11673 = vunpack.c.h.bf16 %v197
    %v11674 = vunpack.c.l.bf16 %v198
    %v11675 = vunpack.c.h.bf16 %v198
    %v11676 = vunpack.c.l.bf16 %v199
    %v11677 = vunpack.c.h.bf16 %v199
    %v11678 = vunpack.c.l.bf16 %v200
    %v11679 = vunpack.c.h.bf16 %v200
    %v11680 = vunpack.c.l.bf16 %v201
    %v11681 = vunpack.c.h.bf16 %v201
    %v11682 = vunpack.c.l.bf16 %v202
    %v11683 = vunpack.c.h.bf16 %v202
    %v11684 = vunpack.c.l.bf16 %v203
    %v11685 = vunpack.c.h.bf16 %v203
    %v11686 = vunpack.c.l.bf16 %v204
    %v11687 = vunpack.c.h.bf16 %v204
    %v11688 = vunpack.c.l.bf16 %v205
    %v11689 = vunpack.c.h.bf16 %v205
    %v11690 = vunpack.c.l.bf16 %v206
    %v11691 = vunpack.c.h.bf16 %v206
    %v11692 = vunpack.c.l.bf16 %v207
    %v11693 = vunpack.c.h.bf16 %v207
    %v11694 = vunpack.c.l.bf16 %v208
    %v11695 = vunpack.c.h.bf16 %v208
    %v11696 = vunpack.c.l.bf16 %v209
    %v11697 = vunpack.c.h.bf16 %v209
    %v11698 = vunpack.c.l.bf16 %v210
    %v11699 = vunpack.c.h.bf16 %v210
    %v11700 = vunpack.c.l.bf16 %v211
    %v11701 = vunpack.c.h.bf16 %v211
    %v11702 = vunpack.c.l.bf16 %v212
    %v11703 = vunpack.c.h.bf16 %v212
    %v11704 = vunpack.c.l.bf16 %v213
    %v11705 = vunpack.c.h.bf16 %v213
    %v11706 = vunpack.c.l.bf16 %v214
    %v11707 = vunpack.c.h.bf16 %v214
    %v11708 = vunpack.c.l.bf16 %v215
    %v11709 = vunpack.c.h.bf16 %v215
    %v11710 = vunpack.c.l.bf16 %v216
    %v11711 = vunpack.c.h.bf16 %v216
    %v11712 = vunpack.c.l.bf16 %v217
    %v11713 = vunpack.c.h.bf16 %v217
    %v11714 = vunpack.c.l.bf16 %v218
    %v11715 = vunpack.c.h.bf16 %v218
    %v11716 = vunpack.c.l.bf16 %v219
    %v11717 = vunpack.c.h.bf16 %v219
    %v11718 = vunpack.c.l.bf16 %v220
    %v11719 = vunpack.c.h.bf16 %v220
    %v11720 = vunpack.c.l.bf16 %v221
    %v11721 = vunpack.c.h.bf16 %v221
    %v11722 = vunpack.c.l.bf16 %v222
    %v11723 = vunpack.c.h.bf16 %v222
    %v11724 = vunpack.c.l.bf16 %v223
    %v11725 = vunpack.c.h.bf16 %v223
    %v11726 = vunpack.c.l.bf16 %v224
    %v11727 = vunpack.c.h.bf16 %v224
    %v11728 = vunpack.c.l.bf16 %v225
    %v11729 = vunpack.c.h.bf16 %v225
    %v11730 = vunpack.c.l.bf16 %v226
    %v11731 = vunpack.c.h.bf16 %v226
    %v11732 = vunpack.c.l.bf16 %v227
    %v11733 = vunpack.c.h.bf16 %v227
    %v11734 = vunpack.c.l.bf16 %v228
    %v11735 = vunpack.c.h.bf16 %v228
    %v11736 = vunpack.c.l.bf16 %v229
    %v11737 = vunpack.c.h.bf16 %v229
    %v11738 = vunpack.c.l.bf16 %v230
    %v11739 = vunpack.c.h.bf16 %v230
    %v11740 = vunpack.c.l.bf16 %v231
    %v11741 = vunpack.c.h.bf16 %v231
    %v11742 = vunpack.c.l.bf16 %v232
    %v11743 = vunpack.c.h.bf16 %v232
    %v11744 = vunpack.c.l.bf16 %v233
    %v11745 = vunpack.c.h.bf16 %v233
    %v11746 = vunpack.c.l.bf16 %v234
    %v11747 = vunpack.c.h.bf16 %v234
    %v11748 = vunpack.c.l.bf16 %v235
    %v11749 = vunpack.c.h.bf16 %v235
    %v11750 = vunpack.c.l.bf16 %v236
    %v11751 = vunpack.c.h.bf16 %v236
    %v11752 = vunpack.c.l.bf16 %v237
    %v11753 = vunpack.c.h.bf16 %v237
    %v11754 = vunpack.c.l.bf16 %v238
    %v11755 = vunpack.c.h.bf16 %v238
    %v11756 = vunpack.c.l.bf16 %v239
    %v11757 = vunpack.c.h.bf16 %v239
    %v11758 = vunpack.c.l.bf16 %v240
    %v11759 = vunpack.c.h.bf16 %v240
    %v11760 = vunpack.c.l.bf16 %v241
    %v11761 = vunpack.c.h.bf16 %v241
    %v11762 = vunpack.c.l.bf16 %v242
    %v11763 = vunpack.c.h.bf16 %v242
    %v11764 = vunpack.c.l.bf16 %v243
    %v11765 = vunpack.c.h.bf16 %v243
    %v11766 = vunpack.c.l.bf16 %v244
    %v11767 = vunpack.c.h.bf16 %v244
    %v11768 = vunpack.c.l.bf16 %v245
    %v11769 = vunpack.c.h.bf16 %v245
    %v11770 = vunpack.c.l.bf16 %v246
    %v11771 = vunpack.c.h.bf16 %v246
    %v11772 = vunpack.c.l.bf16 %v247
    %v11773 = vunpack.c.h.bf16 %v247
    %v11774 = vunpack.c.l.bf16 %v248
    %v11775 = vunpack.c.h.bf16 %v248
    %v11776 = vunpack.c.l.bf16 %v249
    %v11777 = vunpack.c.h.bf16 %v249
    %v11778 = vunpack.c.l.bf16 %v250
    %v11779 = vunpack.c.h.bf16 %v250
    %v11780 = vunpack.c.l.bf16 %v251
    %v11781 = vunpack.c.h.bf16 %v251
    %v11782 = vunpack.c.l.bf16 %v252
    %v11783 = vunpack.c.h.bf16 %v252
    %v11784 = vunpack.c.l.bf16 %v253
    %v11785 = vunpack.c.h.bf16 %v253
    %v11786 = vunpack.c.l.bf16 %v254
    %v11787 = vunpack.c.h.bf16 %v254
    %v11788 = vunpack.c.l.bf16 %v255
    %v11789 = vunpack.c.h.bf16 %v255
    %v11790 = vunpack.c.l.bf16 %v256
    %v11791 = vunpack.c.h.bf16 %v256
    %v11792 = vunpack.c.l.bf16 %v257
    %v11793 = vunpack.c.h.bf16 %v257
    %v11794 = vunpack.c.l.bf16 %v258
    %v11795 = vunpack.c.h.bf16 %v258
    %v11796 = vunpack.c.l.bf16 %v259
    %v11797 = vunpack.c.h.bf16 %v259
    %v11798 = vunpack.c.l.bf16 %v260
    %v11799 = vunpack.c.h.bf16 %v260
    %v11800 = vunpack.c.l.bf16 %v261
    %v11801 = vunpack.c.h.bf16 %v261
    %v11802 = vunpack.c.l.bf16 %v262
    %v11803 = vunpack.c.h.bf16 %v262
    %v11804 = vunpack.c.l.bf16 %v263
    %v11805 = vunpack.c.h.bf16 %v263
    %v11806 = vunpack.c.l.bf16 %v264
    %v11807 = vunpack.c.h.bf16 %v264
    %v11808 = vunpack.c.l.bf16 %v265
    %v11809 = vunpack.c.h.bf16 %v265
    %v11810 = vunpack.c.l.bf16 %v266
    %v11811 = vunpack.c.h.bf16 %v266
    %v11812 = vunpack.c.l.bf16 %v267
    %v11813 = vunpack.c.h.bf16 %v267
    %v11814 = vunpack.c.l.bf16 %v268
    %v11815 = vunpack.c.h.bf16 %v268
    %v11816 = vunpack.c.l.bf16 %v269
    %v11817 = vunpack.c.h.bf16 %v269
    %v11818 = vunpack.c.l.bf16 %v270
    %v11819 = vunpack.c.h.bf16 %v270
    %v11820 = vunpack.c.l.bf16 %v271
    %v11821 = vunpack.c.h.bf16 %v271
    %v11822 = vunpack.c.l.bf16 %v272
    %v11823 = vunpack.c.h.bf16 %v272
    %v11824 = vunpack.c.l.bf16 %v273
    %v11825 = vunpack.c.h.bf16 %v273
    %v11826 = vunpack.c.l.bf16 %v274
    %v11827 = vunpack.c.h.bf16 %v274
    %v11828 = vunpack.c.l.bf16 %v275
    %v11829 = vunpack.c.h.bf16 %v275
    %v11830 = vunpack.c.l.bf16 %v276
    %v11831 = vunpack.c.h.bf16 %v276
    %v11832 = vunpack.c.l.bf16 %v277
    %v11833 = vunpack.c.h.bf16 %v277
    %v11834 = vunpack.c.l.bf16 %v278
    %v11835 = vunpack.c.h.bf16 %v278
    %v11836 = vunpack.c.l.bf16 %v279
    %v11837 = vunpack.c.h.bf16 %v279
    %v11838 = vunpack.c.l.bf16 %v280
    %v11839 = vunpack.c.h.bf16 %v280
    %v11840 = vunpack.c.l.bf16 %v281
    %v11841 = vunpack.c.h.bf16 %v281
    %v11842 = vunpack.c.l.bf16 %v282
    %v11843 = vunpack.c.h.bf16 %v282
    %v11844 = vunpack.c.l.bf16 %v283
    %v11845 = vunpack.c.h.bf16 %v283
    %v11846 = vunpack.c.l.bf16 %v284
    %v11847 = vunpack.c.h.bf16 %v284
    %v11848 = vunpack.c.l.bf16 %v285
    %v11849 = vunpack.c.h.bf16 %v285
    %v11850 = vunpack.c.l.bf16 %v286
    %v11851 = vunpack.c.h.bf16 %v286
    %v11852 = vunpack.c.l.bf16 %v287
    %v11853 = vunpack.c.h.bf16 %v287
    %v11854 = vunpack.c.l.bf16 %v288
    %v11855 = vunpack.c.h.bf16 %v288
    %v11856 = vunpack.c.l.bf16 %v289
    %v11857 = vunpack.c.h.bf16 %v289
    %v11858 = vunpack.c.l.bf16 %v290
    %v11859 = vunpack.c.h.bf16 %v290
    %v11860 = vunpack.c.l.bf16 %v291
    %v11861 = vunpack.c.h.bf16 %v291
    %v11862 = vunpack.c.l.bf16 %v292
    %v11863 = vunpack.c.h.bf16 %v292
    %v11864 = vunpack.c.l.bf16 %v293
    %v11865 = vunpack.c.h.bf16 %v293
    %v11866 = vunpack.c.l.bf16 %v294
    %v11867 = vunpack.c.h.bf16 %v294
    %v11868 = vunpack.c.l.bf16 %v295
    %v11869 = vunpack.c.h.bf16 %v295
    %v11870 = vunpack.c.l.bf16 %v296
    %v11871 = vunpack.c.h.bf16 %v296
    %v11872 = vunpack.c.l.bf16 %v297
    %v11873 = vunpack.c.h.bf16 %v297
    %v11874 = vunpack.c.l.bf16 %v298
    %v11875 = vunpack.c.h.bf16 %v298
    %v11876 = vunpack.c.l.bf16 %v299
    %v11877 = vunpack.c.h.bf16 %v299
    %v11878 = vunpack.c.l.bf16 %v300
    %v11879 = vunpack.c.h.bf16 %v300
    %v11880 = vunpack.c.l.bf16 %v301
    %v11881 = vunpack.c.h.bf16 %v301
    %v11882 = vunpack.c.l.bf16 %v302
    %v11883 = vunpack.c.h.bf16 %v302
    %v11884 = vunpack.c.l.bf16 %v303
    %v11885 = vunpack.c.h.bf16 %v303
    %v11886 = vunpack.c.l.bf16 %v304
    %v11887 = vunpack.c.h.bf16 %v304
    %v11888 = vunpack.c.l.bf16 %v305
    %v11889 = vunpack.c.h.bf16 %v305
    %v11890 = vunpack.c.l.bf16 %v306
    %v11891 = vunpack.c.h.bf16 %v306
    %v11892 = vunpack.c.l.bf16 %v307
    %v11893 = vunpack.c.h.bf16 %v307
    %v11894 = vadd.f32 %v11094, %v11494
    %v11895 = vadd.f32 %v11095, %v11495
    %v11896 = vadd.f32 %v11096, %v11496
    %v11897 = vadd.f32 %v11097, %v11497
    %v11898 = vadd.f32 %v11098, %v11498
    %v11899 = vadd.f32 %v11099, %v11499
    %v11900 = vadd.f32 %v11100, %v11500
    %v11901 = vadd.f32 %v11101, %v11501
    %v11902 = vadd.f32 %v11102, %v11502
    %v11903 = vadd.f32 %v11103, %v11503
    %v11904 = vadd.f32 %v11104, %v11504
    %v11905 = vadd.f32 %v11105, %v11505
    %v11906 = vadd.f32 %v11106, %v11506
    %v11907 = vadd.f32 %v11107, %v11507
    %v11908 = vadd.f32 %v11108, %v11508
    %v11909 = vadd.f32 %v11109, %v11509
    %v11910 = vadd.f32 %v11110, %v11510
    %v11911 = vadd.f32 %v11111, %v11511
    %v11912 = vadd.f32 %v11112, %v11512
    %v11913 = vadd.f32 %v11113, %v11513
    %v11914 = vadd.f32 %v11114, %v11514
    %v11915 = vadd.f32 %v11115, %v11515
    %v11916 = vadd.f32 %v11116, %v11516
    %v11917 = vadd.f32 %v11117, %v11517
    %v11918 = vadd.f32 %v11118, %v11518
    %v11919 = vadd.f32 %v11119, %v11519
    %v11920 = vadd.f32 %v11120, %v11520
    %v11921 = vadd.f32 %v11121, %v11521
    %v11922 = vadd.f32 %v11122, %v11522
    %v11923 = vadd.f32 %v11123, %v11523
    %v11924 = vadd.f32 %v11124, %v11524
    %v11925 = vadd.f32 %v11125, %v11525
    %v11926 = vadd.f32 %v11126, %v11526
    %v11927 = vadd.f32 %v11127, %v11527
    %v11928 = vadd.f32 %v11128, %v11528
    %v11929 = vadd.f32 %v11129, %v11529
    %v11930 = vadd.f32 %v11130, %v11530
    %v11931 = vadd.f32 %v11131, %v11531
    %v11932 = vadd.f32 %v11132, %v11532
    %v11933 = vadd.f32 %v11133, %v11533
    %v11934 = vadd.f32 %v11134, %v11534
    %v11935 = vadd.f32 %v11135, %v11535
    %v11936 = vadd.f32 %v11136, %v11536
    %v11937 = vadd.f32 %v11137, %v11537
    %v11938 = vadd.f32 %v11138, %v11538
    %v11939 = vadd.f32 %v11139, %v11539
    %v11940 = vadd.f32 %v11140, %v11540
    %v11941 = vadd.f32 %v11141, %v11541
    %v11942 = vadd.f32 %v11142, %v11542
    %v11943 = vadd.f32 %v11143, %v11543
    %v11944 = vadd.f32 %v11144, %v11544
    %v11945 = vadd.f32 %v11145, %v11545
    %v11946 = vadd.f32 %v11146, %v11546
    %v11947 = vadd.f32 %v11147, %v11547
    %v11948 = vadd.f32 %v11148, %v11548
    %v11949 = vadd.f32 %v11149, %v11549
    %v11950 = vadd.f32 %v11150, %v11550
    %v11951 = vadd.f32 %v11151, %v11551
    %v11952 = vadd.f32 %v11152, %v11552
    %v11953 = vadd.f32 %v11153, %v11553
    %v11954 = vadd.f32 %v11154, %v11554
    %v11955 = vadd.f32 %v11155, %v11555
    %v11956 = vadd.f32 %v11156, %v11556
    %v11957 = vadd.f32 %v11157, %v11557
    %v11958 = vadd.f32 %v11158, %v11558
    %v11959 = vadd.f32 %v11159, %v11559
    %v11960 = vadd.f32 %v11160, %v11560
    %v11961 = vadd.f32 %v11161, %v11561
    %v11962 = vadd.f32 %v11162, %v11562
    %v11963 = vadd.f32 %v11163, %v11563
    %v11964 = vadd.f32 %v11164, %v11564
    %v11965 = vadd.f32 %v11165, %v11565
    %v11966 = vadd.f32 %v11166, %v11566
    %v11967 = vadd.f32 %v11167, %v11567
    %v11968 = vadd.f32 %v11168, %v11568
    %v11969 = vadd.f32 %v11169, %v11569
    %v11970 = vadd.f32 %v11170, %v11570
    %v11971 = vadd.f32 %v11171, %v11571
    %v11972 = vadd.f32 %v11172, %v11572
    %v11973 = vadd.f32 %v11173, %v11573
    %v11974 = vadd.f32 %v11174, %v11574
    %v11975 = vadd.f32 %v11175, %v11575
    %v11976 = vadd.f32 %v11176, %v11576
    %v11977 = vadd.f32 %v11177, %v11577
    %v11978 = vadd.f32 %v11178, %v11578
    %v11979 = vadd.f32 %v11179, %v11579
    %v11980 = vadd.f32 %v11180, %v11580
    %v11981 = vadd.f32 %v11181, %v11581
    %v11982 = vadd.f32 %v11182, %v11582
    %v11983 = vadd.f32 %v11183, %v11583
    %v11984 = vadd.f32 %v11184, %v11584
    %v11985 = vadd.f32 %v11185, %v11585
    %v11986 = vadd.f32 %v11186, %v11586
    %v11987 = vadd.f32 %v11187, %v11587
    %v11988 = vadd.f32 %v11188, %v11588
    %v11989 = vadd.f32 %v11189, %v11589
    %v11990 = vadd.f32 %v11190, %v11590
    %v11991 = vadd.f32 %v11191, %v11591
    %v11992 = vadd.f32 %v11192, %v11592
    %v11993 = vadd.f32 %v11193, %v11593
    %v11994 = vadd.f32 %v11194, %v11594
    %v11995 = vadd.f32 %v11195, %v11595
    %v11996 = vadd.f32 %v11196, %v11596
    %v11997 = vadd.f32 %v11197, %v11597
    %v11998 = vadd.f32 %v11198, %v11598
    %v11999 = vadd.f32 %v11199, %v11599
    %v12000 = vadd.f32 %v11200, %v11600
    %v12001 = vadd.f32 %v11201, %v11601
    %v12002 = vadd.f32 %v11202, %v11602
    %v12003 = vadd.f32 %v11203, %v11603
    %v12004 = vadd.f32 %v11204, %v11604
    %v12005 = vadd.f32 %v11205, %v11605
    %v12006 = vadd.f32 %v11206, %v11606
    %v12007 = vadd.f32 %v11207, %v11607
    %v12008 = vadd.f32 %v11208, %v11608
    %v12009 = vadd.f32 %v11209, %v11609
    %v12010 = vadd.f32 %v11210, %v11610
    %v12011 = vadd.f32 %v11211, %v11611
    %v12012 = vadd.f32 %v11212, %v11612
    %v12013 = vadd.f32 %v11213, %v11613
    %v12014 = vadd.f32 %v11214, %v11614
    %v12015 = vadd.f32 %v11215, %v11615
    %v12016 = vadd.f32 %v11216, %v11616
    %v12017 = vadd.f32 %v11217, %v11617
    %v12018 = vadd.f32 %v11218, %v11618
    %v12019 = vadd.f32 %v11219, %v11619
    %v12020 = vadd.f32 %v11220, %v11620
    %v12021 = vadd.f32 %v11221, %v11621
    %v12022 = vadd.f32 %v11222, %v11622
    %v12023 = vadd.f32 %v11223, %v11623
    %v12024 = vadd.f32 %v11224, %v11624
    %v12025 = vadd.f32 %v11225, %v11625
    %v12026 = vadd.f32 %v11226, %v11626
    %v12027 = vadd.f32 %v11227, %v11627
    %v12028 = vadd.f32 %v11228, %v11628
    %v12029 = vadd.f32 %v11229, %v11629
    %v12030 = vadd.f32 %v11230, %v11630
    %v12031 = vadd.f32 %v11231, %v11631
    %v12032 = vadd.f32 %v11232, %v11632
    %v12033 = vadd.f32 %v11233, %v11633
    %v12034 = vadd.f32 %v11234, %v11634
    %v12035 = vadd.f32 %v11235, %v11635
    %v12036 = vadd.f32 %v11236, %v11636
    %v12037 = vadd.f32 %v11237, %v11637
    %v12038 = vadd.f32 %v11238, %v11638
    %v12039 = vadd.f32 %v11239, %v11639
    %v12040 = vadd.f32 %v11240, %v11640
    %v12041 = vadd.f32 %v11241, %v11641
    %v12042 = vadd.f32 %v11242, %v11642
    %v12043 = vadd.f32 %v11243, %v11643
    %v12044 = vadd.f32 %v11244, %v11644
    %v12045 = vadd.f32 %v11245, %v11645
    %v12046 = vadd.f32 %v11246, %v11646
    %v12047 = vadd.f32 %v11247, %v11647
    %v12048 = vadd.f32 %v11248, %v11648
    %v12049 = vadd.f32 %v11249, %v11649
    %v12050 = vadd.f32 %v11250, %v11650
    %v12051 = vadd.f32 %v11251, %v11651
    %v12052 = vadd.f32 %v11252, %v11652
    %v12053 = vadd.f32 %v11253, %v11653
    %v12054 = vadd.f32 %v11254, %v11654
    %v12055 = vadd.f32 %v11255, %v11655
    %v12056 = vadd.f32 %v11256, %v11656
    %v12057 = vadd.f32 %v11257, %v11657
    %v12058 = vadd.f32 %v11258, %v11658
    %v12059 = vadd.f32 %v11259, %v11659
    %v12060 = vadd.f32 %v11260, %v11660
    %v12061 = vadd.f32 %v11261, %v11661
    %v12062 = vadd.f32 %v11262, %v11662
    %v12063 = vadd.f32 %v11263, %v11663
    %v12064 = vadd.f32 %v11264, %v11664
    %v12065 = vadd.f32 %v11265, %v11665
    %v12066 = vadd.f32 %v11266, %v11666
    %v12067 = vadd.f32 %v11267, %v11667
    %v12068 = vadd.f32 %v11268, %v11668
    %v12069 = vadd.f32 %v11269, %v11669
    %v12070 = vadd.f32 %v11270, %v11670
    %v12071 = vadd.f32 %v11271, %v11671
    %v12072 = vadd.f32 %v11272, %v11672
    %v12073 = vadd.f32 %v11273, %v11673
    %v12074 = vadd.f32 %v11274, %v11674
    %v12075 = vadd.f32 %v11275, %v11675
    %v12076 = vadd.f32 %v11276, %v11676
    %v12077 = vadd.f32 %v11277, %v11677
    %v12078 = vadd.f32 %v11278, %v11678
    %v12079 = vadd.f32 %v11279, %v11679
    %v12080 = vadd.f32 %v11280, %v11680
    %v12081 = vadd.f32 %v11281, %v11681
    %v12082 = vadd.f32 %v11282, %v11682
    %v12083 = vadd.f32 %v11283, %v11683
    %v12084 = vadd.f32 %v11284, %v11684
    %v12085 = vadd.f32 %v11285, %v11685
    %v12086 = vadd.f32 %v11286, %v11686
    %v12087 = vadd.f32 %v11287, %v11687
    %v12088 = vadd.f32 %v11288, %v11688
    %v12089 = vadd.f32 %v11289, %v11689
    %v12090 = vadd.f32 %v11290, %v11690
    %v12091 = vadd.f32 %v11291, %v11691
    %v12092 = vadd.f32 %v11292, %v11692
    %v12093 = vadd.f32 %v11293, %v11693
    %v12094 = vadd.f32 %v11294, %v11694
    %v12095 = vadd.f32 %v11295, %v11695
    %v12096 = vadd.f32 %v11296, %v11696
    %v12097 = vadd.f32 %v11297, %v11697
    %v12098 = vadd.f32 %v11298, %v11698
    %v12099 = vadd.f32 %v11299, %v11699
    %v12100 = vadd.f32 %v11300, %v11700
    %v12101 = vadd.f32 %v11301, %v11701
    %v12102 = vadd.f32 %v11302, %v11702
    %v12103 = vadd.f32 %v11303, %v11703
    %v12104 = vadd.f32 %v11304, %v11704
    %v12105 = vadd.f32 %v11305, %v11705
    %v12106 = vadd.f32 %v11306, %v11706
    %v12107 = vadd.f32 %v11307, %v11707
    %v12108 = vadd.f32 %v11308, %v11708
    %v12109 = vadd.f32 %v11309, %v11709
    %v12110 = vadd.f32 %v11310, %v11710
    %v12111 = vadd.f32 %v11311, %v11711
    %v12112 = vadd.f32 %v11312, %v11712
    %v12113 = vadd.f32 %v11313, %v11713
    %v12114 = vadd.f32 %v11314, %v11714
    %v12115 = vadd.f32 %v11315, %v11715
    %v12116 = vadd.f32 %v11316, %v11716
    %v12117 = vadd.f32 %v11317, %v11717
    %v12118 = vadd.f32 %v11318, %v11718
    %v12119 = vadd.f32 %v11319, %v11719
    %v12120 = vadd.f32 %v11320, %v11720
    %v12121 = vadd.f32 %v11321, %v11721
    %v12122 = vadd.f32 %v11322, %v11722
    %v12123 = vadd.f32 %v11323, %v11723
    %v12124 = vadd.f32 %v11324, %v11724
    %v12125 = vadd.f32 %v11325, %v11725
    %v12126 = vadd.f32 %v11326, %v11726
    %v12127 = vadd.f32 %v11327, %v11727
    %v12128 = vadd.f32 %v11328, %v11728
    %v12129 = vadd.f32 %v11329, %v11729
    %v12130 = vadd.f32 %v11330, %v11730
    %v12131 = vadd.f32 %v11331, %v11731
    %v12132 = vadd.f32 %v11332, %v11732
    %v12133 = vadd.f32 %v11333, %v11733
    %v12134 = vadd.f32 %v11334, %v11734
    %v12135 = vadd.f32 %v11335, %v11735
    %v12136 = vadd.f32 %v11336, %v11736
    %v12137 = vadd.f32 %v11337, %v11737
    %v12138 = vadd.f32 %v11338, %v11738
    %v12139 = vadd.f32 %v11339, %v11739
    %v12140 = vadd.f32 %v11340, %v11740
    %v12141 = vadd.f32 %v11341, %v11741
    %v12142 = vadd.f32 %v11342, %v11742
    %v12143 = vadd.f32 %v11343, %v11743
    %v12144 = vadd.f32 %v11344, %v11744
    %v12145 = vadd.f32 %v11345, %v11745
    %v12146 = vadd.f32 %v11346, %v11746
    %v12147 = vadd.f32 %v11347, %v11747
    %v12148 = vadd.f32 %v11348, %v11748
    %v12149 = vadd.f32 %v11349, %v11749
    %v12150 = vadd.f32 %v11350, %v11750
    %v12151 = vadd.f32 %v11351, %v11751
    %v12152 = vadd.f32 %v11352, %v11752
    %v12153 = vadd.f32 %v11353, %v11753
    %v12154 = vadd.f32 %v11354, %v11754
    %v12155 = vadd.f32 %v11355, %v11755
    %v12156 = vadd.f32 %v11356, %v11756
    %v12157 = vadd.f32 %v11357, %v11757
    %v12158 = vadd.f32 %v11358, %v11758
    %v12159 = vadd.f32 %v11359, %v11759
    %v12160 = vadd.f32 %v11360, %v11760
    %v12161 = vadd.f32 %v11361, %v11761
    %v12162 = vadd.f32 %v11362, %v11762
    %v12163 = vadd.f32 %v11363, %v11763
    %v12164 = vadd.f32 %v11364, %v11764
    %v12165 = vadd.f32 %v11365, %v11765
    %v12166 = vadd.f32 %v11366, %v11766
    %v12167 = vadd.f32 %v11367, %v11767
    %v12168 = vadd.f32 %v11368, %v11768
    %v12169 = vadd.f32 %v11369, %v11769
    %v12170 = vadd.f32 %v11370, %v11770
    %v12171 = vadd.f32 %v11371, %v11771
    %v12172 = vadd.f32 %v11372, %v11772
    %v12173 = vadd.f32 %v11373, %v11773
    %v12174 = vadd.f32 %v11374, %v11774
    %v12175 = vadd.f32 %v11375, %v11775
    %v12176 = vadd.f32 %v11376, %v11776
    %v12177 = vadd.f32 %v11377, %v11777
    %v12178 = vadd.f32 %v11378, %v11778
    %v12179 = vadd.f32 %v11379, %v11779
    %v12180 = vadd.f32 %v11380, %v11780
    %v12181 = vadd.f32 %v11381, %v11781
    %v12182 = vadd.f32 %v11382, %v11782
    %v12183 = vadd.f32 %v11383, %v11783
    %v12184 = vadd.f32 %v11384, %v11784
    %v12185 = vadd.f32 %v11385, %v11785
    %v12186 = vadd.f32 %v11386, %v11786
    %v12187 = vadd.f32 %v11387, %v11787
    %v12188 = vadd.f32 %v11388, %v11788
    %v12189 = vadd.f32 %v11389, %v11789
    %v12190 = vadd.f32 %v11390, %v11790
    %v12191 = vadd.f32 %v11391, %v11791
    %v12192 = vadd.f32 %v11392, %v11792
    %v12193 = vadd.f32 %v11393, %v11793
    %v12194 = vadd.f32 %v11394, %v11794
    %v12195 = vadd.f32 %v11395, %v11795
    %v12196 = vadd.f32 %v11396, %v11796
    %v12197 = vadd.f32 %v11397, %v11797
    %v12198 = vadd.f32 %v11398, %v11798
    %v12199 = vadd.f32 %v11399, %v11799
    %v12200 = vadd.f32 %v11400, %v11800
    %v12201 = vadd.f32 %v11401, %v11801
    %v12202 = vadd.f32 %v11402, %v11802
    %v12203 = vadd.f32 %v11403, %v11803
    %v12204 = vadd.f32 %v11404, %v11804
    %v12205 = vadd.f32 %v11405, %v11805
    %v12206 = vadd.f32 %v11406, %v11806
    %v12207 = vadd.f32 %v11407, %v11807
    %v12208 = vadd.f32 %v11408, %v11808
    %v12209 = vadd.f32 %v11409, %v11809
    %v12210 = vadd.f32 %v11410, %v11810
    %v12211 = vadd.f32 %v11411, %v11811
    %v12212 = vadd.f32 %v11412, %v11812
    %v12213 = vadd.f32 %v11413, %v11813
    %v12214 = vadd.f32 %v11414, %v11814
    %v12215 = vadd.f32 %v11415, %v11815
    %v12216 = vadd.f32 %v11416, %v11816
    %v12217 = vadd.f32 %v11417, %v11817
    %v12218 = vadd.f32 %v11418, %v11818
    %v12219 = vadd.f32 %v11419, %v11819
    %v12220 = vadd.f32 %v11420, %v11820
    %v12221 = vadd.f32 %v11421, %v11821
    %v12222 = vadd.f32 %v11422, %v11822
    %v12223 = vadd.f32 %v11423, %v11823
    %v12224 = vadd.f32 %v11424, %v11824
    %v12225 = vadd.f32 %v11425, %v11825
    %v12226 = vadd.f32 %v11426, %v11826
    %v12227 = vadd.f32 %v11427, %v11827
    %v12228 = vadd.f32 %v11428, %v11828
    %v12229 = vadd.f32 %v11429, %v11829
    %v12230 = vadd.f32 %v11430, %v11830
    %v12231 = vadd.f32 %v11431, %v11831
    %v12232 = vadd.f32 %v11432, %v11832
    %v12233 = vadd.f32 %v11433, %v11833
    %v12234 = vadd.f32 %v11434, %v11834
    %v12235 = vadd.f32 %v11435, %v11835
    %v12236 = vadd.f32 %v11436, %v11836
    %v12237 = vadd.f32 %v11437, %v11837
    %v12238 = vadd.f32 %v11438, %v11838
    %v12239 = vadd.f32 %v11439, %v11839
    %v12240 = vadd.f32 %v11440, %v11840
    %v12241 = vadd.f32 %v11441, %v11841
    %v12242 = vadd.f32 %v11442, %v11842
    %v12243 = vadd.f32 %v11443, %v11843
    %v12244 = vadd.f32 %v11444, %v11844
    %v12245 = vadd.f32 %v11445, %v11845
    %v12246 = vadd.f32 %v11446, %v11846
    %v12247 = vadd.f32 %v11447, %v11847
    %v12248 = vadd.f32 %v11448, %v11848
    %v12249 = vadd.f32 %v11449, %v11849
    %v12250 = vadd.f32 %v11450, %v11850
    %v12251 = vadd.f32 %v11451, %v11851
    %v12252 = vadd.f32 %v11452, %v11852
    %v12253 = vadd.f32 %v11453, %v11853
    %v12254 = vadd.f32 %v11454, %v11854
    %v12255 = vadd.f32 %v11455, %v11855
    %v12256 = vadd.f32 %v11456, %v11856
    %v12257 = vadd.f32 %v11457, %v11857
    %v12258 = vadd.f32 %v11458, %v11858
    %v12259 = vadd.f32 %v11459, %v11859
    %v12260 = vadd.f32 %v11460, %v11860
    %v12261 = vadd.f32 %v11461, %v11861
    %v12262 = vadd.f32 %v11462, %v11862
    %v12263 = vadd.f32 %v11463, %v11863
    %v12264 = vadd.f32 %v11464, %v11864
    %v12265 = vadd.f32 %v11465, %v11865
    %v12266 = vadd.f32 %v11466, %v11866
    %v12267 = vadd.f32 %v11467, %v11867
    %v12268 = vadd.f32 %v11468, %v11868
    %v12269 = vadd.f32 %v11469, %v11869
    %v12270 = vadd.f32 %v11470, %v11870
    %v12271 = vadd.f32 %v11471, %v11871
    %v12272 = vadd.f32 %v11472, %v11872
    %v12273 = vadd.f32 %v11473, %v11873
    %v12274 = vadd.f32 %v11474, %v11874
    %v12275 = vadd.f32 %v11475, %v11875
    %v12276 = vadd.f32 %v11476, %v11876
    %v12277 = vadd.f32 %v11477, %v11877
    %v12278 = vadd.f32 %v11478, %v11878
    %v12279 = vadd.f32 %v11479, %v11879
    %v12280 = vadd.f32 %v11480, %v11880
    %v12281 = vadd.f32 %v11481, %v11881
    %v12282 = vadd.f32 %v11482, %v11882
    %v12283 = vadd.f32 %v11483, %v11883
    %v12284 = vadd.f32 %v11484, %v11884
    %v12285 = vadd.f32 %v11485, %v11885
    %v12286 = vadd.f32 %v11486, %v11886
    %v12287 = vadd.f32 %v11487, %v11887
    %v12288 = vadd.f32 %v11488, %v11888
    %v12289 = vadd.f32 %v11489, %v11889
    %v12290 = vadd.f32 %v11490, %v11890
    %v12291 = vadd.f32 %v11491, %v11891
    %v12292 = vadd.f32 %v11492, %v11892
    %v12293 = vadd.f32 %v11493, %v11893
    %v12294 = vld [vmem:[#allocation5] sm:$0xff]
    %v12295 = vld [vmem:[#allocation5 + $0x8] sm:$0xff]
    %v12296 = vld [vmem:[#allocation5 + $0x10] sm:$0xff]
    %v12297 = vld [vmem:[#allocation5 + $0x18] sm:$0xff]
    %vm12298 = vcmask 130048
    %v12300 = vsel %vm12298, %v12297, 0
    %12302 = vmatprep.subr.mxu0 %v12015
    %12303 = vmatpush1.msra.mxu0 %v12014
    %12304 = vmatprep.subr.mxu0 %v12007
    %12305 = vmatpush1.msra.mxu0 %v12006
    %12306 = vmatprep.subr.mxu0 %v11999
    %12307 = vmatpush1.msra.mxu0 %v11998
    %12308 = vmatprep.subr.mxu0 %v11991
    %12309 = vmatpush1.msra.mxu0 %v11990
    %12310 = vmatprep.subr.mxu0 %v11983
    %12311 = vmatpush1.msra.mxu0 %v11982
    %12312 = vmatprep.subr.mxu0 %v11975
    %12313 = vmatpush1.msra.mxu0 %v11974
    %12314 = vmatprep.subr.mxu0 %v11967
    %12315 = vmatpush1.msra.mxu0 %v11966
    %12316 = vmatprep.subr.mxu0 %v11959
    %12317 = vmatpush1.msra.mxu0 %v11958
    %12318 = vmatprep.subr.mxu0 %v11951
    %12319 = vmatpush1.msra.mxu0 %v11950
    %12320 = vmatprep.subr.mxu0 %v11943
    %12321 = vmatpush1.msra.mxu0 %v11942
    %12322 = vmatprep.subr.mxu0 %v11935
    %12323 = vmatpush1.msra.mxu0 %v11934
    %12324 = vmatprep.subr.mxu0 %v11927
    %12325 = vmatpush1.msra.mxu0 %v11926
    %12326 = vmatprep.subr.mxu0 %v11919
    %12327 = vmatpush1.msra.mxu0 %v11918
    %12328 = vmatprep.subr.mxu0 %v11911
    %12329 = vmatpush1.msra.mxu0 %v11910
    %12330 = vmatprep.subr.mxu0 %v11903
    %12331 = vmatpush1.msra.mxu0 %v11902
    %12332 = vmatprep.subr.mxu0 %v11895
    %12333 = vmatpush1.msra.mxu0 %v11894
    %12334 = vmatprep.subr.mxu0 %v12143
    %12335 = vmatpush2.msra.mxu0 %v12142
    %12336 = vmatprep.subr.mxu0 %v12135
    %12337 = vmatpush2.msra.mxu0 %v12134
    %12338 = vmatprep.subr.mxu0 %v12127
    %12339 = vmatpush2.msra.mxu0 %v12126
    %12340 = vmatprep.subr.mxu0 %v12119
    %12341 = vmatpush2.msra.mxu0 %v12118
    %12342 = vmatprep.subr.mxu0 %v12111
    %12343 = vmatpush2.msra.mxu0 %v12110
    %12344 = vmatprep.subr.mxu0 %v12103
    %12345 = vmatpush2.msra.mxu0 %v12102
    %12346 = vmatprep.subr.mxu0 %v12095
    %12347 = vmatpush2.msra.mxu0 %v12094
    %12348 = vmatprep.subr.mxu0 %v12087
    %12349 = vmatpush2.msra.mxu0 %v12086
    %12350 = vmatprep.subr.mxu0 %v12079
    %12351 = vmatpush2.msra.mxu0 %v12078
    %12352 = vmatprep.subr.mxu0 %v12071
    %12353 = vmatpush2.msra.mxu0 %v12070
    %12354 = vmatprep.subr.mxu0 %v12063
    %12355 = vmatpush2.msra.mxu0 %v12062
    %12356 = vmatprep.subr.mxu0 %v12055
    %12357 = vmatpush2.msra.mxu0 %v12054
    %12358 = vmatprep.subr.mxu0 %v12047
    %12359 = vmatpush2.msra.mxu0 %v12046
    %12360 = vmatprep.subr.mxu0 %v12039
    %12361 = vmatpush2.msra.mxu0 %v12038
    %12362 = vmatprep.subr.mxu0 %v12031
    %12363 = vmatpush2.msra.mxu0 %v12030
    %12364 = vmatprep.subr.mxu0 %v12023
    %12365 = vmatpush2.msra.mxu0 %v12022
    %12366 = vmatprep.mubr.f32.mxu0 %v12295
    %12367 = vmatmul.mubr.f32.gmra.mxu0 %v12294
    %v12368 = vpop.f32.mrf.mxu0
    %v12369 = vadd.f32 0.0, %v12368
    %v12370 = vpop.f32.mrf.mxu0
    %v12371 = vadd.f32 0.0, %v12370
    %12372 = vdwg.mxu0
    %12373 = vmatprep.subr.mxu0 %v12271
    %12374 = vmatpush1.msra.mxu0 %v12270
    %12375 = vmatprep.subr.mxu0 %v12263
    %12376 = vmatpush1.msra.mxu0 %v12262
    %12377 = vmatprep.subr.mxu0 %v12255
    %12378 = vmatpush1.msra.mxu0 %v12254
    %12379 = vmatprep.subr.mxu0 %v12247
    %12380 = vmatpush1.msra.mxu0 %v12246
    %12381 = vmatprep.subr.mxu0 %v12239
    %12382 = vmatpush1.msra.mxu0 %v12238
    %12383 = vmatprep.subr.mxu0 %v12231
    %12384 = vmatpush1.msra.mxu0 %v12230
    %12385 = vmatprep.subr.mxu0 %v12223
    %12386 = vmatpush1.msra.mxu0 %v12222
    %12387 = vmatprep.subr.mxu0 %v12215
    %12388 = vmatpush1.msra.mxu0 %v12214
    %12389 = vmatprep.subr.mxu0 %v12207
    %12390 = vmatpush1.msra.mxu0 %v12206
    %12391 = vmatprep.subr.mxu0 %v12199
    %12392 = vmatpush1.msra.mxu0 %v12198
    %12393 = vmatprep.subr.mxu0 %v12191
    %12394 = vmatpush1.msra.mxu0 %v12190
    %12395 = vmatprep.subr.mxu0 %v12183
    %12396 = vmatpush1.msra.mxu0 %v12182
    %12397 = vmatprep.subr.mxu0 %v12175
    %12398 = vmatpush1.msra.mxu0 %v12174
    %12399 = vmatprep.subr.mxu0 %v12167
    %12400 = vmatpush1.msra.mxu0 %v12166
    %12401 = vmatprep.subr.mxu0 %v12159
    %12402 = vmatpush1.msra.mxu0 %v12158
    %12403 = vmatprep.subr.mxu0 %v12151
    %12404 = vmatpush1.msra.mxu0 %v12150
    %12405 = vmatprep.subr.mxu0 0.0
    %12406 = vmatpush2.msra.mxu0 0.0
    %12407 = vmatprep.subr.mxu0 0.0
    %12408 = vmatpush2.msra.mxu0 0.0
    %12409 = vmatprep.subr.mxu0 0.0
    %12410 = vmatpush2.msra.mxu0 0.0
    %12411 = vmatprep.subr.mxu0 0.0
    %12412 = vmatpush2.msra.mxu0 0.0
    %12413 = vmatprep.subr.mxu0 0.0
    %12414 = vmatpush2.msra.mxu0 0.0
    %12415 = vmatprep.subr.mxu0 0.0
    %12416 = vmatpush2.msra.mxu0 0.0
    %12417 = vmatprep.subr.mxu0 0.0
    %12418 = vmatpush2.msra.mxu0 0.0
    %12419 = vmatprep.subr.mxu0 0.0
    %12420 = vmatpush2.msra.mxu0 0.0
    %12421 = vmatprep.subr.mxu0 0.0
    %12422 = vmatpush2.msra.mxu0 0.0
    %12423 = vmatprep.subr.mxu0 0.0
    %12424 = vmatpush2.msra.mxu0 0.0
    %12425 = vmatprep.subr.mxu0 0.0
    %12426 = vmatpush2.msra.mxu0 0.0
    %12427 = vmatprep.subr.mxu0 0.0
    %12428 = vmatpush2.msra.mxu0 0.0
    %12429 = vmatprep.subr.mxu0 0.0
    %12430 = vmatpush2.msra.mxu0 0.0
    %12431 = vmatprep.subr.mxu0 0.0
    %12432 = vmatpush2.msra.mxu0 0.0
    %12433 = vmatprep.subr.mxu0 %v12287
    %12434 = vmatpush2.msra.mxu0 %v12286
    %12435 = vmatprep.subr.mxu0 %v12279
    %12436 = vmatpush2.msra.mxu0 %v12278
    %12437 = vmatprep.mubr.f32.mxu0 %v12300
    %12438 = vmatmul.mubr.f32.gmra.mxu0 %v12296
    %v12439 = vpop.f32.mrf.mxu0
    %v12440 = vadd.f32 %v12369, %v12439
    %v12441 = vpop.f32.mrf.mxu0
    %v12442 = vadd.f32 %v12371, %v12441
    %12443 = vdwg.mxu0
    %12444 = vmatprep.subr.mxu0 %v12017
    %12445 = vmatpush1.msra.mxu0 %v12016
    %12446 = vmatprep.subr.mxu0 %v12009
    %12447 = vmatpush1.msra.mxu0 %v12008
    %12448 = vmatprep.subr.mxu0 %v12001
    %12449 = vmatpush1.msra.mxu0 %v12000
    %12450 = vmatprep.subr.mxu0 %v11993
    %12451 = vmatpush1.msra.mxu0 %v11992
    %12452 = vmatprep.subr.mxu0 %v11985
    %12453 = vmatpush1.msra.mxu0 %v11984
    %12454 = vmatprep.subr.mxu0 %v11977
    %12455 = vmatpush1.msra.mxu0 %v11976
    %12456 = vmatprep.subr.mxu0 %v11969
    %12457 = vmatpush1.msra.mxu0 %v11968
    %12458 = vmatprep.subr.mxu0 %v11961
    %12459 = vmatpush1.msra.mxu0 %v11960
    %12460 = vmatprep.subr.mxu0 %v11953
    %12461 = vmatpush1.msra.mxu0 %v11952
    %12462 = vmatprep.subr.mxu0 %v11945
    %12463 = vmatpush1.msra.mxu0 %v11944
    %12464 = vmatprep.subr.mxu0 %v11937
    %12465 = vmatpush1.msra.mxu0 %v11936
    %12466 = vmatprep.subr.mxu0 %v11929
    %12467 = vmatpush1.msra.mxu0 %v11928
    %12468 = vmatprep.subr.mxu0 %v11921
    %12469 = vmatpush1.msra.mxu0 %v11920
    %12470 = vmatprep.subr.mxu0 %v11913
    %12471 = vmatpush1.msra.mxu0 %v11912
    %12472 = vmatprep.subr.mxu0 %v11905
    %12473 = vmatpush1.msra.mxu0 %v11904
    %12474 = vmatprep.subr.mxu0 %v11897
    %12475 = vmatpush1.msra.mxu0 %v11896
    %12476 = vmatprep.subr.mxu0 %v12145
    %12477 = vmatpush2.msra.mxu0 %v12144
    %12478 = vmatprep.subr.mxu0 %v12137
    %12479 = vmatpush2.msra.mxu0 %v12136
    %12480 = vmatprep.subr.mxu0 %v12129
    %12481 = vmatpush2.msra.mxu0 %v12128
    %12482 = vmatprep.subr.mxu0 %v12121
    %12483 = vmatpush2.msra.mxu0 %v12120
    %12484 = vmatprep.subr.mxu0 %v12113
    %12485 = vmatpush2.msra.mxu0 %v12112
    %12486 = vmatprep.subr.mxu0 %v12105
    %12487 = vmatpush2.msra.mxu0 %v12104
    %12488 = vmatprep.subr.mxu0 %v12097
    %12489 = vmatpush2.msra.mxu0 %v12096
    %12490 = vmatprep.subr.mxu0 %v12089
    %12491 = vmatpush2.msra.mxu0 %v12088
    %12492 = vmatprep.subr.mxu0 %v12081
    %12493 = vmatpush2.msra.mxu0 %v12080
    %12494 = vmatprep.subr.mxu0 %v12073
    %12495 = vmatpush2.msra.mxu0 %v12072
    %12496 = vmatprep.subr.mxu0 %v12065
    %12497 = vmatpush2.msra.mxu0 %v12064
    %12498 = vmatprep.subr.mxu0 %v12057
    %12499 = vmatpush2.msra.mxu0 %v12056
    %12500 = vmatprep.subr.mxu0 %v12049
    %12501 = vmatpush2.msra.mxu0 %v12048
    %12502 = vmatprep.subr.mxu0 %v12041
    %12503 = vmatpush2.msra.mxu0 %v12040
    %12504 = vmatprep.subr.mxu0 %v12033
    %12505 = vmatpush2.msra.mxu0 %v12032
    %12506 = vmatprep.subr.mxu0 %v12025
    %12507 = vmatpush2.msra.mxu0 %v12024
    %12508 = vmatprep.mubr.f32.mxu0 %v12295
    %12509 = vmatmul.mubr.f32.gmra.mxu0 %v12294
    %v12510 = vpop.f32.mrf.mxu0
    %v12511 = vadd.f32 0.0, %v12510
    %v12512 = vpop.f32.mrf.mxu0
    %v12513 = vadd.f32 0.0, %v12512
    %12514 = vdwg.mxu0
    %12515 = vmatprep.subr.mxu0 %v12273
    %12516 = vmatpush1.msra.mxu0 %v12272
    %12517 = vmatprep.subr.mxu0 %v12265
    %12518 = vmatpush1.msra.mxu0 %v12264
    %12519 = vmatprep.subr.mxu0 %v12257
    %12520 = vmatpush1.msra.mxu0 %v12256
    %12521 = vmatprep.subr.mxu0 %v12249
    %12522 = vmatpush1.msra.mxu0 %v12248
    %12523 = vmatprep.subr.mxu0 %v12241
    %12524 = vmatpush1.msra.mxu0 %v12240
    %12525 = vmatprep.subr.mxu0 %v12233
    %12526 = vmatpush1.msra.mxu0 %v12232
    %12527 = vmatprep.subr.mxu0 %v12225
    %12528 = vmatpush1.msra.mxu0 %v12224
    %12529 = vmatprep.subr.mxu0 %v12217
    %12530 = vmatpush1.msra.mxu0 %v12216
    %12531 = vmatprep.subr.mxu0 %v12209
    %12532 = vmatpush1.msra.mxu0 %v12208
    %12533 = vmatprep.subr.mxu0 %v12201
    %12534 = vmatpush1.msra.mxu0 %v12200
    %12535 = vmatprep.subr.mxu0 %v12193
    %12536 = vmatpush1.msra.mxu0 %v12192
    %12537 = vmatprep.subr.mxu0 %v12185
    %12538 = vmatpush1.msra.mxu0 %v12184
    %12539 = vmatprep.subr.mxu0 %v12177
    %12540 = vmatpush1.msra.mxu0 %v12176
    %12541 = vmatprep.subr.mxu0 %v12169
    %12542 = vmatpush1.msra.mxu0 %v12168
    %12543 = vmatprep.subr.mxu0 %v12161
    %12544 = vmatpush1.msra.mxu0 %v12160
    %12545 = vmatprep.subr.mxu0 %v12153
    %12546 = vmatpush1.msra.mxu0 %v12152
    %12547 = vmatprep.subr.mxu0 0.0
    %12548 = vmatpush2.msra.mxu0 0.0
    %12549 = vmatprep.subr.mxu0 0.0
    %12550 = vmatpush2.msra.mxu0 0.0
    %12551 = vmatprep.subr.mxu0 0.0
    %12552 = vmatpush2.msra.mxu0 0.0
    %12553 = vmatprep.subr.mxu0 0.0
    %12554 = vmatpush2.msra.mxu0 0.0
    %12555 = vmatprep.subr.mxu0 0.0
    %12556 = vmatpush2.msra.mxu0 0.0
    %12557 = vmatprep.subr.mxu0 0.0
    %12558 = vmatpush2.msra.mxu0 0.0
    %12559 = vmatprep.subr.mxu0 0.0
    %12560 = vmatpush2.msra.mxu0 0.0
    %12561 = vmatprep.subr.mxu0 0.0
    %12562 = vmatpush2.msra.mxu0 0.0
    %12563 = vmatprep.subr.mxu0 0.0
    %12564 = vmatpush2.msra.mxu0 0.0
    %12565 = vmatprep.subr.mxu0 0.0
    %12566 = vmatpush2.msra.mxu0 0.0
    %12567 = vmatprep.subr.mxu0 0.0
    %12568 = vmatpush2.msra.mxu0 0.0
    %12569 = vmatprep.subr.mxu0 0.0
    %12570 = vmatpush2.msra.mxu0 0.0
    %12571 = vmatprep.subr.mxu0 0.0
    %12572 = vmatpush2.msra.mxu0 0.0
    %12573 = vmatprep.subr.mxu0 0.0
    %12574 = vmatpush2.msra.mxu0 0.0
    %12575 = vmatprep.subr.mxu0 %v12289
    %12576 = vmatpush2.msra.mxu0 %v12288
    %12577 = vmatprep.subr.mxu0 %v12281
    %12578 = vmatpush2.msra.mxu0 %v12280
    %12579 = vmatprep.mubr.f32.mxu0 %v12300
    %12580 = vmatmul.mubr.f32.gmra.mxu0 %v12296
    %v12581 = vpop.f32.mrf.mxu0
    %v12582 = vadd.f32 %v12511, %v12581
    %v12583 = vpop.f32.mrf.mxu0
    %v12584 = vadd.f32 %v12513, %v12583
    %12585 = vdwg.mxu0
    %12586 = vmatprep.subr.mxu0 %v12019
    %12587 = vmatpush1.msra.mxu0 %v12018
    %12588 = vmatprep.subr.mxu0 %v12011
    %12589 = vmatpush1.msra.mxu0 %v12010
    %12590 = vmatprep.subr.mxu0 %v12003
    %12591 = vmatpush1.msra.mxu0 %v12002
    %12592 = vmatprep.subr.mxu0 %v11995
    %12593 = vmatpush1.msra.mxu0 %v11994
    %12594 = vmatprep.subr.mxu0 %v11987
    %12595 = vmatpush1.msra.mxu0 %v11986
    %12596 = vmatprep.subr.mxu0 %v11979
    %12597 = vmatpush1.msra.mxu0 %v11978
    %12598 = vmatprep.subr.mxu0 %v11971
    %12599 = vmatpush1.msra.mxu0 %v11970
    %12600 = vmatprep.subr.mxu0 %v11963
    %12601 = vmatpush1.msra.mxu0 %v11962
    %12602 = vmatprep.subr.mxu0 %v11955
    %12603 = vmatpush1.msra.mxu0 %v11954
    %12604 = vmatprep.subr.mxu0 %v11947
    %12605 = vmatpush1.msra.mxu0 %v11946
    %12606 = vmatprep.subr.mxu0 %v11939
    %12607 = vmatpush1.msra.mxu0 %v11938
    %12608 = vmatprep.subr.mxu0 %v11931
    %12609 = vmatpush1.msra.mxu0 %v11930
    %12610 = vmatprep.subr.mxu0 %v11923
    %12611 = vmatpush1.msra.mxu0 %v11922
    %12612 = vmatprep.subr.mxu0 %v11915
    %12613 = vmatpush1.msra.mxu0 %v11914
    %12614 = vmatprep.subr.mxu0 %v11907
    %12615 = vmatpush1.msra.mxu0 %v11906
    %12616 = vmatprep.subr.mxu0 %v11899
    %12617 = vmatpush1.msra.mxu0 %v11898
    %12618 = vmatprep.subr.mxu0 %v12147
    %12619 = vmatpush2.msra.mxu0 %v12146
    %12620 = vmatprep.subr.mxu0 %v12139
    %12621 = vmatpush2.msra.mxu0 %v12138
    %12622 = vmatprep.subr.mxu0 %v12131
    %12623 = vmatpush2.msra.mxu0 %v12130
    %12624 = vmatprep.subr.mxu0 %v12123
    %12625 = vmatpush2.msra.mxu0 %v12122
    %12626 = vmatprep.subr.mxu0 %v12115
    %12627 = vmatpush2.msra.mxu0 %v12114
    %12628 = vmatprep.subr.mxu0 %v12107
    %12629 = vmatpush2.msra.mxu0 %v12106
    %12630 = vmatprep.subr.mxu0 %v12099
    %12631 = vmatpush2.msra.mxu0 %v12098
    %12632 = vmatprep.subr.mxu0 %v12091
    %12633 = vmatpush2.msra.mxu0 %v12090
    %12634 = vmatprep.subr.mxu0 %v12083
    %12635 = vmatpush2.msra.mxu0 %v12082
    %12636 = vmatprep.subr.mxu0 %v12075
    %12637 = vmatpush2.msra.mxu0 %v12074
    %12638 = vmatprep.subr.mxu0 %v12067
    %12639 = vmatpush2.msra.mxu0 %v12066
    %12640 = vmatprep.subr.mxu0 %v12059
    %12641 = vmatpush2.msra.mxu0 %v12058
    %12642 = vmatprep.subr.mxu0 %v12051
    %12643 = vmatpush2.msra.mxu0 %v12050
    %12644 = vmatprep.subr.mxu0 %v12043
    %12645 = vmatpush2.msra.mxu0 %v12042
    %12646 = vmatprep.subr.mxu0 %v12035
    %12647 = vmatpush2.msra.mxu0 %v12034
    %12648 = vmatprep.subr.mxu0 %v12027
    %12649 = vmatpush2.msra.mxu0 %v12026
    %12650 = vmatprep.mubr.f32.mxu0 %v12295
    %12651 = vmatmul.mubr.f32.gmra.mxu0 %v12294
    %v12652 = vpop.f32.mrf.mxu0
    %v12653 = vadd.f32 0.0, %v12652
    %v12654 = vpop.f32.mrf.mxu0
    %v12655 = vadd.f32 0.0, %v12654
    %12656 = vdwg.mxu0
    %12657 = vmatprep.subr.mxu0 %v12275
    %12658 = vmatpush1.msra.mxu0 %v12274
    %12659 = vmatprep.subr.mxu0 %v12267
    %12660 = vmatpush1.msra.mxu0 %v12266
    %12661 = vmatprep.subr.mxu0 %v12259
    %12662 = vmatpush1.msra.mxu0 %v12258
    %12663 = vmatprep.subr.mxu0 %v12251
    %12664 = vmatpush1.msra.mxu0 %v12250
    %12665 = vmatprep.subr.mxu0 %v12243
    %12666 = vmatpush1.msra.mxu0 %v12242
    %12667 = vmatprep.subr.mxu0 %v12235
    %12668 = vmatpush1.msra.mxu0 %v12234
    %12669 = vmatprep.subr.mxu0 %v12227
    %12670 = vmatpush1.msra.mxu0 %v12226
    %12671 = vmatprep.subr.mxu0 %v12219
    %12672 = vmatpush1.msra.mxu0 %v12218
    %12673 = vmatprep.subr.mxu0 %v12211
    %12674 = vmatpush1.msra.mxu0 %v12210
    %12675 = vmatprep.subr.mxu0 %v12203
    %12676 = vmatpush1.msra.mxu0 %v12202
    %12677 = vmatprep.subr.mxu0 %v12195
    %12678 = vmatpush1.msra.mxu0 %v12194
    %12679 = vmatprep.subr.mxu0 %v12187
    %12680 = vmatpush1.msra.mxu0 %v12186
    %12681 = vmatprep.subr.mxu0 %v12179
    %12682 = vmatpush1.msra.mxu0 %v12178
    %12683 = vmatprep.subr.mxu0 %v12171
    %12684 = vmatpush1.msra.mxu0 %v12170
    %12685 = vmatprep.subr.mxu0 %v12163
    %12686 = vmatpush1.msra.mxu0 %v12162
    %12687 = vmatprep.subr.mxu0 %v12155
    %12688 = vmatpush1.msra.mxu0 %v12154
    %12689 = vmatprep.subr.mxu0 0.0
    %12690 = vmatpush2.msra.mxu0 0.0
    %12691 = vmatprep.subr.mxu0 0.0
    %12692 = vmatpush2.msra.mxu0 0.0
    %12693 = vmatprep.subr.mxu0 0.0
    %12694 = vmatpush2.msra.mxu0 0.0
    %12695 = vmatprep.subr.mxu0 0.0
    %12696 = vmatpush2.msra.mxu0 0.0
    %12697 = vmatprep.subr.mxu0 0.0
    %12698 = vmatpush2.msra.mxu0 0.0
    %12699 = vmatprep.subr.mxu0 0.0
    %12700 = vmatpush2.msra.mxu0 0.0
    %12701 = vmatprep.subr.mxu0 0.0
    %12702 = vmatpush2.msra.mxu0 0.0
    %12703 = vmatprep.subr.mxu0 0.0
    %12704 = vmatpush2.msra.mxu0 0.0
    %12705 = vmatprep.subr.mxu0 0.0
    %12706 = vmatpush2.msra.mxu0 0.0
    %12707 = vmatprep.subr.mxu0 0.0
    %12708 = vmatpush2.msra.mxu0 0.0
    %12709 = vmatprep.subr.mxu0 0.0
    %12710 = vmatpush2.msra.mxu0 0.0
    %12711 = vmatprep.subr.mxu0 0.0
    %12712 = vmatpush2.msra.mxu0 0.0
    %12713 = vmatprep.subr.mxu0 0.0
    %12714 = vmatpush2.msra.mxu0 0.0
    %12715 = vmatprep.subr.mxu0 0.0
    %12716 = vmatpush2.msra.mxu0 0.0
    %12717 = vmatprep.subr.mxu0 %v12291
    %12718 = vmatpush2.msra.mxu0 %v12290
    %12719 = vmatprep.subr.mxu0 %v12283
    %12720 = vmatpush2.msra.mxu0 %v12282
    %12721 = vmatprep.mubr.f32.mxu0 %v12300
    %12722 = vmatmul.mubr.f32.gmra.mxu0 %v12296
    %v12723 = vpop.f32.mrf.mxu0
    %v12724 = vadd.f32 %v12653, %v12723
    %v12725 = vpop.f32.mrf.mxu0
    %v12726 = vadd.f32 %v12655, %v12725
    %12727 = vdwg.mxu0
    %12728 = vmatprep.subr.mxu0 %v12021
    %12729 = vmatpush1.msra.mxu0 %v12020
    %12730 = vmatprep.subr.mxu0 %v12013
    %12731 = vmatpush1.msra.mxu0 %v12012
    %12732 = vmatprep.subr.mxu0 %v12005
    %12733 = vmatpush1.msra.mxu0 %v12004
    %12734 = vmatprep.subr.mxu0 %v11997
    %12735 = vmatpush1.msra.mxu0 %v11996
    %12736 = vmatprep.subr.mxu0 %v11989
    %12737 = vmatpush1.msra.mxu0 %v11988
    %12738 = vmatprep.subr.mxu0 %v11981
    %12739 = vmatpush1.msra.mxu0 %v11980
    %12740 = vmatprep.subr.mxu0 %v11973
    %12741 = vmatpush1.msra.mxu0 %v11972
    %12742 = vmatprep.subr.mxu0 %v11965
    %12743 = vmatpush1.msra.mxu0 %v11964
    %12744 = vmatprep.subr.mxu0 %v11957
    %12745 = vmatpush1.msra.mxu0 %v11956
    %12746 = vmatprep.subr.mxu0 %v11949
    %12747 = vmatpush1.msra.mxu0 %v11948
    %12748 = vmatprep.subr.mxu0 %v11941
    %12749 = vmatpush1.msra.mxu0 %v11940
    %12750 = vmatprep.subr.mxu0 %v11933
    %12751 = vmatpush1.msra.mxu0 %v11932
    %12752 = vmatprep.subr.mxu0 %v11925
    %12753 = vmatpush1.msra.mxu0 %v11924
    %12754 = vmatprep.subr.mxu0 %v11917
    %12755 = vmatpush1.msra.mxu0 %v11916
    %12756 = vmatprep.subr.mxu0 %v11909
    %12757 = vmatpush1.msra.mxu0 %v11908
    %12758 = vmatprep.subr.mxu0 %v11901
    %12759 = vmatpush1.msra.mxu0 %v11900
    %12760 = vmatprep.subr.mxu0 %v12149
    %12761 = vmatpush2.msra.mxu0 %v12148
    %12762 = vmatprep.subr.mxu0 %v12141
    %12763 = vmatpush2.msra.mxu0 %v12140
    %12764 = vmatprep.subr.mxu0 %v12133
    %12765 = vmatpush2.msra.mxu0 %v12132
    %12766 = vmatprep.subr.mxu0 %v12125
    %12767 = vmatpush2.msra.mxu0 %v12124
    %12768 = vmatprep.subr.mxu0 %v12117
    %12769 = vmatpush2.msra.mxu0 %v12116
    %12770 = vmatprep.subr.mxu0 %v12109
    %12771 = vmatpush2.msra.mxu0 %v12108
    %12772 = vmatprep.subr.mxu0 %v12101
    %12773 = vmatpush2.msra.mxu0 %v12100
    %12774 = vmatprep.subr.mxu0 %v12093
    %12775 = vmatpush2.msra.mxu0 %v12092
    %12776 = vmatprep.subr.mxu0 %v12085
    %12777 = vmatpush2.msra.mxu0 %v12084
    %12778 = vmatprep.subr.mxu0 %v12077
    %12779 = vmatpush2.msra.mxu0 %v12076
    %12780 = vmatprep.subr.mxu0 %v12069
    %12781 = vmatpush2.msra.mxu0 %v12068
    %12782 = vmatprep.subr.mxu0 %v12061
    %12783 = vmatpush2.msra.mxu0 %v12060
    %12784 = vmatprep.subr.mxu0 %v12053
    %12785 = vmatpush2.msra.mxu0 %v12052
    %12786 = vmatprep.subr.mxu0 %v12045
    %12787 = vmatpush2.msra.mxu0 %v12044
    %12788 = vmatprep.subr.mxu0 %v12037
    %12789 = vmatpush2.msra.mxu0 %v12036
    %12790 = vmatprep.subr.mxu0 %v12029
    %12791 = vmatpush2.msra.mxu0 %v12028
    %12792 = vmatprep.mubr.f32.mxu0 %v12295
    %12793 = vmatmul.mubr.f32.gmra.mxu0 %v12294
    %v12794 = vpop.f32.mrf.mxu0
    %v12795 = vadd.f32 0.0, %v12794
    %v12796 = vpop.f32.mrf.mxu0
    %v12797 = vadd.f32 0.0, %v12796
    %12798 = vdwg.mxu0
    %12799 = vmatprep.subr.mxu0 %v12277
    %12800 = vmatpush1.msra.mxu0 %v12276
    %12801 = vmatprep.subr.mxu0 %v12269
    %12802 = vmatpush1.msra.mxu0 %v12268
    %12803 = vmatprep.subr.mxu0 %v12261
    %12804 = vmatpush1.msra.mxu0 %v12260
    %12805 = vmatprep.subr.mxu0 %v12253
    %12806 = vmatpush1.msra.mxu0 %v12252
    %12807 = vmatprep.subr.mxu0 %v12245
    %12808 = vmatpush1.msra.mxu0 %v12244
    %12809 = vmatprep.subr.mxu0 %v12237
    %12810 = vmatpush1.msra.mxu0 %v12236
    %12811 = vmatprep.subr.mxu0 %v12229
    %12812 = vmatpush1.msra.mxu0 %v12228
    %12813 = vmatprep.subr.mxu0 %v12221
    %12814 = vmatpush1.msra.mxu0 %v12220
    %12815 = vmatprep.subr.mxu0 %v12213
    %12816 = vmatpush1.msra.mxu0 %v12212
    %12817 = vmatprep.subr.mxu0 %v12205
    %12818 = vmatpush1.msra.mxu0 %v12204
    %12819 = vmatprep.subr.mxu0 %v12197
    %12820 = vmatpush1.msra.mxu0 %v12196
    %12821 = vmatprep.subr.mxu0 %v12189
    %12822 = vmatpush1.msra.mxu0 %v12188
    %12823 = vmatprep.subr.mxu0 %v12181
    %12824 = vmatpush1.msra.mxu0 %v12180
    %12825 = vmatprep.subr.mxu0 %v12173
    %12826 = vmatpush1.msra.mxu0 %v12172
    %12827 = vmatprep.subr.mxu0 %v12165
    %12828 = vmatpush1.msra.mxu0 %v12164
    %12829 = vmatprep.subr.mxu0 %v12157
    %12830 = vmatpush1.msra.mxu0 %v12156
    %12831 = vmatprep.subr.mxu0 0.0
    %12832 = vmatpush2.msra.mxu0 0.0
    %12833 = vmatprep.subr.mxu0 0.0
    %12834 = vmatpush2.msra.mxu0 0.0
    %12835 = vmatprep.subr.mxu0 0.0
    %12836 = vmatpush2.msra.mxu0 0.0
    %12837 = vmatprep.subr.mxu0 0.0
    %12838 = vmatpush2.msra.mxu0 0.0
    %12839 = vmatprep.subr.mxu0 0.0
    %12840 = vmatpush2.msra.mxu0 0.0
    %12841 = vmatprep.subr.mxu0 0.0
    %12842 = vmatpush2.msra.mxu0 0.0
    %12843 = vmatprep.subr.mxu0 0.0
    %12844 = vmatpush2.msra.mxu0 0.0
    %12845 = vmatprep.subr.mxu0 0.0
    %12846 = vmatpush2.msra.mxu0 0.0
    %12847 = vmatprep.subr.mxu0 0.0
    %12848 = vmatpush2.msra.mxu0 0.0
    %12849 = vmatprep.subr.mxu0 0.0
    %12850 = vmatpush2.msra.mxu0 0.0
    %12851 = vmatprep.subr.mxu0 0.0
    %12852 = vmatpush2.msra.mxu0 0.0
    %12853 = vmatprep.subr.mxu0 0.0
    %12854 = vmatpush2.msra.mxu0 0.0
    %12855 = vmatprep.subr.mxu0 0.0
    %12856 = vmatpush2.msra.mxu0 0.0
    %12857 = vmatprep.subr.mxu0 0.0
    %12858 = vmatpush2.msra.mxu0 0.0
    %12859 = vmatprep.subr.mxu0 %v12293
    %12860 = vmatpush2.msra.mxu0 %v12292
    %12861 = vmatprep.subr.mxu0 %v12285
    %12862 = vmatpush2.msra.mxu0 %v12284
    %12863 = vmatprep.mubr.f32.mxu0 %v12300
    %12864 = vmatmul.mubr.f32.gmra.mxu0 %v12296
    %v12865 = vpop.f32.mrf.mxu0
    %v12866 = vadd.f32 %v12795, %v12865
    %v12867 = vpop.f32.mrf.mxu0
    %v12868 = vadd.f32 %v12797, %v12867
    %12869 = vdwg.mxu0
    %12870 = vst [vmem:[#allocation13] sm:$0xff] %v12440
    %12871 = vst [vmem:[#allocation13 + $0x8] sm:$0xff] %v12442
    %12872 = vst [vmem:[#allocation13 + $0x10] sm:$0xff] %v12582
    %12873 = vst [vmem:[#allocation13 + $0x18] sm:$0xff] %v12584
    %12874 = vst [vmem:[#allocation13 + $0x20] sm:$0xff] %v12724
    %12875 = vst [vmem:[#allocation13 + $0x28] sm:$0xff] %v12726
    %12876 = vst [vmem:[#allocation13 + $0x30] sm:$0xff] %v12866
    %12877 = vst [vmem:[#allocation13 + $0x38] sm:$0xff] %v12868
    // Predicated region
    $region58: #{tpu_custom_call.1} parent=1 // pred_check
      _
    $region59: #{tpu_custom_call.1} parent=1 // pred_check_branch
      %12879 = sbr.rel (0) target = $region61
    $region60: #{tpu_custom_call.1} parent=1 // pred_region
      %s12881 = ssub.s32 1024, 1024
      %12882 = vsyncadd [#allocation4], %s12881
      %s12884 = sshll.u32 [#allocation13], 4
      %s12885 = int_to_ptr.vmem [resolvable:$true] %s12884
      %12887 = dma.vmem_to_hbm [thread:$0]  %s12885, 1024, %s8, [#allocation4]
    $region61: #{tpu_custom_call.1} parent=1 // pred_fallthru
      _
    // Predicated region
    $region62: #{tpu_custom_call.1} parent=1 // pred_check
      _
    $region63: #{tpu_custom_call.1} parent=1 // pred_check_branch
      %12889 = sbr.rel (0) target = $region65
    $region64: #{tpu_custom_call.1} parent=1 // pred_region
      %12890 = dma.done [#allocation4], 1024
    $region65: #{tpu_custom_call.1} parent=1 // pred_fallthru
      _
    %12891 = vsyncpa [#allocation3], 1
    %12892 = vsyncpa [#allocation6], 1
    %12893 = vsyncpa [#allocation9], 1
    %12894 = vsyncpa [#allocation12], 1
    %12895 = vsyncpa [#allocation4], 1

</llo_original>
